<compile_context>
chip_gen: v5e
topology: v5e:2x2
jax: 0.10.0
libtpu: 0.0.40
codegen_flags: <defaults>
</compile_context>

<pallas_src>
import jax
import jax.numpy as jnp
import numpy as np
from jax.experimental import pallas as pl
from jax.experimental.pallas import tpu as pltpu


# ----------------------- fused tower kernel (per level) ---------------------

def _make_tower_kernel(H, W, PAD, G):
    """(conv3x3 + GN + ReLU) x3 + per-level 1x1 conv_pred slice, fully fused.

    Operates on one (HW, C) image tile; emits lane-dense (HW, 128) scores."""
    HW = H * W

    def kernel(x_ref, w1, g1, b1, w2, g2, b2, w3, g3, b3, wp, o_ref,
               s1, s2, s3):
        # Zero ONLY the vertical pad rows of each strip scratch.  Done every
        # grid step (cheap: 2*PAD rows) so it stays correct even if the batch
        # axis is split across TensorCores; the interior rows are fully
        # overwritten by the conv stores below.
        for s in (s1, s2, s3):
            zpad = jnp.zeros((PAD, s.shape[1]), s.dtype)
            s[pl.ds(0, PAD), :] = zpad
            s[pl.ds(PAD + HW, PAD), :] = zpad

        # Column-validity masks, keyed on the INPUT element's column (built
        # once, reused by all three convs).  f32 on purpose (v5e-safe VPU).
        col = jax.lax.broadcasted_iota(jnp.int32, (HW, 1), 0) % W
        mask_m1 = (col != W - 1).astype(jnp.float32)   # dx=-1 copy: kill col W-1
        mask_p1 = (col != 0).astype(jnp.float32)       # dx=+1 copy: kill col 0

        def conv3x3(a, w_ref, s_ref):
            # a: (HW, cin) f32.  s_ref: (rows, 3*cin) bf16 im2col strip:
            #   lanes [0:cin]        dx=-1 copy, shifted down 1 row, col W-1 masked
            #   lanes [cin:2cin]     dx= 0 copy
            #   lanes [2cin:3cin]    dx=+1 copy, shifted up 1 row, col 0 masked
            # The wrap element produced by the roll lands exactly on a masked
            # column, so no extra boundary handling is needed.  A single
            # row-window load per dy then yields a (HW, 3*cin) operand and the
            # conv is 3 MXU dots with K=3*cin.
            cin = a.shape[1]
            cout = w_ref.shape[2]
            c_m1 = jnp.roll(a * mask_m1, 1, axis=0)    # stored[q] = masked[q-1]
            c_p1 = jnp.roll(a * mask_p1, -1, axis=0)   # stored[q] = masked[q+1]
            s_ref[pl.ds(PAD, HW), pl.ds(0, cin)] = c_m1.astype(s_ref.dtype)
            s_ref[pl.ds(PAD, HW), pl.ds(cin, cin)] = a.astype(s_ref.dtype)
            s_ref[pl.ds(PAD, HW), pl.ds(2 * cin, cin)] = c_p1.astype(s_ref.dtype)

            acc = jnp.zeros((HW, cout), jnp.float32)
            for j, dy in enumerate((-1, 0, 1)):
                xs = s_ref[pl.ds(PAD + dy * W, HW), :]          # (HW, 3*cin) bf16
                acc = acc + jnp.dot(xs, w_ref[j],
                                    preferred_element_type=jnp.float32)
            return acc

        def gn_relu(acc, g_ref, b_ref):
            # GroupNorm(G) + ReLU epilogue; f32 stats over the full tile.
            C = acc.shape[1]
            cpg = C // G
            n = float(HW * cpg)
            s = jnp.sum(acc, axis=0, keepdims=True)             # (1, C)
            sq = jnp.sum(acc * acc, axis=0, keepdims=True)      # (1, C)
            if cpg == 1:
                mean_c, ex2_c = s / n, sq / n
            elif cpg == 2:
                even = (jax.lax.broadcasted_iota(jnp.int32, (1, C), 1) % 2) == 0

                def pair_sum(v):   # v[c] + v[c^1]  (sum over the 2-ch group)
                    return v + jnp.where(even, jnp.roll(v, -1, axis=1),
                                         jnp.roll(v, 1, axis=1))

                mean_c, ex2_c = pair_sum(s) / n, pair_sum(sq) / n
            else:
                # general fallback: group-membership matmuls (tiny, rarely used)
                cid = jax.lax.broadcasted_iota(jnp.int32, (C, G), 0) // cpg
                gid = jax.lax.broadcasted_iota(jnp.int32, (C, G), 1)
                mem = (cid == gid).astype(jnp.float32)          # (C, G)
                gid2 = jax.lax.broadcasted_iota(jnp.int32, (G, C), 0)
                cid2 = jax.lax.broadcasted_iota(jnp.int32, (G, C), 1) // cpg
                mem_t = (gid2 == cid2).astype(jnp.float32)      # (G, C)
                mean_c = jnp.dot(
                    jnp.dot(s, mem, preferred_element_type=jnp.float32) / n,
                    mem_t, preferred_element_type=jnp.float32)
                ex2_c = jnp.dot(
                    jnp.dot(sq, mem, preferred_element_type=jnp.float32) / n,
                    mem_t, preferred_element_type=jnp.float32)
            # E[x^2]-E[x]^2 is cancellation-prone for large activations;
            # clamp to keep rsqrt well-defined.
            var_c = jnp.maximum(ex2_c - mean_c * mean_c, 0.0)
            inv_c = jax.lax.rsqrt(var_c + 1e-5)                 # GroupNorm eps
            y = (acc - mean_c) * inv_c * g_ref[...] + b_ref[...]
            return jnp.maximum(y, 0.0)

        x = x_ref[0].astype(jnp.float32)
        a1 = gn_relu(conv3x3(x, w1, s1), g1, b1)
        a2 = gn_relu(conv3x3(a1, w2, s2), g2, b2)
        a3 = gn_relu(conv3x3(a2, w3, s3), g3, b3)
        # fused per-level slice of the 1x1 conv_pred -> lane-dense 128-class
        # scores (bias is added once, later, in the head kernel).
        sc = jnp.dot(a3.astype(jnp.bfloat16), wp[...],
                     preferred_element_type=jnp.float32)
        o_ref[0] = sc.astype(o_ref.dtype)

    return kernel


def fused_tower_scores(xh, H, W, p, wp, num_groups=32):
    """xh: (B, H*W, Cin) bf16.  wp: (Cout, n_pad) bf16 conv_pred slice.
    Returns (B, H*W, n_pad) bf16 per-level class scores."""
    B, HW, Cin = xh.shape
    C1, C2, C3 = p["w1"].shape[0], p["w2"].shape[0], p["w3"].shape[0]
    n_pad = wp.shape[1]
    PAD = ((W + 1 + 7) // 8) * 8          # 8-aligned vertical pad >= W+1
    rows = 2 * PAD + HW

    def prep_w(w):   # (cout, cin, 3, 3) -> (3, 3*cin, cout) bf16  (dy, dx*cin)
        co, ci = w.shape[0], w.shape[1]
        return jnp.transpose(w, (2, 3, 1, 0)).reshape(3, 3 * ci, co).astype(jnp.bfloat16)

    def prep_gb(v):
        return v.reshape(1, -1).astype(jnp.float32)

    kernel = _make_tower_kernel(H, W, PAD, num_groups)
    return pl.pallas_call(
        kernel,
        out_shape=jax.ShapeDtypeStruct((B, HW, n_pad), jnp.bfloat16),
        grid=(B,),
        in_specs=[
            pl.BlockSpec((1, HW, Cin), lambda b: (b, 0, 0)),
            pl.BlockSpec((3, 3 * Cin, C1), lambda b: (0, 0, 0)),
            pl.BlockSpec((1, C1), lambda b: (0, 0)),
            pl.BlockSpec((1, C1), lambda b: (0, 0)),
            pl.BlockSpec((3, 3 * C1, C2), lambda b: (0, 0, 0)),
            pl.BlockSpec((1, C2), lambda b: (0, 0)),
            pl.BlockSpec((1, C2), lambda b: (0, 0)),
            pl.BlockSpec((3, 3 * C2, C3), lambda b: (0, 0, 0)),
            pl.BlockSpec((1, C3), lambda b: (0, 0)),
            pl.BlockSpec((1, C3), lambda b: (0, 0)),
            pl.BlockSpec((C3, n_pad), lambda b: (0, 0)),
        ],
        out_specs=pl.BlockSpec((1, HW, n_pad), lambda b: (b, 0, 0)),
        scratch_shapes=[pltpu.VMEM((rows, 3 * Cin), jnp.bfloat16),
                        pltpu.VMEM((rows, 3 * C1), jnp.bfloat16),
                        pltpu.VMEM((rows, 3 * C2), jnp.bfloat16)],
        compiler_params=pltpu.CompilerParams(
            dimension_semantics=("parallel",),
            vmem_limit_bytes=32 * 1024 * 1024),
    )(xh, prep_w(p["w1"]), prep_gb(p["g1"]), prep_gb(p["b1"]),
      prep_w(p["w2"]), prep_gb(p["g2"]), prep_gb(p["b2"]),
      prep_w(p["w3"]), prep_gb(p["g3"]), prep_gb(p["b3"]), wp)


# -------------- fused per-level interpolation + sum + bias head -------------

def _make_head_kernel():
    def kernel(s2, s3, s4, s5, m2, m3, m4, m5, b_ref, o_ref):
        # bf16 x bf16 MXU matmuls, f32 accumulation; bias added once at the end.
        acc = jnp.dot(m2[...], s2[0], preferred_element_type=jnp.float32)
        acc = acc + jnp.dot(m3[...], s3[0], preferred_element_type=jnp.float32)
        acc = acc + jnp.dot(m4[...], s4[0], preferred_element_type=jnp.float32)
        acc = acc + jnp.dot(m5[...], s5[0], preferred_element_type=jnp.float32)
        o_ref[0] = (acc + b_ref[...]).astype(o_ref.dtype)
    return kernel


def fused_interp_sum(scores, Ms, bias):
    """scores: 4x (B, Hi*Wi, n_pad) bf16; Ms: 4x (HoWo, Hi*Wi) bf16;
    bias: (1, n_pad) f32.  Returns (B, HoWo, n_pad) bf16 logits."""
    B = scores[0].shape[0]
    n_pad = scores[0].shape[2]
    HoWo = Ms[0].shape[0]
    hw = [int(m.shape[1]) for m in Ms]
    TM = min(512, HoWo)                   # sweep {256, 512, 1024} if tuning
    while TM > 8 and HoWo % TM:
        TM //= 2
    if HoWo % TM:
        TM = HoWo
    nT = HoWo // TM

    kernel = _make_head_kernel()
    return pl.pallas_call(
        kernel,
        out_shape=jax.ShapeDtypeStruct((B, HoWo, n_pad), jnp.bfloat16),
        grid=(nT, B),                     # batch innermost: M tiles stay resident
        in_specs=[
            pl.BlockSpec((1, hw[0], n_pad), lambda j, b: (b, 0, 0)),
            pl.BlockSpec((1, hw[1], n_pad), lambda j, b: (b, 0, 0)),
            pl.BlockSpec((1, hw[2], n_pad), lambda j, b: (b, 0, 0)),
            pl.BlockSpec((1, hw[3], n_pad), lambda j, b: (b, 0, 0)),
            pl.BlockSpec((TM, hw[0]), lambda j, b: (j, 0)),
            pl.BlockSpec((TM, hw[1]), lambda j, b: (j, 0)),
            pl.BlockSpec((TM, hw[2]), lambda j, b: (j, 0)),
            pl.BlockSpec((TM, hw[3]), lambda j, b: (j, 0)),
            pl.BlockSpec((1, n_pad), lambda j, b: (0, 0)),
        ],
        out_specs=pl.BlockSpec((1, TM, n_pad), lambda j, b: (b, j, 0)),
        compiler_params=pltpu.CompilerParams(
            dimension_semantics=("parallel", "parallel"),
            vmem_limit_bytes=32 * 1024 * 1024),
    )(scores[0], scores[1], scores[2], scores[3],
      Ms[0], Ms[1], Ms[2], Ms[3], bias)


# -------------------- bilinear interpolation operators ----------------------

def _bilinear_matrix_np(out_size, in_size):
    """PyTorch bilinear (align_corners=False) 1-D interpolation matrix."""
    d = np.arange(out_size, dtype=np.float64)
    src = (d + 0.5) * (in_size / out_size) - 0.5
    src = np.maximum(src, 0.0)
    i0 = np.clip(np.floor(src).astype(np.int64), 0, in_size - 1)
    i1 = np.minimum(i0 + 1, in_size - 1)
    frac = src - i0
    R = np.zeros((out_size, in_size), np.float64)
    R[np.arange(out_size), i0] += 1.0 - frac
    R[np.arange(out_size), i1] += frac
    return R


# ------------------------------- FCNHead ------------------------------------

def fcn_head_forward(inputs, params):
    """inputs: dict of 4 FPN levels, NCHW f32.  Returns logits NCHW (inference)."""
    xs = list(inputs.values())
    assert len(xs) == 4
    B = xs[0].shape[0]
    ncls = params["pred_b"].shape[0]
    Cout = params["tower"]["w3"].shape[0]
    n_pad = ((ncls + 127) // 128) * 128   # lane-dense padded class dim

    # per-level slices of the 1x1 conv_pred weight (concat order p2,p3,p4,p5),
    # padded to 128 classes; fused into the tower epilogue.
    wmat = jnp.transpose(params["pred_w"].reshape(ncls, 4 * Cout), (1, 0))
    wmat = jnp.pad(wmat, ((0, 0), (0, n_pad - ncls))).astype(jnp.bfloat16)
    wp4 = wmat.reshape(4, Cout, n_pad)

    scores, shapes = [], []
    for i, x in enumerate(xs):
        _, C, Hh, Ww = x.shape
        xh = jnp.transpose(x, (0, 2, 3, 1)).reshape(B, Hh * Ww, C).astype(jnp.bfloat16)
        scores.append(fused_tower_scores(xh, Hh, Ww, params["tower"], wp4[i]))
        shapes.append((Hh, Ww))

    # Combined (level -> p2 -> x4) bilinear operators, composed separably on
    # the host then kron'ed, cast to bf16 for the MXU.
    H2, W2 = shapes[0]
    Ho, Wo = 4 * H2, 4 * W2
    Rhf = _bilinear_matrix_np(Ho, H2)
    Rwf = _bilinear_matrix_np(Wo, W2)
    Ms = [jnp.asarray(np.kron(Rhf, Rwf), dtype=jnp.bfloat16)]   # p2: only the x4
    for lvl, scale in ((1, 2), (2, 4), (3, 8)):
        Hi, Wi = shapes[lvl]
        Rh = _bilinear_matrix_np(Hi * scale, Hi)
        Rw = _bilinear_matrix_np(Wi * scale, Wi)
        assert Rh.shape[0] >= H2, "FPN level height too small after upsample"
        assert Rw.shape[0] == W2, "FPN level widths must match after upsample"
        Rh = Rh[:H2]                        # PyTorch trims height only
        Ms.append(jnp.asarray(np.kron(Rhf @ Rh, Rwf @ Rw), dtype=jnp.bfloat16))

    bias = jnp.pad(params["pred_b"], (0, n_pad - ncls)).reshape(1, n_pad)
    logits = fused_interp_sum(scores, Ms, bias.astype(jnp.float32))
    out = logits[:, :, :ncls].astype(jnp.float32).reshape(B, Ho, Wo, ncls)
    return jnp.transpose(out, (0, 3, 1, 2))            # back to NCHW


def init_params(key, in_ch, out_ch, num_classes):
    ks = jax.random.split(key, 11)

    def conv_w(k, cout, cin):
        lim = (6.0 / ((cin + cout) * 9)) ** 0.5          # xavier-uniform-ish
        return jax.random.uniform(k, (cout, cin, 3, 3), jnp.float32, -lim, lim)

    tower = {
        "w1": conv_w(ks[0], in_ch, in_ch),
        "g1": 1.0 + 0.1 * jax.random.normal(ks[1], (in_ch,), jnp.float32),
        "b1": 0.1 * jax.random.normal(ks[2], (in_ch,), jnp.float32),
        "w2": conv_w(ks[3], out_ch, in_ch),
        "g2": 1.0 + 0.1 * jax.random.normal(ks[4], (out_ch,), jnp.float32),
        "b2": 0.1 * jax.random.normal(ks[5], (out_ch,), jnp.float32),
        "w3": conv_w(ks[6], out_ch, out_ch),
        "g3": 1.0 + 0.1 * jax.random.normal(ks[7], (out_ch,), jnp.float32),
        "b3": 0.1 * jax.random.normal(ks[8], (out_ch,), jnp.float32),
    }
    cin_pred = out_ch * 4
    lim = (6.0 / (cin_pred + num_classes)) ** 0.5
    pred_w = jax.random.uniform(ks[9], (num_classes, cin_pred, 1, 1),
                                jnp.float32, -lim, lim)
    pred_b = 0.01 * jax.random.normal(ks[10], (num_classes,), jnp.float32)
    return {"tower": tower, "pred_w": pred_w, "pred_b": pred_b}


if __name__ == "__main__":
    key = jax.random.PRNGKey(0)
    k_in, k_par = jax.random.split(key)

    # cfg: IN_CHANNELS=64, OUT_CHANNELS=32, NUM_LEVELS=4, NUM_CLASSES=8
    N, Cin, Cout, NCLS = 2, 64, 32, 8
    H = 16
    sizes = [H, H // 2, H // 4, H // 8]          # p2, p3, p4, p5 strides
    kin = jax.random.split(k_in, 4)
    inputs = {f"p{i + 2}": jax.random.normal(kin[i], (N, Cin, s, s), jnp.float32)
              for i, s in enumerate(sizes)}

    params = init_params(k_par, Cin, Cout, NCLS)

    out = fcn_head_forward(inputs, params)
    out = jax.block_until_ready(out)
    assert out.shape == (N, NCLS, 4 * H, 4 * H), out.shape
    assert bool(jnp.all(jnp.isfinite(out)))
    print("KERNEL_OK")
</pallas_src>

<mosaic_0001>
module attributes {stable_mosaic.version = 11 : i64} {
  func.func @kernel(%arg0: i32, %arg1: memref<1x256x64xbf16, #tpu.memory_space<vmem>>, %arg2: memref<3x192x64xbf16, #tpu.memory_space<vmem>>, %arg3: memref<1x64xf32, #tpu.memory_space<vmem>>, %arg4: memref<1x64xf32, #tpu.memory_space<vmem>>, %arg5: memref<3x192x32xbf16, #tpu.memory_space<vmem>>, %arg6: memref<1x32xf32, #tpu.memory_space<vmem>>, %arg7: memref<1x32xf32, #tpu.memory_space<vmem>>, %arg8: memref<3x96x32xbf16, #tpu.memory_space<vmem>>, %arg9: memref<1x32xf32, #tpu.memory_space<vmem>>, %arg10: memref<1x32xf32, #tpu.memory_space<vmem>>, %arg11: memref<32x128xbf16, #tpu.memory_space<vmem>>, %arg12: memref<1x256x128xbf16, #tpu.memory_space<vmem>>, %arg13: memref<304x192xbf16, #tpu.memory_space<vmem>>, %arg14: memref<304x192xbf16, #tpu.memory_space<vmem>>, %arg15: memref<304x96xbf16, #tpu.memory_space<vmem>>) attributes {dimension_semantics = [#tpu.dimension_semantics<parallel>], iteration_bounds = array<i64: 2>, scalar_prefetch = 0 : i64, scratch_operands = 3 : i64, tpu.core_type = #tpu.core_type<tc>, window_params = [{transform_indices = @transform_0, window_bounds = array<i64: 1, 256, 64>}, {pipeline_mode = #tpu.pipeline_mode<synchronous>, transform_indices = @transform_1, window_bounds = array<i64: 3, 192, 64>}, {pipeline_mode = #tpu.pipeline_mode<synchronous>, transform_indices = @transform_2, window_bounds = array<i64: 1, 64>}, {pipeline_mode = #tpu.pipeline_mode<synchronous>, transform_indices = @transform_3, window_bounds = array<i64: 1, 64>}, {pipeline_mode = #tpu.pipeline_mode<synchronous>, transform_indices = @transform_4, window_bounds = array<i64: 3, 192, 32>}, {pipeline_mode = #tpu.pipeline_mode<synchronous>, transform_indices = @transform_5, window_bounds = array<i64: 1, 32>}, {pipeline_mode = #tpu.pipeline_mode<synchronous>, transform_indices = @transform_6, window_bounds = array<i64: 1, 32>}, {pipeline_mode = #tpu.pipeline_mode<synchronous>, transform_indices = @transform_7, window_bounds = array<i64: 3, 96, 32>}, {pipeline_mode = #tpu.pipeline_mode<synchronous>, transform_indices = @transform_8, window_bounds = array<i64: 1, 32>}, {pipeline_mode = #tpu.pipeline_mode<synchronous>, transform_indices = @transform_9, window_bounds = array<i64: 1, 32>}, {pipeline_mode = #tpu.pipeline_mode<synchronous>, transform_indices = @transform_10, window_bounds = array<i64: 32, 128>}, {transform_indices = @transform_11, window_bounds = array<i64: 1, 256, 128>}]} {
    %cst = arith.constant 0.000000e+00 : bf16
    %0 = vector.broadcast %cst : bf16 to vector<24x192xbf16>
    %c0 = arith.constant 0 : index
    %c0_0 = arith.constant 0 : index
    %1 = vector.load %arg13[%c0, %c0_0] : memref<304x192xbf16, #tpu.memory_space<vmem>>, vector<24x192xbf16>
    tpu.vector_store %arg13[%c0, %c0_0], %0 {strides = array<i32>} : memref<304x192xbf16, #tpu.memory_space<vmem>>, vector<24x192xbf16>,
    %c280 = arith.constant 280 : index
    %c0_1 = arith.constant 0 : index
    %2 = vector.load %arg13[%c280, %c0_1] : memref<304x192xbf16, #tpu.memory_space<vmem>>, vector<24x192xbf16>
    tpu.vector_store %arg13[%c280, %c0_1], %0 {strides = array<i32>} : memref<304x192xbf16, #tpu.memory_space<vmem>>, vector<24x192xbf16>,
    %cst_2 = arith.constant 0.000000e+00 : bf16
    %3 = vector.broadcast %cst_2 : bf16 to vector<24x192xbf16>
    %c0_3 = arith.constant 0 : index
    %c0_4 = arith.constant 0 : index
    %4 = vector.load %arg14[%c0_3, %c0_4] : memref<304x192xbf16, #tpu.memory_space<vmem>>, vector<24x192xbf16>
    tpu.vector_store %arg14[%c0_3, %c0_4], %3 {strides = array<i32>} : memref<304x192xbf16, #tpu.memory_space<vmem>>, vector<24x192xbf16>,
    %c280_5 = arith.constant 280 : index
    %c0_6 = arith.constant 0 : index
    %5 = vector.load %arg14[%c280_5, %c0_6] : memref<304x192xbf16, #tpu.memory_space<vmem>>, vector<24x192xbf16>
    tpu.vector_store %arg14[%c280_5, %c0_6], %3 {strides = array<i32>} : memref<304x192xbf16, #tpu.memory_space<vmem>>, vector<24x192xbf16>,
    %cst_7 = arith.constant 0.000000e+00 : bf16
    %6 = vector.broadcast %cst_7 : bf16 to vector<24x96xbf16>
    %c0_8 = arith.constant 0 : index
    %c0_9 = arith.constant 0 : index
    %7 = vector.load %arg15[%c0_8, %c0_9] : memref<304x96xbf16, #tpu.memory_space<vmem>>, vector<24x96xbf16>
    tpu.vector_store %arg15[%c0_8, %c0_9], %6 {strides = array<i32>} : memref<304x96xbf16, #tpu.memory_space<vmem>>, vector<24x96xbf16>,
    %c280_10 = arith.constant 280 : index
    %c0_11 = arith.constant 0 : index
    %8 = vector.load %arg15[%c280_10, %c0_11] : memref<304x96xbf16, #tpu.memory_space<vmem>>, vector<24x96xbf16>
    tpu.vector_store %arg15[%c280_10, %c0_11], %6 {strides = array<i32>} : memref<304x96xbf16, #tpu.memory_space<vmem>>, vector<24x96xbf16>,
    %9 = tpu.iota {dimensions = array<i32: 0>} : vector<256x1xi32>
    %c16_i32 = arith.constant 16 : i32
    %c0_i32 = arith.constant 0 : i32
    %10 = arith.cmpi eq, %c16_i32, %c0_i32 : i32
    %c1_i32 = arith.constant 1 : i32
    %11 = arith.select %10, %c1_i32, %c16_i32 : i32
    %12 = vector.broadcast %11 : i32 to vector<256x1xi32>
    %13 = arith.remsi %9, %12 : vector<256x1xi32>
    %c0_i32_12 = arith.constant 0 : i32
    %14 = vector.broadcast %c0_i32_12 : i32 to vector<256x1xi32>
    %15 = arith.cmpi ne, %13, %14 : vector<256x1xi32>
    %c0_i32_13 = arith.constant 0 : i32
    %16 = vector.broadcast %c0_i32_13 : i32 to vector<256x1xi32>
    %17 = arith.cmpi slt, %13, %16 : vector<256x1xi32>
    %c0_i32_14 = arith.constant 0 : i32
    %18 = arith.cmpi slt, %11, %c0_i32_14 : i32
    %19 = vector.broadcast %18 : i1 to vector<256x1xi1>
    %20 = vector.broadcast %19 : vector<256x1xi1> to vector<256x1xi1>
    %21 = arith.xori %17, %20 : vector<256x1xi1>
    %22 = arith.andi %21, %15 : vector<256x1xi1>
    %23 = vector.broadcast %11 : i32 to vector<256x1xi32>
    %24 = arith.addi %13, %23 : vector<256x1xi32>
    %25 = arith.select %22, %24, %13 : vector<256x1xi1>, vector<256x1xi32>
    %c15_i32 = arith.constant 15 : i32
    %26 = vector.broadcast %c15_i32 : i32 to vector<256x1xi32>
    %27 = arith.cmpi ne, %25, %26 : vector<256x1xi32>
    %28 = arith.extui %27 : vector<256x1xi1> to vector<256x1xi32>
    %29 = arith.sitofp %28 : vector<256x1xi32> to vector<256x1xf32>
    %c0_i32_15 = arith.constant 0 : i32
    %30 = vector.broadcast %c0_i32_15 : i32 to vector<256x1xi32>
    %31 = arith.cmpi ne, %25, %30 : vector<256x1xi32>
    %32 = arith.extui %31 : vector<256x1xi1> to vector<256x1xi32>
    %33 = arith.sitofp %32 : vector<256x1xi32> to vector<256x1xf32>
    %c0_16 = arith.constant 0 : index
    %c0_17 = arith.constant 0 : index
    %c0_18 = arith.constant 0 : index
    %34 = vector.load %arg1[%c0_16, %c0_17, %c0_18] : memref<1x256x64xbf16, #tpu.memory_space<vmem>>, vector<1x256x64xbf16>
    %35 = vector.shape_cast %34 : vector<1x256x64xbf16> to vector<256x64xbf16>
    %36 = arith.extf %35 : vector<256x64xbf16> to vector<256x64xf32>
    %37 = vector.broadcast %29 : vector<256x1xf32> to vector<256x64xf32>
    %38 = arith.mulf %36, %37 : vector<256x64xf32>
    %39 = vector.extract_strided_slice %38 {offsets = [255, 0], sizes = [1, 64], strides = [1, 1]} : vector<256x64xf32> to vector<1x64xf32>
    %40 = vector.extract_strided_slice %38 {offsets = [0, 0], sizes = [255, 64], strides = [1, 1]} : vector<256x64xf32> to vector<255x64xf32>
    %41 = tpu.concatenate %39, %40 in 0 : vector<1x64xf32>, vector<255x64xf32> -> vector<256x64xf32>
    %42 = vector.broadcast %33 : vector<256x1xf32> to vector<256x64xf32>
    %43 = arith.mulf %36, %42 : vector<256x64xf32>
    %44 = vector.extract_strided_slice %43 {offsets = [1, 0], sizes = [255, 64], strides = [1, 1]} : vector<256x64xf32> to vector<255x64xf32>
    %45 = vector.extract_strided_slice %43 {offsets = [0, 0], sizes = [1, 64], strides = [1, 1]} : vector<256x64xf32> to vector<1x64xf32>
    %46 = tpu.concatenate %44, %45 in 0 : vector<255x64xf32>, vector<1x64xf32> -> vector<256x64xf32>
    %47 = arith.truncf %41 : vector<256x64xf32> to vector<256x64xbf16>
    %c24 = arith.constant 24 : index
    %c0_19 = arith.constant 0 : index
    %48 = vector.load %arg13[%c24, %c0_19] : memref<304x192xbf16, #tpu.memory_space<vmem>>, vector<256x64xbf16>
    tpu.vector_store %arg13[%c24, %c0_19], %47 {strides = array<i32>} : memref<304x192xbf16, #tpu.memory_space<vmem>>, vector<256x64xbf16>,
    %49 = arith.truncf %36 : vector<256x64xf32> to vector<256x64xbf16>
    %c24_20 = arith.constant 24 : index
    %c64 = arith.constant 64 : index
    %50 = vector.load %arg13[%c24_20, %c64] : memref<304x192xbf16, #tpu.memory_space<vmem>>, vector<256x64xbf16>
    tpu.vector_store %arg13[%c24_20, %c64], %49 {strides = array<i32>} : memref<304x192xbf16, #tpu.memory_space<vmem>>, vector<256x64xbf16>,
    %51 = arith.truncf %46 : vector<256x64xf32> to vector<256x64xbf16>
    %c24_21 = arith.constant 24 : index
    %c128 = arith.constant 128 : index
    %52 = vector.load %arg13[%c24_21, %c128] : memref<304x192xbf16, #tpu.memory_space<vmem>>, vector<256x64xbf16>
    tpu.vector_store %arg13[%c24_21, %c128], %51 {strides = array<i32>} : memref<304x192xbf16, #tpu.memory_space<vmem>>, vector<256x64xbf16>,
    %cst_22 = arith.constant 0.000000e+00 : f32
    %53 = vector.broadcast %cst_22 : f32 to vector<256x64xf32>
    %c8 = arith.constant 8 : index
    %c0_23 = arith.constant 0 : index
    %54 = vector.load %arg13[%c8, %c0_23] : memref<304x192xbf16, #tpu.memory_space<vmem>>, vector<256x192xbf16>
    %c0_24 = arith.constant 0 : index
    %c0_25 = arith.constant 0 : index
    %c0_26 = arith.constant 0 : index
    %55 = vector.load %arg2[%c0_24, %c0_25, %c0_26] : memref<3x192x64xbf16, #tpu.memory_space<vmem>>, vector<1x192x64xbf16>
    %56 = vector.shape_cast %55 : vector<1x192x64xbf16> to vector<192x64xbf16>
    %cst_27 = arith.constant dense<0.000000e+00> : vector<256x64xf32>
    %57 = tpu.matmul %54, %56, %cst_27 {dimension_numbers = #tpu.dot_dimension_numbers<[1], [0], [0], [1], [0, 0, 1, 1], [], []>} : vector<256x192xbf16>, vector<192x64xbf16>, vector<256x64xf32> -> vector<256x64xf32>
    %58 = arith.addf %53, %57 : vector<256x64xf32>
    %c24_28 = arith.constant 24 : index
    %c0_29 = arith.constant 0 : index
    %59 = vector.load %arg13[%c24_28, %c0_29] : memref<304x192xbf16, #tpu.memory_space<vmem>>, vector<256x192xbf16>
    %c1 = arith.constant 1 : index
    %c0_30 = arith.constant 0 : index
    %c0_31 = arith.constant 0 : index
    %60 = vector.load %arg2[%c1, %c0_30, %c0_31] : memref<3x192x64xbf16, #tpu.memory_space<vmem>>, vector<1x192x64xbf16>
    %61 = vector.shape_cast %60 : vector<1x192x64xbf16> to vector<192x64xbf16>
    %cst_32 = arith.constant dense<0.000000e+00> : vector<256x64xf32>
    %62 = tpu.matmul %59, %61, %cst_32 {dimension_numbers = #tpu.dot_dimension_numbers<[1], [0], [0], [1], [0, 0, 1, 1], [], []>} : vector<256x192xbf16>, vector<192x64xbf16>, vector<256x64xf32> -> vector<256x64xf32>
    %63 = arith.addf %58, %62 : vector<256x64xf32>
    %c40 = arith.constant 40 : index
    %c0_33 = arith.constant 0 : index
    %64 = vector.load %arg13[%c40, %c0_33] : memref<304x192xbf16, #tpu.memory_space<vmem>>, vector<256x192xbf16>
    %c2 = arith.constant 2 : index
    %c0_34 = arith.constant 0 : index
    %c0_35 = arith.constant 0 : index
    %65 = vector.load %arg2[%c2, %c0_34, %c0_35] : memref<3x192x64xbf16, #tpu.memory_space<vmem>>, vector<1x192x64xbf16>
    %66 = vector.shape_cast %65 : vector<1x192x64xbf16> to vector<192x64xbf16>
    %cst_36 = arith.constant dense<0.000000e+00> : vector<256x64xf32>
    %67 = tpu.matmul %64, %66, %cst_36 {dimension_numbers = #tpu.dot_dimension_numbers<[1], [0], [0], [1], [0, 0, 1, 1], [], []>} : vector<256x192xbf16>, vector<192x64xbf16>, vector<256x64xf32> -> vector<256x64xf32>
    %68 = arith.addf %63, %67 : vector<256x64xf32>
    %cst_37 = arith.constant dense<0.000000e+00> : vector<64xf32>
    %69 = vector.multi_reduction <add>, %68, %cst_37 [0] : vector<256x64xf32> to vector<64xf32>
    %70 = vector.shape_cast %69 : vector<64xf32> to vector<1x64xf32>
    %71 = arith.mulf %68, %68 : vector<256x64xf32>
    %cst_38 = arith.constant dense<0.000000e+00> : vector<64xf32>
    %72 = vector.multi_reduction <add>, %71, %cst_38 [0] : vector<256x64xf32> to vector<64xf32>
    %73 = vector.shape_cast %72 : vector<64xf32> to vector<1x64xf32>
    %74 = tpu.iota {dimensions = array<i32: 1>} : vector<1x64xi32>
    %c2_i32 = arith.constant 2 : i32
    %c0_i32_39 = arith.constant 0 : i32
    %75 = arith.cmpi eq, %c2_i32, %c0_i32_39 : i32
    %c1_i32_40 = arith.constant 1 : i32
    %76 = arith.select %75, %c1_i32_40, %c2_i32 : i32
    %77 = vector.broadcast %76 : i32 to vector<1x64xi32>
    %78 = arith.remsi %74, %77 : vector<1x64xi32>
    %c0_i32_41 = arith.constant 0 : i32
    %79 = vector.broadcast %c0_i32_41 : i32 to vector<1x64xi32>
    %80 = arith.cmpi ne, %78, %79 : vector<1x64xi32>
    %c0_i32_42 = arith.constant 0 : i32
    %81 = vector.broadcast %c0_i32_42 : i32 to vector<1x64xi32>
    %82 = arith.cmpi slt, %78, %81 : vector<1x64xi32>
    %c0_i32_43 = arith.constant 0 : i32
    %83 = arith.cmpi slt, %76, %c0_i32_43 : i32
    %84 = vector.broadcast %83 : i1 to vector<1x64xi1>
    %85 = vector.broadcast %84 : vector<1x64xi1> to vector<1x64xi1>
    %86 = arith.xori %82, %85 : vector<1x64xi1>
    %87 = arith.andi %86, %80 : vector<1x64xi1>
    %88 = vector.broadcast %76 : i32 to vector<1x64xi32>
    %89 = arith.addi %78, %88 : vector<1x64xi32>
    %90 = arith.select %87, %89, %78 : vector<1x64xi1>, vector<1x64xi32>
    %c0_i32_44 = arith.constant 0 : i32
    %91 = vector.broadcast %c0_i32_44 : i32 to vector<1x64xi32>
    %92 = arith.cmpi eq, %90, %91 : vector<1x64xi32>
    %93 = vector.extract_strided_slice %70 {offsets = [0, 1], sizes = [1, 63], strides = [1, 1]} : vector<1x64xf32> to vector<1x63xf32>
    %94 = vector.extract_strided_slice %70 {offsets = [0, 0], sizes = [1, 1], strides = [1, 1]} : vector<1x64xf32> to vector<1x1xf32>
    %95 = tpu.concatenate %93, %94 in 1 : vector<1x63xf32>, vector<1x1xf32> -> vector<1x64xf32>
    %96 = vector.extract_strided_slice %70 {offsets = [0, 63], sizes = [1, 1], strides = [1, 1]} : vector<1x64xf32> to vector<1x1xf32>
    %97 = vector.extract_strided_slice %70 {offsets = [0, 0], sizes = [1, 63], strides = [1, 1]} : vector<1x64xf32> to vector<1x63xf32>
    %98 = tpu.concatenate %96, %97 in 1 : vector<1x1xf32>, vector<1x63xf32> -> vector<1x64xf32>
    %99 = arith.select %92, %95, %98 : vector<1x64xi1>, vector<1x64xf32>
    %100 = arith.addf %70, %99 : vector<1x64xf32>
    %cst_45 = arith.constant 5.120000e+02 : f32
    %101 = vector.broadcast %cst_45 : f32 to vector<1x64xf32>
    %102 = arith.divf %100, %101 : vector<1x64xf32>
    %103 = vector.extract_strided_slice %73 {offsets = [0, 1], sizes = [1, 63], strides = [1, 1]} : vector<1x64xf32> to vector<1x63xf32>
    %104 = vector.extract_strided_slice %73 {offsets = [0, 0], sizes = [1, 1], strides = [1, 1]} : vector<1x64xf32> to vector<1x1xf32>
    %105 = tpu.concatenate %103, %104 in 1 : vector<1x63xf32>, vector<1x1xf32> -> vector<1x64xf32>
    %106 = vector.extract_strided_slice %73 {offsets = [0, 63], sizes = [1, 1], strides = [1, 1]} : vector<1x64xf32> to vector<1x1xf32>
    %107 = vector.extract_strided_slice %73 {offsets = [0, 0], sizes = [1, 63], strides = [1, 1]} : vector<1x64xf32> to vector<1x63xf32>
    %108 = tpu.concatenate %106, %107 in 1 : vector<1x1xf32>, vector<1x63xf32> -> vector<1x64xf32>
    %109 = arith.select %92, %105, %108 : vector<1x64xi1>, vector<1x64xf32>
    %110 = arith.addf %73, %109 : vector<1x64xf32>
    %cst_46 = arith.constant 5.120000e+02 : f32
    %111 = vector.broadcast %cst_46 : f32 to vector<1x64xf32>
    %112 = arith.divf %110, %111 : vector<1x64xf32>
    %113 = arith.mulf %102, %102 : vector<1x64xf32>
    %114 = arith.subf %112, %113 : vector<1x64xf32>
    %cst_47 = arith.constant 0.000000e+00 : f32
    %115 = vector.broadcast %cst_47 : f32 to vector<1x64xf32>
    %116 = arith.maximumf %114, %115 : vector<1x64xf32>
    %cst_48 = arith.constant 9.99999974E-6 : f32
    %117 = vector.broadcast %cst_48 : f32 to vector<1x64xf32>
    %118 = arith.addf %116, %117 : vector<1x64xf32>
    %119 = math.rsqrt %118 : vector<1x64xf32>
    %120 = vector.broadcast %102 : vector<1x64xf32> to vector<256x64xf32>
    %121 = arith.subf %68, %120 : vector<256x64xf32>
    %122 = vector.broadcast %119 : vector<1x64xf32> to vector<256x64xf32>
    %123 = arith.mulf %121, %122 : vector<256x64xf32>
    %c0_49 = arith.constant 0 : index
    %c0_50 = arith.constant 0 : index
    %124 = vector.load %arg3[%c0_49, %c0_50] : memref<1x64xf32, #tpu.memory_space<vmem>>, vector<1x64xf32>
    %125 = vector.broadcast %124 : vector<1x64xf32> to vector<256x64xf32>
    %126 = arith.mulf %123, %125 : vector<256x64xf32>
    %c0_51 = arith.constant 0 : index
    %c0_52 = arith.constant 0 : index
    %127 = vector.load %arg4[%c0_51, %c0_52] : memref<1x64xf32, #tpu.memory_space<vmem>>, vector<1x64xf32>
    %128 = vector.broadcast %127 : vector<1x64xf32> to vector<256x64xf32>
    %129 = arith.addf %126, %128 : vector<256x64xf32>
    %cst_53 = arith.constant 0.000000e+00 : f32
    %130 = vector.broadcast %cst_53 : f32 to vector<256x64xf32>
    %131 = arith.maximumf %129, %130 : vector<256x64xf32>
    %132 = vector.broadcast %29 : vector<256x1xf32> to vector<256x64xf32>
    %133 = arith.mulf %131, %132 : vector<256x64xf32>
    %134 = vector.extract_strided_slice %133 {offsets = [255, 0], sizes = [1, 64], strides = [1, 1]} : vector<256x64xf32> to vector<1x64xf32>
    %135 = vector.extract_strided_slice %133 {offsets = [0, 0], sizes = [255, 64], strides = [1, 1]} : vector<256x64xf32> to vector<255x64xf32>
    %136 = tpu.concatenate %134, %135 in 0 : vector<1x64xf32>, vector<255x64xf32> -> vector<256x64xf32>
    %137 = vector.broadcast %33 : vector<256x1xf32> to vector<256x64xf32>
    %138 = arith.mulf %131, %137 : vector<256x64xf32>
    %139 = vector.extract_strided_slice %138 {offsets = [1, 0], sizes = [255, 64], strides = [1, 1]} : vector<256x64xf32> to vector<255x64xf32>
    %140 = vector.extract_strided_slice %138 {offsets = [0, 0], sizes = [1, 64], strides = [1, 1]} : vector<256x64xf32> to vector<1x64xf32>
    %141 = tpu.concatenate %139, %140 in 0 : vector<255x64xf32>, vector<1x64xf32> -> vector<256x64xf32>
    %142 = arith.truncf %136 : vector<256x64xf32> to vector<256x64xbf16>
    %c24_54 = arith.constant 24 : index
    %c0_55 = arith.constant 0 : index
    %143 = vector.load %arg14[%c24_54, %c0_55] : memref<304x192xbf16, #tpu.memory_space<vmem>>, vector<256x64xbf16>
    tpu.vector_store %arg14[%c24_54, %c0_55], %142 {strides = array<i32>} : memref<304x192xbf16, #tpu.memory_space<vmem>>, vector<256x64xbf16>,
    %144 = arith.truncf %131 : vector<256x64xf32> to vector<256x64xbf16>
    %c24_56 = arith.constant 24 : index
    %c64_57 = arith.constant 64 : index
    %145 = vector.load %arg14[%c24_56, %c64_57] : memref<304x192xbf16, #tpu.memory_space<vmem>>, vector<256x64xbf16>
    tpu.vector_store %arg14[%c24_56, %c64_57], %144 {strides = array<i32>} : memref<304x192xbf16, #tpu.memory_space<vmem>>, vector<256x64xbf16>,
    %146 = arith.truncf %141 : vector<256x64xf32> to vector<256x64xbf16>
    %c24_58 = arith.constant 24 : index
    %c128_59 = arith.constant 128 : index
    %147 = vector.load %arg14[%c24_58, %c128_59] : memref<304x192xbf16, #tpu.memory_space<vmem>>, vector<256x64xbf16>
    tpu.vector_store %arg14[%c24_58, %c128_59], %146 {strides = array<i32>} : memref<304x192xbf16, #tpu.memory_space<vmem>>, vector<256x64xbf16>,
    %cst_60 = arith.constant 0.000000e+00 : f32
    %148 = vector.broadcast %cst_60 : f32 to vector<256x32xf32>
    %c8_61 = arith.constant 8 : index
    %c0_62 = arith.constant 0 : index
    %149 = vector.load %arg14[%c8_61, %c0_62] : memref<304x192xbf16, #tpu.memory_space<vmem>>, vector<256x192xbf16>
    %c0_63 = arith.constant 0 : index
    %c0_64 = arith.constant 0 : index
    %c0_65 = arith.constant 0 : index
    %150 = vector.load %arg5[%c0_63, %c0_64, %c0_65] : memref<3x192x32xbf16, #tpu.memory_space<vmem>>, vector<1x192x32xbf16>
    %151 = vector.shape_cast %150 : vector<1x192x32xbf16> to vector<192x32xbf16>
    %cst_66 = arith.constant dense<0.000000e+00> : vector<256x32xf32>
    %152 = tpu.matmul %149, %151, %cst_66 {dimension_numbers = #tpu.dot_dimension_numbers<[1], [0], [0], [1], [0, 0, 1, 1], [], []>} : vector<256x192xbf16>, vector<192x32xbf16>, vector<256x32xf32> -> vector<256x32xf32>
    %153 = arith.addf %148, %152 : vector<256x32xf32>
    %c24_67 = arith.constant 24 : index
    %c0_68 = arith.constant 0 : index
    %154 = vector.load %arg14[%c24_67, %c0_68] : memref<304x192xbf16, #tpu.memory_space<vmem>>, vector<256x192xbf16>
    %c1_69 = arith.constant 1 : index
    %c0_70 = arith.constant 0 : index
    %c0_71 = arith.constant 0 : index
    %155 = vector.load %arg5[%c1_69, %c0_70, %c0_71] : memref<3x192x32xbf16, #tpu.memory_space<vmem>>, vector<1x192x32xbf16>
    %156 = vector.shape_cast %155 : vector<1x192x32xbf16> to vector<192x32xbf16>
    %cst_72 = arith.constant dense<0.000000e+00> : vector<256x32xf32>
    %157 = tpu.matmul %154, %156, %cst_72 {dimension_numbers = #tpu.dot_dimension_numbers<[1], [0], [0], [1], [0, 0, 1, 1], [], []>} : vector<256x192xbf16>, vector<192x32xbf16>, vector<256x32xf32> -> vector<256x32xf32>
    %158 = arith.addf %153, %157 : vector<256x32xf32>
    %c40_73 = arith.constant 40 : index
    %c0_74 = arith.constant 0 : index
    %159 = vector.load %arg14[%c40_73, %c0_74] : memref<304x192xbf16, #tpu.memory_space<vmem>>, vector<256x192xbf16>
    %c2_75 = arith.constant 2 : index
    %c0_76 = arith.constant 0 : index
    %c0_77 = arith.constant 0 : index
    %160 = vector.load %arg5[%c2_75, %c0_76, %c0_77] : memref<3x192x32xbf16, #tpu.memory_space<vmem>>, vector<1x192x32xbf16>
    %161 = vector.shape_cast %160 : vector<1x192x32xbf16> to vector<192x32xbf16>
    %cst_78 = arith.constant dense<0.000000e+00> : vector<256x32xf32>
    %162 = tpu.matmul %159, %161, %cst_78 {dimension_numbers = #tpu.dot_dimension_numbers<[1], [0], [0], [1], [0, 0, 1, 1], [], []>} : vector<256x192xbf16>, vector<192x32xbf16>, vector<256x32xf32> -> vector<256x32xf32>
    %163 = arith.addf %158, %162 : vector<256x32xf32>
    %cst_79 = arith.constant dense<0.000000e+00> : vector<32xf32>
    %164 = vector.multi_reduction <add>, %163, %cst_79 [0] : vector<256x32xf32> to vector<32xf32>
    %165 = vector.shape_cast %164 : vector<32xf32> to vector<1x32xf32>
    %166 = arith.mulf %163, %163 : vector<256x32xf32>
    %cst_80 = arith.constant dense<0.000000e+00> : vector<32xf32>
    %167 = vector.multi_reduction <add>, %166, %cst_80 [0] : vector<256x32xf32> to vector<32xf32>
    %168 = vector.shape_cast %167 : vector<32xf32> to vector<1x32xf32>
    %cst_81 = arith.constant 2.560000e+02 : f32
    %169 = vector.broadcast %cst_81 : f32 to vector<1x32xf32>
    %170 = arith.divf %165, %169 : vector<1x32xf32>
    %cst_82 = arith.constant 2.560000e+02 : f32
    %171 = vector.broadcast %cst_82 : f32 to vector<1x32xf32>
    %172 = arith.divf %168, %171 : vector<1x32xf32>
    %173 = arith.mulf %170, %170 : vector<1x32xf32>
    %174 = arith.subf %172, %173 : vector<1x32xf32>
    %cst_83 = arith.constant 0.000000e+00 : f32
    %175 = vector.broadcast %cst_83 : f32 to vector<1x32xf32>
    %176 = arith.maximumf %174, %175 : vector<1x32xf32>
    %cst_84 = arith.constant 9.99999974E-6 : f32
    %177 = vector.broadcast %cst_84 : f32 to vector<1x32xf32>
    %178 = arith.addf %176, %177 : vector<1x32xf32>
    %179 = math.rsqrt %178 : vector<1x32xf32>
    %180 = vector.broadcast %170 : vector<1x32xf32> to vector<256x32xf32>
    %181 = arith.subf %163, %180 : vector<256x32xf32>
    %182 = vector.broadcast %179 : vector<1x32xf32> to vector<256x32xf32>
    %183 = arith.mulf %181, %182 : vector<256x32xf32>
    %c0_85 = arith.constant 0 : index
    %c0_86 = arith.constant 0 : index
    %184 = vector.load %arg6[%c0_85, %c0_86] : memref<1x32xf32, #tpu.memory_space<vmem>>, vector<1x32xf32>
    %185 = vector.broadcast %184 : vector<1x32xf32> to vector<256x32xf32>
    %186 = arith.mulf %183, %185 : vector<256x32xf32>
    %c0_87 = arith.constant 0 : index
    %c0_88 = arith.constant 0 : index
    %187 = vector.load %arg7[%c0_87, %c0_88] : memref<1x32xf32, #tpu.memory_space<vmem>>, vector<1x32xf32>
    %188 = vector.broadcast %187 : vector<1x32xf32> to vector<256x32xf32>
    %189 = arith.addf %186, %188 : vector<256x32xf32>
    %cst_89 = arith.constant 0.000000e+00 : f32
    %190 = vector.broadcast %cst_89 : f32 to vector<256x32xf32>
    %191 = arith.maximumf %189, %190 : vector<256x32xf32>
    %192 = vector.broadcast %29 : vector<256x1xf32> to vector<256x32xf32>
    %193 = arith.mulf %191, %192 : vector<256x32xf32>
    %194 = vector.extract_strided_slice %193 {offsets = [255, 0], sizes = [1, 32], strides = [1, 1]} : vector<256x32xf32> to vector<1x32xf32>
    %195 = vector.extract_strided_slice %193 {offsets = [0, 0], sizes = [255, 32], strides = [1, 1]} : vector<256x32xf32> to vector<255x32xf32>
    %196 = tpu.concatenate %194, %195 in 0 : vector<1x32xf32>, vector<255x32xf32> -> vector<256x32xf32>
    %197 = vector.broadcast %33 : vector<256x1xf32> to vector<256x32xf32>
    %198 = arith.mulf %191, %197 : vector<256x32xf32>
    %199 = vector.extract_strided_slice %198 {offsets = [1, 0], sizes = [255, 32], strides = [1, 1]} : vector<256x32xf32> to vector<255x32xf32>
    %200 = vector.extract_strided_slice %198 {offsets = [0, 0], sizes = [1, 32], strides = [1, 1]} : vector<256x32xf32> to vector<1x32xf32>
    %201 = tpu.concatenate %199, %200 in 0 : vector<255x32xf32>, vector<1x32xf32> -> vector<256x32xf32>
    %202 = arith.truncf %196 : vector<256x32xf32> to vector<256x32xbf16>
    %c24_90 = arith.constant 24 : index
    %c0_91 = arith.constant 0 : index
    %203 = vector.load %arg15[%c24_90, %c0_91] : memref<304x96xbf16, #tpu.memory_space<vmem>>, vector<256x32xbf16>
    tpu.vector_store %arg15[%c24_90, %c0_91], %202 {strides = array<i32>} : memref<304x96xbf16, #tpu.memory_space<vmem>>, vector<256x32xbf16>,
    %204 = arith.truncf %191 : vector<256x32xf32> to vector<256x32xbf16>
    %c24_92 = arith.constant 24 : index
    %c32 = arith.constant 32 : index
    %205 = vector.load %arg15[%c24_92, %c32] : memref<304x96xbf16, #tpu.memory_space<vmem>>, vector<256x32xbf16>
    tpu.vector_store %arg15[%c24_92, %c32], %204 {strides = array<i32>} : memref<304x96xbf16, #tpu.memory_space<vmem>>, vector<256x32xbf16>,
    %206 = arith.truncf %201 : vector<256x32xf32> to vector<256x32xbf16>
    %c24_93 = arith.constant 24 : index
    %c64_94 = arith.constant 64 : index
    %207 = vector.load %arg15[%c24_93, %c64_94] : memref<304x96xbf16, #tpu.memory_space<vmem>>, vector<256x32xbf16>
    tpu.vector_store %arg15[%c24_93, %c64_94], %206 {strides = array<i32>} : memref<304x96xbf16, #tpu.memory_space<vmem>>, vector<256x32xbf16>,
    %cst_95 = arith.constant 0.000000e+00 : f32
    %208 = vector.broadcast %cst_95 : f32 to vector<256x32xf32>
    %c8_96 = arith.constant 8 : index
    %c0_97 = arith.constant 0 : index
    %209 = vector.load %arg15[%c8_96, %c0_97] : memref<304x96xbf16, #tpu.memory_space<vmem>>, vector<256x96xbf16>
    %c0_98 = arith.constant 0 : index
    %c0_99 = arith.constant 0 : index
    %c0_100 = arith.constant 0 : index
    %210 = vector.load %arg8[%c0_98, %c0_99, %c0_100] : memref<3x96x32xbf16, #tpu.memory_space<vmem>>, vector<1x96x32xbf16>
    %211 = vector.shape_cast %210 : vector<1x96x32xbf16> to vector<96x32xbf16>
    %cst_101 = arith.constant dense<0.000000e+00> : vector<256x32xf32>
    %212 = tpu.matmul %209, %211, %cst_101 {dimension_numbers = #tpu.dot_dimension_numbers<[1], [0], [0], [1], [0, 0, 1, 1], [], []>} : vector<256x96xbf16>, vector<96x32xbf16>, vector<256x32xf32> -> vector<256x32xf32>
    %213 = arith.addf %208, %212 : vector<256x32xf32>
    %c24_102 = arith.constant 24 : index
    %c0_103 = arith.constant 0 : index
    %214 = vector.load %arg15[%c24_102, %c0_103] : memref<304x96xbf16, #tpu.memory_space<vmem>>, vector<256x96xbf16>
    %c1_104 = arith.constant 1 : index
    %c0_105 = arith.constant 0 : index
    %c0_106 = arith.constant 0 : index
    %215 = vector.load %arg8[%c1_104, %c0_105, %c0_106] : memref<3x96x32xbf16, #tpu.memory_space<vmem>>, vector<1x96x32xbf16>
    %216 = vector.shape_cast %215 : vector<1x96x32xbf16> to vector<96x32xbf16>
    %cst_107 = arith.constant dense<0.000000e+00> : vector<256x32xf32>
    %217 = tpu.matmul %214, %216, %cst_107 {dimension_numbers = #tpu.dot_dimension_numbers<[1], [0], [0], [1], [0, 0, 1, 1], [], []>} : vector<256x96xbf16>, vector<96x32xbf16>, vector<256x32xf32> -> vector<256x32xf32>
    %218 = arith.addf %213, %217 : vector<256x32xf32>
    %c40_108 = arith.constant 40 : index
    %c0_109 = arith.constant 0 : index
    %219 = vector.load %arg15[%c40_108, %c0_109] : memref<304x96xbf16, #tpu.memory_space<vmem>>, vector<256x96xbf16>
    %c2_110 = arith.constant 2 : index
    %c0_111 = arith.constant 0 : index
    %c0_112 = arith.constant 0 : index
    %220 = vector.load %arg8[%c2_110, %c0_111, %c0_112] : memref<3x96x32xbf16, #tpu.memory_space<vmem>>, vector<1x96x32xbf16>
    %221 = vector.shape_cast %220 : vector<1x96x32xbf16> to vector<96x32xbf16>
    %cst_113 = arith.constant dense<0.000000e+00> : vector<256x32xf32>
    %222 = tpu.matmul %219, %221, %cst_113 {dimension_numbers = #tpu.dot_dimension_numbers<[1], [0], [0], [1], [0, 0, 1, 1], [], []>} : vector<256x96xbf16>, vector<96x32xbf16>, vector<256x32xf32> -> vector<256x32xf32>
    %223 = arith.addf %218, %222 : vector<256x32xf32>
    %cst_114 = arith.constant dense<0.000000e+00> : vector<32xf32>
    %224 = vector.multi_reduction <add>, %223, %cst_114 [0] : vector<256x32xf32> to vector<32xf32>
    %225 = vector.shape_cast %224 : vector<32xf32> to vector<1x32xf32>
    %226 = arith.mulf %223, %223 : vector<256x32xf32>
    %cst_115 = arith.constant dense<0.000000e+00> : vector<32xf32>
    %227 = vector.multi_reduction <add>, %226, %cst_115 [0] : vector<256x32xf32> to vector<32xf32>
    %228 = vector.shape_cast %227 : vector<32xf32> to vector<1x32xf32>
    %cst_116 = arith.constant 2.560000e+02 : f32
    %229 = vector.broadcast %cst_116 : f32 to vector<1x32xf32>
    %230 = arith.divf %225, %229 : vector<1x32xf32>
    %cst_117 = arith.constant 2.560000e+02 : f32
    %231 = vector.broadcast %cst_117 : f32 to vector<1x32xf32>
    %232 = arith.divf %228, %231 : vector<1x32xf32>
    %233 = arith.mulf %230, %230 : vector<1x32xf32>
    %234 = arith.subf %232, %233 : vector<1x32xf32>
    %cst_118 = arith.constant 0.000000e+00 : f32
    %235 = vector.broadcast %cst_118 : f32 to vector<1x32xf32>
    %236 = arith.maximumf %234, %235 : vector<1x32xf32>
    %cst_119 = arith.constant 9.99999974E-6 : f32
    %237 = vector.broadcast %cst_119 : f32 to vector<1x32xf32>
    %238 = arith.addf %236, %237 : vector<1x32xf32>
    %239 = math.rsqrt %238 : vector<1x32xf32>
    %240 = vector.broadcast %230 : vector<1x32xf32> to vector<256x32xf32>
    %241 = arith.subf %223, %240 : vector<256x32xf32>
    %242 = vector.broadcast %239 : vector<1x32xf32> to vector<256x32xf32>
    %243 = arith.mulf %241, %242 : vector<256x32xf32>
    %c0_120 = arith.constant 0 : index
    %c0_121 = arith.constant 0 : index
    %244 = vector.load %arg9[%c0_120, %c0_121] : memref<1x32xf32, #tpu.memory_space<vmem>>, vector<1x32xf32>
    %245 = vector.broadcast %244 : vector<1x32xf32> to vector<256x32xf32>
    %246 = arith.mulf %243, %245 : vector<256x32xf32>
    %c0_122 = arith.constant 0 : index
    %c0_123 = arith.constant 0 : index
    %247 = vector.load %arg10[%c0_122, %c0_123] : memref<1x32xf32, #tpu.memory_space<vmem>>, vector<1x32xf32>
    %248 = vector.broadcast %247 : vector<1x32xf32> to vector<256x32xf32>
    %249 = arith.addf %246, %248 : vector<256x32xf32>
    %cst_124 = arith.constant 0.000000e+00 : f32
    %250 = vector.broadcast %cst_124 : f32 to vector<256x32xf32>
    %251 = arith.maximumf %249, %250 : vector<256x32xf32>
    %252 = arith.truncf %251 : vector<256x32xf32> to vector<256x32xbf16>
    %c0_125 = arith.constant 0 : index
    %c0_126 = arith.constant 0 : index
    %253 = vector.load %arg11[%c0_125, %c0_126] : memref<32x128xbf16, #tpu.memory_space<vmem>>, vector<32x128xbf16>
    %cst_127 = arith.constant dense<0.000000e+00> : vector<256x128xf32>
    %254 = tpu.matmul %252, %253, %cst_127 {dimension_numbers = #tpu.dot_dimension_numbers<[1], [0], [0], [1], [0, 0, 1, 1], [], []>} : vector<256x32xbf16>, vector<32x128xbf16>, vector<256x128xf32> -> vector<256x128xf32>
    %255 = arith.truncf %254 : vector<256x128xf32> to vector<256x128xbf16>
    %c0_128 = arith.constant 0 : index
    %c0_129 = arith.constant 0 : index
    %c0_130 = arith.constant 0 : index
    %256 = vector.load %arg12[%c0_128, %c0_129, %c0_130] : memref<1x256x128xbf16, #tpu.memory_space<vmem>>, vector<1x256x128xbf16>
    %257 = vector.shape_cast %256 : vector<1x256x128xbf16> to vector<256x128xbf16>
    %258 = vector.shape_cast %255 : vector<256x128xbf16> to vector<1x256x128xbf16>
    tpu.vector_store %arg12[%c0_128, %c0_129, %c0_130], %258 {strides = array<i32>} : memref<1x256x128xbf16, #tpu.memory_space<vmem>>, vector<1x256x128xbf16>,
    return
  }
  func.func @transform_0(%arg0: i32) -> (i32, i32, i32) {
    %c0_i32 = arith.constant 0 : i32
    %c0_i32_0 = arith.constant 0 : i32
    %c0_i32_1 = arith.constant 0 : i32
    return %arg0, %c0_i32, %c0_i32_0 : i32, i32, i32
  }
  func.func @transform_1(%arg0: i32) -> (i32, i32, i32) {
    %c0_i32 = arith.constant 0 : i32
    %c0_i32_0 = arith.constant 0 : i32
    %c0_i32_1 = arith.constant 0 : i32
    %c0_i32_2 = arith.constant 0 : i32
    return %c0_i32, %c0_i32_0, %c0_i32_1 : i32, i32, i32
  }
  func.func @transform_2(%arg0: i32) -> (i32, i32) {
    %c0_i32 = arith.constant 0 : i32
    %c0_i32_0 = arith.constant 0 : i32
    %c0_i32_1 = arith.constant 0 : i32
    return %c0_i32, %c0_i32_0 : i32, i32
  }
  func.func @transform_3(%arg0: i32) -> (i32, i32) {
    %c0_i32 = arith.constant 0 : i32
    %c0_i32_0 = arith.constant 0 : i32
    %c0_i32_1 = arith.constant 0 : i32
    return %c0_i32, %c0_i32_0 : i32, i32
  }
  func.func @transform_4(%arg0: i32) -> (i32, i32, i32) {
    %c0_i32 = arith.constant 0 : i32
    %c0_i32_0 = arith.constant 0 : i32
    %c0_i32_1 = arith.constant 0 : i32
    %c0_i32_2 = arith.constant 0 : i32
    return %c0_i32, %c0_i32_0, %c0_i32_1 : i32, i32, i32
  }
  func.func @transform_5(%arg0: i32) -> (i32, i32) {
    %c0_i32 = arith.constant 0 : i32
    %c0_i32_0 = arith.constant 0 : i32
    %c0_i32_1 = arith.constant 0 : i32
    return %c0_i32, %c0_i32_0 : i32, i32
  }
  func.func @transform_6(%arg0: i32) -> (i32, i32) {
    %c0_i32 = arith.constant 0 : i32
    %c0_i32_0 = arith.constant 0 : i32
    %c0_i32_1 = arith.constant 0 : i32
    return %c0_i32, %c0_i32_0 : i32, i32
  }
  func.func @transform_7(%arg0: i32) -> (i32, i32, i32) {
    %c0_i32 = arith.constant 0 : i32
    %c0_i32_0 = arith.constant 0 : i32
    %c0_i32_1 = arith.constant 0 : i32
    %c0_i32_2 = arith.constant 0 : i32
    return %c0_i32, %c0_i32_0, %c0_i32_1 : i32, i32, i32
  }
  func.func @transform_8(%arg0: i32) -> (i32, i32) {
    %c0_i32 = arith.constant 0 : i32
    %c0_i32_0 = arith.constant 0 : i32
    %c0_i32_1 = arith.constant 0 : i32
    return %c0_i32, %c0_i32_0 : i32, i32
  }
  func.func @transform_9(%arg0: i32) -> (i32, i32) {
    %c0_i32 = arith.constant 0 : i32
    %c0_i32_0 = arith.constant 0 : i32
    %c0_i32_1 = arith.constant 0 : i32
    return %c0_i32, %c0_i32_0 : i32, i32
  }
  func.func @transform_10(%arg0: i32) -> (i32, i32) {
    %c0_i32 = arith.constant 0 : i32
    %c0_i32_0 = arith.constant 0 : i32
    %c0_i32_1 = arith.constant 0 : i32
    return %c0_i32, %c0_i32_0 : i32, i32
  }
  func.func @transform_11(%arg0: i32) -> (i32, i32, i32) {
    %c0_i32 = arith.constant 0 : i32
    %c0_i32_0 = arith.constant 0 : i32
    %c0_i32_1 = arith.constant 0 : i32
    return %arg0, %c0_i32, %c0_i32_0 : i32, i32, i32
  }
}

</mosaic_0001>

<llo_original>
// kernel: tpu_custom_call.1
$region0: #{tpu_custom_call.1}
  #allocation0 [shape = 'u32[]', space=smem, size = 0x4, offset = 0x4, fixed_abs, tag = 'smem constant byte address 0x4 - core index']
  #allocation1 [shape = 'u32[72,128]{1,0:T(1,128)}', space=vmem, size = 0x9000, scoped, tag = 'internal scratch']
  #allocation2 [shape = 'bf16[304,192]{1,0:T(8,128)(2,1)}', space=vmem, size = 0x26000, scoped, tag = 'scratch operand']
  #allocation3 [shape = 'bf16[304,192]{1,0:T(8,128)(2,1)}', space=vmem, size = 0x26000, scoped, tag = 'scratch operand']
  #allocation4 [shape = 'bf16[304,96]{1,0:T(8,128)(2,1)}', space=vmem, size = 0x13000, scoped, tag = 'scratch operand']
  %s0 = inlined_call_operand.vmem [shape: bf16[2,256,64], index: 0, kind: input, shape index: {}]
  %s1 = inlined_call_operand.vmem [shape: bf16[3,192,64], index: 1, kind: input, shape index: {}]
  %s2 = inlined_call_operand.vmem [shape: f32[1,64], index: 2, kind: input, shape index: {}]
  %s3 = inlined_call_operand.vmem [shape: f32[1,64], index: 3, kind: input, shape index: {}]
  %s4 = inlined_call_operand.vmem [shape: bf16[3,192,32], index: 4, kind: input, shape index: {}]
  %s5 = inlined_call_operand.vmem [shape: f32[1,32], index: 5, kind: input, shape index: {}]
  %s6 = inlined_call_operand.vmem [shape: f32[1,32], index: 6, kind: input, shape index: {}]
  %s7 = inlined_call_operand.vmem [shape: bf16[3,96,32], index: 7, kind: input, shape index: {}]
  %s8 = inlined_call_operand.vmem [shape: f32[1,32], index: 8, kind: input, shape index: {}]
  %s9 = inlined_call_operand.vmem [shape: f32[1,32], index: 9, kind: input, shape index: {}]
  %s10 = inlined_call_operand.vmem [shape: bf16[32,128], index: 10, kind: input, shape index: {}]
  %s11 = inlined_call_operand.hbm [shape: bf16[2,256,128], index: 11, kind: output, shape index: {}]
  %s12 = sld [smem:[#allocation0]]
  $region77: #{tpu_custom_call.1} parent=0
    _
  %s14 = ssub.s32 1, %s12
  %s15 = scalar_select 0, %s14, %s12
  $region1: #{tpu_custom_call.1} parent=0
    #allocation5 [shape = 'u8[131072]{0}', space=vmem, size = 0x20000, scoped, tag = 'output window, operand 0']
    #allocation6 [shape = 's32[2]{0}', space=sflag, size = 0x8, scoped, tag = 'scoped memory for tpu_custom_call.1']
    %16 = vsyncpa [#allocation6], 0
    %s17 = scalar_lea.sflag [#allocation6], 1
    %18 = vsyncpa %s17, 0
    loop: start=0, step=1, limit=4
    $region2: #{tpu_custom_call.1} parent=1 // loop_pre_header
      _
    $region3: #{tpu_custom_call.1} parent=1 // loop_header
      %s20 = sphi 0, %s24
      %p21 = scmp.ge.s32.totalorder %s20, 4
      %s30 = sphi 0, %s32
      %s33 = sphi 0, %s30
      %s34 = sphi 0, %s33
      %s50 = sphi 0, %s34
      %s54 = sphi 0, %s54
      %s56 = sphi 0, %s54
      %s57 = sphi 0, %s56
      %s71 = sphi 0, %s57
      %s75 = sphi 0, %s75
      %s77 = sphi 0, %s75
      %s78 = sphi 0, %s77
      %s92 = sphi 0, %s78
      %s96 = sphi 0, %s96
      %s98 = sphi 0, %s96
      %s99 = sphi 0, %s98
      %s113 = sphi 0, %s99
      %s117 = sphi 0, %s117
      %s119 = sphi 0, %s117
      %s120 = sphi 0, %s119
      %s134 = sphi 0, %s120
      %s138 = sphi 0, %s138
      %s140 = sphi 0, %s138
      %s141 = sphi 0, %s140
      %s155 = sphi 0, %s141
      %s159 = sphi 0, %s159
      %s161 = sphi 0, %s159
      %s162 = sphi 0, %s161
      %s176 = sphi 0, %s162
      %s180 = sphi 0, %s180
      %s182 = sphi 0, %s180
      %s183 = sphi 0, %s182
      %s197 = sphi 0, %s183
      %s201 = sphi 0, %s201
      %s203 = sphi 0, %s201
      %s204 = sphi 0, %s203
      %s218 = sphi 0, %s204
      %s222 = sphi 0, %s222
      %s224 = sphi 0, %s222
      %s225 = sphi 0, %s224
      %s239 = sphi 0, %s225
      %s243 = sphi 0, %s243
      %s245 = sphi 0, %s243
      %s246 = sphi 0, %s245
      %s260 = sphi 0, %s246
      %s266 = sphi 0, %s268
      %s269 = sphi 0, %s266
      %s270 = sphi 0, %s269
      %s286 = sphi 0, %s270
    $region4: #{tpu_custom_call.1} parent=1 // loop_header_branch
      %23 = sbr.rel (%p21) target = $region8
    $region5: #{tpu_custom_call.1} parent=1 // loop_body
      %s25 = ssub.s32 %s20, 1
      %s26 = ssub.s32 %s20, 2
      %s27 = sadd.s32 %s20, 1
      %s28 = ssub.s32 %s20, %s27
      %p29 = scmp.eq.s32.totalorder %s28, 0
      %s31 = sadd.s32 %s30, 1
      %s32 = scalar_select %p29, %s30, %s31
      %p35 = pneg %p29
      %p36 = scmp.eq.s32.totalorder %s20, 1
      %p37 = por %p35, %p36
      %p38 = scmp.ne.s32.totalorder %s30, %s33
      %p39 = scmp.eq.s32.totalorder %s20, 0
      %p40 = por %p38, %p39
      %p41 = scmp.ne.s32.totalorder %s30, %s33
      %p42 = scmp.eq.s32.totalorder %s25, 1
      %p43 = por %p41, %p42
      %p44 = scmp.ne.s32.totalorder %s33, %s34
      %p45 = scmp.eq.s32.totalorder %s25, 0
      %p46 = por %p44, %p45
      %p47 = scmp.ne.s32.totalorder %s33, %s34
      %p48 = scmp.eq.s32.totalorder %s26, 1
      %p49 = por %p47, %p48
      %p51 = scmp.ne.s32.totalorder %s34, %s50
      %p52 = scmp.eq.s32.totalorder %s26, 0
      %p53 = por %p51, %p52
      %s55 = sadd.s32 %s54, 1
      %p58 = scmp.eq.s32.totalorder %s20, 1
      %p59 = scmp.ne.s32.totalorder %s54, %s56
      %p60 = scmp.eq.s32.totalorder %s20, 0
      %p61 = por %p59, %p60
      %p62 = scmp.ne.s32.totalorder %s54, %s56
      %p63 = scmp.eq.s32.totalorder %s25, 1
      %p64 = por %p62, %p63
      %p65 = scmp.ne.s32.totalorder %s56, %s57
      %p66 = scmp.eq.s32.totalorder %s25, 0
      %p67 = por %p65, %p66
      %p68 = scmp.ne.s32.totalorder %s56, %s57
      %p69 = scmp.eq.s32.totalorder %s26, 1
      %p70 = por %p68, %p69
      %p72 = scmp.ne.s32.totalorder %s57, %s71
      %p73 = scmp.eq.s32.totalorder %s26, 0
      %p74 = por %p72, %p73
      %s76 = sadd.s32 %s75, 1
      %p79 = scmp.eq.s32.totalorder %s20, 1
      %p80 = scmp.ne.s32.totalorder %s75, %s77
      %p81 = scmp.eq.s32.totalorder %s20, 0
      %p82 = por %p80, %p81
      %p83 = scmp.ne.s32.totalorder %s75, %s77
      %p84 = scmp.eq.s32.totalorder %s25, 1
      %p85 = por %p83, %p84
      %p86 = scmp.ne.s32.totalorder %s77, %s78
      %p87 = scmp.eq.s32.totalorder %s25, 0
      %p88 = por %p86, %p87
      %p89 = scmp.ne.s32.totalorder %s77, %s78
      %p90 = scmp.eq.s32.totalorder %s26, 1
      %p91 = por %p89, %p90
      %p93 = scmp.ne.s32.totalorder %s78, %s92
      %p94 = scmp.eq.s32.totalorder %s26, 0
      %p95 = por %p93, %p94
      %s97 = sadd.s32 %s96, 1
      %p100 = scmp.eq.s32.totalorder %s20, 1
      %p101 = scmp.ne.s32.totalorder %s96, %s98
      %p102 = scmp.eq.s32.totalorder %s20, 0
      %p103 = por %p101, %p102
      %p104 = scmp.ne.s32.totalorder %s96, %s98
      %p105 = scmp.eq.s32.totalorder %s25, 1
      %p106 = por %p104, %p105
      %p107 = scmp.ne.s32.totalorder %s98, %s99
      %p108 = scmp.eq.s32.totalorder %s25, 0
      %p109 = por %p107, %p108
      %p110 = scmp.ne.s32.totalorder %s98, %s99
      %p111 = scmp.eq.s32.totalorder %s26, 1
      %p112 = por %p110, %p111
      %p114 = scmp.ne.s32.totalorder %s99, %s113
      %p115 = scmp.eq.s32.totalorder %s26, 0
      %p116 = por %p114, %p115
      %s118 = sadd.s32 %s117, 1
      %p121 = scmp.eq.s32.totalorder %s20, 1
      %p122 = scmp.ne.s32.totalorder %s117, %s119
      %p123 = scmp.eq.s32.totalorder %s20, 0
      %p124 = por %p122, %p123
      %p125 = scmp.ne.s32.totalorder %s117, %s119
      %p126 = scmp.eq.s32.totalorder %s25, 1
      %p127 = por %p125, %p126
      %p128 = scmp.ne.s32.totalorder %s119, %s120
      %p129 = scmp.eq.s32.totalorder %s25, 0
      %p130 = por %p128, %p129
      %p131 = scmp.ne.s32.totalorder %s119, %s120
      %p132 = scmp.eq.s32.totalorder %s26, 1
      %p133 = por %p131, %p132
      %p135 = scmp.ne.s32.totalorder %s120, %s134
      %p136 = scmp.eq.s32.totalorder %s26, 0
      %p137 = por %p135, %p136
      %s139 = sadd.s32 %s138, 1
      %p142 = scmp.eq.s32.totalorder %s20, 1
      %p143 = scmp.ne.s32.totalorder %s138, %s140
      %p144 = scmp.eq.s32.totalorder %s20, 0
      %p145 = por %p143, %p144
      %p146 = scmp.ne.s32.totalorder %s138, %s140
      %p147 = scmp.eq.s32.totalorder %s25, 1
      %p148 = por %p146, %p147
      %p149 = scmp.ne.s32.totalorder %s140, %s141
      %p150 = scmp.eq.s32.totalorder %s25, 0
      %p151 = por %p149, %p150
      %p152 = scmp.ne.s32.totalorder %s140, %s141
      %p153 = scmp.eq.s32.totalorder %s26, 1
      %p154 = por %p152, %p153
      %p156 = scmp.ne.s32.totalorder %s141, %s155
      %p157 = scmp.eq.s32.totalorder %s26, 0
      %p158 = por %p156, %p157
      %s160 = sadd.s32 %s159, 1
      %p163 = scmp.eq.s32.totalorder %s20, 1
      %p164 = scmp.ne.s32.totalorder %s159, %s161
      %p165 = scmp.eq.s32.totalorder %s20, 0
      %p166 = por %p164, %p165
      %p167 = scmp.ne.s32.totalorder %s159, %s161
      %p168 = scmp.eq.s32.totalorder %s25, 1
      %p169 = por %p167, %p168
      %p170 = scmp.ne.s32.totalorder %s161, %s162
      %p171 = scmp.eq.s32.totalorder %s25, 0
      %p172 = por %p170, %p171
      %p173 = scmp.ne.s32.totalorder %s161, %s162
      %p174 = scmp.eq.s32.totalorder %s26, 1
      %p175 = por %p173, %p174
      %p177 = scmp.ne.s32.totalorder %s162, %s176
      %p178 = scmp.eq.s32.totalorder %s26, 0
      %p179 = por %p177, %p178
      %s181 = sadd.s32 %s180, 1
      %p184 = scmp.eq.s32.totalorder %s20, 1
      %p185 = scmp.ne.s32.totalorder %s180, %s182
      %p186 = scmp.eq.s32.totalorder %s20, 0
      %p187 = por %p185, %p186
      %p188 = scmp.ne.s32.totalorder %s180, %s182
      %p189 = scmp.eq.s32.totalorder %s25, 1
      %p190 = por %p188, %p189
      %p191 = scmp.ne.s32.totalorder %s182, %s183
      %p192 = scmp.eq.s32.totalorder %s25, 0
      %p193 = por %p191, %p192
      %p194 = scmp.ne.s32.totalorder %s182, %s183
      %p195 = scmp.eq.s32.totalorder %s26, 1
      %p196 = por %p194, %p195
      %p198 = scmp.ne.s32.totalorder %s183, %s197
      %p199 = scmp.eq.s32.totalorder %s26, 0
      %p200 = por %p198, %p199
      %s202 = sadd.s32 %s201, 1
      %p205 = scmp.eq.s32.totalorder %s20, 1
      %p206 = scmp.ne.s32.totalorder %s201, %s203
      %p207 = scmp.eq.s32.totalorder %s20, 0
      %p208 = por %p206, %p207
      %p209 = scmp.ne.s32.totalorder %s201, %s203
      %p210 = scmp.eq.s32.totalorder %s25, 1
      %p211 = por %p209, %p210
      %p212 = scmp.ne.s32.totalorder %s203, %s204
      %p213 = scmp.eq.s32.totalorder %s25, 0
      %p214 = por %p212, %p213
      %p215 = scmp.ne.s32.totalorder %s203, %s204
      %p216 = scmp.eq.s32.totalorder %s26, 1
      %p217 = por %p215, %p216
      %p219 = scmp.ne.s32.totalorder %s204, %s218
      %p220 = scmp.eq.s32.totalorder %s26, 0
      %p221 = por %p219, %p220
      %s223 = sadd.s32 %s222, 1
      %p226 = scmp.eq.s32.totalorder %s20, 1
      %p227 = scmp.ne.s32.totalorder %s222, %s224
      %p228 = scmp.eq.s32.totalorder %s20, 0
      %p229 = por %p227, %p228
      %p230 = scmp.ne.s32.totalorder %s222, %s224
      %p231 = scmp.eq.s32.totalorder %s25, 1
      %p232 = por %p230, %p231
      %p233 = scmp.ne.s32.totalorder %s224, %s225
      %p234 = scmp.eq.s32.totalorder %s25, 0
      %p235 = por %p233, %p234
      %p236 = scmp.ne.s32.totalorder %s224, %s225
      %p237 = scmp.eq.s32.totalorder %s26, 1
      %p238 = por %p236, %p237
      %p240 = scmp.ne.s32.totalorder %s225, %s239
      %p241 = scmp.eq.s32.totalorder %s26, 0
      %p242 = por %p240, %p241
      %s244 = sadd.s32 %s243, 1
      %p247 = scmp.eq.s32.totalorder %s20, 1
      %p248 = scmp.ne.s32.totalorder %s243, %s245
      %p249 = scmp.eq.s32.totalorder %s20, 0
      %p250 = por %p248, %p249
      %p251 = scmp.ne.s32.totalorder %s243, %s245
      %p252 = scmp.eq.s32.totalorder %s25, 1
      %p253 = por %p251, %p252
      %p254 = scmp.ne.s32.totalorder %s245, %s246
      %p255 = scmp.eq.s32.totalorder %s25, 0
      %p256 = por %p254, %p255
      %p257 = scmp.ne.s32.totalorder %s245, %s246
      %p258 = scmp.eq.s32.totalorder %s26, 1
      %p259 = por %p257, %p258
      %p261 = scmp.ne.s32.totalorder %s246, %s260
      %p262 = scmp.eq.s32.totalorder %s26, 0
      %p263 = por %p261, %p262
      %s264 = ssub.s32 %s20, %s27
      %p265 = scmp.eq.s32.totalorder %s264, 0
      %s267 = sadd.s32 %s266, 1
      %s268 = scalar_select %p265, %s266, %s267
      %p271 = pneg %p265
      %p272 = scmp.eq.s32.totalorder %s20, 1
      %p273 = por %p271, %p272
      %p274 = scmp.ne.s32.totalorder %s266, %s269
      %p275 = scmp.eq.s32.totalorder %s20, 0
      %p276 = por %p274, %p275
      %p277 = scmp.ne.s32.totalorder %s266, %s269
      %p278 = scmp.eq.s32.totalorder %s25, 1
      %p279 = por %p277, %p278
      %p280 = scmp.ne.s32.totalorder %s269, %s270
      %p281 = scmp.eq.s32.totalorder %s25, 0
      %p282 = por %p280, %p281
      %p283 = scmp.ne.s32.totalorder %s269, %s270
      %p284 = scmp.eq.s32.totalorder %s26, 1
      %p285 = por %p283, %p284
      %p287 = scmp.ne.s32.totalorder %s270, %s286
      %p288 = scmp.eq.s32.totalorder %s26, 0
      %p289 = por %p287, %p288
      %p290 = scmp.le.s32.totalorder 1, %s20
      %p291 = scmp.lt.s32.totalorder %s20, 3
      %p292 = pnand %p290, %p291
      %p293 = pneg %p292
      // Predicated region
      $region9: #{tpu_custom_call.1} parent=5 // pred_check
        _
      $region10: #{tpu_custom_call.1} parent=5 // pred_check_branch
        %295 = sbr.rel (%p292) target = $region12
      $region11: #{tpu_custom_call.1} parent=5 // pred_region
        %s296 = ssub.s32 %s20, 1
        // Predicated region
        $region13: #{tpu_custom_call.1} parent=11 // pred_check
          %p297 = pneg %p67
        $region14: #{tpu_custom_call.1} parent=11 // pred_check_branch
          %299 = sbr.rel (%p297) target = $region16
        $region15: #{tpu_custom_call.1} parent=11 // pred_region
          _
        $region16: #{tpu_custom_call.1} parent=11 // pred_fallthru
          _
        // Predicated region
        $region17: #{tpu_custom_call.1} parent=11 // pred_check
          %p300 = pneg %p88
        $region18: #{tpu_custom_call.1} parent=11 // pred_check_branch
          %302 = sbr.rel (%p300) target = $region20
        $region19: #{tpu_custom_call.1} parent=11 // pred_region
          _
        $region20: #{tpu_custom_call.1} parent=11 // pred_fallthru
          _
        // Predicated region
        $region21: #{tpu_custom_call.1} parent=11 // pred_check
          %p303 = pneg %p109
        $region22: #{tpu_custom_call.1} parent=11 // pred_check_branch
          %305 = sbr.rel (%p303) target = $region24
        $region23: #{tpu_custom_call.1} parent=11 // pred_region
          _
        $region24: #{tpu_custom_call.1} parent=11 // pred_fallthru
          _
        // Predicated region
        $region25: #{tpu_custom_call.1} parent=11 // pred_check
          %p306 = pneg %p130
        $region26: #{tpu_custom_call.1} parent=11 // pred_check_branch
          %308 = sbr.rel (%p306) target = $region28
        $region27: #{tpu_custom_call.1} parent=11 // pred_region
          _
        $region28: #{tpu_custom_call.1} parent=11 // pred_fallthru
          _
        // Predicated region
        $region29: #{tpu_custom_call.1} parent=11 // pred_check
          %p309 = pneg %p151
        $region30: #{tpu_custom_call.1} parent=11 // pred_check_branch
          %311 = sbr.rel (%p309) target = $region32
        $region31: #{tpu_custom_call.1} parent=11 // pred_region
          _
        $region32: #{tpu_custom_call.1} parent=11 // pred_fallthru
          _
        // Predicated region
        $region33: #{tpu_custom_call.1} parent=11 // pred_check
          %p312 = pneg %p172
        $region34: #{tpu_custom_call.1} parent=11 // pred_check_branch
          %314 = sbr.rel (%p312) target = $region36
        $region35: #{tpu_custom_call.1} parent=11 // pred_region
          _
        $region36: #{tpu_custom_call.1} parent=11 // pred_fallthru
          _
        // Predicated region
        $region37: #{tpu_custom_call.1} parent=11 // pred_check
          %p315 = pneg %p193
        $region38: #{tpu_custom_call.1} parent=11 // pred_check_branch
          %317 = sbr.rel (%p315) target = $region40
        $region39: #{tpu_custom_call.1} parent=11 // pred_region
          _
        $region40: #{tpu_custom_call.1} parent=11 // pred_fallthru
          _
        // Predicated region
        $region41: #{tpu_custom_call.1} parent=11 // pred_check
          %p318 = pneg %p214
        $region42: #{tpu_custom_call.1} parent=11 // pred_check_branch
          %320 = sbr.rel (%p318) target = $region44
        $region43: #{tpu_custom_call.1} parent=11 // pred_region
          _
        $region44: #{tpu_custom_call.1} parent=11 // pred_fallthru
          _
        // Predicated region
        $region45: #{tpu_custom_call.1} parent=11 // pred_check
          %p321 = pneg %p235
        $region46: #{tpu_custom_call.1} parent=11 // pred_check_branch
          %323 = sbr.rel (%p321) target = $region48
        $region47: #{tpu_custom_call.1} parent=11 // pred_region
          _
        $region48: #{tpu_custom_call.1} parent=11 // pred_fallthru
          _
        // Predicated region
        $region49: #{tpu_custom_call.1} parent=11 // pred_check
          %p324 = pneg %p256
        $region50: #{tpu_custom_call.1} parent=11 // pred_check_branch
          %326 = sbr.rel (%p324) target = $region52
        $region51: #{tpu_custom_call.1} parent=11 // pred_region
          _
        $region52: #{tpu_custom_call.1} parent=11 // pred_fallthru
          _
      $region12: #{tpu_custom_call.1} parent=5 // pred_fallthru
        _
      %p327 = scmp.lt.s32.totalorder %s20, 2
      // Predicated region
      $region53: #{tpu_custom_call.1} parent=5 // pred_check
        %p328 = pneg %p327
      $region54: #{tpu_custom_call.1} parent=5 // pred_check_branch
        %330 = sbr.rel (%p328) target = $region56
      $region55: #{tpu_custom_call.1} parent=5 // pred_region
        // Predicated region
        $region57: #{tpu_custom_call.1} parent=55 // pred_check
          %p331 = pneg %p40
        $region58: #{tpu_custom_call.1} parent=55 // pred_check_branch
          %333 = sbr.rel (%p331) target = $region60
        $region59: #{tpu_custom_call.1} parent=55 // pred_region
          %p334 = scmp.lt.s32.totalorder %s20, 1
          %s335 = scalar_select %p334, %s20, 1
          %s336 = smul.addr %s335, 32
          %s337 = smul.addr %s336, 4
          %s338 = scalar_lea.vmem %s0, %s337
        $region60: #{tpu_custom_call.1} parent=55 // pred_fallthru
          _
      $region56: #{tpu_custom_call.1} parent=5 // pred_fallthru
        _
      %p339 = scmp.le.s32.totalorder 1, %s20
      %p340 = scmp.lt.s32.totalorder %s20, 3
      %p341 = pnand %p339, %p340
      %p342 = pneg %p341
      // Predicated region
      $region61: #{tpu_custom_call.1} parent=5 // pred_check
        _
      $region62: #{tpu_custom_call.1} parent=5 // pred_check_branch
        %344 = sbr.rel (%p341) target = $region64
      $region63: #{tpu_custom_call.1} parent=5 // pred_region
        %s345 = ssub.s32 %s20, 1
        %p346 = scmp.lt.s32.totalorder %s25, 1
        %s347 = scalar_select %p346, %s25, 1
        %s348 = smul.addr %s347, 32
        %s349 = smul.addr %s348, 4
        %s350 = scalar_lea.vmem %s0, %s349
        %p351 = pneg %p46
        %p352 = pneg %p43
        %p353 = pneg %p67
        %p354 = pneg %p64
        %p355 = pneg %p88
        %p356 = pneg %p85
        %p357 = pneg %p109
        %p358 = pneg %p106
        %p359 = pneg %p130
        %p360 = pneg %p127
        %p361 = pneg %p151
        %p362 = pneg %p148
        %p363 = pneg %p172
        %p364 = pneg %p169
        %p365 = pneg %p193
        %p366 = pneg %p190
        %p367 = pneg %p214
        %p368 = pneg %p211
        %p369 = pneg %p235
        %p370 = pneg %p232
        %p371 = pneg %p256
        %p372 = pneg %p253
        %p373 = pneg %p282
        %p374 = pneg %p279
        %s375 = sand.u32 %s269, 1
        %s376 = scalar_lea.sflag [#allocation6], %s375
        %s377 = sand.u32 %s269, 1
        %s378 = smul.addr %s377, 128
        %s379 = scalar_lea.vmem [#allocation5], %s378
        %p380 = scmp.lt.s32.totalorder %s25, 1
        %s381 = scalar_select %p380, %s25, 1
        %s382 = smul.addr %s381, 32
        %s383 = smul.addr %s382, 4
        %s384 = scalar_lea.vmem %s0, %s383
        %vm386 = vcmask 1043456
        %vm387 = vcmask 523268
        %vm388 = vmor %vm387, %vm386
        %389 = vst.msk [vmem:[#allocation2] sm:$0xff] %vm388, 0
        %390 = vst.msk [vmem:[#allocation2 + $0x8] sm:$0xff] %vm388, 0
        %391 = vst.msk [vmem:[#allocation2 + $0x10] sm:$0xff] %vm388, 0
        %392 = vst.msk [vmem:[#allocation2 + $0x118] sm:$0xff] %vm388, 0
        %393 = vst.msk [vmem:[#allocation2 + $0x120] sm:$0xff] %vm388, 0
        %394 = vst.msk [vmem:[#allocation2 + $0x128] sm:$0xff] %vm388, 0
        %395 = vst.msk [vmem:[#allocation3] sm:$0xff] %vm388, 0
        %396 = vst.msk [vmem:[#allocation3 + $0x8] sm:$0xff] %vm388, 0
        %397 = vst.msk [vmem:[#allocation3 + $0x10] sm:$0xff] %vm388, 0
        %398 = vst.msk [vmem:[#allocation3 + $0x118] sm:$0xff] %vm388, 0
        %399 = vst.msk [vmem:[#allocation3 + $0x120] sm:$0xff] %vm388, 0
        %400 = vst.msk [vmem:[#allocation3 + $0x128] sm:$0xff] %vm388, 0
        %vm401 = vcmask 781312
        %402 = vst.msk [vmem:[#allocation4] sm:$0xf] %vm401, 0
        %403 = vst.msk [vmem:[#allocation4 + $0x4] sm:$0xf] %vm401, 0
        %404 = vst.msk [vmem:[#allocation4 + $0x8] sm:$0xf] %vm401, 0
        %405 = vst.msk [vmem:[#allocation4 + $0x8c] sm:$0xf] %vm401, 0
        %406 = vst.msk [vmem:[#allocation4 + $0x90] sm:$0xf] %vm401, 0
        %407 = vst.msk [vmem:[#allocation4 + $0x94] sm:$0xf] %vm401, 0
        %v408 = vlaneseq
        %v409 = vshrl.u32 %v408, 7
        %v410 = vadd.s32 %v409, 8
        %v411 = vadd.s32 %v409, 16
        %v412 = vadd.s32 %v409, 24
        %v413 = vadd.s32 %v409, 32
        %v414 = vadd.s32 %v409, 40
        %v415 = vadd.s32 %v409, 48
        %v416 = vadd.s32 %v409, 56
        %v417 = vadd.s32 %v409, 64
        %v418 = vadd.s32 %v409, 72
        %v419 = vadd.s32 %v409, 80
        %v420 = vadd.s32 %v409, 88
        %v421 = vadd.s32 %v409, 96
        %v422 = vadd.s32 %v409, 104
        %v423 = vadd.s32 %v409, 112
        %v424 = vadd.s32 %v409, 120
        %v425 = vadd.s32 %v409, 128
        %v426 = vadd.s32 %v409, 136
        %v427 = vadd.s32 %v409, 144
        %v428 = vadd.s32 %v409, 152
        %v429 = vadd.s32 %v409, 160
        %v430 = vadd.s32 %v409, 168
        %v431 = vadd.s32 %v409, 176
        %v432 = vadd.s32 %v409, 184
        %v433 = vadd.s32 %v409, 192
        %v434 = vadd.s32 %v409, 200
        %v435 = vadd.s32 %v409, 208
        %v436 = vadd.s32 %v409, 216
        %v437 = vadd.s32 %v409, 224
        %v438 = vadd.s32 %v409, 232
        %v439 = vadd.s32 %v409, 240
        %v440 = vadd.s32 %v409, 248
        %vm441 = vcmp.lt.s32.totalorder %v409, 0
        %v442 = vsub.s32 0, %v409
        %v443 = vsel %vm441, %v442, %v409
        %v444 = vshrl.u32 %v443, 4
        %v445 = vand.u32 %v443, 15
        %v446 = vsub.s32 0, %v445
        %v447 = vsel %vm441, %v446, %v445
        %vm448 = vcmp.lt.s32.totalorder %v410, 0
        %v449 = vsub.s32 0, %v410
        %v450 = vsel %vm448, %v449, %v410
        %v451 = vshrl.u32 %v450, 4
        %v452 = vand.u32 %v450, 15
        %v453 = vsub.s32 0, %v452
        %v454 = vsel %vm448, %v453, %v452
        %vm455 = vcmp.lt.s32.totalorder %v411, 0
        %v456 = vsub.s32 0, %v411
        %v457 = vsel %vm455, %v456, %v411
        %v458 = vshrl.u32 %v457, 4
        %v459 = vand.u32 %v457, 15
        %v460 = vsub.s32 0, %v459
        %v461 = vsel %vm455, %v460, %v459
        %vm462 = vcmp.lt.s32.totalorder %v412, 0
        %v463 = vsub.s32 0, %v412
        %v464 = vsel %vm462, %v463, %v412
        %v465 = vshrl.u32 %v464, 4
        %v466 = vand.u32 %v464, 15
        %v467 = vsub.s32 0, %v466
        %v468 = vsel %vm462, %v467, %v466
        %vm469 = vcmp.lt.s32.totalorder %v413, 0
        %v470 = vsub.s32 0, %v413
        %v471 = vsel %vm469, %v470, %v413
        %v472 = vshrl.u32 %v471, 4
        %v473 = vand.u32 %v471, 15
        %v474 = vsub.s32 0, %v473
        %v475 = vsel %vm469, %v474, %v473
        %vm476 = vcmp.lt.s32.totalorder %v414, 0
        %v477 = vsub.s32 0, %v414
        %v478 = vsel %vm476, %v477, %v414
        %v479 = vshrl.u32 %v478, 4
        %v480 = vand.u32 %v478, 15
        %v481 = vsub.s32 0, %v480
        %v482 = vsel %vm476, %v481, %v480
        %vm483 = vcmp.lt.s32.totalorder %v415, 0
        %v484 = vsub.s32 0, %v415
        %v485 = vsel %vm483, %v484, %v415
        %v486 = vshrl.u32 %v485, 4
        %v487 = vand.u32 %v485, 15
        %v488 = vsub.s32 0, %v487
        %v489 = vsel %vm483, %v488, %v487
        %vm490 = vcmp.lt.s32.totalorder %v416, 0
        %v491 = vsub.s32 0, %v416
        %v492 = vsel %vm490, %v491, %v416
        %v493 = vshrl.u32 %v492, 4
        %v494 = vand.u32 %v492, 15
        %v495 = vsub.s32 0, %v494
        %v496 = vsel %vm490, %v495, %v494
        %vm497 = vcmp.lt.s32.totalorder %v417, 0
        %v498 = vsub.s32 0, %v417
        %v499 = vsel %vm497, %v498, %v417
        %v500 = vshrl.u32 %v499, 4
        %v501 = vand.u32 %v499, 15
        %v502 = vsub.s32 0, %v501
        %v503 = vsel %vm497, %v502, %v501
        %vm504 = vcmp.lt.s32.totalorder %v418, 0
        %v505 = vsub.s32 0, %v418
        %v506 = vsel %vm504, %v505, %v418
        %v507 = vshrl.u32 %v506, 4
        %v508 = vand.u32 %v506, 15
        %v509 = vsub.s32 0, %v508
        %v510 = vsel %vm504, %v509, %v508
        %vm511 = vcmp.lt.s32.totalorder %v419, 0
        %v512 = vsub.s32 0, %v419
        %v513 = vsel %vm511, %v512, %v419
        %v514 = vshrl.u32 %v513, 4
        %v515 = vand.u32 %v513, 15
        %v516 = vsub.s32 0, %v515
        %v517 = vsel %vm511, %v516, %v515
        %vm518 = vcmp.lt.s32.totalorder %v420, 0
        %v519 = vsub.s32 0, %v420
        %v520 = vsel %vm518, %v519, %v420
        %v521 = vshrl.u32 %v520, 4
        %v522 = vand.u32 %v520, 15
        %v523 = vsub.s32 0, %v522
        %v524 = vsel %vm518, %v523, %v522
        %vm525 = vcmp.lt.s32.totalorder %v421, 0
        %v526 = vsub.s32 0, %v421
        %v527 = vsel %vm525, %v526, %v421
        %v528 = vshrl.u32 %v527, 4
        %v529 = vand.u32 %v527, 15
        %v530 = vsub.s32 0, %v529
        %v531 = vsel %vm525, %v530, %v529
        %vm532 = vcmp.lt.s32.totalorder %v422, 0
        %v533 = vsub.s32 0, %v422
        %v534 = vsel %vm532, %v533, %v422
        %v535 = vshrl.u32 %v534, 4
        %v536 = vand.u32 %v534, 15
        %v537 = vsub.s32 0, %v536
        %v538 = vsel %vm532, %v537, %v536
        %vm539 = vcmp.lt.s32.totalorder %v423, 0
        %v540 = vsub.s32 0, %v423
        %v541 = vsel %vm539, %v540, %v423
        %v542 = vshrl.u32 %v541, 4
        %v543 = vand.u32 %v541, 15
        %v544 = vsub.s32 0, %v543
        %v545 = vsel %vm539, %v544, %v543
        %vm546 = vcmp.lt.s32.totalorder %v424, 0
        %v547 = vsub.s32 0, %v424
        %v548 = vsel %vm546, %v547, %v424
        %v549 = vshrl.u32 %v548, 4
        %v550 = vand.u32 %v548, 15
        %v551 = vsub.s32 0, %v550
        %v552 = vsel %vm546, %v551, %v550
        %vm553 = vcmp.lt.s32.totalorder %v425, 0
        %v554 = vsub.s32 0, %v425
        %v555 = vsel %vm553, %v554, %v425
        %v556 = vshrl.u32 %v555, 4
        %v557 = vand.u32 %v555, 15
        %v558 = vsub.s32 0, %v557
        %v559 = vsel %vm553, %v558, %v557
        %vm560 = vcmp.lt.s32.totalorder %v426, 0
        %v561 = vsub.s32 0, %v426
        %v562 = vsel %vm560, %v561, %v426
        %v563 = vshrl.u32 %v562, 4
        %v564 = vand.u32 %v562, 15
        %v565 = vsub.s32 0, %v564
        %v566 = vsel %vm560, %v565, %v564
        %vm567 = vcmp.lt.s32.totalorder %v427, 0
        %v568 = vsub.s32 0, %v427
        %v569 = vsel %vm567, %v568, %v427
        %v570 = vshrl.u32 %v569, 4
        %v571 = vand.u32 %v569, 15
        %v572 = vsub.s32 0, %v571
        %v573 = vsel %vm567, %v572, %v571
        %vm574 = vcmp.lt.s32.totalorder %v428, 0
        %v575 = vsub.s32 0, %v428
        %v576 = vsel %vm574, %v575, %v428
        %v577 = vshrl.u32 %v576, 4
        %v578 = vand.u32 %v576, 15
        %v579 = vsub.s32 0, %v578
        %v580 = vsel %vm574, %v579, %v578
        %vm581 = vcmp.lt.s32.totalorder %v429, 0
        %v582 = vsub.s32 0, %v429
        %v583 = vsel %vm581, %v582, %v429
        %v584 = vshrl.u32 %v583, 4
        %v585 = vand.u32 %v583, 15
        %v586 = vsub.s32 0, %v585
        %v587 = vsel %vm581, %v586, %v585
        %vm588 = vcmp.lt.s32.totalorder %v430, 0
        %v589 = vsub.s32 0, %v430
        %v590 = vsel %vm588, %v589, %v430
        %v591 = vshrl.u32 %v590, 4
        %v592 = vand.u32 %v590, 15
        %v593 = vsub.s32 0, %v592
        %v594 = vsel %vm588, %v593, %v592
        %vm595 = vcmp.lt.s32.totalorder %v431, 0
        %v596 = vsub.s32 0, %v431
        %v597 = vsel %vm595, %v596, %v431
        %v598 = vshrl.u32 %v597, 4
        %v599 = vand.u32 %v597, 15
        %v600 = vsub.s32 0, %v599
        %v601 = vsel %vm595, %v600, %v599
        %vm602 = vcmp.lt.s32.totalorder %v432, 0
        %v603 = vsub.s32 0, %v432
        %v604 = vsel %vm602, %v603, %v432
        %v605 = vshrl.u32 %v604, 4
        %v606 = vand.u32 %v604, 15
        %v607 = vsub.s32 0, %v606
        %v608 = vsel %vm602, %v607, %v606
        %vm609 = vcmp.lt.s32.totalorder %v433, 0
        %v610 = vsub.s32 0, %v433
        %v611 = vsel %vm609, %v610, %v433
        %v612 = vshrl.u32 %v611, 4
        %v613 = vand.u32 %v611, 15
        %v614 = vsub.s32 0, %v613
        %v615 = vsel %vm609, %v614, %v613
        %vm616 = vcmp.lt.s32.totalorder %v434, 0
        %v617 = vsub.s32 0, %v434
        %v618 = vsel %vm616, %v617, %v434
        %v619 = vshrl.u32 %v618, 4
        %v620 = vand.u32 %v618, 15
        %v621 = vsub.s32 0, %v620
        %v622 = vsel %vm616, %v621, %v620
        %vm623 = vcmp.lt.s32.totalorder %v435, 0
        %v624 = vsub.s32 0, %v435
        %v625 = vsel %vm623, %v624, %v435
        %v626 = vshrl.u32 %v625, 4
        %v627 = vand.u32 %v625, 15
        %v628 = vsub.s32 0, %v627
        %v629 = vsel %vm623, %v628, %v627
        %vm630 = vcmp.lt.s32.totalorder %v436, 0
        %v631 = vsub.s32 0, %v436
        %v632 = vsel %vm630, %v631, %v436
        %v633 = vshrl.u32 %v632, 4
        %v634 = vand.u32 %v632, 15
        %v635 = vsub.s32 0, %v634
        %v636 = vsel %vm630, %v635, %v634
        %vm637 = vcmp.lt.s32.totalorder %v437, 0
        %v638 = vsub.s32 0, %v437
        %v639 = vsel %vm637, %v638, %v437
        %v640 = vshrl.u32 %v639, 4
        %v641 = vand.u32 %v639, 15
        %v642 = vsub.s32 0, %v641
        %v643 = vsel %vm637, %v642, %v641
        %vm644 = vcmp.lt.s32.totalorder %v438, 0
        %v645 = vsub.s32 0, %v438
        %v646 = vsel %vm644, %v645, %v438
        %v647 = vshrl.u32 %v646, 4
        %v648 = vand.u32 %v646, 15
        %v649 = vsub.s32 0, %v648
        %v650 = vsel %vm644, %v649, %v648
        %vm651 = vcmp.lt.s32.totalorder %v439, 0
        %v652 = vsub.s32 0, %v439
        %v653 = vsel %vm651, %v652, %v439
        %v654 = vshrl.u32 %v653, 4
        %v655 = vand.u32 %v653, 15
        %v656 = vsub.s32 0, %v655
        %v657 = vsel %vm651, %v656, %v655
        %vm658 = vcmp.lt.s32.totalorder %v440, 0
        %v659 = vsub.s32 0, %v440
        %v660 = vsel %vm658, %v659, %v440
        %v661 = vshrl.u32 %v660, 4
        %v662 = vand.u32 %v660, 15
        %v663 = vsub.s32 0, %v662
        %v664 = vsel %vm658, %v663, %v662
        %vm665 = vcmp.ne.s32.totalorder %v447, 0
        %vm666 = vcmp.ne.s32.totalorder %v454, 0
        %vm667 = vcmp.ne.s32.totalorder %v461, 0
        %vm668 = vcmp.ne.s32.totalorder %v468, 0
        %vm669 = vcmp.ne.s32.totalorder %v475, 0
        %vm670 = vcmp.ne.s32.totalorder %v482, 0
        %vm671 = vcmp.ne.s32.totalorder %v489, 0
        %vm672 = vcmp.ne.s32.totalorder %v496, 0
        %vm673 = vcmp.ne.s32.totalorder %v503, 0
        %vm674 = vcmp.ne.s32.totalorder %v510, 0
        %vm675 = vcmp.ne.s32.totalorder %v517, 0
        %vm676 = vcmp.ne.s32.totalorder %v524, 0
        %vm677 = vcmp.ne.s32.totalorder %v531, 0
        %vm678 = vcmp.ne.s32.totalorder %v538, 0
        %vm679 = vcmp.ne.s32.totalorder %v545, 0
        %vm680 = vcmp.ne.s32.totalorder %v552, 0
        %vm681 = vcmp.ne.s32.totalorder %v559, 0
        %vm682 = vcmp.ne.s32.totalorder %v566, 0
        %vm683 = vcmp.ne.s32.totalorder %v573, 0
        %vm684 = vcmp.ne.s32.totalorder %v580, 0
        %vm685 = vcmp.ne.s32.totalorder %v587, 0
        %vm686 = vcmp.ne.s32.totalorder %v594, 0
        %vm687 = vcmp.ne.s32.totalorder %v601, 0
        %vm688 = vcmp.ne.s32.totalorder %v608, 0
        %vm689 = vcmp.ne.s32.totalorder %v615, 0
        %vm690 = vcmp.ne.s32.totalorder %v622, 0
        %vm691 = vcmp.ne.s32.totalorder %v629, 0
        %vm692 = vcmp.ne.s32.totalorder %v636, 0
        %vm693 = vcmp.ne.s32.totalorder %v643, 0
        %vm694 = vcmp.ne.s32.totalorder %v650, 0
        %vm695 = vcmp.ne.s32.totalorder %v657, 0
        %vm696 = vcmp.ne.s32.totalorder %v664, 0
        %vm697 = vcmp.lt.s32.totalorder %v447, 0
        %vm698 = vcmp.lt.s32.totalorder %v454, 0
        %vm699 = vcmp.lt.s32.totalorder %v461, 0
        %vm700 = vcmp.lt.s32.totalorder %v468, 0
        %vm701 = vcmp.lt.s32.totalorder %v475, 0
        %vm702 = vcmp.lt.s32.totalorder %v482, 0
        %vm703 = vcmp.lt.s32.totalorder %v489, 0
        %vm704 = vcmp.lt.s32.totalorder %v496, 0
        %vm705 = vcmp.lt.s32.totalorder %v503, 0
        %vm706 = vcmp.lt.s32.totalorder %v510, 0
        %vm707 = vcmp.lt.s32.totalorder %v517, 0
        %vm708 = vcmp.lt.s32.totalorder %v524, 0
        %vm709 = vcmp.lt.s32.totalorder %v531, 0
        %vm710 = vcmp.lt.s32.totalorder %v538, 0
        %vm711 = vcmp.lt.s32.totalorder %v545, 0
        %vm712 = vcmp.lt.s32.totalorder %v552, 0
        %vm713 = vcmp.lt.s32.totalorder %v559, 0
        %vm714 = vcmp.lt.s32.totalorder %v566, 0
        %vm715 = vcmp.lt.s32.totalorder %v573, 0
        %vm716 = vcmp.lt.s32.totalorder %v580, 0
        %vm717 = vcmp.lt.s32.totalorder %v587, 0
        %vm718 = vcmp.lt.s32.totalorder %v594, 0
        %vm719 = vcmp.lt.s32.totalorder %v601, 0
        %vm720 = vcmp.lt.s32.totalorder %v608, 0
        %vm721 = vcmp.lt.s32.totalorder %v615, 0
        %vm722 = vcmp.lt.s32.totalorder %v622, 0
        %vm723 = vcmp.lt.s32.totalorder %v629, 0
        %vm724 = vcmp.lt.s32.totalorder %v636, 0
        %vm725 = vcmp.lt.s32.totalorder %v643, 0
        %vm726 = vcmp.lt.s32.totalorder %v650, 0
        %vm727 = vcmp.lt.s32.totalorder %v657, 0
        %vm728 = vcmp.lt.s32.totalorder %v664, 0
        %vm729 = vmand %vm697, %vm665
        %vm730 = vmand %vm698, %vm666
        %vm731 = vmand %vm699, %vm667
        %vm732 = vmand %vm700, %vm668
        %vm733 = vmand %vm701, %vm669
        %vm734 = vmand %vm702, %vm670
        %vm735 = vmand %vm703, %vm671
        %vm736 = vmand %vm704, %vm672
        %vm737 = vmand %vm705, %vm673
        %vm738 = vmand %vm706, %vm674
        %vm739 = vmand %vm707, %vm675
        %vm740 = vmand %vm708, %vm676
        %vm741 = vmand %vm709, %vm677
        %vm742 = vmand %vm710, %vm678
        %vm743 = vmand %vm711, %vm679
        %vm744 = vmand %vm712, %vm680
        %vm745 = vmand %vm713, %vm681
        %vm746 = vmand %vm714, %vm682
        %vm747 = vmand %vm715, %vm683
        %vm748 = vmand %vm716, %vm684
        %vm749 = vmand %vm717, %vm685
        %vm750 = vmand %vm718, %vm686
        %vm751 = vmand %vm719, %vm687
        %vm752 = vmand %vm720, %vm688
        %vm753 = vmand %vm721, %vm689
        %vm754 = vmand %vm722, %vm690
        %vm755 = vmand %vm723, %vm691
        %vm756 = vmand %vm724, %vm692
        %vm757 = vmand %vm725, %vm693
        %vm758 = vmand %vm726, %vm694
        %vm759 = vmand %vm727, %vm695
        %vm760 = vmand %vm728, %vm696
        %v761 = vadd.s32 %v447, 16
        %v762 = vadd.s32 %v454, 16
        %v763 = vadd.s32 %v461, 16
        %v764 = vadd.s32 %v468, 16
        %v765 = vadd.s32 %v475, 16
        %v766 = vadd.s32 %v482, 16
        %v767 = vadd.s32 %v489, 16
        %v768 = vadd.s32 %v496, 16
        %v769 = vadd.s32 %v503, 16
        %v770 = vadd.s32 %v510, 16
        %v771 = vadd.s32 %v517, 16
        %v772 = vadd.s32 %v524, 16
        %v773 = vadd.s32 %v531, 16
        %v774 = vadd.s32 %v538, 16
        %v775 = vadd.s32 %v545, 16
        %v776 = vadd.s32 %v552, 16
        %v777 = vadd.s32 %v559, 16
        %v778 = vadd.s32 %v566, 16
        %v779 = vadd.s32 %v573, 16
        %v780 = vadd.s32 %v580, 16
        %v781 = vadd.s32 %v587, 16
        %v782 = vadd.s32 %v594, 16
        %v783 = vadd.s32 %v601, 16
        %v784 = vadd.s32 %v608, 16
        %v785 = vadd.s32 %v615, 16
        %v786 = vadd.s32 %v622, 16
        %v787 = vadd.s32 %v629, 16
        %v788 = vadd.s32 %v636, 16
        %v789 = vadd.s32 %v643, 16
        %v790 = vadd.s32 %v650, 16
        %v791 = vadd.s32 %v657, 16
        %v792 = vadd.s32 %v664, 16
        %v793 = vsel %vm729, %v761, %v447
        %v794 = vsel %vm730, %v762, %v454
        %v795 = vsel %vm731, %v763, %v461
        %v796 = vsel %vm732, %v764, %v468
        %v797 = vsel %vm733, %v765, %v475
        %v798 = vsel %vm734, %v766, %v482
        %v799 = vsel %vm735, %v767, %v489
        %v800 = vsel %vm736, %v768, %v496
        %v801 = vsel %vm737, %v769, %v503
        %v802 = vsel %vm738, %v770, %v510
        %v803 = vsel %vm739, %v771, %v517
        %v804 = vsel %vm740, %v772, %v524
        %v805 = vsel %vm741, %v773, %v531
        %v806 = vsel %vm742, %v774, %v538
        %v807 = vsel %vm743, %v775, %v545
        %v808 = vsel %vm744, %v776, %v552
        %v809 = vsel %vm745, %v777, %v559
        %v810 = vsel %vm746, %v778, %v566
        %v811 = vsel %vm747, %v779, %v573
        %v812 = vsel %vm748, %v780, %v580
        %v813 = vsel %vm749, %v781, %v587
        %v814 = vsel %vm750, %v782, %v594
        %v815 = vsel %vm751, %v783, %v601
        %v816 = vsel %vm752, %v784, %v608
        %v817 = vsel %vm753, %v785, %v615
        %v818 = vsel %vm754, %v786, %v622
        %v819 = vsel %vm755, %v787, %v629
        %v820 = vsel %vm756, %v788, %v636
        %v821 = vsel %vm757, %v789, %v643
        %v822 = vsel %vm758, %v790, %v650
        %v823 = vsel %vm759, %v791, %v657
        %v824 = vsel %vm760, %v792, %v664
        %vm825 = vcmp.ne.s32.totalorder %v793, 15
        %vm826 = vcmp.ne.s32.totalorder %v794, 15
        %vm827 = vcmp.ne.s32.totalorder %v795, 15
        %vm828 = vcmp.ne.s32.totalorder %v796, 15
        %vm829 = vcmp.ne.s32.totalorder %v797, 15
        %vm830 = vcmp.ne.s32.totalorder %v798, 15
        %vm831 = vcmp.ne.s32.totalorder %v799, 15
        %vm832 = vcmp.ne.s32.totalorder %v800, 15
        %vm833 = vcmp.ne.s32.totalorder %v801, 15
        %vm834 = vcmp.ne.s32.totalorder %v802, 15
        %vm835 = vcmp.ne.s32.totalorder %v803, 15
        %vm836 = vcmp.ne.s32.totalorder %v804, 15
        %vm837 = vcmp.ne.s32.totalorder %v805, 15
        %vm838 = vcmp.ne.s32.totalorder %v806, 15
        %vm839 = vcmp.ne.s32.totalorder %v807, 15
        %vm840 = vcmp.ne.s32.totalorder %v808, 15
        %vm841 = vcmp.ne.s32.totalorder %v809, 15
        %vm842 = vcmp.ne.s32.totalorder %v810, 15
        %vm843 = vcmp.ne.s32.totalorder %v811, 15
        %vm844 = vcmp.ne.s32.totalorder %v812, 15
        %vm845 = vcmp.ne.s32.totalorder %v813, 15
        %vm846 = vcmp.ne.s32.totalorder %v814, 15
        %vm847 = vcmp.ne.s32.totalorder %v815, 15
        %vm848 = vcmp.ne.s32.totalorder %v816, 15
        %vm849 = vcmp.ne.s32.totalorder %v817, 15
        %vm850 = vcmp.ne.s32.totalorder %v818, 15
        %vm851 = vcmp.ne.s32.totalorder %v819, 15
        %vm852 = vcmp.ne.s32.totalorder %v820, 15
        %vm853 = vcmp.ne.s32.totalorder %v821, 15
        %vm854 = vcmp.ne.s32.totalorder %v822, 15
        %vm855 = vcmp.ne.s32.totalorder %v823, 15
        %vm856 = vcmp.ne.s32.totalorder %v824, 15
        %v857 = vsel %vm825, 1, 0
        %v858 = vsel %vm826, 1, 0
        %v859 = vsel %vm827, 1, 0
        %v860 = vsel %vm828, 1, 0
        %v861 = vsel %vm829, 1, 0
        %v862 = vsel %vm830, 1, 0
        %v863 = vsel %vm831, 1, 0
        %v864 = vsel %vm832, 1, 0
        %v865 = vsel %vm833, 1, 0
        %v866 = vsel %vm834, 1, 0
        %v867 = vsel %vm835, 1, 0
        %v868 = vsel %vm836, 1, 0
        %v869 = vsel %vm837, 1, 0
        %v870 = vsel %vm838, 1, 0
        %v871 = vsel %vm839, 1, 0
        %v872 = vsel %vm840, 1, 0
        %v873 = vsel %vm841, 1, 0
        %v874 = vsel %vm842, 1, 0
        %v875 = vsel %vm843, 1, 0
        %v876 = vsel %vm844, 1, 0
        %v877 = vsel %vm845, 1, 0
        %v878 = vsel %vm846, 1, 0
        %v879 = vsel %vm847, 1, 0
        %v880 = vsel %vm848, 1, 0
        %v881 = vsel %vm849, 1, 0
        %v882 = vsel %vm850, 1, 0
        %v883 = vsel %vm851, 1, 0
        %v884 = vsel %vm852, 1, 0
        %v885 = vsel %vm853, 1, 0
        %v886 = vsel %vm854, 1, 0
        %v887 = vsel %vm855, 1, 0
        %v888 = vsel %vm856, 1, 0
        %v889 = vcvt.s32.f32 %v857
        %v890 = vcvt.s32.f32 %v858
        %v891 = vcvt.s32.f32 %v859
        %v892 = vcvt.s32.f32 %v860
        %v893 = vcvt.s32.f32 %v861
        %v894 = vcvt.s32.f32 %v862
        %v895 = vcvt.s32.f32 %v863
        %v896 = vcvt.s32.f32 %v864
        %v897 = vcvt.s32.f32 %v865
        %v898 = vcvt.s32.f32 %v866
        %v899 = vcvt.s32.f32 %v867
        %v900 = vcvt.s32.f32 %v868
        %v901 = vcvt.s32.f32 %v869
        %v902 = vcvt.s32.f32 %v870
        %v903 = vcvt.s32.f32 %v871
        %v904 = vcvt.s32.f32 %v872
        %v905 = vcvt.s32.f32 %v873
        %v906 = vcvt.s32.f32 %v874
        %v907 = vcvt.s32.f32 %v875
        %v908 = vcvt.s32.f32 %v876
        %v909 = vcvt.s32.f32 %v877
        %v910 = vcvt.s32.f32 %v878
        %v911 = vcvt.s32.f32 %v879
        %v912 = vcvt.s32.f32 %v880
        %v913 = vcvt.s32.f32 %v881
        %v914 = vcvt.s32.f32 %v882
        %v915 = vcvt.s32.f32 %v883
        %v916 = vcvt.s32.f32 %v884
        %v917 = vcvt.s32.f32 %v885
        %v918 = vcvt.s32.f32 %v886
        %v919 = vcvt.s32.f32 %v887
        %v920 = vcvt.s32.f32 %v888
        %vm921 = vcmp.ne.s32.totalorder %v793, 0
        %vm922 = vcmp.ne.s32.totalorder %v794, 0
        %vm923 = vcmp.ne.s32.totalorder %v795, 0
        %vm924 = vcmp.ne.s32.totalorder %v796, 0
        %vm925 = vcmp.ne.s32.totalorder %v797, 0
        %vm926 = vcmp.ne.s32.totalorder %v798, 0
        %vm927 = vcmp.ne.s32.totalorder %v799, 0
        %vm928 = vcmp.ne.s32.totalorder %v800, 0
        %vm929 = vcmp.ne.s32.totalorder %v801, 0
        %vm930 = vcmp.ne.s32.totalorder %v802, 0
        %vm931 = vcmp.ne.s32.totalorder %v803, 0
        %vm932 = vcmp.ne.s32.totalorder %v804, 0
        %vm933 = vcmp.ne.s32.totalorder %v805, 0
        %vm934 = vcmp.ne.s32.totalorder %v806, 0
        %vm935 = vcmp.ne.s32.totalorder %v807, 0
        %vm936 = vcmp.ne.s32.totalorder %v808, 0
        %vm937 = vcmp.ne.s32.totalorder %v809, 0
        %vm938 = vcmp.ne.s32.totalorder %v810, 0
        %vm939 = vcmp.ne.s32.totalorder %v811, 0
        %vm940 = vcmp.ne.s32.totalorder %v812, 0
        %vm941 = vcmp.ne.s32.totalorder %v813, 0
        %vm942 = vcmp.ne.s32.totalorder %v814, 0
        %vm943 = vcmp.ne.s32.totalorder %v815, 0
        %vm944 = vcmp.ne.s32.totalorder %v816, 0
        %vm945 = vcmp.ne.s32.totalorder %v817, 0
        %vm946 = vcmp.ne.s32.totalorder %v818, 0
        %vm947 = vcmp.ne.s32.totalorder %v819, 0
        %vm948 = vcmp.ne.s32.totalorder %v820, 0
        %vm949 = vcmp.ne.s32.totalorder %v821, 0
        %vm950 = vcmp.ne.s32.totalorder %v822, 0
        %vm951 = vcmp.ne.s32.totalorder %v823, 0
        %vm952 = vcmp.ne.s32.totalorder %v824, 0
        %v953 = vsel %vm921, 1, 0
        %v954 = vsel %vm922, 1, 0
        %v955 = vsel %vm923, 1, 0
        %v956 = vsel %vm924, 1, 0
        %v957 = vsel %vm925, 1, 0
        %v958 = vsel %vm926, 1, 0
        %v959 = vsel %vm927, 1, 0
        %v960 = vsel %vm928, 1, 0
        %v961 = vsel %vm929, 1, 0
        %v962 = vsel %vm930, 1, 0
        %v963 = vsel %vm931, 1, 0
        %v964 = vsel %vm932, 1, 0
        %v965 = vsel %vm933, 1, 0
        %v966 = vsel %vm934, 1, 0
        %v967 = vsel %vm935, 1, 0
        %v968 = vsel %vm936, 1, 0
        %v969 = vsel %vm937, 1, 0
        %v970 = vsel %vm938, 1, 0
        %v971 = vsel %vm939, 1, 0
        %v972 = vsel %vm940, 1, 0
        %v973 = vsel %vm941, 1, 0
        %v974 = vsel %vm942, 1, 0
        %v975 = vsel %vm943, 1, 0
        %v976 = vsel %vm944, 1, 0
        %v977 = vsel %vm945, 1, 0
        %v978 = vsel %vm946, 1, 0
        %v979 = vsel %vm947, 1, 0
        %v980 = vsel %vm948, 1, 0
        %v981 = vsel %vm949, 1, 0
        %v982 = vsel %vm950, 1, 0
        %v983 = vsel %vm951, 1, 0
        %v984 = vsel %vm952, 1, 0
        %v985 = vcvt.s32.f32 %v953
        %v986 = vcvt.s32.f32 %v954
        %v987 = vcvt.s32.f32 %v955
        %v988 = vcvt.s32.f32 %v956
        %v989 = vcvt.s32.f32 %v957
        %v990 = vcvt.s32.f32 %v958
        %v991 = vcvt.s32.f32 %v959
        %v992 = vcvt.s32.f32 %v960
        %v993 = vcvt.s32.f32 %v961
        %v994 = vcvt.s32.f32 %v962
        %v995 = vcvt.s32.f32 %v963
        %v996 = vcvt.s32.f32 %v964
        %v997 = vcvt.s32.f32 %v965
        %v998 = vcvt.s32.f32 %v966
        %v999 = vcvt.s32.f32 %v967
        %v1000 = vcvt.s32.f32 %v968
        %v1001 = vcvt.s32.f32 %v969
        %v1002 = vcvt.s32.f32 %v970
        %v1003 = vcvt.s32.f32 %v971
        %v1004 = vcvt.s32.f32 %v972
        %v1005 = vcvt.s32.f32 %v973
        %v1006 = vcvt.s32.f32 %v974
        %v1007 = vcvt.s32.f32 %v975
        %v1008 = vcvt.s32.f32 %v976
        %v1009 = vcvt.s32.f32 %v977
        %v1010 = vcvt.s32.f32 %v978
        %v1011 = vcvt.s32.f32 %v979
        %v1012 = vcvt.s32.f32 %v980
        %v1013 = vcvt.s32.f32 %v981
        %v1014 = vcvt.s32.f32 %v982
        %v1015 = vcvt.s32.f32 %v983
        %v1016 = vcvt.s32.f32 %v984
        %v1017 = vld [vmem:[%s384] sm:$0xf]
        %v1018 = vld [vmem:[%s384 + $0x4] sm:$0xf]
        %v1019 = vld [vmem:[%s384 + $0x8] sm:$0xf]
        %v1020 = vld [vmem:[%s384 + $0xc] sm:$0xf]
        %v1021 = vld [vmem:[%s384 + $0x10] sm:$0xf]
        %v1022 = vld [vmem:[%s384 + $0x14] sm:$0xf]
        %v1023 = vld [vmem:[%s384 + $0x18] sm:$0xf]
        %v1024 = vld [vmem:[%s384 + $0x1c] sm:$0xf]
        %v1025 = vld [vmem:[%s384 + $0x20] sm:$0xf]
        %v1026 = vld [vmem:[%s384 + $0x24] sm:$0xf]
        %v1027 = vld [vmem:[%s384 + $0x28] sm:$0xf]
        %v1028 = vld [vmem:[%s384 + $0x2c] sm:$0xf]
        %v1029 = vld [vmem:[%s384 + $0x30] sm:$0xf]
        %v1030 = vld [vmem:[%s384 + $0x34] sm:$0xf]
        %v1031 = vld [vmem:[%s384 + $0x38] sm:$0xf]
        %v1032 = vld [vmem:[%s384 + $0x3c] sm:$0xf]
        %v1033 = vld [vmem:[%s384 + $0x40] sm:$0xf]
        %v1034 = vld [vmem:[%s384 + $0x44] sm:$0xf]
        %v1035 = vld [vmem:[%s384 + $0x48] sm:$0xf]
        %v1036 = vld [vmem:[%s384 + $0x4c] sm:$0xf]
        %v1037 = vld [vmem:[%s384 + $0x50] sm:$0xf]
        %v1038 = vld [vmem:[%s384 + $0x54] sm:$0xf]
        %v1039 = vld [vmem:[%s384 + $0x58] sm:$0xf]
        %v1040 = vld [vmem:[%s384 + $0x5c] sm:$0xf]
        %v1041 = vld [vmem:[%s384 + $0x60] sm:$0xf]
        %v1042 = vld [vmem:[%s384 + $0x64] sm:$0xf]
        %v1043 = vld [vmem:[%s384 + $0x68] sm:$0xf]
        %v1044 = vld [vmem:[%s384 + $0x6c] sm:$0xf]
        %v1045 = vld [vmem:[%s384 + $0x70] sm:$0xf]
        %v1046 = vld [vmem:[%s384 + $0x74] sm:$0xf]
        %v1047 = vld [vmem:[%s384 + $0x78] sm:$0xf]
        %v1048 = vld [vmem:[%s384 + $0x7c] sm:$0xf]
        %v1049 = vunpack.c.l.bf16 %v1017
        %v1050 = vunpack.c.l.bf16 %v1018
        %v1051 = vunpack.c.l.bf16 %v1019
        %v1052 = vunpack.c.l.bf16 %v1020
        %v1053 = vunpack.c.l.bf16 %v1021
        %v1054 = vunpack.c.l.bf16 %v1022
        %v1055 = vunpack.c.l.bf16 %v1023
        %v1056 = vunpack.c.l.bf16 %v1024
        %v1057 = vunpack.c.l.bf16 %v1025
        %v1058 = vunpack.c.l.bf16 %v1026
        %v1059 = vunpack.c.l.bf16 %v1027
        %v1060 = vunpack.c.l.bf16 %v1028
        %v1061 = vunpack.c.l.bf16 %v1029
        %v1062 = vunpack.c.l.bf16 %v1030
        %v1063 = vunpack.c.l.bf16 %v1031
        %v1064 = vunpack.c.l.bf16 %v1032
        %v1065 = vunpack.c.l.bf16 %v1033
        %v1066 = vunpack.c.l.bf16 %v1034
        %v1067 = vunpack.c.l.bf16 %v1035
        %v1068 = vunpack.c.l.bf16 %v1036
        %v1069 = vunpack.c.l.bf16 %v1037
        %v1070 = vunpack.c.l.bf16 %v1038
        %v1071 = vunpack.c.l.bf16 %v1039
        %v1072 = vunpack.c.l.bf16 %v1040
        %v1073 = vunpack.c.l.bf16 %v1041
        %v1074 = vunpack.c.l.bf16 %v1042
        %v1075 = vunpack.c.l.bf16 %v1043
        %v1076 = vunpack.c.l.bf16 %v1044
        %v1077 = vunpack.c.l.bf16 %v1045
        %v1078 = vunpack.c.l.bf16 %v1046
        %v1079 = vunpack.c.l.bf16 %v1047
        %v1080 = vunpack.c.l.bf16 %v1048
        %v1081 = vmul.f32 %v1049, %v889
        %v1082 = vmul.f32 %v1050, %v890
        %v1083 = vmul.f32 %v1051, %v891
        %v1084 = vmul.f32 %v1052, %v892
        %v1085 = vmul.f32 %v1053, %v893
        %v1086 = vmul.f32 %v1054, %v894
        %v1087 = vmul.f32 %v1055, %v895
        %v1088 = vmul.f32 %v1056, %v896
        %v1089 = vmul.f32 %v1057, %v897
        %v1090 = vmul.f32 %v1058, %v898
        %v1091 = vmul.f32 %v1059, %v899
        %v1092 = vmul.f32 %v1060, %v900
        %v1093 = vmul.f32 %v1061, %v901
        %v1094 = vmul.f32 %v1062, %v902
        %v1095 = vmul.f32 %v1063, %v903
        %v1096 = vmul.f32 %v1064, %v904
        %v1097 = vmul.f32 %v1065, %v905
        %v1098 = vmul.f32 %v1066, %v906
        %v1099 = vmul.f32 %v1067, %v907
        %v1100 = vmul.f32 %v1068, %v908
        %v1101 = vmul.f32 %v1069, %v909
        %v1102 = vmul.f32 %v1070, %v910
        %v1103 = vmul.f32 %v1071, %v911
        %v1104 = vmul.f32 %v1072, %v912
        %v1105 = vmul.f32 %v1073, %v913
        %v1106 = vmul.f32 %v1074, %v914
        %v1107 = vmul.f32 %v1075, %v915
        %v1108 = vmul.f32 %v1076, %v916
        %v1109 = vmul.f32 %v1077, %v917
        %v1110 = vmul.f32 %v1078, %v918
        %v1111 = vmul.f32 %v1079, %v919
        %v1112 = vmul.f32 %v1080, %v920
        %v1114 = vrot.slane %v1112, 7
        %vm1147 = vcmask 1040384
        %v1148 = vrot.slane %v1081, 7
        %v1149 = vrot.slane %v1082, 7
        %v1150 = vsel %vm1147, %v1148, %v1149
        %v1151 = vrot.slane %v1083, 7
        %v1152 = vsel %vm1147, %v1149, %v1151
        %v1153 = vrot.slane %v1084, 7
        %v1154 = vsel %vm1147, %v1151, %v1153
        %v1155 = vrot.slane %v1085, 7
        %v1156 = vsel %vm1147, %v1153, %v1155
        %v1157 = vrot.slane %v1086, 7
        %v1158 = vsel %vm1147, %v1155, %v1157
        %v1159 = vrot.slane %v1087, 7
        %v1160 = vsel %vm1147, %v1157, %v1159
        %v1161 = vrot.slane %v1088, 7
        %v1162 = vsel %vm1147, %v1159, %v1161
        %v1163 = vrot.slane %v1089, 7
        %v1164 = vsel %vm1147, %v1161, %v1163
        %v1165 = vrot.slane %v1090, 7
        %v1166 = vsel %vm1147, %v1163, %v1165
        %v1167 = vrot.slane %v1091, 7
        %v1168 = vsel %vm1147, %v1165, %v1167
        %v1169 = vrot.slane %v1092, 7
        %v1170 = vsel %vm1147, %v1167, %v1169
        %v1171 = vrot.slane %v1093, 7
        %v1172 = vsel %vm1147, %v1169, %v1171
        %v1173 = vrot.slane %v1094, 7
        %v1174 = vsel %vm1147, %v1171, %v1173
        %v1175 = vrot.slane %v1095, 7
        %v1176 = vsel %vm1147, %v1173, %v1175
        %v1177 = vrot.slane %v1096, 7
        %v1178 = vsel %vm1147, %v1175, %v1177
        %v1179 = vrot.slane %v1097, 7
        %v1180 = vsel %vm1147, %v1177, %v1179
        %v1181 = vrot.slane %v1098, 7
        %v1182 = vsel %vm1147, %v1179, %v1181
        %v1183 = vrot.slane %v1099, 7
        %v1184 = vsel %vm1147, %v1181, %v1183
        %v1185 = vrot.slane %v1100, 7
        %v1186 = vsel %vm1147, %v1183, %v1185
        %v1187 = vrot.slane %v1101, 7
        %v1188 = vsel %vm1147, %v1185, %v1187
        %v1189 = vrot.slane %v1102, 7
        %v1190 = vsel %vm1147, %v1187, %v1189
        %v1191 = vrot.slane %v1103, 7
        %v1192 = vsel %vm1147, %v1189, %v1191
        %v1193 = vrot.slane %v1104, 7
        %v1194 = vsel %vm1147, %v1191, %v1193
        %v1195 = vrot.slane %v1105, 7
        %v1196 = vsel %vm1147, %v1193, %v1195
        %v1197 = vrot.slane %v1106, 7
        %v1198 = vsel %vm1147, %v1195, %v1197
        %v1199 = vrot.slane %v1107, 7
        %v1200 = vsel %vm1147, %v1197, %v1199
        %v1201 = vrot.slane %v1108, 7
        %v1202 = vsel %vm1147, %v1199, %v1201
        %v1203 = vrot.slane %v1109, 7
        %v1204 = vsel %vm1147, %v1201, %v1203
        %v1205 = vrot.slane %v1110, 7
        %v1206 = vsel %vm1147, %v1203, %v1205
        %v1207 = vrot.slane %v1111, 7
        %v1208 = vsel %vm1147, %v1205, %v1207
        %v1209 = vsel %vm1147, %v1207, %v1114
        %v1242 = vsel %vm1147, %v1114, %v1148
        %v1243 = vmul.f32 %v1049, %v985
        %v1244 = vmul.f32 %v1050, %v986
        %v1245 = vmul.f32 %v1051, %v987
        %v1246 = vmul.f32 %v1052, %v988
        %v1247 = vmul.f32 %v1053, %v989
        %v1248 = vmul.f32 %v1054, %v990
        %v1249 = vmul.f32 %v1055, %v991
        %v1250 = vmul.f32 %v1056, %v992
        %v1251 = vmul.f32 %v1057, %v993
        %v1252 = vmul.f32 %v1058, %v994
        %v1253 = vmul.f32 %v1059, %v995
        %v1254 = vmul.f32 %v1060, %v996
        %v1255 = vmul.f32 %v1061, %v997
        %v1256 = vmul.f32 %v1062, %v998
        %v1257 = vmul.f32 %v1063, %v999
        %v1258 = vmul.f32 %v1064, %v1000
        %v1259 = vmul.f32 %v1065, %v1001
        %v1260 = vmul.f32 %v1066, %v1002
        %v1261 = vmul.f32 %v1067, %v1003
        %v1262 = vmul.f32 %v1068, %v1004
        %v1263 = vmul.f32 %v1069, %v1005
        %v1264 = vmul.f32 %v1070, %v1006
        %v1265 = vmul.f32 %v1071, %v1007
        %v1266 = vmul.f32 %v1072, %v1008
        %v1267 = vmul.f32 %v1073, %v1009
        %v1268 = vmul.f32 %v1074, %v1010
        %v1269 = vmul.f32 %v1075, %v1011
        %v1270 = vmul.f32 %v1076, %v1012
        %v1271 = vmul.f32 %v1077, %v1013
        %v1272 = vmul.f32 %v1078, %v1014
        %v1273 = vmul.f32 %v1079, %v1015
        %v1274 = vmul.f32 %v1080, %v1016
        %vm1307 = vcmask 1046528
        %v1308 = vrot.slane %v1243, 1
        %v1309 = vrot.slane %v1244, 1
        %v1310 = vsel %vm1307, %v1308, %v1309
        %v1311 = vrot.slane %v1245, 1
        %v1312 = vsel %vm1307, %v1309, %v1311
        %v1313 = vrot.slane %v1246, 1
        %v1314 = vsel %vm1307, %v1311, %v1313
        %v1315 = vrot.slane %v1247, 1
        %v1316 = vsel %vm1307, %v1313, %v1315
        %v1317 = vrot.slane %v1248, 1
        %v1318 = vsel %vm1307, %v1315, %v1317
        %v1319 = vrot.slane %v1249, 1
        %v1320 = vsel %vm1307, %v1317, %v1319
        %v1321 = vrot.slane %v1250, 1
        %v1322 = vsel %vm1307, %v1319, %v1321
        %v1323 = vrot.slane %v1251, 1
        %v1324 = vsel %vm1307, %v1321, %v1323
        %v1325 = vrot.slane %v1252, 1
        %v1326 = vsel %vm1307, %v1323, %v1325
        %v1327 = vrot.slane %v1253, 1
        %v1328 = vsel %vm1307, %v1325, %v1327
        %v1329 = vrot.slane %v1254, 1
        %v1330 = vsel %vm1307, %v1327, %v1329
        %v1331 = vrot.slane %v1255, 1
        %v1332 = vsel %vm1307, %v1329, %v1331
        %v1333 = vrot.slane %v1256, 1
        %v1334 = vsel %vm1307, %v1331, %v1333
        %v1335 = vrot.slane %v1257, 1
        %v1336 = vsel %vm1307, %v1333, %v1335
        %v1337 = vrot.slane %v1258, 1
        %v1338 = vsel %vm1307, %v1335, %v1337
        %v1339 = vrot.slane %v1259, 1
        %v1340 = vsel %vm1307, %v1337, %v1339
        %v1341 = vrot.slane %v1260, 1
        %v1342 = vsel %vm1307, %v1339, %v1341
        %v1343 = vrot.slane %v1261, 1
        %v1344 = vsel %vm1307, %v1341, %v1343
        %v1345 = vrot.slane %v1262, 1
        %v1346 = vsel %vm1307, %v1343, %v1345
        %v1347 = vrot.slane %v1263, 1
        %v1348 = vsel %vm1307, %v1345, %v1347
        %v1349 = vrot.slane %v1264, 1
        %v1350 = vsel %vm1307, %v1347, %v1349
        %v1351 = vrot.slane %v1265, 1
        %v1352 = vsel %vm1307, %v1349, %v1351
        %v1353 = vrot.slane %v1266, 1
        %v1354 = vsel %vm1307, %v1351, %v1353
        %v1355 = vrot.slane %v1267, 1
        %v1356 = vsel %vm1307, %v1353, %v1355
        %v1357 = vrot.slane %v1268, 1
        %v1358 = vsel %vm1307, %v1355, %v1357
        %v1359 = vrot.slane %v1269, 1
        %v1360 = vsel %vm1307, %v1357, %v1359
        %v1361 = vrot.slane %v1270, 1
        %v1362 = vsel %vm1307, %v1359, %v1361
        %v1363 = vrot.slane %v1271, 1
        %v1364 = vsel %vm1307, %v1361, %v1363
        %v1365 = vrot.slane %v1272, 1
        %v1366 = vsel %vm1307, %v1363, %v1365
        %v1367 = vrot.slane %v1273, 1
        %v1368 = vsel %vm1307, %v1365, %v1367
        %v1369 = vrot.slane %v1274, 1
        %v1370 = vsel %vm1307, %v1367, %v1369
        %v1404 = vsel %vm1307, %v1369, %v1308
        %v1405 = vpack.c.bf16 %v1242, %v1242
        %v1406 = vpack.c.bf16 %v1150, %v1150
        %v1407 = vpack.c.bf16 %v1152, %v1152
        %v1408 = vpack.c.bf16 %v1154, %v1154
        %v1409 = vpack.c.bf16 %v1156, %v1156
        %v1410 = vpack.c.bf16 %v1158, %v1158
        %v1411 = vpack.c.bf16 %v1160, %v1160
        %v1412 = vpack.c.bf16 %v1162, %v1162
        %v1413 = vpack.c.bf16 %v1164, %v1164
        %v1414 = vpack.c.bf16 %v1166, %v1166
        %v1415 = vpack.c.bf16 %v1168, %v1168
        %v1416 = vpack.c.bf16 %v1170, %v1170
        %v1417 = vpack.c.bf16 %v1172, %v1172
        %v1418 = vpack.c.bf16 %v1174, %v1174
        %v1419 = vpack.c.bf16 %v1176, %v1176
        %v1420 = vpack.c.bf16 %v1178, %v1178
        %v1421 = vpack.c.bf16 %v1180, %v1180
        %v1422 = vpack.c.bf16 %v1182, %v1182
        %v1423 = vpack.c.bf16 %v1184, %v1184
        %v1424 = vpack.c.bf16 %v1186, %v1186
        %v1425 = vpack.c.bf16 %v1188, %v1188
        %v1426 = vpack.c.bf16 %v1190, %v1190
        %v1427 = vpack.c.bf16 %v1192, %v1192
        %v1428 = vpack.c.bf16 %v1194, %v1194
        %v1429 = vpack.c.bf16 %v1196, %v1196
        %v1430 = vpack.c.bf16 %v1198, %v1198
        %v1431 = vpack.c.bf16 %v1200, %v1200
        %v1432 = vpack.c.bf16 %v1202, %v1202
        %v1433 = vpack.c.bf16 %v1204, %v1204
        %v1434 = vpack.c.bf16 %v1206, %v1206
        %v1435 = vpack.c.bf16 %v1208, %v1208
        %v1436 = vpack.c.bf16 %v1209, %v1209
        %vm1437 = vcmask 519168
        %1438 = vst.msk [vmem:[#allocation2 + $0x18] sm:$0xf] %vm1437, %v1405
        %1439 = vst.msk [vmem:[#allocation2 + $0x20] sm:$0xf] %vm1437, %v1406
        %1440 = vst.msk [vmem:[#allocation2 + $0x28] sm:$0xf] %vm1437, %v1407
        %1441 = vst.msk [vmem:[#allocation2 + $0x30] sm:$0xf] %vm1437, %v1408
        %1442 = vst.msk [vmem:[#allocation2 + $0x38] sm:$0xf] %vm1437, %v1409
        %1443 = vst.msk [vmem:[#allocation2 + $0x40] sm:$0xf] %vm1437, %v1410
        %1444 = vst.msk [vmem:[#allocation2 + $0x48] sm:$0xf] %vm1437, %v1411
        %1445 = vst.msk [vmem:[#allocation2 + $0x50] sm:$0xf] %vm1437, %v1412
        %1446 = vst.msk [vmem:[#allocation2 + $0x58] sm:$0xf] %vm1437, %v1413
        %1447 = vst.msk [vmem:[#allocation2 + $0x60] sm:$0xf] %vm1437, %v1414
        %1448 = vst.msk [vmem:[#allocation2 + $0x68] sm:$0xf] %vm1437, %v1415
        %1449 = vst.msk [vmem:[#allocation2 + $0x70] sm:$0xf] %vm1437, %v1416
        %1450 = vst.msk [vmem:[#allocation2 + $0x78] sm:$0xf] %vm1437, %v1417
        %1451 = vst.msk [vmem:[#allocation2 + $0x80] sm:$0xf] %vm1437, %v1418
        %1452 = vst.msk [vmem:[#allocation2 + $0x88] sm:$0xf] %vm1437, %v1419
        %1453 = vst.msk [vmem:[#allocation2 + $0x90] sm:$0xf] %vm1437, %v1420
        %1454 = vst.msk [vmem:[#allocation2 + $0x98] sm:$0xf] %vm1437, %v1421
        %1455 = vst.msk [vmem:[#allocation2 + $0xa0] sm:$0xf] %vm1437, %v1422
        %1456 = vst.msk [vmem:[#allocation2 + $0xa8] sm:$0xf] %vm1437, %v1423
        %1457 = vst.msk [vmem:[#allocation2 + $0xb0] sm:$0xf] %vm1437, %v1424
        %1458 = vst.msk [vmem:[#allocation2 + $0xb8] sm:$0xf] %vm1437, %v1425
        %1459 = vst.msk [vmem:[#allocation2 + $0xc0] sm:$0xf] %vm1437, %v1426
        %1460 = vst.msk [vmem:[#allocation2 + $0xc8] sm:$0xf] %vm1437, %v1427
        %1461 = vst.msk [vmem:[#allocation2 + $0xd0] sm:$0xf] %vm1437, %v1428
        %1462 = vst.msk [vmem:[#allocation2 + $0xd8] sm:$0xf] %vm1437, %v1429
        %1463 = vst.msk [vmem:[#allocation2 + $0xe0] sm:$0xf] %vm1437, %v1430
        %1464 = vst.msk [vmem:[#allocation2 + $0xe8] sm:$0xf] %vm1437, %v1431
        %1465 = vst.msk [vmem:[#allocation2 + $0xf0] sm:$0xf] %vm1437, %v1432
        %1466 = vst.msk [vmem:[#allocation2 + $0xf8] sm:$0xf] %vm1437, %v1433
        %1467 = vst.msk [vmem:[#allocation2 + $0x100] sm:$0xf] %vm1437, %v1434
        %1468 = vst.msk [vmem:[#allocation2 + $0x108] sm:$0xf] %vm1437, %v1435
        %1469 = vst.msk [vmem:[#allocation2 + $0x110] sm:$0xf] %vm1437, %v1436
        %1502 = vrot.lane.b32.xlu0 %v1017, 64
        %v1503 = vpop.permute.xlu0 %1502
        %1504 = vrot.lane.b32.xlu0 %v1018, 64
        %v1505 = vpop.permute.xlu0 %1504
        %1506 = vrot.lane.b32.xlu0 %v1019, 64
        %v1507 = vpop.permute.xlu0 %1506
        %1508 = vrot.lane.b32.xlu0 %v1020, 64
        %v1509 = vpop.permute.xlu0 %1508
        %1510 = vrot.lane.b32.xlu0 %v1021, 64
        %v1511 = vpop.permute.xlu0 %1510
        %1512 = vrot.lane.b32.xlu0 %v1022, 64
        %v1513 = vpop.permute.xlu0 %1512
        %1514 = vrot.lane.b32.xlu0 %v1023, 64
        %v1515 = vpop.permute.xlu0 %1514
        %1516 = vrot.lane.b32.xlu0 %v1024, 64
        %v1517 = vpop.permute.xlu0 %1516
        %1518 = vrot.lane.b32.xlu0 %v1025, 64
        %v1519 = vpop.permute.xlu0 %1518
        %1520 = vrot.lane.b32.xlu0 %v1026, 64
        %v1521 = vpop.permute.xlu0 %1520
        %1522 = vrot.lane.b32.xlu0 %v1027, 64
        %v1523 = vpop.permute.xlu0 %1522
        %1524 = vrot.lane.b32.xlu0 %v1028, 64
        %v1525 = vpop.permute.xlu0 %1524
        %1526 = vrot.lane.b32.xlu0 %v1029, 64
        %v1527 = vpop.permute.xlu0 %1526
        %1528 = vrot.lane.b32.xlu0 %v1030, 64
        %v1529 = vpop.permute.xlu0 %1528
        %1530 = vrot.lane.b32.xlu0 %v1031, 64
        %v1531 = vpop.permute.xlu0 %1530
        %1532 = vrot.lane.b32.xlu0 %v1032, 64
        %v1533 = vpop.permute.xlu0 %1532
        %1534 = vrot.lane.b32.xlu0 %v1033, 64
        %v1535 = vpop.permute.xlu0 %1534
        %1536 = vrot.lane.b32.xlu0 %v1034, 64
        %v1537 = vpop.permute.xlu0 %1536
        %1538 = vrot.lane.b32.xlu0 %v1035, 64
        %v1539 = vpop.permute.xlu0 %1538
        %1540 = vrot.lane.b32.xlu0 %v1036, 64
        %v1541 = vpop.permute.xlu0 %1540
        %1542 = vrot.lane.b32.xlu0 %v1037, 64
        %v1543 = vpop.permute.xlu0 %1542
        %1544 = vrot.lane.b32.xlu0 %v1038, 64
        %v1545 = vpop.permute.xlu0 %1544
        %1546 = vrot.lane.b32.xlu0 %v1039, 64
        %v1547 = vpop.permute.xlu0 %1546
        %1548 = vrot.lane.b32.xlu0 %v1040, 64
        %v1549 = vpop.permute.xlu0 %1548
        %1550 = vrot.lane.b32.xlu0 %v1041, 64
        %v1551 = vpop.permute.xlu0 %1550
        %1552 = vrot.lane.b32.xlu0 %v1042, 64
        %v1553 = vpop.permute.xlu0 %1552
        %1554 = vrot.lane.b32.xlu0 %v1043, 64
        %v1555 = vpop.permute.xlu0 %1554
        %1556 = vrot.lane.b32.xlu0 %v1044, 64
        %v1557 = vpop.permute.xlu0 %1556
        %1558 = vrot.lane.b32.xlu0 %v1045, 64
        %v1559 = vpop.permute.xlu0 %1558
        %1560 = vrot.lane.b32.xlu0 %v1046, 64
        %v1561 = vpop.permute.xlu0 %1560
        %1562 = vrot.lane.b32.xlu0 %v1047, 64
        %v1563 = vpop.permute.xlu0 %1562
        %1564 = vrot.lane.b32.xlu0 %v1048, 64
        %v1565 = vpop.permute.xlu0 %1564
        %vm1598 = vcmask 1043968
        %1599 = vst.msk [vmem:[#allocation2 + $0x18] sm:$0xf] %vm1598, %v1503
        %1600 = vst.msk [vmem:[#allocation2 + $0x20] sm:$0xf] %vm1598, %v1505
        %1601 = vst.msk [vmem:[#allocation2 + $0x28] sm:$0xf] %vm1598, %v1507
        %1602 = vst.msk [vmem:[#allocation2 + $0x30] sm:$0xf] %vm1598, %v1509
        %1603 = vst.msk [vmem:[#allocation2 + $0x38] sm:$0xf] %vm1598, %v1511
        %1604 = vst.msk [vmem:[#allocation2 + $0x40] sm:$0xf] %vm1598, %v1513
        %1605 = vst.msk [vmem:[#allocation2 + $0x48] sm:$0xf] %vm1598, %v1515
        %1606 = vst.msk [vmem:[#allocation2 + $0x50] sm:$0xf] %vm1598, %v1517
        %1607 = vst.msk [vmem:[#allocation2 + $0x58] sm:$0xf] %vm1598, %v1519
        %1608 = vst.msk [vmem:[#allocation2 + $0x60] sm:$0xf] %vm1598, %v1521
        %1609 = vst.msk [vmem:[#allocation2 + $0x68] sm:$0xf] %vm1598, %v1523
        %1610 = vst.msk [vmem:[#allocation2 + $0x70] sm:$0xf] %vm1598, %v1525
        %1611 = vst.msk [vmem:[#allocation2 + $0x78] sm:$0xf] %vm1598, %v1527
        %1612 = vst.msk [vmem:[#allocation2 + $0x80] sm:$0xf] %vm1598, %v1529
        %1613 = vst.msk [vmem:[#allocation2 + $0x88] sm:$0xf] %vm1598, %v1531
        %1614 = vst.msk [vmem:[#allocation2 + $0x90] sm:$0xf] %vm1598, %v1533
        %1615 = vst.msk [vmem:[#allocation2 + $0x98] sm:$0xf] %vm1598, %v1535
        %1616 = vst.msk [vmem:[#allocation2 + $0xa0] sm:$0xf] %vm1598, %v1537
        %1617 = vst.msk [vmem:[#allocation2 + $0xa8] sm:$0xf] %vm1598, %v1539
        %1618 = vst.msk [vmem:[#allocation2 + $0xb0] sm:$0xf] %vm1598, %v1541
        %1619 = vst.msk [vmem:[#allocation2 + $0xb8] sm:$0xf] %vm1598, %v1543
        %1620 = vst.msk [vmem:[#allocation2 + $0xc0] sm:$0xf] %vm1598, %v1545
        %1621 = vst.msk [vmem:[#allocation2 + $0xc8] sm:$0xf] %vm1598, %v1547
        %1622 = vst.msk [vmem:[#allocation2 + $0xd0] sm:$0xf] %vm1598, %v1549
        %1623 = vst.msk [vmem:[#allocation2 + $0xd8] sm:$0xf] %vm1598, %v1551
        %1624 = vst.msk [vmem:[#allocation2 + $0xe0] sm:$0xf] %vm1598, %v1553
        %1625 = vst.msk [vmem:[#allocation2 + $0xe8] sm:$0xf] %vm1598, %v1555
        %1626 = vst.msk [vmem:[#allocation2 + $0xf0] sm:$0xf] %vm1598, %v1557
        %1627 = vst.msk [vmem:[#allocation2 + $0xf8] sm:$0xf] %vm1598, %v1559
        %1628 = vst.msk [vmem:[#allocation2 + $0x100] sm:$0xf] %vm1598, %v1561
        %1629 = vst.msk [vmem:[#allocation2 + $0x108] sm:$0xf] %vm1598, %v1563
        %1630 = vst.msk [vmem:[#allocation2 + $0x110] sm:$0xf] %vm1598, %v1565
        %v1631 = vpack.c.bf16 %v1310, %v1310
        %v1632 = vpack.c.bf16 %v1312, %v1312
        %v1633 = vpack.c.bf16 %v1314, %v1314
        %v1634 = vpack.c.bf16 %v1316, %v1316
        %v1635 = vpack.c.bf16 %v1318, %v1318
        %v1636 = vpack.c.bf16 %v1320, %v1320
        %v1637 = vpack.c.bf16 %v1322, %v1322
        %v1638 = vpack.c.bf16 %v1324, %v1324
        %v1639 = vpack.c.bf16 %v1326, %v1326
        %v1640 = vpack.c.bf16 %v1328, %v1328
        %v1641 = vpack.c.bf16 %v1330, %v1330
        %v1642 = vpack.c.bf16 %v1332, %v1332
        %v1643 = vpack.c.bf16 %v1334, %v1334
        %v1644 = vpack.c.bf16 %v1336, %v1336
        %v1645 = vpack.c.bf16 %v1338, %v1338
        %v1646 = vpack.c.bf16 %v1340, %v1340
        %v1647 = vpack.c.bf16 %v1342, %v1342
        %v1648 = vpack.c.bf16 %v1344, %v1344
        %v1649 = vpack.c.bf16 %v1346, %v1346
        %v1650 = vpack.c.bf16 %v1348, %v1348
        %v1651 = vpack.c.bf16 %v1350, %v1350
        %v1652 = vpack.c.bf16 %v1352, %v1352
        %v1653 = vpack.c.bf16 %v1354, %v1354
        %v1654 = vpack.c.bf16 %v1356, %v1356
        %v1655 = vpack.c.bf16 %v1358, %v1358
        %v1656 = vpack.c.bf16 %v1360, %v1360
        %v1657 = vpack.c.bf16 %v1362, %v1362
        %v1658 = vpack.c.bf16 %v1364, %v1364
        %v1659 = vpack.c.bf16 %v1366, %v1366
        %v1660 = vpack.c.bf16 %v1368, %v1368
        %v1661 = vpack.c.bf16 %v1370, %v1370
        %v1662 = vpack.c.bf16 %v1404, %v1404
        %1663 = vst.msk [vmem:[#allocation2 + $0x1c] sm:$0xf] %vm1437, %v1631
        %1664 = vst.msk [vmem:[#allocation2 + $0x24] sm:$0xf] %vm1437, %v1632
        %1665 = vst.msk [vmem:[#allocation2 + $0x2c] sm:$0xf] %vm1437, %v1633
        %1666 = vst.msk [vmem:[#allocation2 + $0x34] sm:$0xf] %vm1437, %v1634
        %1667 = vst.msk [vmem:[#allocation2 + $0x3c] sm:$0xf] %vm1437, %v1635
        %1668 = vst.msk [vmem:[#allocation2 + $0x44] sm:$0xf] %vm1437, %v1636
        %1669 = vst.msk [vmem:[#allocation2 + $0x4c] sm:$0xf] %vm1437, %v1637
        %1670 = vst.msk [vmem:[#allocation2 + $0x54] sm:$0xf] %vm1437, %v1638
        %1671 = vst.msk [vmem:[#allocation2 + $0x5c] sm:$0xf] %vm1437, %v1639
        %1672 = vst.msk [vmem:[#allocation2 + $0x64] sm:$0xf] %vm1437, %v1640
        %1673 = vst.msk [vmem:[#allocation2 + $0x6c] sm:$0xf] %vm1437, %v1641
        %1674 = vst.msk [vmem:[#allocation2 + $0x74] sm:$0xf] %vm1437, %v1642
        %1675 = vst.msk [vmem:[#allocation2 + $0x7c] sm:$0xf] %vm1437, %v1643
        %1676 = vst.msk [vmem:[#allocation2 + $0x84] sm:$0xf] %vm1437, %v1644
        %1677 = vst.msk [vmem:[#allocation2 + $0x8c] sm:$0xf] %vm1437, %v1645
        %1678 = vst.msk [vmem:[#allocation2 + $0x94] sm:$0xf] %vm1437, %v1646
        %1679 = vst.msk [vmem:[#allocation2 + $0x9c] sm:$0xf] %vm1437, %v1647
        %1680 = vst.msk [vmem:[#allocation2 + $0xa4] sm:$0xf] %vm1437, %v1648
        %1681 = vst.msk [vmem:[#allocation2 + $0xac] sm:$0xf] %vm1437, %v1649
        %1682 = vst.msk [vmem:[#allocation2 + $0xb4] sm:$0xf] %vm1437, %v1650
        %1683 = vst.msk [vmem:[#allocation2 + $0xbc] sm:$0xf] %vm1437, %v1651
        %1684 = vst.msk [vmem:[#allocation2 + $0xc4] sm:$0xf] %vm1437, %v1652
        %1685 = vst.msk [vmem:[#allocation2 + $0xcc] sm:$0xf] %vm1437, %v1653
        %1686 = vst.msk [vmem:[#allocation2 + $0xd4] sm:$0xf] %vm1437, %v1654
        %1687 = vst.msk [vmem:[#allocation2 + $0xdc] sm:$0xf] %vm1437, %v1655
        %1688 = vst.msk [vmem:[#allocation2 + $0xe4] sm:$0xf] %vm1437, %v1656
        %1689 = vst.msk [vmem:[#allocation2 + $0xec] sm:$0xf] %vm1437, %v1657
        %1690 = vst.msk [vmem:[#allocation2 + $0xf4] sm:$0xf] %vm1437, %v1658
        %1691 = vst.msk [vmem:[#allocation2 + $0xfc] sm:$0xf] %vm1437, %v1659
        %1692 = vst.msk [vmem:[#allocation2 + $0x104] sm:$0xf] %vm1437, %v1660
        %1693 = vst.msk [vmem:[#allocation2 + $0x10c] sm:$0xf] %vm1437, %v1661
        %1694 = vst.msk [vmem:[#allocation2 + $0x114] sm:$0xf] %vm1437, %v1662
        %v1695 = vld [vmem:[#allocation2 + $0x8] sm:$0xff]
        %v1696 = vld [vmem:[#allocation2 + $0x10] sm:$0xff]
        %v1697 = vld [vmem:[#allocation2 + $0x18] sm:$0xff]
        %v1698 = vld [vmem:[#allocation2 + $0x20] sm:$0xff]
        %v1699 = vld [vmem:[#allocation2 + $0x28] sm:$0xff]
        %v1700 = vld [vmem:[#allocation2 + $0x30] sm:$0xff]
        %v1701 = vld [vmem:[#allocation2 + $0x38] sm:$0xff]
        %v1702 = vld [vmem:[#allocation2 + $0x40] sm:$0xff]
        %v1703 = vld [vmem:[#allocation2 + $0x48] sm:$0xff]
        %v1704 = vld [vmem:[#allocation2 + $0x50] sm:$0xff]
        %v1705 = vld [vmem:[#allocation2 + $0x58] sm:$0xff]
        %v1706 = vld [vmem:[#allocation2 + $0x60] sm:$0xff]
        %v1707 = vld [vmem:[#allocation2 + $0x68] sm:$0xff]
        %v1708 = vld [vmem:[#allocation2 + $0x70] sm:$0xff]
        %v1709 = vld [vmem:[#allocation2 + $0x78] sm:$0xff]
        %v1710 = vld [vmem:[#allocation2 + $0x80] sm:$0xff]
        %v1711 = vld [vmem:[#allocation2 + $0x88] sm:$0xff]
        %v1712 = vld [vmem:[#allocation2 + $0x90] sm:$0xff]
        %v1713 = vld [vmem:[#allocation2 + $0x98] sm:$0xff]
        %v1714 = vld [vmem:[#allocation2 + $0xa0] sm:$0xff]
        %v1715 = vld [vmem:[#allocation2 + $0xa8] sm:$0xff]
        %v1716 = vld [vmem:[#allocation2 + $0xb0] sm:$0xff]
        %v1717 = vld [vmem:[#allocation2 + $0xb8] sm:$0xff]
        %v1718 = vld [vmem:[#allocation2 + $0xc0] sm:$0xff]
        %v1719 = vld [vmem:[#allocation2 + $0xc8] sm:$0xff]
        %v1720 = vld [vmem:[#allocation2 + $0xd0] sm:$0xff]
        %v1721 = vld [vmem:[#allocation2 + $0xd8] sm:$0xff]
        %v1722 = vld [vmem:[#allocation2 + $0xe0] sm:$0xff]
        %v1723 = vld [vmem:[#allocation2 + $0xe8] sm:$0xff]
        %v1724 = vld [vmem:[#allocation2 + $0xf0] sm:$0xff]
        %v1725 = vld [vmem:[#allocation2 + $0xf8] sm:$0xff]
        %v1726 = vld [vmem:[#allocation2 + $0x100] sm:$0xff]
        %v1727 = vld [vmem:[%s1] sm:$0xf]
        %v1728 = vld [vmem:[%s1 + $0x4] sm:$0xf]
        %v1729 = vld [vmem:[%s1 + $0x8] sm:$0xf]
        %v1730 = vld [vmem:[%s1 + $0xc] sm:$0xf]
        %v1731 = vld [vmem:[%s1 + $0x10] sm:$0xf]
        %v1732 = vld [vmem:[%s1 + $0x14] sm:$0xf]
        %v1733 = vld [vmem:[%s1 + $0x18] sm:$0xf]
        %v1734 = vld [vmem:[%s1 + $0x1c] sm:$0xf]
        %v1735 = vld [vmem:[%s1 + $0x20] sm:$0xf]
        %v1736 = vld [vmem:[%s1 + $0x24] sm:$0xf]
        %v1737 = vld [vmem:[%s1 + $0x28] sm:$0xf]
        %v1738 = vld [vmem:[%s1 + $0x2c] sm:$0xf]
        %v1739 = vld [vmem:[%s1 + $0x30] sm:$0xf]
        %v1740 = vld [vmem:[%s1 + $0x34] sm:$0xf]
        %v1741 = vld [vmem:[%s1 + $0x38] sm:$0xf]
        %v1742 = vld [vmem:[%s1 + $0x3c] sm:$0xf]
        %v1743 = vld [vmem:[%s1 + $0x40] sm:$0xf]
        %v1744 = vld [vmem:[%s1 + $0x44] sm:$0xf]
        %v1745 = vld [vmem:[%s1 + $0x48] sm:$0xf]
        %v1746 = vld [vmem:[%s1 + $0x4c] sm:$0xf]
        %v1747 = vld [vmem:[%s1 + $0x50] sm:$0xf]
        %v1748 = vld [vmem:[%s1 + $0x54] sm:$0xf]
        %v1749 = vld [vmem:[%s1 + $0x58] sm:$0xf]
        %v1750 = vld [vmem:[%s1 + $0x5c] sm:$0xf]
        %v1751 = vld [vmem:[#allocation2 + $0x108] sm:$0xff]
        %v1752 = vld [vmem:[#allocation2 + $0x110] sm:$0xff]
        %s1753 = scalar_lea.vmem %s1, 96
        %v1754 = vld [vmem:[%s1753] sm:$0xf]
        %v1755 = vld [vmem:[%s1753 + $0x4] sm:$0xf]
        %v1756 = vld [vmem:[%s1753 + $0x8] sm:$0xf]
        %v1757 = vld [vmem:[%s1753 + $0xc] sm:$0xf]
        %v1758 = vld [vmem:[%s1753 + $0x10] sm:$0xf]
        %v1759 = vld [vmem:[%s1753 + $0x14] sm:$0xf]
        %v1760 = vld [vmem:[%s1753 + $0x18] sm:$0xf]
        %v1761 = vld [vmem:[%s1753 + $0x1c] sm:$0xf]
        %v1762 = vld [vmem:[%s1753 + $0x20] sm:$0xf]
        %v1763 = vld [vmem:[%s1753 + $0x24] sm:$0xf]
        %v1764 = vld [vmem:[%s1753 + $0x28] sm:$0xf]
        %v1765 = vld [vmem:[%s1753 + $0x2c] sm:$0xf]
        %v1766 = vld [vmem:[%s1753 + $0x30] sm:$0xf]
        %v1767 = vld [vmem:[%s1753 + $0x34] sm:$0xf]
        %v1768 = vld [vmem:[%s1753 + $0x38] sm:$0xf]
        %v1769 = vld [vmem:[%s1753 + $0x3c] sm:$0xf]
        %v1770 = vld [vmem:[%s1753 + $0x40] sm:$0xf]
        %v1771 = vld [vmem:[%s1753 + $0x44] sm:$0xf]
        %v1772 = vld [vmem:[%s1753 + $0x48] sm:$0xf]
        %v1773 = vld [vmem:[%s1753 + $0x4c] sm:$0xf]
        %v1774 = vld [vmem:[%s1753 + $0x50] sm:$0xf]
        %v1775 = vld [vmem:[%s1753 + $0x54] sm:$0xf]
        %v1776 = vld [vmem:[%s1753 + $0x58] sm:$0xf]
        %v1777 = vld [vmem:[%s1753 + $0x5c] sm:$0xf]
        %v1810 = vunpack.c.l.b16 %v1697
        %v1811 = vunpack.c.h.b16 %v1697
        %v1812 = vunpack.c.l.b16 %v1698
        %v1813 = vunpack.c.h.b16 %v1698
        %v1814 = vunpack.c.l.b16 %v1699
        %v1815 = vunpack.c.h.b16 %v1699
        %v1816 = vunpack.c.l.b16 %v1700
        %v1817 = vunpack.c.h.b16 %v1700
        %v1818 = vunpack.c.l.b16 %v1701
        %v1819 = vunpack.c.h.b16 %v1701
        %v1820 = vunpack.c.l.b16 %v1702
        %v1821 = vunpack.c.h.b16 %v1702
        %v1822 = vunpack.c.l.b16 %v1703
        %v1823 = vunpack.c.h.b16 %v1703
        %v1824 = vunpack.c.l.b16 %v1704
        %v1825 = vunpack.c.h.b16 %v1704
        %v1826 = vunpack.c.l.b16 %v1705
        %v1827 = vunpack.c.h.b16 %v1705
        %v1828 = vunpack.c.l.b16 %v1706
        %v1829 = vunpack.c.h.b16 %v1706
        %v1830 = vunpack.c.l.b16 %v1707
        %v1831 = vunpack.c.h.b16 %v1707
        %v1832 = vunpack.c.l.b16 %v1708
        %v1833 = vunpack.c.h.b16 %v1708
        %v1834 = vunpack.c.l.b16 %v1709
        %v1835 = vunpack.c.h.b16 %v1709
        %v1836 = vunpack.c.l.b16 %v1710
        %v1837 = vunpack.c.h.b16 %v1710
        %v1838 = vunpack.c.l.b16 %v1711
        %v1839 = vunpack.c.h.b16 %v1711
        %v1840 = vunpack.c.l.b16 %v1712
        %v1841 = vunpack.c.h.b16 %v1712
        %v1842 = vunpack.c.l.b16 %v1713
        %v1843 = vunpack.c.h.b16 %v1713
        %v1844 = vunpack.c.l.b16 %v1714
        %v1845 = vunpack.c.h.b16 %v1714
        %v1846 = vunpack.c.l.b16 %v1715
        %v1847 = vunpack.c.h.b16 %v1715
        %v1848 = vunpack.c.l.b16 %v1716
        %v1849 = vunpack.c.h.b16 %v1716
        %v1850 = vunpack.c.l.b16 %v1717
        %v1851 = vunpack.c.h.b16 %v1717
        %v1852 = vunpack.c.l.b16 %v1718
        %v1853 = vunpack.c.h.b16 %v1718
        %v1854 = vunpack.c.l.b16 %v1719
        %v1855 = vunpack.c.h.b16 %v1719
        %v1856 = vunpack.c.l.b16 %v1720
        %v1857 = vunpack.c.h.b16 %v1720
        %v1858 = vunpack.c.l.b16 %v1721
        %v1859 = vunpack.c.h.b16 %v1721
        %v1860 = vunpack.c.l.b16 %v1722
        %v1861 = vunpack.c.h.b16 %v1722
        %v1862 = vunpack.c.l.b16 %v1723
        %v1863 = vunpack.c.h.b16 %v1723
        %v1864 = vunpack.c.l.b16 %v1724
        %v1865 = vunpack.c.h.b16 %v1724
        %v1866 = vunpack.c.l.b16 %v1725
        %v1867 = vunpack.c.h.b16 %v1725
        %v1868 = vunpack.c.l.b16 %v1726
        %v1869 = vunpack.c.h.b16 %v1726
        %v1870 = vunpack.c.l.b16 %v1751
        %v1871 = vunpack.c.h.b16 %v1751
        %v1872 = vunpack.c.l.b16 %v1752
        %v1873 = vunpack.c.h.b16 %v1752
        %v1874 = vpack.c.b16 %v1812, %v1810
        %v1875 = vpack.c.b16 %v1813, %v1811
        %v1876 = vpack.c.b16 %v1816, %v1814
        %v1877 = vpack.c.b16 %v1817, %v1815
        %v1878 = vpack.c.b16 %v1820, %v1818
        %v1879 = vpack.c.b16 %v1821, %v1819
        %v1880 = vpack.c.b16 %v1824, %v1822
        %v1881 = vpack.c.b16 %v1825, %v1823
        %v1882 = vpack.c.b16 %v1828, %v1826
        %v1883 = vpack.c.b16 %v1829, %v1827
        %v1884 = vpack.c.b16 %v1832, %v1830
        %v1885 = vpack.c.b16 %v1833, %v1831
        %v1886 = vpack.c.b16 %v1836, %v1834
        %v1887 = vpack.c.b16 %v1837, %v1835
        %v1888 = vpack.c.b16 %v1840, %v1838
        %v1889 = vpack.c.b16 %v1841, %v1839
        %v1890 = vpack.c.b16 %v1844, %v1842
        %v1891 = vpack.c.b16 %v1845, %v1843
        %v1892 = vpack.c.b16 %v1848, %v1846
        %v1893 = vpack.c.b16 %v1849, %v1847
        %v1894 = vpack.c.b16 %v1852, %v1850
        %v1895 = vpack.c.b16 %v1853, %v1851
        %v1896 = vpack.c.b16 %v1856, %v1854
        %v1897 = vpack.c.b16 %v1857, %v1855
        %v1898 = vpack.c.b16 %v1860, %v1858
        %v1899 = vpack.c.b16 %v1861, %v1859
        %v1900 = vpack.c.b16 %v1864, %v1862
        %v1901 = vpack.c.b16 %v1865, %v1863
        %v1902 = vpack.c.b16 %v1868, %v1866
        %v1903 = vpack.c.b16 %v1869, %v1867
        %v1904 = vpack.c.b16 %v1872, %v1870
        %v1905 = vpack.c.b16 %v1873, %v1871
        %v1946 = vunpack.c.l.b16 %v1754
        %v1947 = vunpack.c.l.b16 %v1755
        %v1948 = vunpack.c.l.b16 %v1756
        %v1949 = vunpack.c.l.b16 %v1757
        %v1950 = vunpack.c.l.b16 %v1758
        %v1951 = vunpack.c.l.b16 %v1759
        %v1952 = vunpack.c.l.b16 %v1760
        %v1953 = vunpack.c.l.b16 %v1761
        %v1954 = vunpack.c.l.b16 %v1762
        %v1955 = vunpack.c.l.b16 %v1763
        %v1956 = vunpack.c.l.b16 %v1764
        %v1957 = vunpack.c.l.b16 %v1765
        %v1958 = vunpack.c.l.b16 %v1766
        %v1959 = vunpack.c.l.b16 %v1767
        %v1960 = vunpack.c.l.b16 %v1768
        %v1961 = vunpack.c.l.b16 %v1769
        %v1962 = vunpack.c.l.b16 %v1770
        %v1963 = vunpack.c.l.b16 %v1771
        %v1964 = vunpack.c.l.b16 %v1772
        %v1965 = vunpack.c.l.b16 %v1773
        %v1966 = vunpack.c.l.b16 %v1774
        %v1967 = vunpack.c.l.b16 %v1775
        %v1968 = vunpack.c.l.b16 %v1776
        %v1969 = vunpack.c.l.b16 %v1777
        %v1970 = vpack.c.b16 %v1947, %v1946
        %v1971 = vpack.c.b16 %v1949, %v1948
        %v1972 = vpack.c.b16 %v1951, %v1950
        %v1973 = vpack.c.b16 %v1953, %v1952
        %v1974 = vpack.c.b16 %v1955, %v1954
        %v1975 = vpack.c.b16 %v1957, %v1956
        %v1976 = vpack.c.b16 %v1959, %v1958
        %v1977 = vpack.c.b16 %v1961, %v1960
        %v1978 = vpack.c.b16 %v1963, %v1962
        %v1979 = vpack.c.b16 %v1965, %v1964
        %v1980 = vpack.c.b16 %v1967, %v1966
        %v1981 = vpack.c.b16 %v1969, %v1968
        %vm1994 = vcmask 523264
        %v1996 = vsel %vm1994, %v1875, 0
        %v1999 = vsel %vm1994, %v1877, 0
        %v2002 = vsel %vm1994, %v1879, 0
        %v2005 = vsel %vm1994, %v1881, 0
        %v2008 = vsel %vm1994, %v1883, 0
        %v2011 = vsel %vm1994, %v1885, 0
        %v2014 = vsel %vm1994, %v1887, 0
        %v2017 = vsel %vm1994, %v1889, 0
        %v2020 = vsel %vm1994, %v1891, 0
        %v2023 = vsel %vm1994, %v1893, 0
        %v2026 = vsel %vm1994, %v1895, 0
        %v2029 = vsel %vm1994, %v1897, 0
        %v2032 = vsel %vm1994, %v1899, 0
        %v2035 = vsel %vm1994, %v1901, 0
        %v2038 = vsel %vm1994, %v1903, 0
        %v2041 = vsel %vm1994, %v1905, 0
        %2043 = vmatpush.bf16.msra.mxu0 %v1977
        %2044 = vmatpush.bf16.msra.mxu0 %v1976
        %2045 = vmatpush.bf16.msra.mxu0 %v1975
        %2046 = vmatpush.bf16.msra.mxu0 %v1974
        %2047 = vmatpush.bf16.msra.mxu0 %v1973
        %2048 = vmatpush.bf16.msra.mxu0 %v1972
        %2049 = vmatpush.bf16.msra.mxu0 %v1971
        %2050 = vmatpush.bf16.msra.mxu0 %v1970
        %2051 = vmatmul.bf16.gmra.mxu0 %v1874
        %v2052 = vpop.f32.mrf.mxu0
        %v2053 = vadd.f32 0.0, %v2052
        %v2054 = vpop.f32.mrf.mxu0
        %v2055 = vadd.f32 0.0, %v2054
        %2056 = vmatmul.bf16.gmra.mxu0 %v1876
        %v2057 = vpop.f32.mrf.mxu0
        %v2058 = vadd.f32 0.0, %v2057
        %v2059 = vpop.f32.mrf.mxu0
        %v2060 = vadd.f32 0.0, %v2059
        %2061 = vmatmul.bf16.gmra.mxu0 %v1878
        %v2062 = vpop.f32.mrf.mxu0
        %v2063 = vadd.f32 0.0, %v2062
        %v2064 = vpop.f32.mrf.mxu0
        %v2065 = vadd.f32 0.0, %v2064
        %2066 = vmatmul.bf16.gmra.mxu0 %v1880
        %v2067 = vpop.f32.mrf.mxu0
        %v2068 = vadd.f32 0.0, %v2067
        %v2069 = vpop.f32.mrf.mxu0
        %v2070 = vadd.f32 0.0, %v2069
        %2071 = vmatmul.bf16.gmra.mxu0 %v1882
        %v2072 = vpop.f32.mrf.mxu0
        %v2073 = vadd.f32 0.0, %v2072
        %v2074 = vpop.f32.mrf.mxu0
        %v2075 = vadd.f32 0.0, %v2074
        %2076 = vmatmul.bf16.gmra.mxu0 %v1884
        %v2077 = vpop.f32.mrf.mxu0
        %v2078 = vadd.f32 0.0, %v2077
        %v2079 = vpop.f32.mrf.mxu0
        %v2080 = vadd.f32 0.0, %v2079
        %2081 = vmatmul.bf16.gmra.mxu0 %v1886
        %v2082 = vpop.f32.mrf.mxu0
        %v2083 = vadd.f32 0.0, %v2082
        %v2084 = vpop.f32.mrf.mxu0
        %v2085 = vadd.f32 0.0, %v2084
        %2086 = vmatmul.bf16.gmra.mxu0 %v1888
        %v2087 = vpop.f32.mrf.mxu0
        %v2088 = vadd.f32 0.0, %v2087
        %v2089 = vpop.f32.mrf.mxu0
        %v2090 = vadd.f32 0.0, %v2089
        %2091 = vmatmul.bf16.gmra.mxu0 %v1890
        %v2092 = vpop.f32.mrf.mxu0
        %v2093 = vadd.f32 0.0, %v2092
        %v2094 = vpop.f32.mrf.mxu0
        %v2095 = vadd.f32 0.0, %v2094
        %2096 = vmatmul.bf16.gmra.mxu0 %v1892
        %v2097 = vpop.f32.mrf.mxu0
        %v2098 = vadd.f32 0.0, %v2097
        %v2099 = vpop.f32.mrf.mxu0
        %v2100 = vadd.f32 0.0, %v2099
        %2101 = vmatmul.bf16.gmra.mxu0 %v1894
        %v2102 = vpop.f32.mrf.mxu0
        %v2103 = vadd.f32 0.0, %v2102
        %v2104 = vpop.f32.mrf.mxu0
        %v2105 = vadd.f32 0.0, %v2104
        %2106 = vmatmul.bf16.gmra.mxu0 %v1896
        %v2107 = vpop.f32.mrf.mxu0
        %v2108 = vadd.f32 0.0, %v2107
        %v2109 = vpop.f32.mrf.mxu0
        %v2110 = vadd.f32 0.0, %v2109
        %2111 = vmatmul.bf16.gmra.mxu0 %v1898
        %v2112 = vpop.f32.mrf.mxu0
        %v2113 = vadd.f32 0.0, %v2112
        %v2114 = vpop.f32.mrf.mxu0
        %v2115 = vadd.f32 0.0, %v2114
        %2116 = vmatmul.bf16.gmra.mxu0 %v1900
        %v2117 = vpop.f32.mrf.mxu0
        %v2118 = vadd.f32 0.0, %v2117
        %v2119 = vpop.f32.mrf.mxu0
        %v2120 = vadd.f32 0.0, %v2119
        %2121 = vmatmul.bf16.gmra.mxu0 %v1902
        %v2122 = vpop.f32.mrf.mxu0
        %v2123 = vadd.f32 0.0, %v2122
        %v2124 = vpop.f32.mrf.mxu0
        %v2125 = vadd.f32 0.0, %v2124
        %2126 = vmatmul.bf16.gmra.mxu0 %v1904
        %v2127 = vpop.f32.mrf.mxu0
        %v2128 = vadd.f32 0.0, %v2127
        %v2129 = vpop.f32.mrf.mxu0
        %v2130 = vadd.f32 0.0, %v2129
        %2131 = vdwg.mxu0
        %2132 = vmatpush.bf16.msra.mxu0 0
        %2133 = vmatpush.bf16.msra.mxu0 0
        %2134 = vmatpush.bf16.msra.mxu0 0
        %2135 = vmatpush.bf16.msra.mxu0 0
        %2136 = vmatpush.bf16.msra.mxu0 %v1981
        %2137 = vmatpush.bf16.msra.mxu0 %v1980
        %2138 = vmatpush.bf16.msra.mxu0 %v1979
        %2139 = vmatpush.bf16.msra.mxu0 %v1978
        %2140 = vmatmul.bf16.gmra.mxu0 %v1996
        %v2141 = vpop.f32.mrf.mxu0
        %v2142 = vadd.f32 %v2053, %v2141
        %v2143 = vpop.f32.mrf.mxu0
        %v2144 = vadd.f32 %v2055, %v2143
        %2145 = vmatmul.bf16.gmra.mxu0 %v1999
        %v2146 = vpop.f32.mrf.mxu0
        %v2147 = vadd.f32 %v2058, %v2146
        %v2148 = vpop.f32.mrf.mxu0
        %v2149 = vadd.f32 %v2060, %v2148
        %2150 = vmatmul.bf16.gmra.mxu0 %v2002
        %v2151 = vpop.f32.mrf.mxu0
        %v2152 = vadd.f32 %v2063, %v2151
        %v2153 = vpop.f32.mrf.mxu0
        %v2154 = vadd.f32 %v2065, %v2153
        %2155 = vmatmul.bf16.gmra.mxu0 %v2005
        %v2156 = vpop.f32.mrf.mxu0
        %v2157 = vadd.f32 %v2068, %v2156
        %v2158 = vpop.f32.mrf.mxu0
        %v2159 = vadd.f32 %v2070, %v2158
        %2160 = vmatmul.bf16.gmra.mxu0 %v2008
        %v2161 = vpop.f32.mrf.mxu0
        %v2162 = vadd.f32 %v2073, %v2161
        %v2163 = vpop.f32.mrf.mxu0
        %v2164 = vadd.f32 %v2075, %v2163
        %2165 = vmatmul.bf16.gmra.mxu0 %v2011
        %v2166 = vpop.f32.mrf.mxu0
        %v2167 = vadd.f32 %v2078, %v2166
        %v2168 = vpop.f32.mrf.mxu0
        %v2169 = vadd.f32 %v2080, %v2168
        %2170 = vmatmul.bf16.gmra.mxu0 %v2014
        %v2171 = vpop.f32.mrf.mxu0
        %v2172 = vadd.f32 %v2083, %v2171
        %v2173 = vpop.f32.mrf.mxu0
        %v2174 = vadd.f32 %v2085, %v2173
        %2175 = vmatmul.bf16.gmra.mxu0 %v2017
        %v2176 = vpop.f32.mrf.mxu0
        %v2177 = vadd.f32 %v2088, %v2176
        %v2178 = vpop.f32.mrf.mxu0
        %v2179 = vadd.f32 %v2090, %v2178
        %2180 = vmatmul.bf16.gmra.mxu0 %v2020
        %v2181 = vpop.f32.mrf.mxu0
        %v2182 = vadd.f32 %v2093, %v2181
        %v2183 = vpop.f32.mrf.mxu0
        %v2184 = vadd.f32 %v2095, %v2183
        %2185 = vmatmul.bf16.gmra.mxu0 %v2023
        %v2186 = vpop.f32.mrf.mxu0
        %v2187 = vadd.f32 %v2098, %v2186
        %v2188 = vpop.f32.mrf.mxu0
        %v2189 = vadd.f32 %v2100, %v2188
        %2190 = vmatmul.bf16.gmra.mxu0 %v2026
        %v2191 = vpop.f32.mrf.mxu0
        %v2192 = vadd.f32 %v2103, %v2191
        %v2193 = vpop.f32.mrf.mxu0
        %v2194 = vadd.f32 %v2105, %v2193
        %2195 = vmatmul.bf16.gmra.mxu0 %v2029
        %v2196 = vpop.f32.mrf.mxu0
        %v2197 = vadd.f32 %v2108, %v2196
        %v2198 = vpop.f32.mrf.mxu0
        %v2199 = vadd.f32 %v2110, %v2198
        %2200 = vmatmul.bf16.gmra.mxu0 %v2032
        %v2201 = vpop.f32.mrf.mxu0
        %v2202 = vadd.f32 %v2113, %v2201
        %v2203 = vpop.f32.mrf.mxu0
        %v2204 = vadd.f32 %v2115, %v2203
        %2205 = vmatmul.bf16.gmra.mxu0 %v2035
        %v2206 = vpop.f32.mrf.mxu0
        %v2207 = vadd.f32 %v2118, %v2206
        %v2208 = vpop.f32.mrf.mxu0
        %v2209 = vadd.f32 %v2120, %v2208
        %2210 = vmatmul.bf16.gmra.mxu0 %v2038
        %v2211 = vpop.f32.mrf.mxu0
        %v2212 = vadd.f32 %v2123, %v2211
        %v2213 = vpop.f32.mrf.mxu0
        %v2214 = vadd.f32 %v2125, %v2213
        %2215 = vmatmul.bf16.gmra.mxu0 %v2041
        %v2216 = vpop.f32.mrf.mxu0
        %v2217 = vadd.f32 %v2128, %v2216
        %v2218 = vpop.f32.mrf.mxu0
        %v2219 = vadd.f32 %v2130, %v2218
        %2220 = vdwg.mxu0
        %v2223 = vunpack.c.l.b16 %v1695
        %v2224 = vunpack.c.h.b16 %v1695
        %v2225 = vunpack.c.l.b16 %v1696
        %v2226 = vunpack.c.h.b16 %v1696
        %v2227 = vpack.c.b16 %v2225, %v2223
        %v2228 = vpack.c.b16 %v2226, %v2224
        %v2254 = vunpack.c.l.b16 %v1727
        %v2255 = vunpack.c.l.b16 %v1728
        %v2256 = vunpack.c.l.b16 %v1729
        %v2257 = vunpack.c.l.b16 %v1730
        %v2258 = vunpack.c.l.b16 %v1731
        %v2259 = vunpack.c.l.b16 %v1732
        %v2260 = vunpack.c.l.b16 %v1733
        %v2261 = vunpack.c.l.b16 %v1734
        %v2262 = vunpack.c.l.b16 %v1735
        %v2263 = vunpack.c.l.b16 %v1736
        %v2264 = vunpack.c.l.b16 %v1737
        %v2265 = vunpack.c.l.b16 %v1738
        %v2266 = vunpack.c.l.b16 %v1739
        %v2267 = vunpack.c.l.b16 %v1740
        %v2268 = vunpack.c.l.b16 %v1741
        %v2269 = vunpack.c.l.b16 %v1742
        %v2270 = vunpack.c.l.b16 %v1743
        %v2271 = vunpack.c.l.b16 %v1744
        %v2272 = vunpack.c.l.b16 %v1745
        %v2273 = vunpack.c.l.b16 %v1746
        %v2274 = vunpack.c.l.b16 %v1747
        %v2275 = vunpack.c.l.b16 %v1748
        %v2276 = vunpack.c.l.b16 %v1749
        %v2277 = vunpack.c.l.b16 %v1750
        %v2278 = vpack.c.b16 %v2255, %v2254
        %v2279 = vpack.c.b16 %v2257, %v2256
        %v2280 = vpack.c.b16 %v2259, %v2258
        %v2281 = vpack.c.b16 %v2261, %v2260
        %v2282 = vpack.c.b16 %v2263, %v2262
        %v2283 = vpack.c.b16 %v2265, %v2264
        %v2284 = vpack.c.b16 %v2267, %v2266
        %v2285 = vpack.c.b16 %v2269, %v2268
        %v2286 = vpack.c.b16 %v2271, %v2270
        %v2287 = vpack.c.b16 %v2273, %v2272
        %v2288 = vpack.c.b16 %v2275, %v2274
        %v2289 = vpack.c.b16 %v2277, %v2276
        %v2303 = vsel %vm1994, %v2228, 0
        %2305 = vmatpush.bf16.msra.mxu0 %v2285
        %2306 = vmatpush.bf16.msra.mxu0 %v2284
        %2307 = vmatpush.bf16.msra.mxu0 %v2283
        %2308 = vmatpush.bf16.msra.mxu0 %v2282
        %2309 = vmatpush.bf16.msra.mxu0 %v2281
        %2310 = vmatpush.bf16.msra.mxu0 %v2280
        %2311 = vmatpush.bf16.msra.mxu0 %v2279
        %2312 = vmatpush.bf16.msra.mxu0 %v2278
        %2313 = vmatmul.bf16.gmra.mxu0 %v2227
        %v2314 = vpop.f32.mrf.mxu0
        %v2315 = vadd.f32 %v2142, %v2314
        %v2316 = vpop.f32.mrf.mxu0
        %v2317 = vadd.f32 %v2144, %v2316
        %2318 = vmatmul.bf16.gmra.mxu0 %v1874
        %v2319 = vpop.f32.mrf.mxu0
        %v2320 = vadd.f32 %v2147, %v2319
        %v2321 = vpop.f32.mrf.mxu0
        %v2322 = vadd.f32 %v2149, %v2321
        %2323 = vmatmul.bf16.gmra.mxu0 %v1876
        %v2324 = vpop.f32.mrf.mxu0
        %v2325 = vadd.f32 %v2152, %v2324
        %v2326 = vpop.f32.mrf.mxu0
        %v2327 = vadd.f32 %v2154, %v2326
        %2328 = vmatmul.bf16.gmra.mxu0 %v1878
        %v2329 = vpop.f32.mrf.mxu0
        %v2330 = vadd.f32 %v2157, %v2329
        %v2331 = vpop.f32.mrf.mxu0
        %v2332 = vadd.f32 %v2159, %v2331
        %2333 = vmatmul.bf16.gmra.mxu0 %v1880
        %v2334 = vpop.f32.mrf.mxu0
        %v2335 = vadd.f32 %v2162, %v2334
        %v2336 = vpop.f32.mrf.mxu0
        %v2337 = vadd.f32 %v2164, %v2336
        %2338 = vmatmul.bf16.gmra.mxu0 %v1882
        %v2339 = vpop.f32.mrf.mxu0
        %v2340 = vadd.f32 %v2167, %v2339
        %v2341 = vpop.f32.mrf.mxu0
        %v2342 = vadd.f32 %v2169, %v2341
        %2343 = vmatmul.bf16.gmra.mxu0 %v1884
        %v2344 = vpop.f32.mrf.mxu0
        %v2345 = vadd.f32 %v2172, %v2344
        %v2346 = vpop.f32.mrf.mxu0
        %v2347 = vadd.f32 %v2174, %v2346
        %2348 = vmatmul.bf16.gmra.mxu0 %v1886
        %v2349 = vpop.f32.mrf.mxu0
        %v2350 = vadd.f32 %v2177, %v2349
        %v2351 = vpop.f32.mrf.mxu0
        %v2352 = vadd.f32 %v2179, %v2351
        %2353 = vmatmul.bf16.gmra.mxu0 %v1888
        %v2354 = vpop.f32.mrf.mxu0
        %v2355 = vadd.f32 %v2182, %v2354
        %v2356 = vpop.f32.mrf.mxu0
        %v2357 = vadd.f32 %v2184, %v2356
        %2358 = vmatmul.bf16.gmra.mxu0 %v1890
        %v2359 = vpop.f32.mrf.mxu0
        %v2360 = vadd.f32 %v2187, %v2359
        %v2361 = vpop.f32.mrf.mxu0
        %v2362 = vadd.f32 %v2189, %v2361
        %2363 = vmatmul.bf16.gmra.mxu0 %v1892
        %v2364 = vpop.f32.mrf.mxu0
        %v2365 = vadd.f32 %v2192, %v2364
        %v2366 = vpop.f32.mrf.mxu0
        %v2367 = vadd.f32 %v2194, %v2366
        %2368 = vmatmul.bf16.gmra.mxu0 %v1894
        %v2369 = vpop.f32.mrf.mxu0
        %v2370 = vadd.f32 %v2197, %v2369
        %v2371 = vpop.f32.mrf.mxu0
        %v2372 = vadd.f32 %v2199, %v2371
        %2373 = vmatmul.bf16.gmra.mxu0 %v1896
        %v2374 = vpop.f32.mrf.mxu0
        %v2375 = vadd.f32 %v2202, %v2374
        %v2376 = vpop.f32.mrf.mxu0
        %v2377 = vadd.f32 %v2204, %v2376
        %2378 = vmatmul.bf16.gmra.mxu0 %v1898
        %v2379 = vpop.f32.mrf.mxu0
        %v2380 = vadd.f32 %v2207, %v2379
        %v2381 = vpop.f32.mrf.mxu0
        %v2382 = vadd.f32 %v2209, %v2381
        %2383 = vmatmul.bf16.gmra.mxu0 %v1900
        %v2384 = vpop.f32.mrf.mxu0
        %v2385 = vadd.f32 %v2212, %v2384
        %v2386 = vpop.f32.mrf.mxu0
        %v2387 = vadd.f32 %v2214, %v2386
        %2388 = vmatmul.bf16.gmra.mxu0 %v1902
        %v2389 = vpop.f32.mrf.mxu0
        %v2390 = vadd.f32 %v2217, %v2389
        %v2391 = vpop.f32.mrf.mxu0
        %v2392 = vadd.f32 %v2219, %v2391
        %2393 = vdwg.mxu0
        %2394 = vmatpush.bf16.msra.mxu0 0
        %2395 = vmatpush.bf16.msra.mxu0 0
        %2396 = vmatpush.bf16.msra.mxu0 0
        %2397 = vmatpush.bf16.msra.mxu0 0
        %2398 = vmatpush.bf16.msra.mxu0 %v2289
        %2399 = vmatpush.bf16.msra.mxu0 %v2288
        %2400 = vmatpush.bf16.msra.mxu0 %v2287
        %2401 = vmatpush.bf16.msra.mxu0 %v2286
        %2402 = vmatmul.bf16.gmra.mxu0 %v2303
        %v2403 = vpop.f32.mrf.mxu0
        %v2404 = vadd.f32 %v2315, %v2403
        %v2405 = vpop.f32.mrf.mxu0
        %v2406 = vadd.f32 %v2317, %v2405
        %2407 = vmatmul.bf16.gmra.mxu0 %v1996
        %v2408 = vpop.f32.mrf.mxu0
        %v2409 = vadd.f32 %v2320, %v2408
        %v2410 = vpop.f32.mrf.mxu0
        %v2411 = vadd.f32 %v2322, %v2410
        %2412 = vmatmul.bf16.gmra.mxu0 %v1999
        %v2413 = vpop.f32.mrf.mxu0
        %v2414 = vadd.f32 %v2325, %v2413
        %v2415 = vpop.f32.mrf.mxu0
        %v2416 = vadd.f32 %v2327, %v2415
        %2417 = vmatmul.bf16.gmra.mxu0 %v2002
        %v2418 = vpop.f32.mrf.mxu0
        %v2419 = vadd.f32 %v2330, %v2418
        %v2420 = vpop.f32.mrf.mxu0
        %v2421 = vadd.f32 %v2332, %v2420
        %2422 = vmatmul.bf16.gmra.mxu0 %v2005
        %v2423 = vpop.f32.mrf.mxu0
        %v2424 = vadd.f32 %v2335, %v2423
        %v2425 = vpop.f32.mrf.mxu0
        %v2426 = vadd.f32 %v2337, %v2425
        %2427 = vmatmul.bf16.gmra.mxu0 %v2008
        %v2428 = vpop.f32.mrf.mxu0
        %v2429 = vadd.f32 %v2340, %v2428
        %v2430 = vpop.f32.mrf.mxu0
        %v2431 = vadd.f32 %v2342, %v2430
        %2432 = vmatmul.bf16.gmra.mxu0 %v2011
        %v2433 = vpop.f32.mrf.mxu0
        %v2434 = vadd.f32 %v2345, %v2433
        %v2435 = vpop.f32.mrf.mxu0
        %v2436 = vadd.f32 %v2347, %v2435
        %2437 = vmatmul.bf16.gmra.mxu0 %v2014
        %v2438 = vpop.f32.mrf.mxu0
        %v2439 = vadd.f32 %v2350, %v2438
        %v2440 = vpop.f32.mrf.mxu0
        %v2441 = vadd.f32 %v2352, %v2440
        %2442 = vmatmul.bf16.gmra.mxu0 %v2017
        %v2443 = vpop.f32.mrf.mxu0
        %v2444 = vadd.f32 %v2355, %v2443
        %v2445 = vpop.f32.mrf.mxu0
        %v2446 = vadd.f32 %v2357, %v2445
        %2447 = vmatmul.bf16.gmra.mxu0 %v2020
        %v2448 = vpop.f32.mrf.mxu0
        %v2449 = vadd.f32 %v2360, %v2448
        %v2450 = vpop.f32.mrf.mxu0
        %v2451 = vadd.f32 %v2362, %v2450
        %2452 = vmatmul.bf16.gmra.mxu0 %v2023
        %v2453 = vpop.f32.mrf.mxu0
        %v2454 = vadd.f32 %v2365, %v2453
        %v2455 = vpop.f32.mrf.mxu0
        %v2456 = vadd.f32 %v2367, %v2455
        %2457 = vmatmul.bf16.gmra.mxu0 %v2026
        %v2458 = vpop.f32.mrf.mxu0
        %v2459 = vadd.f32 %v2370, %v2458
        %v2460 = vpop.f32.mrf.mxu0
        %v2461 = vadd.f32 %v2372, %v2460
        %2462 = vmatmul.bf16.gmra.mxu0 %v2029
        %v2463 = vpop.f32.mrf.mxu0
        %v2464 = vadd.f32 %v2375, %v2463
        %v2465 = vpop.f32.mrf.mxu0
        %v2466 = vadd.f32 %v2377, %v2465
        %2467 = vmatmul.bf16.gmra.mxu0 %v2032
        %v2468 = vpop.f32.mrf.mxu0
        %v2469 = vadd.f32 %v2380, %v2468
        %v2470 = vpop.f32.mrf.mxu0
        %v2471 = vadd.f32 %v2382, %v2470
        %2472 = vmatmul.bf16.gmra.mxu0 %v2035
        %v2473 = vpop.f32.mrf.mxu0
        %v2474 = vadd.f32 %v2385, %v2473
        %v2475 = vpop.f32.mrf.mxu0
        %v2476 = vadd.f32 %v2387, %v2475
        %2477 = vmatmul.bf16.gmra.mxu0 %v2038
        %v2478 = vpop.f32.mrf.mxu0
        %v2479 = vadd.f32 %v2390, %v2478
        %v2480 = vpop.f32.mrf.mxu0
        %v2481 = vadd.f32 %v2392, %v2480
        %2482 = vdwg.mxu0
        %v2483 = vld [vmem:[#allocation2 + $0x28] sm:$0xff]
        %v2484 = vld [vmem:[#allocation2 + $0x30] sm:$0xff]
        %v2485 = vld [vmem:[#allocation2 + $0x38] sm:$0xff]
        %v2486 = vld [vmem:[#allocation2 + $0x40] sm:$0xff]
        %v2487 = vld [vmem:[#allocation2 + $0x48] sm:$0xff]
        %v2488 = vld [vmem:[#allocation2 + $0x50] sm:$0xff]
        %v2489 = vld [vmem:[#allocation2 + $0x58] sm:$0xff]
        %v2490 = vld [vmem:[#allocation2 + $0x60] sm:$0xff]
        %v2491 = vld [vmem:[#allocation2 + $0x68] sm:$0xff]
        %v2492 = vld [vmem:[#allocation2 + $0x70] sm:$0xff]
        %v2493 = vld [vmem:[#allocation2 + $0x78] sm:$0xff]
        %v2494 = vld [vmem:[#allocation2 + $0x80] sm:$0xff]
        %v2495 = vld [vmem:[#allocation2 + $0x88] sm:$0xff]
        %v2496 = vld [vmem:[#allocation2 + $0x90] sm:$0xff]
        %v2497 = vld [vmem:[#allocation2 + $0x98] sm:$0xff]
        %v2498 = vld [vmem:[#allocation2 + $0xa0] sm:$0xff]
        %v2499 = vld [vmem:[#allocation2 + $0xa8] sm:$0xff]
        %v2500 = vld [vmem:[#allocation2 + $0xb0] sm:$0xff]
        %v2501 = vld [vmem:[#allocation2 + $0xb8] sm:$0xff]
        %v2502 = vld [vmem:[#allocation2 + $0xc0] sm:$0xff]
        %v2503 = vld [vmem:[#allocation2 + $0xc8] sm:$0xff]
        %v2504 = vld [vmem:[#allocation2 + $0xd0] sm:$0xff]
        %v2505 = vld [vmem:[#allocation2 + $0xd8] sm:$0xff]
        %v2506 = vld [vmem:[#allocation2 + $0xe0] sm:$0xff]
        %v2507 = vld [vmem:[#allocation2 + $0xe8] sm:$0xff]
        %v2508 = vld [vmem:[#allocation2 + $0xf0] sm:$0xff]
        %v2509 = vld [vmem:[#allocation2 + $0xf8] sm:$0xff]
        %v2510 = vld [vmem:[#allocation2 + $0x100] sm:$0xff]
        %v2511 = vld [vmem:[#allocation2 + $0x108] sm:$0xff]
        %v2512 = vld [vmem:[#allocation2 + $0x110] sm:$0xff]
        %v2513 = vld [vmem:[#allocation2 + $0x118] sm:$0xff]
        %v2514 = vld [vmem:[#allocation2 + $0x120] sm:$0xff]
        %s2515 = scalar_lea.vmem %s1, 192
        %v2516 = vld [vmem:[%s2515] sm:$0xf]
        %v2517 = vld [vmem:[%s2515 + $0x4] sm:$0xf]
        %v2518 = vld [vmem:[%s2515 + $0x8] sm:$0xf]
        %v2519 = vld [vmem:[%s2515 + $0xc] sm:$0xf]
        %v2520 = vld [vmem:[%s2515 + $0x10] sm:$0xf]
        %v2521 = vld [vmem:[%s2515 + $0x14] sm:$0xf]
        %v2522 = vld [vmem:[%s2515 + $0x18] sm:$0xf]
        %v2523 = vld [vmem:[%s2515 + $0x1c] sm:$0xf]
        %v2524 = vld [vmem:[%s2515 + $0x20] sm:$0xf]
        %v2525 = vld [vmem:[%s2515 + $0x24] sm:$0xf]
        %v2526 = vld [vmem:[%s2515 + $0x28] sm:$0xf]
        %v2527 = vld [vmem:[%s2515 + $0x2c] sm:$0xf]
        %v2528 = vld [vmem:[%s2515 + $0x30] sm:$0xf]
        %v2529 = vld [vmem:[%s2515 + $0x34] sm:$0xf]
        %v2530 = vld [vmem:[%s2515 + $0x38] sm:$0xf]
        %v2531 = vld [vmem:[%s2515 + $0x3c] sm:$0xf]
        %v2532 = vld [vmem:[%s2515 + $0x40] sm:$0xf]
        %v2533 = vld [vmem:[%s2515 + $0x44] sm:$0xf]
        %v2534 = vld [vmem:[%s2515 + $0x48] sm:$0xf]
        %v2535 = vld [vmem:[%s2515 + $0x4c] sm:$0xf]
        %v2536 = vld [vmem:[%s2515 + $0x50] sm:$0xf]
        %v2537 = vld [vmem:[%s2515 + $0x54] sm:$0xf]
        %v2538 = vld [vmem:[%s2515 + $0x58] sm:$0xf]
        %v2539 = vld [vmem:[%s2515 + $0x5c] sm:$0xf]
        %v2572 = vunpack.c.l.b16 %v2483
        %v2573 = vunpack.c.h.b16 %v2483
        %v2574 = vunpack.c.l.b16 %v2484
        %v2575 = vunpack.c.h.b16 %v2484
        %v2576 = vunpack.c.l.b16 %v2485
        %v2577 = vunpack.c.h.b16 %v2485
        %v2578 = vunpack.c.l.b16 %v2486
        %v2579 = vunpack.c.h.b16 %v2486
        %v2580 = vunpack.c.l.b16 %v2487
        %v2581 = vunpack.c.h.b16 %v2487
        %v2582 = vunpack.c.l.b16 %v2488
        %v2583 = vunpack.c.h.b16 %v2488
        %v2584 = vunpack.c.l.b16 %v2489
        %v2585 = vunpack.c.h.b16 %v2489
        %v2586 = vunpack.c.l.b16 %v2490
        %v2587 = vunpack.c.h.b16 %v2490
        %v2588 = vunpack.c.l.b16 %v2491
        %v2589 = vunpack.c.h.b16 %v2491
        %v2590 = vunpack.c.l.b16 %v2492
        %v2591 = vunpack.c.h.b16 %v2492
        %v2592 = vunpack.c.l.b16 %v2493
        %v2593 = vunpack.c.h.b16 %v2493
        %v2594 = vunpack.c.l.b16 %v2494
        %v2595 = vunpack.c.h.b16 %v2494
        %v2596 = vunpack.c.l.b16 %v2495
        %v2597 = vunpack.c.h.b16 %v2495
        %v2598 = vunpack.c.l.b16 %v2496
        %v2599 = vunpack.c.h.b16 %v2496
        %v2600 = vunpack.c.l.b16 %v2497
        %v2601 = vunpack.c.h.b16 %v2497
        %v2602 = vunpack.c.l.b16 %v2498
        %v2603 = vunpack.c.h.b16 %v2498
        %v2604 = vunpack.c.l.b16 %v2499
        %v2605 = vunpack.c.h.b16 %v2499
        %v2606 = vunpack.c.l.b16 %v2500
        %v2607 = vunpack.c.h.b16 %v2500
        %v2608 = vunpack.c.l.b16 %v2501
        %v2609 = vunpack.c.h.b16 %v2501
        %v2610 = vunpack.c.l.b16 %v2502
        %v2611 = vunpack.c.h.b16 %v2502
        %v2612 = vunpack.c.l.b16 %v2503
        %v2613 = vunpack.c.h.b16 %v2503
        %v2614 = vunpack.c.l.b16 %v2504
        %v2615 = vunpack.c.h.b16 %v2504
        %v2616 = vunpack.c.l.b16 %v2505
        %v2617 = vunpack.c.h.b16 %v2505
        %v2618 = vunpack.c.l.b16 %v2506
        %v2619 = vunpack.c.h.b16 %v2506
        %v2620 = vunpack.c.l.b16 %v2507
        %v2621 = vunpack.c.h.b16 %v2507
        %v2622 = vunpack.c.l.b16 %v2508
        %v2623 = vunpack.c.h.b16 %v2508
        %v2624 = vunpack.c.l.b16 %v2509
        %v2625 = vunpack.c.h.b16 %v2509
        %v2626 = vunpack.c.l.b16 %v2510
        %v2627 = vunpack.c.h.b16 %v2510
        %v2628 = vunpack.c.l.b16 %v2511
        %v2629 = vunpack.c.h.b16 %v2511
        %v2630 = vunpack.c.l.b16 %v2512
        %v2631 = vunpack.c.h.b16 %v2512
        %v2632 = vunpack.c.l.b16 %v2513
        %v2633 = vunpack.c.h.b16 %v2513
        %v2634 = vunpack.c.l.b16 %v2514
        %v2635 = vunpack.c.h.b16 %v2514
        %v2636 = vpack.c.b16 %v2574, %v2572
        %v2637 = vpack.c.b16 %v2575, %v2573
        %v2638 = vpack.c.b16 %v2578, %v2576
        %v2639 = vpack.c.b16 %v2579, %v2577
        %v2640 = vpack.c.b16 %v2582, %v2580
        %v2641 = vpack.c.b16 %v2583, %v2581
        %v2642 = vpack.c.b16 %v2586, %v2584
        %v2643 = vpack.c.b16 %v2587, %v2585
        %v2644 = vpack.c.b16 %v2590, %v2588
        %v2645 = vpack.c.b16 %v2591, %v2589
        %v2646 = vpack.c.b16 %v2594, %v2592
        %v2647 = vpack.c.b16 %v2595, %v2593
        %v2648 = vpack.c.b16 %v2598, %v2596
        %v2649 = vpack.c.b16 %v2599, %v2597
        %v2650 = vpack.c.b16 %v2602, %v2600
        %v2651 = vpack.c.b16 %v2603, %v2601
        %v2652 = vpack.c.b16 %v2606, %v2604
        %v2653 = vpack.c.b16 %v2607, %v2605
        %v2654 = vpack.c.b16 %v2610, %v2608
        %v2655 = vpack.c.b16 %v2611, %v2609
        %v2656 = vpack.c.b16 %v2614, %v2612
        %v2657 = vpack.c.b16 %v2615, %v2613
        %v2658 = vpack.c.b16 %v2618, %v2616
        %v2659 = vpack.c.b16 %v2619, %v2617
        %v2660 = vpack.c.b16 %v2622, %v2620
        %v2661 = vpack.c.b16 %v2623, %v2621
        %v2662 = vpack.c.b16 %v2626, %v2624
        %v2663 = vpack.c.b16 %v2627, %v2625
        %v2664 = vpack.c.b16 %v2630, %v2628
        %v2665 = vpack.c.b16 %v2631, %v2629
        %v2666 = vpack.c.b16 %v2634, %v2632
        %v2667 = vpack.c.b16 %v2635, %v2633
        %v2708 = vunpack.c.l.b16 %v2516
        %v2709 = vunpack.c.l.b16 %v2517
        %v2710 = vunpack.c.l.b16 %v2518
        %v2711 = vunpack.c.l.b16 %v2519
        %v2712 = vunpack.c.l.b16 %v2520
        %v2713 = vunpack.c.l.b16 %v2521
        %v2714 = vunpack.c.l.b16 %v2522
        %v2715 = vunpack.c.l.b16 %v2523
        %v2716 = vunpack.c.l.b16 %v2524
        %v2717 = vunpack.c.l.b16 %v2525
        %v2718 = vunpack.c.l.b16 %v2526
        %v2719 = vunpack.c.l.b16 %v2527
        %v2720 = vunpack.c.l.b16 %v2528
        %v2721 = vunpack.c.l.b16 %v2529
        %v2722 = vunpack.c.l.b16 %v2530
        %v2723 = vunpack.c.l.b16 %v2531
        %v2724 = vunpack.c.l.b16 %v2532
        %v2725 = vunpack.c.l.b16 %v2533
        %v2726 = vunpack.c.l.b16 %v2534
        %v2727 = vunpack.c.l.b16 %v2535
        %v2728 = vunpack.c.l.b16 %v2536
        %v2729 = vunpack.c.l.b16 %v2537
        %v2730 = vunpack.c.l.b16 %v2538
        %v2731 = vunpack.c.l.b16 %v2539
        %v2732 = vpack.c.b16 %v2709, %v2708
        %v2733 = vpack.c.b16 %v2711, %v2710
        %v2734 = vpack.c.b16 %v2713, %v2712
        %v2735 = vpack.c.b16 %v2715, %v2714
        %v2736 = vpack.c.b16 %v2717, %v2716
        %v2737 = vpack.c.b16 %v2719, %v2718
        %v2738 = vpack.c.b16 %v2721, %v2720
        %v2739 = vpack.c.b16 %v2723, %v2722
        %v2740 = vpack.c.b16 %v2725, %v2724
        %v2741 = vpack.c.b16 %v2727, %v2726
        %v2742 = vpack.c.b16 %v2729, %v2728
        %v2743 = vpack.c.b16 %v2731, %v2730
        %v2757 = vsel %vm1994, %v2637, 0
        %v2760 = vsel %vm1994, %v2639, 0
        %v2763 = vsel %vm1994, %v2641, 0
        %v2766 = vsel %vm1994, %v2643, 0
        %v2769 = vsel %vm1994, %v2645, 0
        %v2772 = vsel %vm1994, %v2647, 0
        %v2775 = vsel %vm1994, %v2649, 0
        %v2778 = vsel %vm1994, %v2651, 0
        %v2781 = vsel %vm1994, %v2653, 0
        %v2784 = vsel %vm1994, %v2655, 0
        %v2787 = vsel %vm1994, %v2657, 0
        %v2790 = vsel %vm1994, %v2659, 0
        %v2793 = vsel %vm1994, %v2661, 0
        %v2796 = vsel %vm1994, %v2663, 0
        %v2799 = vsel %vm1994, %v2665, 0
        %v2802 = vsel %vm1994, %v2667, 0
        %2804 = vmatpush.bf16.msra.mxu0 %v2739
        %2805 = vmatpush.bf16.msra.mxu0 %v2738
        %2806 = vmatpush.bf16.msra.mxu0 %v2737
        %2807 = vmatpush.bf16.msra.mxu0 %v2736
        %2808 = vmatpush.bf16.msra.mxu0 %v2735
        %2809 = vmatpush.bf16.msra.mxu0 %v2734
        %2810 = vmatpush.bf16.msra.mxu0 %v2733
        %2811 = vmatpush.bf16.msra.mxu0 %v2732
        %2812 = vmatmul.bf16.gmra.mxu0 %v2636
        %v2813 = vpop.f32.mrf.mxu0
        %v2814 = vadd.f32 0.0, %v2813
        %v2815 = vpop.f32.mrf.mxu0
        %v2816 = vadd.f32 0.0, %v2815
        %2817 = vmatmul.bf16.gmra.mxu0 %v2638
        %v2818 = vpop.f32.mrf.mxu0
        %v2819 = vadd.f32 0.0, %v2818
        %v2820 = vpop.f32.mrf.mxu0
        %v2821 = vadd.f32 0.0, %v2820
        %2822 = vmatmul.bf16.gmra.mxu0 %v2640
        %v2823 = vpop.f32.mrf.mxu0
        %v2824 = vadd.f32 0.0, %v2823
        %v2825 = vpop.f32.mrf.mxu0
        %v2826 = vadd.f32 0.0, %v2825
        %2827 = vmatmul.bf16.gmra.mxu0 %v2642
        %v2828 = vpop.f32.mrf.mxu0
        %v2829 = vadd.f32 0.0, %v2828
        %v2830 = vpop.f32.mrf.mxu0
        %v2831 = vadd.f32 0.0, %v2830
        %2832 = vmatmul.bf16.gmra.mxu0 %v2644
        %v2833 = vpop.f32.mrf.mxu0
        %v2834 = vadd.f32 0.0, %v2833
        %v2835 = vpop.f32.mrf.mxu0
        %v2836 = vadd.f32 0.0, %v2835
        %2837 = vmatmul.bf16.gmra.mxu0 %v2646
        %v2838 = vpop.f32.mrf.mxu0
        %v2839 = vadd.f32 0.0, %v2838
        %v2840 = vpop.f32.mrf.mxu0
        %v2841 = vadd.f32 0.0, %v2840
        %2842 = vmatmul.bf16.gmra.mxu0 %v2648
        %v2843 = vpop.f32.mrf.mxu0
        %v2844 = vadd.f32 0.0, %v2843
        %v2845 = vpop.f32.mrf.mxu0
        %v2846 = vadd.f32 0.0, %v2845
        %2847 = vmatmul.bf16.gmra.mxu0 %v2650
        %v2848 = vpop.f32.mrf.mxu0
        %v2849 = vadd.f32 0.0, %v2848
        %v2850 = vpop.f32.mrf.mxu0
        %v2851 = vadd.f32 0.0, %v2850
        %2852 = vmatmul.bf16.gmra.mxu0 %v2652
        %v2853 = vpop.f32.mrf.mxu0
        %v2854 = vadd.f32 0.0, %v2853
        %v2855 = vpop.f32.mrf.mxu0
        %v2856 = vadd.f32 0.0, %v2855
        %2857 = vmatmul.bf16.gmra.mxu0 %v2654
        %v2858 = vpop.f32.mrf.mxu0
        %v2859 = vadd.f32 0.0, %v2858
        %v2860 = vpop.f32.mrf.mxu0
        %v2861 = vadd.f32 0.0, %v2860
        %2862 = vmatmul.bf16.gmra.mxu0 %v2656
        %v2863 = vpop.f32.mrf.mxu0
        %v2864 = vadd.f32 0.0, %v2863
        %v2865 = vpop.f32.mrf.mxu0
        %v2866 = vadd.f32 0.0, %v2865
        %2867 = vmatmul.bf16.gmra.mxu0 %v2658
        %v2868 = vpop.f32.mrf.mxu0
        %v2869 = vadd.f32 0.0, %v2868
        %v2870 = vpop.f32.mrf.mxu0
        %v2871 = vadd.f32 0.0, %v2870
        %2872 = vmatmul.bf16.gmra.mxu0 %v2660
        %v2873 = vpop.f32.mrf.mxu0
        %v2874 = vadd.f32 0.0, %v2873
        %v2875 = vpop.f32.mrf.mxu0
        %v2876 = vadd.f32 0.0, %v2875
        %2877 = vmatmul.bf16.gmra.mxu0 %v2662
        %v2878 = vpop.f32.mrf.mxu0
        %v2879 = vadd.f32 0.0, %v2878
        %v2880 = vpop.f32.mrf.mxu0
        %v2881 = vadd.f32 0.0, %v2880
        %2882 = vmatmul.bf16.gmra.mxu0 %v2664
        %v2883 = vpop.f32.mrf.mxu0
        %v2884 = vadd.f32 0.0, %v2883
        %v2885 = vpop.f32.mrf.mxu0
        %v2886 = vadd.f32 0.0, %v2885
        %2887 = vmatmul.bf16.gmra.mxu0 %v2666
        %v2888 = vpop.f32.mrf.mxu0
        %v2889 = vadd.f32 0.0, %v2888
        %v2890 = vpop.f32.mrf.mxu0
        %v2891 = vadd.f32 0.0, %v2890
        %2892 = vdwg.mxu0
        %2893 = vmatpush.bf16.msra.mxu0 0
        %2894 = vmatpush.bf16.msra.mxu0 0
        %2895 = vmatpush.bf16.msra.mxu0 0
        %2896 = vmatpush.bf16.msra.mxu0 0
        %2897 = vmatpush.bf16.msra.mxu0 %v2743
        %2898 = vmatpush.bf16.msra.mxu0 %v2742
        %2899 = vmatpush.bf16.msra.mxu0 %v2741
        %2900 = vmatpush.bf16.msra.mxu0 %v2740
        %2901 = vmatmul.bf16.gmra.mxu0 %v2757
        %v2902 = vpop.f32.mrf.mxu0
        %v2903 = vadd.f32 %v2814, %v2902
        %v2904 = vpop.f32.mrf.mxu0
        %v2905 = vadd.f32 %v2816, %v2904
        %2906 = vmatmul.bf16.gmra.mxu0 %v2760
        %v2907 = vpop.f32.mrf.mxu0
        %v2908 = vadd.f32 %v2819, %v2907
        %v2909 = vpop.f32.mrf.mxu0
        %v2910 = vadd.f32 %v2821, %v2909
        %2911 = vmatmul.bf16.gmra.mxu0 %v2763
        %v2912 = vpop.f32.mrf.mxu0
        %v2913 = vadd.f32 %v2824, %v2912
        %v2914 = vpop.f32.mrf.mxu0
        %v2915 = vadd.f32 %v2826, %v2914
        %2916 = vmatmul.bf16.gmra.mxu0 %v2766
        %v2917 = vpop.f32.mrf.mxu0
        %v2918 = vadd.f32 %v2829, %v2917
        %v2919 = vpop.f32.mrf.mxu0
        %v2920 = vadd.f32 %v2831, %v2919
        %2921 = vmatmul.bf16.gmra.mxu0 %v2769
        %v2922 = vpop.f32.mrf.mxu0
        %v2923 = vadd.f32 %v2834, %v2922
        %v2924 = vpop.f32.mrf.mxu0
        %v2925 = vadd.f32 %v2836, %v2924
        %2926 = vmatmul.bf16.gmra.mxu0 %v2772
        %v2927 = vpop.f32.mrf.mxu0
        %v2928 = vadd.f32 %v2839, %v2927
        %v2929 = vpop.f32.mrf.mxu0
        %v2930 = vadd.f32 %v2841, %v2929
        %2931 = vmatmul.bf16.gmra.mxu0 %v2775
        %v2932 = vpop.f32.mrf.mxu0
        %v2933 = vadd.f32 %v2844, %v2932
        %v2934 = vpop.f32.mrf.mxu0
        %v2935 = vadd.f32 %v2846, %v2934
        %2936 = vmatmul.bf16.gmra.mxu0 %v2778
        %v2937 = vpop.f32.mrf.mxu0
        %v2938 = vadd.f32 %v2849, %v2937
        %v2939 = vpop.f32.mrf.mxu0
        %v2940 = vadd.f32 %v2851, %v2939
        %2941 = vmatmul.bf16.gmra.mxu0 %v2781
        %v2942 = vpop.f32.mrf.mxu0
        %v2943 = vadd.f32 %v2854, %v2942
        %v2944 = vpop.f32.mrf.mxu0
        %v2945 = vadd.f32 %v2856, %v2944
        %2946 = vmatmul.bf16.gmra.mxu0 %v2784
        %v2947 = vpop.f32.mrf.mxu0
        %v2948 = vadd.f32 %v2859, %v2947
        %v2949 = vpop.f32.mrf.mxu0
        %v2950 = vadd.f32 %v2861, %v2949
        %2951 = vmatmul.bf16.gmra.mxu0 %v2787
        %v2952 = vpop.f32.mrf.mxu0
        %v2953 = vadd.f32 %v2864, %v2952
        %v2954 = vpop.f32.mrf.mxu0
        %v2955 = vadd.f32 %v2866, %v2954
        %2956 = vmatmul.bf16.gmra.mxu0 %v2790
        %v2957 = vpop.f32.mrf.mxu0
        %v2958 = vadd.f32 %v2869, %v2957
        %v2959 = vpop.f32.mrf.mxu0
        %v2960 = vadd.f32 %v2871, %v2959
        %2961 = vmatmul.bf16.gmra.mxu0 %v2793
        %v2962 = vpop.f32.mrf.mxu0
        %v2963 = vadd.f32 %v2874, %v2962
        %v2964 = vpop.f32.mrf.mxu0
        %v2965 = vadd.f32 %v2876, %v2964
        %2966 = vmatmul.bf16.gmra.mxu0 %v2796
        %v2967 = vpop.f32.mrf.mxu0
        %v2968 = vadd.f32 %v2879, %v2967
        %v2969 = vpop.f32.mrf.mxu0
        %v2970 = vadd.f32 %v2881, %v2969
        %2971 = vmatmul.bf16.gmra.mxu0 %v2799
        %v2972 = vpop.f32.mrf.mxu0
        %v2973 = vadd.f32 %v2884, %v2972
        %v2974 = vpop.f32.mrf.mxu0
        %v2975 = vadd.f32 %v2886, %v2974
        %2976 = vmatmul.bf16.gmra.mxu0 %v2802
        %v2977 = vpop.f32.mrf.mxu0
        %v2978 = vadd.f32 %v2889, %v2977
        %v2979 = vpop.f32.mrf.mxu0
        %v2980 = vadd.f32 %v2891, %v2979
        %2981 = vdwg.mxu0
        %v2982 = vadd.f32 %v2404, %v2903
        %v2983 = vadd.f32 %v2406, %v2905
        %v2984 = vadd.f32 %v2409, %v2908
        %v2985 = vadd.f32 %v2411, %v2910
        %v2986 = vadd.f32 %v2414, %v2913
        %v2987 = vadd.f32 %v2416, %v2915
        %v2988 = vadd.f32 %v2419, %v2918
        %v2989 = vadd.f32 %v2421, %v2920
        %v2990 = vadd.f32 %v2424, %v2923
        %v2991 = vadd.f32 %v2426, %v2925
        %v2992 = vadd.f32 %v2429, %v2928
        %v2993 = vadd.f32 %v2431, %v2930
        %v2994 = vadd.f32 %v2434, %v2933
        %v2995 = vadd.f32 %v2436, %v2935
        %v2996 = vadd.f32 %v2439, %v2938
        %v2997 = vadd.f32 %v2441, %v2940
        %v2998 = vadd.f32 %v2444, %v2943
        %v2999 = vadd.f32 %v2446, %v2945
        %v3000 = vadd.f32 %v2449, %v2948
        %v3001 = vadd.f32 %v2451, %v2950
        %v3002 = vadd.f32 %v2454, %v2953
        %v3003 = vadd.f32 %v2456, %v2955
        %v3004 = vadd.f32 %v2459, %v2958
        %v3005 = vadd.f32 %v2461, %v2960
        %v3006 = vadd.f32 %v2464, %v2963
        %v3007 = vadd.f32 %v2466, %v2965
        %v3008 = vadd.f32 %v2469, %v2968
        %v3009 = vadd.f32 %v2471, %v2970
        %v3010 = vadd.f32 %v2474, %v2973
        %v3011 = vadd.f32 %v2476, %v2975
        %v3012 = vadd.f32 %v2479, %v2978
        %v3013 = vadd.f32 %v2481, %v2980
        %v3014 = vsel %vm1994, %v2982, 0.0
        %v3015 = vsel %vm1994, %v2983, 0.0
        %v3016 = vadd.f32 %v3014, %v3015
        %v3017 = vsel %vm1994, %v2984, 0.0
        %v3018 = vadd.f32 %v3016, %v3017
        %v3019 = vsel %vm1994, %v2985, 0.0
        %v3020 = vadd.f32 %v3018, %v3019
        %v3021 = vsel %vm1994, %v2986, 0.0
        %v3022 = vadd.f32 %v3020, %v3021
        %v3023 = vsel %vm1994, %v2987, 0.0
        %v3024 = vadd.f32 %v3022, %v3023
        %v3025 = vsel %vm1994, %v2988, 0.0
        %v3026 = vadd.f32 %v3024, %v3025
        %v3027 = vsel %vm1994, %v2989, 0.0
        %v3028 = vadd.f32 %v3026, %v3027
        %v3029 = vsel %vm1994, %v2990, 0.0
        %v3030 = vadd.f32 %v3028, %v3029
        %v3031 = vsel %vm1994, %v2991, 0.0
        %v3032 = vadd.f32 %v3030, %v3031
        %v3033 = vsel %vm1994, %v2992, 0.0
        %v3034 = vadd.f32 %v3032, %v3033
        %v3035 = vsel %vm1994, %v2993, 0.0
        %v3036 = vadd.f32 %v3034, %v3035
        %v3037 = vsel %vm1994, %v2994, 0.0
        %v3038 = vadd.f32 %v3036, %v3037
        %v3039 = vsel %vm1994, %v2995, 0.0
        %v3040 = vadd.f32 %v3038, %v3039
        %v3041 = vsel %vm1994, %v2996, 0.0
        %v3042 = vadd.f32 %v3040, %v3041
        %v3043 = vsel %vm1994, %v2997, 0.0
        %v3044 = vadd.f32 %v3042, %v3043
        %v3045 = vsel %vm1994, %v2998, 0.0
        %v3046 = vadd.f32 %v3044, %v3045
        %v3047 = vsel %vm1994, %v2999, 0.0
        %v3048 = vadd.f32 %v3046, %v3047
        %v3049 = vsel %vm1994, %v3000, 0.0
        %v3050 = vadd.f32 %v3048, %v3049
        %v3051 = vsel %vm1994, %v3001, 0.0
        %v3052 = vadd.f32 %v3050, %v3051
        %v3053 = vsel %vm1994, %v3002, 0.0
        %v3054 = vadd.f32 %v3052, %v3053
        %v3055 = vsel %vm1994, %v3003, 0.0
        %v3056 = vadd.f32 %v3054, %v3055
        %v3057 = vsel %vm1994, %v3004, 0.0
        %v3058 = vadd.f32 %v3056, %v3057
        %v3059 = vsel %vm1994, %v3005, 0.0
        %v3060 = vadd.f32 %v3058, %v3059
        %v3061 = vsel %vm1994, %v3006, 0.0
        %v3062 = vadd.f32 %v3060, %v3061
        %v3063 = vsel %vm1994, %v3007, 0.0
        %v3064 = vadd.f32 %v3062, %v3063
        %v3065 = vsel %vm1994, %v3008, 0.0
        %v3066 = vadd.f32 %v3064, %v3065
        %v3067 = vsel %vm1994, %v3009, 0.0
        %v3068 = vadd.f32 %v3066, %v3067
        %v3069 = vsel %vm1994, %v3010, 0.0
        %v3070 = vadd.f32 %v3068, %v3069
        %v3071 = vsel %vm1994, %v3011, 0.0
        %v3072 = vadd.f32 %v3070, %v3071
        %v3073 = vsel %vm1994, %v3012, 0.0
        %v3074 = vadd.f32 %v3072, %v3073
        %v3075 = vsel %vm1994, %v3013, 0.0
        %v3076 = vadd.f32 %v3074, %v3075
        %v3077 = vrot.slane %v3076, 4
        %v3078 = vadd.f32 %v3076, %v3077
        %v3079 = vrot.slane %v3078, 2
        %v3080 = vadd.f32 %v3078, %v3079
        %v3081 = vrot.slane %v3080, 1
        %v3082 = vadd.f32 %v3080, %v3081
        %v3083 = vmul.f32 %v2982, %v2982
        %v3084 = vmul.f32 %v2983, %v2983
        %v3085 = vmul.f32 %v2984, %v2984
        %v3086 = vmul.f32 %v2985, %v2985
        %v3087 = vmul.f32 %v2986, %v2986
        %v3088 = vmul.f32 %v2987, %v2987
        %v3089 = vmul.f32 %v2988, %v2988
        %v3090 = vmul.f32 %v2989, %v2989
        %v3091 = vmul.f32 %v2990, %v2990
        %v3092 = vmul.f32 %v2991, %v2991
        %v3093 = vmul.f32 %v2992, %v2992
        %v3094 = vmul.f32 %v2993, %v2993
        %v3095 = vmul.f32 %v2994, %v2994
        %v3096 = vmul.f32 %v2995, %v2995
        %v3097 = vmul.f32 %v2996, %v2996
        %v3098 = vmul.f32 %v2997, %v2997
        %v3099 = vmul.f32 %v2998, %v2998
        %v3100 = vmul.f32 %v2999, %v2999
        %v3101 = vmul.f32 %v3000, %v3000
        %v3102 = vmul.f32 %v3001, %v3001
        %v3103 = vmul.f32 %v3002, %v3002
        %v3104 = vmul.f32 %v3003, %v3003
        %v3105 = vmul.f32 %v3004, %v3004
        %v3106 = vmul.f32 %v3005, %v3005
        %v3107 = vmul.f32 %v3006, %v3006
        %v3108 = vmul.f32 %v3007, %v3007
        %v3109 = vmul.f32 %v3008, %v3008
        %v3110 = vmul.f32 %v3009, %v3009
        %v3111 = vmul.f32 %v3010, %v3010
        %v3112 = vmul.f32 %v3011, %v3011
        %v3113 = vmul.f32 %v3012, %v3012
        %v3114 = vmul.f32 %v3013, %v3013
        %v3115 = vsel %vm1994, %v3083, 0.0
        %v3116 = vsel %vm1994, %v3084, 0.0
        %v3117 = vadd.f32 %v3115, %v3116
        %v3118 = vsel %vm1994, %v3085, 0.0
        %v3119 = vadd.f32 %v3117, %v3118
        %v3120 = vsel %vm1994, %v3086, 0.0
        %v3121 = vadd.f32 %v3119, %v3120
        %v3122 = vsel %vm1994, %v3087, 0.0
        %v3123 = vadd.f32 %v3121, %v3122
        %v3124 = vsel %vm1994, %v3088, 0.0
        %v3125 = vadd.f32 %v3123, %v3124
        %v3126 = vsel %vm1994, %v3089, 0.0
        %v3127 = vadd.f32 %v3125, %v3126
        %v3128 = vsel %vm1994, %v3090, 0.0
        %v3129 = vadd.f32 %v3127, %v3128
        %v3130 = vsel %vm1994, %v3091, 0.0
        %v3131 = vadd.f32 %v3129, %v3130
        %v3132 = vsel %vm1994, %v3092, 0.0
        %v3133 = vadd.f32 %v3131, %v3132
        %v3134 = vsel %vm1994, %v3093, 0.0
        %v3135 = vadd.f32 %v3133, %v3134
        %v3136 = vsel %vm1994, %v3094, 0.0
        %v3137 = vadd.f32 %v3135, %v3136
        %v3138 = vsel %vm1994, %v3095, 0.0
        %v3139 = vadd.f32 %v3137, %v3138
        %v3140 = vsel %vm1994, %v3096, 0.0
        %v3141 = vadd.f32 %v3139, %v3140
        %v3142 = vsel %vm1994, %v3097, 0.0
        %v3143 = vadd.f32 %v3141, %v3142
        %v3144 = vsel %vm1994, %v3098, 0.0
        %v3145 = vadd.f32 %v3143, %v3144
        %v3146 = vsel %vm1994, %v3099, 0.0
        %v3147 = vadd.f32 %v3145, %v3146
        %v3148 = vsel %vm1994, %v3100, 0.0
        %v3149 = vadd.f32 %v3147, %v3148
        %v3150 = vsel %vm1994, %v3101, 0.0
        %v3151 = vadd.f32 %v3149, %v3150
        %v3152 = vsel %vm1994, %v3102, 0.0
        %v3153 = vadd.f32 %v3151, %v3152
        %v3154 = vsel %vm1994, %v3103, 0.0
        %v3155 = vadd.f32 %v3153, %v3154
        %v3156 = vsel %vm1994, %v3104, 0.0
        %v3157 = vadd.f32 %v3155, %v3156
        %v3158 = vsel %vm1994, %v3105, 0.0
        %v3159 = vadd.f32 %v3157, %v3158
        %v3160 = vsel %vm1994, %v3106, 0.0
        %v3161 = vadd.f32 %v3159, %v3160
        %v3162 = vsel %vm1994, %v3107, 0.0
        %v3163 = vadd.f32 %v3161, %v3162
        %v3164 = vsel %vm1994, %v3108, 0.0
        %v3165 = vadd.f32 %v3163, %v3164
        %v3166 = vsel %vm1994, %v3109, 0.0
        %v3167 = vadd.f32 %v3165, %v3166
        %v3168 = vsel %vm1994, %v3110, 0.0
        %v3169 = vadd.f32 %v3167, %v3168
        %v3170 = vsel %vm1994, %v3111, 0.0
        %v3171 = vadd.f32 %v3169, %v3170
        %v3172 = vsel %vm1994, %v3112, 0.0
        %v3173 = vadd.f32 %v3171, %v3172
        %v3174 = vsel %vm1994, %v3113, 0.0
        %v3175 = vadd.f32 %v3173, %v3174
        %v3176 = vsel %vm1994, %v3114, 0.0
        %v3177 = vadd.f32 %v3175, %v3176
        %v3178 = vrot.slane %v3177, 4
        %v3179 = vadd.f32 %v3177, %v3178
        %v3180 = vrot.slane %v3179, 2
        %v3181 = vadd.f32 %v3179, %v3180
        %v3182 = vrot.slane %v3181, 1
        %v3183 = vadd.f32 %v3181, %v3182
        %v3184 = vlaneseq
        %v3185 = vand.u32 %v3184, 127
        %vm3186 = vcmp.lt.s32.totalorder %v3185, 0
        %v3187 = vsub.s32 0, %v3185
        %v3188 = vsel %vm3186, %v3187, %v3185
        %v3189 = vshrl.u32 %v3188, 1
        %v3190 = vand.u32 %v3188, 1
        %v3191 = vsub.s32 0, %v3190
        %v3192 = vsel %vm3186, %v3191, %v3190
        %vm3193 = vcmp.ne.s32.totalorder %v3192, 0
        %vm3194 = vcmp.lt.s32.totalorder %v3192, 0
        %vm3195 = vmand %vm3194, %vm3193
        %v3196 = vadd.s32 %v3192, 2
        %v3197 = vsel %vm3195, %v3196, %v3192
        %vm3198 = vcmp.eq.s32.totalorder %v3197, 0
        %3200 = vrot.lane.b32.xlu0 %v3082, 127
        %v3201 = vpop.permute.xlu0 %3200
        %3203 = vrot.lane.b32.xlu0 %v3082, 63
        %v3204 = vpop.permute.xlu0 %3203
        %vm3206 = vcmask 515072
        %v3207 = vsel %vm3206, %v3201, %v3204
        %3208 = vrot.lane.b32.xlu0 %v3082, 65
        %v3209 = vpop.permute.xlu0 %3208
        %3211 = vrot.lane.b32.xlu0 %v3082, 1
        %v3212 = vpop.permute.xlu0 %3211
        %vm3214 = vcmask 7168
        %v3215 = vsel %vm3214, %v3209, %v3212
        %v3216 = vsel %vm3198, %v3207, %v3215
        %v3217 = vadd.f32 %v3082, %v3216
        %v3218 = vrcp.pop 512.0
        %v3219 = vmul.f32 512.0, %v3218
        %v3220 = vsub.f32 1.0, %v3219
        %v3221 = vmul.f32 %v3218, %v3220
        %v3222 = vadd.f32 %v3218, %v3221
        %vm3223 = vweird.f32 %v3218
        %v3224 = vsel %vm3223, %v3218, %v3222
        %v3225 = vmul.f32 %v3217, %v3224
        %3227 = vrot.lane.b32.xlu0 %v3183, 127
        %v3228 = vpop.permute.xlu0 %3227
        %3230 = vrot.lane.b32.xlu0 %v3183, 63
        %v3231 = vpop.permute.xlu0 %3230
        %v3233 = vsel %vm3206, %v3228, %v3231
        %3234 = vrot.lane.b32.xlu0 %v3183, 65
        %v3235 = vpop.permute.xlu0 %3234
        %3237 = vrot.lane.b32.xlu0 %v3183, 1
        %v3238 = vpop.permute.xlu0 %3237
        %v3240 = vsel %vm3214, %v3235, %v3238
        %v3241 = vsel %vm3198, %v3233, %v3240
        %v3242 = vadd.f32 %v3183, %v3241
        %v3243 = vmul.f32 %v3242, %v3224
        %v3244 = vmul.f32 %v3225, %v3225
        %v3245 = vsub.f32 %v3243, %v3244
        %v3246 = vmax.f32 %v3245, 0.0
        %v3247 = vadd.f32 %v3246, 1e-05
        %v3248 = vrsqrt.pop %v3247
        %v3249 = vmul.f32 %v3248, %v3247
        %v3250 = vmul.f32 %v3249, %v3248
        %v3251 = vmul.f32 0.5, %v3250
        %v3252 = vsub.f32 1.5, %v3251
        %v3253 = vmul.f32 %v3248, %v3252
        %vm3254 = vweird.f32 %v3247
        %vm3255 = vweird.f32 %v3248
        %vm3256 = vmor %vm3254, %vm3255
        %v3257 = vsel %vm3256, %v3248, %v3253
        %v3258 = vperm.slane %v3225, 0
        %v3259 = vsub.f32 %v2982, %v3258
        %v3260 = vsub.f32 %v2983, %v3258
        %v3261 = vsub.f32 %v2984, %v3258
        %v3262 = vsub.f32 %v2985, %v3258
        %v3263 = vsub.f32 %v2986, %v3258
        %v3264 = vsub.f32 %v2987, %v3258
        %v3265 = vsub.f32 %v2988, %v3258
        %v3266 = vsub.f32 %v2989, %v3258
        %v3267 = vsub.f32 %v2990, %v3258
        %v3268 = vsub.f32 %v2991, %v3258
        %v3269 = vsub.f32 %v2992, %v3258
        %v3270 = vsub.f32 %v2993, %v3258
        %v3271 = vsub.f32 %v2994, %v3258
        %v3272 = vsub.f32 %v2995, %v3258
        %v3273 = vsub.f32 %v2996, %v3258
        %v3274 = vsub.f32 %v2997, %v3258
        %v3275 = vsub.f32 %v2998, %v3258
        %v3276 = vsub.f32 %v2999, %v3258
        %v3277 = vsub.f32 %v3000, %v3258
        %v3278 = vsub.f32 %v3001, %v3258
        %v3279 = vsub.f32 %v3002, %v3258
        %v3280 = vsub.f32 %v3003, %v3258
        %v3281 = vsub.f32 %v3004, %v3258
        %v3282 = vsub.f32 %v3005, %v3258
        %v3283 = vsub.f32 %v3006, %v3258
        %v3284 = vsub.f32 %v3007, %v3258
        %v3285 = vsub.f32 %v3008, %v3258
        %v3286 = vsub.f32 %v3009, %v3258
        %v3287 = vsub.f32 %v3010, %v3258
        %v3288 = vsub.f32 %v3011, %v3258
        %v3289 = vsub.f32 %v3012, %v3258
        %v3290 = vsub.f32 %v3013, %v3258
        %v3291 = vperm.slane %v3257, 0
        %v3292 = vmul.f32 %v3259, %v3291
        %v3293 = vmul.f32 %v3260, %v3291
        %v3294 = vmul.f32 %v3261, %v3291
        %v3295 = vmul.f32 %v3262, %v3291
        %v3296 = vmul.f32 %v3263, %v3291
        %v3297 = vmul.f32 %v3264, %v3291
        %v3298 = vmul.f32 %v3265, %v3291
        %v3299 = vmul.f32 %v3266, %v3291
        %v3300 = vmul.f32 %v3267, %v3291
        %v3301 = vmul.f32 %v3268, %v3291
        %v3302 = vmul.f32 %v3269, %v3291
        %v3303 = vmul.f32 %v3270, %v3291
        %v3304 = vmul.f32 %v3271, %v3291
        %v3305 = vmul.f32 %v3272, %v3291
        %v3306 = vmul.f32 %v3273, %v3291
        %v3307 = vmul.f32 %v3274, %v3291
        %v3308 = vmul.f32 %v3275, %v3291
        %v3309 = vmul.f32 %v3276, %v3291
        %v3310 = vmul.f32 %v3277, %v3291
        %v3311 = vmul.f32 %v3278, %v3291
        %v3312 = vmul.f32 %v3279, %v3291
        %v3313 = vmul.f32 %v3280, %v3291
        %v3314 = vmul.f32 %v3281, %v3291
        %v3315 = vmul.f32 %v3282, %v3291
        %v3316 = vmul.f32 %v3283, %v3291
        %v3317 = vmul.f32 %v3284, %v3291
        %v3318 = vmul.f32 %v3285, %v3291
        %v3319 = vmul.f32 %v3286, %v3291
        %v3320 = vmul.f32 %v3287, %v3291
        %v3321 = vmul.f32 %v3288, %v3291
        %v3322 = vmul.f32 %v3289, %v3291
        %v3323 = vmul.f32 %v3290, %v3291
        %v3324 = vld [vmem:[%s2] sm:$0x1]
        %v3326 = vperm.slane %v3324, 0
        %v3328 = vmul.f32 %v3292, %v3326
        %v3329 = vmul.f32 %v3293, %v3326
        %v3330 = vmul.f32 %v3294, %v3326
        %v3331 = vmul.f32 %v3295, %v3326
        %v3332 = vmul.f32 %v3296, %v3326
        %v3333 = vmul.f32 %v3297, %v3326
        %v3334 = vmul.f32 %v3298, %v3326
        %v3335 = vmul.f32 %v3299, %v3326
        %v3336 = vmul.f32 %v3300, %v3326
        %v3337 = vmul.f32 %v3301, %v3326
        %v3338 = vmul.f32 %v3302, %v3326
        %v3339 = vmul.f32 %v3303, %v3326
        %v3340 = vmul.f32 %v3304, %v3326
        %v3341 = vmul.f32 %v3305, %v3326
        %v3342 = vmul.f32 %v3306, %v3326
        %v3343 = vmul.f32 %v3307, %v3326
        %v3344 = vmul.f32 %v3308, %v3326
        %v3345 = vmul.f32 %v3309, %v3326
        %v3346 = vmul.f32 %v3310, %v3326
        %v3347 = vmul.f32 %v3311, %v3326
        %v3348 = vmul.f32 %v3312, %v3326
        %v3349 = vmul.f32 %v3313, %v3326
        %v3350 = vmul.f32 %v3314, %v3326
        %v3351 = vmul.f32 %v3315, %v3326
        %v3352 = vmul.f32 %v3316, %v3326
        %v3353 = vmul.f32 %v3317, %v3326
        %v3354 = vmul.f32 %v3318, %v3326
        %v3355 = vmul.f32 %v3319, %v3326
        %v3356 = vmul.f32 %v3320, %v3326
        %v3357 = vmul.f32 %v3321, %v3326
        %v3358 = vmul.f32 %v3322, %v3326
        %v3359 = vmul.f32 %v3323, %v3326
        %v3360 = vld [vmem:[%s3] sm:$0x1]
        %v3362 = vperm.slane %v3360, 0
        %v3364 = vadd.f32 %v3328, %v3362
        %v3365 = vadd.f32 %v3329, %v3362
        %v3366 = vadd.f32 %v3330, %v3362
        %v3367 = vadd.f32 %v3331, %v3362
        %v3368 = vadd.f32 %v3332, %v3362
        %v3369 = vadd.f32 %v3333, %v3362
        %v3370 = vadd.f32 %v3334, %v3362
        %v3371 = vadd.f32 %v3335, %v3362
        %v3372 = vadd.f32 %v3336, %v3362
        %v3373 = vadd.f32 %v3337, %v3362
        %v3374 = vadd.f32 %v3338, %v3362
        %v3375 = vadd.f32 %v3339, %v3362
        %v3376 = vadd.f32 %v3340, %v3362
        %v3377 = vadd.f32 %v3341, %v3362
        %v3378 = vadd.f32 %v3342, %v3362
        %v3379 = vadd.f32 %v3343, %v3362
        %v3380 = vadd.f32 %v3344, %v3362
        %v3381 = vadd.f32 %v3345, %v3362
        %v3382 = vadd.f32 %v3346, %v3362
        %v3383 = vadd.f32 %v3347, %v3362
        %v3384 = vadd.f32 %v3348, %v3362
        %v3385 = vadd.f32 %v3349, %v3362
        %v3386 = vadd.f32 %v3350, %v3362
        %v3387 = vadd.f32 %v3351, %v3362
        %v3388 = vadd.f32 %v3352, %v3362
        %v3389 = vadd.f32 %v3353, %v3362
        %v3390 = vadd.f32 %v3354, %v3362
        %v3391 = vadd.f32 %v3355, %v3362
        %v3392 = vadd.f32 %v3356, %v3362
        %v3393 = vadd.f32 %v3357, %v3362
        %v3394 = vadd.f32 %v3358, %v3362
        %v3395 = vadd.f32 %v3359, %v3362
        %v3396 = vmax.f32 %v3364, 0.0
        %v3397 = vmax.f32 %v3365, 0.0
        %v3398 = vmax.f32 %v3366, 0.0
        %v3399 = vmax.f32 %v3367, 0.0
        %v3400 = vmax.f32 %v3368, 0.0
        %v3401 = vmax.f32 %v3369, 0.0
        %v3402 = vmax.f32 %v3370, 0.0
        %v3403 = vmax.f32 %v3371, 0.0
        %v3404 = vmax.f32 %v3372, 0.0
        %v3405 = vmax.f32 %v3373, 0.0
        %v3406 = vmax.f32 %v3374, 0.0
        %v3407 = vmax.f32 %v3375, 0.0
        %v3408 = vmax.f32 %v3376, 0.0
        %v3409 = vmax.f32 %v3377, 0.0
        %v3410 = vmax.f32 %v3378, 0.0
        %v3411 = vmax.f32 %v3379, 0.0
        %v3412 = vmax.f32 %v3380, 0.0
        %v3413 = vmax.f32 %v3381, 0.0
        %v3414 = vmax.f32 %v3382, 0.0
        %v3415 = vmax.f32 %v3383, 0.0
        %v3416 = vmax.f32 %v3384, 0.0
        %v3417 = vmax.f32 %v3385, 0.0
        %v3418 = vmax.f32 %v3386, 0.0
        %v3419 = vmax.f32 %v3387, 0.0
        %v3420 = vmax.f32 %v3388, 0.0
        %v3421 = vmax.f32 %v3389, 0.0
        %v3422 = vmax.f32 %v3390, 0.0
        %v3423 = vmax.f32 %v3391, 0.0
        %v3424 = vmax.f32 %v3392, 0.0
        %v3425 = vmax.f32 %v3393, 0.0
        %v3426 = vmax.f32 %v3394, 0.0
        %v3427 = vmax.f32 %v3395, 0.0
        %v3428 = vmul.f32 %v3396, %v889
        %v3429 = vmul.f32 %v3397, %v890
        %v3430 = vmul.f32 %v3398, %v891
        %v3431 = vmul.f32 %v3399, %v892
        %v3432 = vmul.f32 %v3400, %v893
        %v3433 = vmul.f32 %v3401, %v894
        %v3434 = vmul.f32 %v3402, %v895
        %v3435 = vmul.f32 %v3403, %v896
        %v3436 = vmul.f32 %v3404, %v897
        %v3437 = vmul.f32 %v3405, %v898
        %v3438 = vmul.f32 %v3406, %v899
        %v3439 = vmul.f32 %v3407, %v900
        %v3440 = vmul.f32 %v3408, %v901
        %v3441 = vmul.f32 %v3409, %v902
        %v3442 = vmul.f32 %v3410, %v903
        %v3443 = vmul.f32 %v3411, %v904
        %v3444 = vmul.f32 %v3412, %v905
        %v3445 = vmul.f32 %v3413, %v906
        %v3446 = vmul.f32 %v3414, %v907
        %v3447 = vmul.f32 %v3415, %v908
        %v3448 = vmul.f32 %v3416, %v909
        %v3449 = vmul.f32 %v3417, %v910
        %v3450 = vmul.f32 %v3418, %v911
        %v3451 = vmul.f32 %v3419, %v912
        %v3452 = vmul.f32 %v3420, %v913
        %v3453 = vmul.f32 %v3421, %v914
        %v3454 = vmul.f32 %v3422, %v915
        %v3455 = vmul.f32 %v3423, %v916
        %v3456 = vmul.f32 %v3424, %v917
        %v3457 = vmul.f32 %v3425, %v918
        %v3458 = vmul.f32 %v3426, %v919
        %v3459 = vmul.f32 %v3427, %v920
        %v3461 = vrot.slane %v3459, 7
        %v3494 = vrot.slane %v3428, 7
        %v3495 = vrot.slane %v3429, 7
        %v3496 = vsel %vm1147, %v3494, %v3495
        %v3497 = vrot.slane %v3430, 7
        %v3498 = vsel %vm1147, %v3495, %v3497
        %v3499 = vrot.slane %v3431, 7
        %v3500 = vsel %vm1147, %v3497, %v3499
        %v3501 = vrot.slane %v3432, 7
        %v3502 = vsel %vm1147, %v3499, %v3501
        %v3503 = vrot.slane %v3433, 7
        %v3504 = vsel %vm1147, %v3501, %v3503
        %v3505 = vrot.slane %v3434, 7
        %v3506 = vsel %vm1147, %v3503, %v3505
        %v3507 = vrot.slane %v3435, 7
        %v3508 = vsel %vm1147, %v3505, %v3507
        %v3509 = vrot.slane %v3436, 7
        %v3510 = vsel %vm1147, %v3507, %v3509
        %v3511 = vrot.slane %v3437, 7
        %v3512 = vsel %vm1147, %v3509, %v3511
        %v3513 = vrot.slane %v3438, 7
        %v3514 = vsel %vm1147, %v3511, %v3513
        %v3515 = vrot.slane %v3439, 7
        %v3516 = vsel %vm1147, %v3513, %v3515
        %v3517 = vrot.slane %v3440, 7
        %v3518 = vsel %vm1147, %v3515, %v3517
        %v3519 = vrot.slane %v3441, 7
        %v3520 = vsel %vm1147, %v3517, %v3519
        %v3521 = vrot.slane %v3442, 7
        %v3522 = vsel %vm1147, %v3519, %v3521
        %v3523 = vrot.slane %v3443, 7
        %v3524 = vsel %vm1147, %v3521, %v3523
        %v3525 = vrot.slane %v3444, 7
        %v3526 = vsel %vm1147, %v3523, %v3525
        %v3527 = vrot.slane %v3445, 7
        %v3528 = vsel %vm1147, %v3525, %v3527
        %v3529 = vrot.slane %v3446, 7
        %v3530 = vsel %vm1147, %v3527, %v3529
        %v3531 = vrot.slane %v3447, 7
        %v3532 = vsel %vm1147, %v3529, %v3531
        %v3533 = vrot.slane %v3448, 7
        %v3534 = vsel %vm1147, %v3531, %v3533
        %v3535 = vrot.slane %v3449, 7
        %v3536 = vsel %vm1147, %v3533, %v3535
        %v3537 = vrot.slane %v3450, 7
        %v3538 = vsel %vm1147, %v3535, %v3537
        %v3539 = vrot.slane %v3451, 7
        %v3540 = vsel %vm1147, %v3537, %v3539
        %v3541 = vrot.slane %v3452, 7
        %v3542 = vsel %vm1147, %v3539, %v3541
        %v3543 = vrot.slane %v3453, 7
        %v3544 = vsel %vm1147, %v3541, %v3543
        %v3545 = vrot.slane %v3454, 7
        %v3546 = vsel %vm1147, %v3543, %v3545
        %v3547 = vrot.slane %v3455, 7
        %v3548 = vsel %vm1147, %v3545, %v3547
        %v3549 = vrot.slane %v3456, 7
        %v3550 = vsel %vm1147, %v3547, %v3549
        %v3551 = vrot.slane %v3457, 7
        %v3552 = vsel %vm1147, %v3549, %v3551
        %v3553 = vrot.slane %v3458, 7
        %v3554 = vsel %vm1147, %v3551, %v3553
        %v3555 = vsel %vm1147, %v3553, %v3461
        %v3588 = vsel %vm1147, %v3461, %v3494
        %v3589 = vmul.f32 %v3396, %v985
        %v3590 = vmul.f32 %v3397, %v986
        %v3591 = vmul.f32 %v3398, %v987
        %v3592 = vmul.f32 %v3399, %v988
        %v3593 = vmul.f32 %v3400, %v989
        %v3594 = vmul.f32 %v3401, %v990
        %v3595 = vmul.f32 %v3402, %v991
        %v3596 = vmul.f32 %v3403, %v992
        %v3597 = vmul.f32 %v3404, %v993
        %v3598 = vmul.f32 %v3405, %v994
        %v3599 = vmul.f32 %v3406, %v995
        %v3600 = vmul.f32 %v3407, %v996
        %v3601 = vmul.f32 %v3408, %v997
        %v3602 = vmul.f32 %v3409, %v998
        %v3603 = vmul.f32 %v3410, %v999
        %v3604 = vmul.f32 %v3411, %v1000
        %v3605 = vmul.f32 %v3412, %v1001
        %v3606 = vmul.f32 %v3413, %v1002
        %v3607 = vmul.f32 %v3414, %v1003
        %v3608 = vmul.f32 %v3415, %v1004
        %v3609 = vmul.f32 %v3416, %v1005
        %v3610 = vmul.f32 %v3417, %v1006
        %v3611 = vmul.f32 %v3418, %v1007
        %v3612 = vmul.f32 %v3419, %v1008
        %v3613 = vmul.f32 %v3420, %v1009
        %v3614 = vmul.f32 %v3421, %v1010
        %v3615 = vmul.f32 %v3422, %v1011
        %v3616 = vmul.f32 %v3423, %v1012
        %v3617 = vmul.f32 %v3424, %v1013
        %v3618 = vmul.f32 %v3425, %v1014
        %v3619 = vmul.f32 %v3426, %v1015
        %v3620 = vmul.f32 %v3427, %v1016
        %v3653 = vrot.slane %v3589, 1
        %v3654 = vrot.slane %v3590, 1
        %v3655 = vsel %vm1307, %v3653, %v3654
        %v3656 = vrot.slane %v3591, 1
        %v3657 = vsel %vm1307, %v3654, %v3656
        %v3658 = vrot.slane %v3592, 1
        %v3659 = vsel %vm1307, %v3656, %v3658
        %v3660 = vrot.slane %v3593, 1
        %v3661 = vsel %vm1307, %v3658, %v3660
        %v3662 = vrot.slane %v3594, 1
        %v3663 = vsel %vm1307, %v3660, %v3662
        %v3664 = vrot.slane %v3595, 1
        %v3665 = vsel %vm1307, %v3662, %v3664
        %v3666 = vrot.slane %v3596, 1
        %v3667 = vsel %vm1307, %v3664, %v3666
        %v3668 = vrot.slane %v3597, 1
        %v3669 = vsel %vm1307, %v3666, %v3668
        %v3670 = vrot.slane %v3598, 1
        %v3671 = vsel %vm1307, %v3668, %v3670
        %v3672 = vrot.slane %v3599, 1
        %v3673 = vsel %vm1307, %v3670, %v3672
        %v3674 = vrot.slane %v3600, 1
        %v3675 = vsel %vm1307, %v3672, %v3674
        %v3676 = vrot.slane %v3601, 1
        %v3677 = vsel %vm1307, %v3674, %v3676
        %v3678 = vrot.slane %v3602, 1
        %v3679 = vsel %vm1307, %v3676, %v3678
        %v3680 = vrot.slane %v3603, 1
        %v3681 = vsel %vm1307, %v3678, %v3680
        %v3682 = vrot.slane %v3604, 1
        %v3683 = vsel %vm1307, %v3680, %v3682
        %v3684 = vrot.slane %v3605, 1
        %v3685 = vsel %vm1307, %v3682, %v3684
        %v3686 = vrot.slane %v3606, 1
        %v3687 = vsel %vm1307, %v3684, %v3686
        %v3688 = vrot.slane %v3607, 1
        %v3689 = vsel %vm1307, %v3686, %v3688
        %v3690 = vrot.slane %v3608, 1
        %v3691 = vsel %vm1307, %v3688, %v3690
        %v3692 = vrot.slane %v3609, 1
        %v3693 = vsel %vm1307, %v3690, %v3692
        %v3694 = vrot.slane %v3610, 1
        %v3695 = vsel %vm1307, %v3692, %v3694
        %v3696 = vrot.slane %v3611, 1
        %v3697 = vsel %vm1307, %v3694, %v3696
        %v3698 = vrot.slane %v3612, 1
        %v3699 = vsel %vm1307, %v3696, %v3698
        %v3700 = vrot.slane %v3613, 1
        %v3701 = vsel %vm1307, %v3698, %v3700
        %v3702 = vrot.slane %v3614, 1
        %v3703 = vsel %vm1307, %v3700, %v3702
        %v3704 = vrot.slane %v3615, 1
        %v3705 = vsel %vm1307, %v3702, %v3704
        %v3706 = vrot.slane %v3616, 1
        %v3707 = vsel %vm1307, %v3704, %v3706
        %v3708 = vrot.slane %v3617, 1
        %v3709 = vsel %vm1307, %v3706, %v3708
        %v3710 = vrot.slane %v3618, 1
        %v3711 = vsel %vm1307, %v3708, %v3710
        %v3712 = vrot.slane %v3619, 1
        %v3713 = vsel %vm1307, %v3710, %v3712
        %v3714 = vrot.slane %v3620, 1
        %v3715 = vsel %vm1307, %v3712, %v3714
        %v3749 = vsel %vm1307, %v3714, %v3653
        %v3750 = vpack.c.bf16 %v3588, %v3588
        %v3751 = vpack.c.bf16 %v3496, %v3496
        %v3752 = vpack.c.bf16 %v3498, %v3498
        %v3753 = vpack.c.bf16 %v3500, %v3500
        %v3754 = vpack.c.bf16 %v3502, %v3502
        %v3755 = vpack.c.bf16 %v3504, %v3504
        %v3756 = vpack.c.bf16 %v3506, %v3506
        %v3757 = vpack.c.bf16 %v3508, %v3508
        %v3758 = vpack.c.bf16 %v3510, %v3510
        %v3759 = vpack.c.bf16 %v3512, %v3512
        %v3760 = vpack.c.bf16 %v3514, %v3514
        %v3761 = vpack.c.bf16 %v3516, %v3516
        %v3762 = vpack.c.bf16 %v3518, %v3518
        %v3763 = vpack.c.bf16 %v3520, %v3520
        %v3764 = vpack.c.bf16 %v3522, %v3522
        %v3765 = vpack.c.bf16 %v3524, %v3524
        %v3766 = vpack.c.bf16 %v3526, %v3526
        %v3767 = vpack.c.bf16 %v3528, %v3528
        %v3768 = vpack.c.bf16 %v3530, %v3530
        %v3769 = vpack.c.bf16 %v3532, %v3532
        %v3770 = vpack.c.bf16 %v3534, %v3534
        %v3771 = vpack.c.bf16 %v3536, %v3536
        %v3772 = vpack.c.bf16 %v3538, %v3538
        %v3773 = vpack.c.bf16 %v3540, %v3540
        %v3774 = vpack.c.bf16 %v3542, %v3542
        %v3775 = vpack.c.bf16 %v3544, %v3544
        %v3776 = vpack.c.bf16 %v3546, %v3546
        %v3777 = vpack.c.bf16 %v3548, %v3548
        %v3778 = vpack.c.bf16 %v3550, %v3550
        %v3779 = vpack.c.bf16 %v3552, %v3552
        %v3780 = vpack.c.bf16 %v3554, %v3554
        %v3781 = vpack.c.bf16 %v3555, %v3555
        %3782 = vst.msk [vmem:[#allocation3 + $0x18] sm:$0xf] %vm1437, %v3750
        %3783 = vst.msk [vmem:[#allocation3 + $0x20] sm:$0xf] %vm1437, %v3751
        %3784 = vst.msk [vmem:[#allocation3 + $0x28] sm:$0xf] %vm1437, %v3752
        %3785 = vst.msk [vmem:[#allocation3 + $0x30] sm:$0xf] %vm1437, %v3753
        %3786 = vst.msk [vmem:[#allocation3 + $0x38] sm:$0xf] %vm1437, %v3754
        %3787 = vst.msk [vmem:[#allocation3 + $0x40] sm:$0xf] %vm1437, %v3755
        %3788 = vst.msk [vmem:[#allocation3 + $0x48] sm:$0xf] %vm1437, %v3756
        %3789 = vst.msk [vmem:[#allocation3 + $0x50] sm:$0xf] %vm1437, %v3757
        %3790 = vst.msk [vmem:[#allocation3 + $0x58] sm:$0xf] %vm1437, %v3758
        %3791 = vst.msk [vmem:[#allocation3 + $0x60] sm:$0xf] %vm1437, %v3759
        %3792 = vst.msk [vmem:[#allocation3 + $0x68] sm:$0xf] %vm1437, %v3760
        %3793 = vst.msk [vmem:[#allocation3 + $0x70] sm:$0xf] %vm1437, %v3761
        %3794 = vst.msk [vmem:[#allocation3 + $0x78] sm:$0xf] %vm1437, %v3762
        %3795 = vst.msk [vmem:[#allocation3 + $0x80] sm:$0xf] %vm1437, %v3763
        %3796 = vst.msk [vmem:[#allocation3 + $0x88] sm:$0xf] %vm1437, %v3764
        %3797 = vst.msk [vmem:[#allocation3 + $0x90] sm:$0xf] %vm1437, %v3765
        %3798 = vst.msk [vmem:[#allocation3 + $0x98] sm:$0xf] %vm1437, %v3766
        %3799 = vst.msk [vmem:[#allocation3 + $0xa0] sm:$0xf] %vm1437, %v3767
        %3800 = vst.msk [vmem:[#allocation3 + $0xa8] sm:$0xf] %vm1437, %v3768
        %3801 = vst.msk [vmem:[#allocation3 + $0xb0] sm:$0xf] %vm1437, %v3769
        %3802 = vst.msk [vmem:[#allocation3 + $0xb8] sm:$0xf] %vm1437, %v3770
        %3803 = vst.msk [vmem:[#allocation3 + $0xc0] sm:$0xf] %vm1437, %v3771
        %3804 = vst.msk [vmem:[#allocation3 + $0xc8] sm:$0xf] %vm1437, %v3772
        %3805 = vst.msk [vmem:[#allocation3 + $0xd0] sm:$0xf] %vm1437, %v3773
        %3806 = vst.msk [vmem:[#allocation3 + $0xd8] sm:$0xf] %vm1437, %v3774
        %3807 = vst.msk [vmem:[#allocation3 + $0xe0] sm:$0xf] %vm1437, %v3775
        %3808 = vst.msk [vmem:[#allocation3 + $0xe8] sm:$0xf] %vm1437, %v3776
        %3809 = vst.msk [vmem:[#allocation3 + $0xf0] sm:$0xf] %vm1437, %v3777
        %3810 = vst.msk [vmem:[#allocation3 + $0xf8] sm:$0xf] %vm1437, %v3778
        %3811 = vst.msk [vmem:[#allocation3 + $0x100] sm:$0xf] %vm1437, %v3779
        %3812 = vst.msk [vmem:[#allocation3 + $0x108] sm:$0xf] %vm1437, %v3780
        %3813 = vst.msk [vmem:[#allocation3 + $0x110] sm:$0xf] %vm1437, %v3781
        %v3814 = vpack.c.bf16 %v3396, %v3396
        %v3815 = vpack.c.bf16 %v3397, %v3397
        %v3816 = vpack.c.bf16 %v3398, %v3398
        %v3817 = vpack.c.bf16 %v3399, %v3399
        %v3818 = vpack.c.bf16 %v3400, %v3400
        %v3819 = vpack.c.bf16 %v3401, %v3401
        %v3820 = vpack.c.bf16 %v3402, %v3402
        %v3821 = vpack.c.bf16 %v3403, %v3403
        %v3822 = vpack.c.bf16 %v3404, %v3404
        %v3823 = vpack.c.bf16 %v3405, %v3405
        %v3824 = vpack.c.bf16 %v3406, %v3406
        %v3825 = vpack.c.bf16 %v3407, %v3407
        %v3826 = vpack.c.bf16 %v3408, %v3408
        %v3827 = vpack.c.bf16 %v3409, %v3409
        %v3828 = vpack.c.bf16 %v3410, %v3410
        %v3829 = vpack.c.bf16 %v3411, %v3411
        %v3830 = vpack.c.bf16 %v3412, %v3412
        %v3831 = vpack.c.bf16 %v3413, %v3413
        %v3832 = vpack.c.bf16 %v3414, %v3414
        %v3833 = vpack.c.bf16 %v3415, %v3415
        %v3834 = vpack.c.bf16 %v3416, %v3416
        %v3835 = vpack.c.bf16 %v3417, %v3417
        %v3836 = vpack.c.bf16 %v3418, %v3418
        %v3837 = vpack.c.bf16 %v3419, %v3419
        %v3838 = vpack.c.bf16 %v3420, %v3420
        %v3839 = vpack.c.bf16 %v3421, %v3421
        %v3840 = vpack.c.bf16 %v3422, %v3422
        %v3841 = vpack.c.bf16 %v3423, %v3423
        %v3842 = vpack.c.bf16 %v3424, %v3424
        %v3843 = vpack.c.bf16 %v3425, %v3425
        %v3844 = vpack.c.bf16 %v3426, %v3426
        %v3845 = vpack.c.bf16 %v3427, %v3427
        %3878 = vrot.lane.b32.xlu0 %v3814, 64
        %v3879 = vpop.permute.xlu0 %3878
        %3880 = vrot.lane.b32.xlu0 %v3815, 64
        %v3881 = vpop.permute.xlu0 %3880
        %3882 = vrot.lane.b32.xlu0 %v3816, 64
        %v3883 = vpop.permute.xlu0 %3882
        %3884 = vrot.lane.b32.xlu0 %v3817, 64
        %v3885 = vpop.permute.xlu0 %3884
        %3886 = vrot.lane.b32.xlu0 %v3818, 64
        %v3887 = vpop.permute.xlu0 %3886
        %3888 = vrot.lane.b32.xlu0 %v3819, 64
        %v3889 = vpop.permute.xlu0 %3888
        %3890 = vrot.lane.b32.xlu0 %v3820, 64
        %v3891 = vpop.permute.xlu0 %3890
        %3892 = vrot.lane.b32.xlu0 %v3821, 64
        %v3893 = vpop.permute.xlu0 %3892
        %3894 = vrot.lane.b32.xlu0 %v3822, 64
        %v3895 = vpop.permute.xlu0 %3894
        %3896 = vrot.lane.b32.xlu0 %v3823, 64
        %v3897 = vpop.permute.xlu0 %3896
        %3898 = vrot.lane.b32.xlu0 %v3824, 64
        %v3899 = vpop.permute.xlu0 %3898
        %3900 = vrot.lane.b32.xlu0 %v3825, 64
        %v3901 = vpop.permute.xlu0 %3900
        %3902 = vrot.lane.b32.xlu0 %v3826, 64
        %v3903 = vpop.permute.xlu0 %3902
        %3904 = vrot.lane.b32.xlu0 %v3827, 64
        %v3905 = vpop.permute.xlu0 %3904
        %3906 = vrot.lane.b32.xlu0 %v3828, 64
        %v3907 = vpop.permute.xlu0 %3906
        %3908 = vrot.lane.b32.xlu0 %v3829, 64
        %v3909 = vpop.permute.xlu0 %3908
        %3910 = vrot.lane.b32.xlu0 %v3830, 64
        %v3911 = vpop.permute.xlu0 %3910
        %3912 = vrot.lane.b32.xlu0 %v3831, 64
        %v3913 = vpop.permute.xlu0 %3912
        %3914 = vrot.lane.b32.xlu0 %v3832, 64
        %v3915 = vpop.permute.xlu0 %3914
        %3916 = vrot.lane.b32.xlu0 %v3833, 64
        %v3917 = vpop.permute.xlu0 %3916
        %3918 = vrot.lane.b32.xlu0 %v3834, 64
        %v3919 = vpop.permute.xlu0 %3918
        %3920 = vrot.lane.b32.xlu0 %v3835, 64
        %v3921 = vpop.permute.xlu0 %3920
        %3922 = vrot.lane.b32.xlu0 %v3836, 64
        %v3923 = vpop.permute.xlu0 %3922
        %3924 = vrot.lane.b32.xlu0 %v3837, 64
        %v3925 = vpop.permute.xlu0 %3924
        %3926 = vrot.lane.b32.xlu0 %v3838, 64
        %v3927 = vpop.permute.xlu0 %3926
        %3928 = vrot.lane.b32.xlu0 %v3839, 64
        %v3929 = vpop.permute.xlu0 %3928
        %3930 = vrot.lane.b32.xlu0 %v3840, 64
        %v3931 = vpop.permute.xlu0 %3930
        %3932 = vrot.lane.b32.xlu0 %v3841, 64
        %v3933 = vpop.permute.xlu0 %3932
        %3934 = vrot.lane.b32.xlu0 %v3842, 64
        %v3935 = vpop.permute.xlu0 %3934
        %3936 = vrot.lane.b32.xlu0 %v3843, 64
        %v3937 = vpop.permute.xlu0 %3936
        %3938 = vrot.lane.b32.xlu0 %v3844, 64
        %v3939 = vpop.permute.xlu0 %3938
        %3940 = vrot.lane.b32.xlu0 %v3845, 64
        %v3941 = vpop.permute.xlu0 %3940
        %3974 = vst.msk [vmem:[#allocation3 + $0x18] sm:$0xf] %vm1598, %v3879
        %3975 = vst.msk [vmem:[#allocation3 + $0x20] sm:$0xf] %vm1598, %v3881
        %3976 = vst.msk [vmem:[#allocation3 + $0x28] sm:$0xf] %vm1598, %v3883
        %3977 = vst.msk [vmem:[#allocation3 + $0x30] sm:$0xf] %vm1598, %v3885
        %3978 = vst.msk [vmem:[#allocation3 + $0x38] sm:$0xf] %vm1598, %v3887
        %3979 = vst.msk [vmem:[#allocation3 + $0x40] sm:$0xf] %vm1598, %v3889
        %3980 = vst.msk [vmem:[#allocation3 + $0x48] sm:$0xf] %vm1598, %v3891
        %3981 = vst.msk [vmem:[#allocation3 + $0x50] sm:$0xf] %vm1598, %v3893
        %3982 = vst.msk [vmem:[#allocation3 + $0x58] sm:$0xf] %vm1598, %v3895
        %3983 = vst.msk [vmem:[#allocation3 + $0x60] sm:$0xf] %vm1598, %v3897
        %3984 = vst.msk [vmem:[#allocation3 + $0x68] sm:$0xf] %vm1598, %v3899
        %3985 = vst.msk [vmem:[#allocation3 + $0x70] sm:$0xf] %vm1598, %v3901
        %3986 = vst.msk [vmem:[#allocation3 + $0x78] sm:$0xf] %vm1598, %v3903
        %3987 = vst.msk [vmem:[#allocation3 + $0x80] sm:$0xf] %vm1598, %v3905
        %3988 = vst.msk [vmem:[#allocation3 + $0x88] sm:$0xf] %vm1598, %v3907
        %3989 = vst.msk [vmem:[#allocation3 + $0x90] sm:$0xf] %vm1598, %v3909
        %3990 = vst.msk [vmem:[#allocation3 + $0x98] sm:$0xf] %vm1598, %v3911
        %3991 = vst.msk [vmem:[#allocation3 + $0xa0] sm:$0xf] %vm1598, %v3913
        %3992 = vst.msk [vmem:[#allocation3 + $0xa8] sm:$0xf] %vm1598, %v3915
        %3993 = vst.msk [vmem:[#allocation3 + $0xb0] sm:$0xf] %vm1598, %v3917
        %3994 = vst.msk [vmem:[#allocation3 + $0xb8] sm:$0xf] %vm1598, %v3919
        %3995 = vst.msk [vmem:[#allocation3 + $0xc0] sm:$0xf] %vm1598, %v3921
        %3996 = vst.msk [vmem:[#allocation3 + $0xc8] sm:$0xf] %vm1598, %v3923
        %3997 = vst.msk [vmem:[#allocation3 + $0xd0] sm:$0xf] %vm1598, %v3925
        %3998 = vst.msk [vmem:[#allocation3 + $0xd8] sm:$0xf] %vm1598, %v3927
        %3999 = vst.msk [vmem:[#allocation3 + $0xe0] sm:$0xf] %vm1598, %v3929
        %4000 = vst.msk [vmem:[#allocation3 + $0xe8] sm:$0xf] %vm1598, %v3931
        %4001 = vst.msk [vmem:[#allocation3 + $0xf0] sm:$0xf] %vm1598, %v3933
        %4002 = vst.msk [vmem:[#allocation3 + $0xf8] sm:$0xf] %vm1598, %v3935
        %4003 = vst.msk [vmem:[#allocation3 + $0x100] sm:$0xf] %vm1598, %v3937
        %4004 = vst.msk [vmem:[#allocation3 + $0x108] sm:$0xf] %vm1598, %v3939
        %4005 = vst.msk [vmem:[#allocation3 + $0x110] sm:$0xf] %vm1598, %v3941
        %v4006 = vpack.c.bf16 %v3655, %v3655
        %v4007 = vpack.c.bf16 %v3657, %v3657
        %v4008 = vpack.c.bf16 %v3659, %v3659
        %v4009 = vpack.c.bf16 %v3661, %v3661
        %v4010 = vpack.c.bf16 %v3663, %v3663
        %v4011 = vpack.c.bf16 %v3665, %v3665
        %v4012 = vpack.c.bf16 %v3667, %v3667
        %v4013 = vpack.c.bf16 %v3669, %v3669
        %v4014 = vpack.c.bf16 %v3671, %v3671
        %v4015 = vpack.c.bf16 %v3673, %v3673
        %v4016 = vpack.c.bf16 %v3675, %v3675
        %v4017 = vpack.c.bf16 %v3677, %v3677
        %v4018 = vpack.c.bf16 %v3679, %v3679
        %v4019 = vpack.c.bf16 %v3681, %v3681
        %v4020 = vpack.c.bf16 %v3683, %v3683
        %v4021 = vpack.c.bf16 %v3685, %v3685
        %v4022 = vpack.c.bf16 %v3687, %v3687
        %v4023 = vpack.c.bf16 %v3689, %v3689
        %v4024 = vpack.c.bf16 %v3691, %v3691
        %v4025 = vpack.c.bf16 %v3693, %v3693
        %v4026 = vpack.c.bf16 %v3695, %v3695
        %v4027 = vpack.c.bf16 %v3697, %v3697
        %v4028 = vpack.c.bf16 %v3699, %v3699
        %v4029 = vpack.c.bf16 %v3701, %v3701
        %v4030 = vpack.c.bf16 %v3703, %v3703
        %v4031 = vpack.c.bf16 %v3705, %v3705
        %v4032 = vpack.c.bf16 %v3707, %v3707
        %v4033 = vpack.c.bf16 %v3709, %v3709
        %v4034 = vpack.c.bf16 %v3711, %v3711
        %v4035 = vpack.c.bf16 %v3713, %v3713
        %v4036 = vpack.c.bf16 %v3715, %v3715
        %v4037 = vpack.c.bf16 %v3749, %v3749
        %4038 = vst.msk [vmem:[#allocation3 + $0x1c] sm:$0xf] %vm1437, %v4006
        %4039 = vst.msk [vmem:[#allocation3 + $0x24] sm:$0xf] %vm1437, %v4007
        %4040 = vst.msk [vmem:[#allocation3 + $0x2c] sm:$0xf] %vm1437, %v4008
        %4041 = vst.msk [vmem:[#allocation3 + $0x34] sm:$0xf] %vm1437, %v4009
        %4042 = vst.msk [vmem:[#allocation3 + $0x3c] sm:$0xf] %vm1437, %v4010
        %4043 = vst.msk [vmem:[#allocation3 + $0x44] sm:$0xf] %vm1437, %v4011
        %4044 = vst.msk [vmem:[#allocation3 + $0x4c] sm:$0xf] %vm1437, %v4012
        %4045 = vst.msk [vmem:[#allocation3 + $0x54] sm:$0xf] %vm1437, %v4013
        %4046 = vst.msk [vmem:[#allocation3 + $0x5c] sm:$0xf] %vm1437, %v4014
        %4047 = vst.msk [vmem:[#allocation3 + $0x64] sm:$0xf] %vm1437, %v4015
        %4048 = vst.msk [vmem:[#allocation3 + $0x6c] sm:$0xf] %vm1437, %v4016
        %4049 = vst.msk [vmem:[#allocation3 + $0x74] sm:$0xf] %vm1437, %v4017
        %4050 = vst.msk [vmem:[#allocation3 + $0x7c] sm:$0xf] %vm1437, %v4018
        %4051 = vst.msk [vmem:[#allocation3 + $0x84] sm:$0xf] %vm1437, %v4019
        %4052 = vst.msk [vmem:[#allocation3 + $0x8c] sm:$0xf] %vm1437, %v4020
        %4053 = vst.msk [vmem:[#allocation3 + $0x94] sm:$0xf] %vm1437, %v4021
        %4054 = vst.msk [vmem:[#allocation3 + $0x9c] sm:$0xf] %vm1437, %v4022
        %4055 = vst.msk [vmem:[#allocation3 + $0xa4] sm:$0xf] %vm1437, %v4023
        %4056 = vst.msk [vmem:[#allocation3 + $0xac] sm:$0xf] %vm1437, %v4024
        %4057 = vst.msk [vmem:[#allocation3 + $0xb4] sm:$0xf] %vm1437, %v4025
        %4058 = vst.msk [vmem:[#allocation3 + $0xbc] sm:$0xf] %vm1437, %v4026
        %4059 = vst.msk [vmem:[#allocation3 + $0xc4] sm:$0xf] %vm1437, %v4027
        %4060 = vst.msk [vmem:[#allocation3 + $0xcc] sm:$0xf] %vm1437, %v4028
        %4061 = vst.msk [vmem:[#allocation3 + $0xd4] sm:$0xf] %vm1437, %v4029
        %4062 = vst.msk [vmem:[#allocation3 + $0xdc] sm:$0xf] %vm1437, %v4030
        %4063 = vst.msk [vmem:[#allocation3 + $0xe4] sm:$0xf] %vm1437, %v4031
        %4064 = vst.msk [vmem:[#allocation3 + $0xec] sm:$0xf] %vm1437, %v4032
        %4065 = vst.msk [vmem:[#allocation3 + $0xf4] sm:$0xf] %vm1437, %v4033
        %4066 = vst.msk [vmem:[#allocation3 + $0xfc] sm:$0xf] %vm1437, %v4034
        %4067 = vst.msk [vmem:[#allocation3 + $0x104] sm:$0xf] %vm1437, %v4035
        %4068 = vst.msk [vmem:[#allocation3 + $0x10c] sm:$0xf] %vm1437, %v4036
        %4069 = vst.msk [vmem:[#allocation3 + $0x114] sm:$0xf] %vm1437, %v4037
        %v4070 = vld [vmem:[#allocation3 + $0x8] sm:$0xff]
        %v4071 = vld [vmem:[#allocation3 + $0x10] sm:$0xff]
        %v4072 = vld [vmem:[#allocation3 + $0x18] sm:$0xff]
        %v4073 = vld [vmem:[#allocation3 + $0x20] sm:$0xff]
        %v4074 = vld [vmem:[#allocation3 + $0x28] sm:$0xff]
        %v4075 = vld [vmem:[#allocation3 + $0x30] sm:$0xff]
        %v4076 = vld [vmem:[#allocation3 + $0x38] sm:$0xff]
        %v4077 = vld [vmem:[#allocation3 + $0x40] sm:$0xff]
        %v4078 = vld [vmem:[#allocation3 + $0x48] sm:$0xff]
        %v4079 = vld [vmem:[#allocation3 + $0x50] sm:$0xff]
        %v4080 = vld [vmem:[#allocation3 + $0x58] sm:$0xff]
        %v4081 = vld [vmem:[#allocation3 + $0x60] sm:$0xff]
        %v4082 = vld [vmem:[#allocation3 + $0x68] sm:$0xff]
        %v4083 = vld [vmem:[#allocation3 + $0x70] sm:$0xff]
        %v4084 = vld [vmem:[#allocation3 + $0x78] sm:$0xff]
        %v4085 = vld [vmem:[#allocation3 + $0x80] sm:$0xff]
        %v4086 = vld [vmem:[#allocation3 + $0x88] sm:$0xff]
        %v4087 = vld [vmem:[#allocation3 + $0x90] sm:$0xff]
        %v4088 = vld [vmem:[#allocation3 + $0x98] sm:$0xff]
        %v4089 = vld [vmem:[#allocation3 + $0xa0] sm:$0xff]
        %v4090 = vld [vmem:[#allocation3 + $0xa8] sm:$0xff]
        %v4091 = vld [vmem:[#allocation3 + $0xb0] sm:$0xff]
        %v4092 = vld [vmem:[#allocation3 + $0xb8] sm:$0xff]
        %v4093 = vld [vmem:[#allocation3 + $0xc0] sm:$0xff]
        %v4094 = vld [vmem:[#allocation3 + $0xc8] sm:$0xff]
        %v4095 = vld [vmem:[#allocation3 + $0xd0] sm:$0xff]
        %v4096 = vld [vmem:[#allocation3 + $0xd8] sm:$0xff]
        %v4097 = vld [vmem:[#allocation3 + $0xe0] sm:$0xff]
        %v4098 = vld [vmem:[#allocation3 + $0xe8] sm:$0xff]
        %v4099 = vld [vmem:[#allocation3 + $0xf0] sm:$0xff]
        %v4100 = vld [vmem:[#allocation3 + $0xf8] sm:$0xff]
        %v4101 = vld [vmem:[#allocation3 + $0x100] sm:$0xff]
        %v4102 = vld [vmem:[%s4] sm:$0xf]
        %v4103 = vld [vmem:[%s4 + $0x4] sm:$0xf]
        %v4104 = vld [vmem:[%s4 + $0x8] sm:$0xf]
        %v4105 = vld [vmem:[%s4 + $0xc] sm:$0xf]
        %v4106 = vld [vmem:[%s4 + $0x10] sm:$0xf]
        %v4107 = vld [vmem:[%s4 + $0x14] sm:$0xf]
        %v4108 = vld [vmem:[%s4 + $0x18] sm:$0xf]
        %v4109 = vld [vmem:[%s4 + $0x1c] sm:$0xf]
        %v4110 = vld [vmem:[%s4 + $0x20] sm:$0xf]
        %v4111 = vld [vmem:[%s4 + $0x24] sm:$0xf]
        %v4112 = vld [vmem:[%s4 + $0x28] sm:$0xf]
        %v4113 = vld [vmem:[%s4 + $0x2c] sm:$0xf]
        %v4114 = vld [vmem:[%s4 + $0x30] sm:$0xf]
        %v4115 = vld [vmem:[%s4 + $0x34] sm:$0xf]
        %v4116 = vld [vmem:[%s4 + $0x38] sm:$0xf]
        %v4117 = vld [vmem:[%s4 + $0x3c] sm:$0xf]
        %v4118 = vld [vmem:[%s4 + $0x40] sm:$0xf]
        %v4119 = vld [vmem:[%s4 + $0x44] sm:$0xf]
        %v4120 = vld [vmem:[%s4 + $0x48] sm:$0xf]
        %v4121 = vld [vmem:[%s4 + $0x4c] sm:$0xf]
        %v4122 = vld [vmem:[%s4 + $0x50] sm:$0xf]
        %v4123 = vld [vmem:[%s4 + $0x54] sm:$0xf]
        %v4124 = vld [vmem:[%s4 + $0x58] sm:$0xf]
        %v4125 = vld [vmem:[%s4 + $0x5c] sm:$0xf]
        %v4126 = vld [vmem:[#allocation3 + $0x108] sm:$0xff]
        %v4127 = vld [vmem:[#allocation3 + $0x110] sm:$0xff]
        %s4128 = scalar_lea.vmem %s4, 96
        %v4129 = vld [vmem:[%s4128] sm:$0xf]
        %v4130 = vld [vmem:[%s4128 + $0x4] sm:$0xf]
        %v4131 = vld [vmem:[%s4128 + $0x8] sm:$0xf]
        %v4132 = vld [vmem:[%s4128 + $0xc] sm:$0xf]
        %v4133 = vld [vmem:[%s4128 + $0x10] sm:$0xf]
        %v4134 = vld [vmem:[%s4128 + $0x14] sm:$0xf]
        %v4135 = vld [vmem:[%s4128 + $0x18] sm:$0xf]
        %v4136 = vld [vmem:[%s4128 + $0x1c] sm:$0xf]
        %v4137 = vld [vmem:[%s4128 + $0x20] sm:$0xf]
        %v4138 = vld [vmem:[%s4128 + $0x24] sm:$0xf]
        %v4139 = vld [vmem:[%s4128 + $0x28] sm:$0xf]
        %v4140 = vld [vmem:[%s4128 + $0x2c] sm:$0xf]
        %v4141 = vld [vmem:[%s4128 + $0x30] sm:$0xf]
        %v4142 = vld [vmem:[%s4128 + $0x34] sm:$0xf]
        %v4143 = vld [vmem:[%s4128 + $0x38] sm:$0xf]
        %v4144 = vld [vmem:[%s4128 + $0x3c] sm:$0xf]
        %v4145 = vld [vmem:[%s4128 + $0x40] sm:$0xf]
        %v4146 = vld [vmem:[%s4128 + $0x44] sm:$0xf]
        %v4147 = vld [vmem:[%s4128 + $0x48] sm:$0xf]
        %v4148 = vld [vmem:[%s4128 + $0x4c] sm:$0xf]
        %v4149 = vld [vmem:[%s4128 + $0x50] sm:$0xf]
        %v4150 = vld [vmem:[%s4128 + $0x54] sm:$0xf]
        %v4151 = vld [vmem:[%s4128 + $0x58] sm:$0xf]
        %v4152 = vld [vmem:[%s4128 + $0x5c] sm:$0xf]
        %v4185 = vunpack.c.l.b16 %v4072
        %v4186 = vunpack.c.h.b16 %v4072
        %v4187 = vunpack.c.l.b16 %v4073
        %v4188 = vunpack.c.h.b16 %v4073
        %v4189 = vunpack.c.l.b16 %v4074
        %v4190 = vunpack.c.h.b16 %v4074
        %v4191 = vunpack.c.l.b16 %v4075
        %v4192 = vunpack.c.h.b16 %v4075
        %v4193 = vunpack.c.l.b16 %v4076
        %v4194 = vunpack.c.h.b16 %v4076
        %v4195 = vunpack.c.l.b16 %v4077
        %v4196 = vunpack.c.h.b16 %v4077
        %v4197 = vunpack.c.l.b16 %v4078
        %v4198 = vunpack.c.h.b16 %v4078
        %v4199 = vunpack.c.l.b16 %v4079
        %v4200 = vunpack.c.h.b16 %v4079
        %v4201 = vunpack.c.l.b16 %v4080
        %v4202 = vunpack.c.h.b16 %v4080
        %v4203 = vunpack.c.l.b16 %v4081
        %v4204 = vunpack.c.h.b16 %v4081
        %v4205 = vunpack.c.l.b16 %v4082
        %v4206 = vunpack.c.h.b16 %v4082
        %v4207 = vunpack.c.l.b16 %v4083
        %v4208 = vunpack.c.h.b16 %v4083
        %v4209 = vunpack.c.l.b16 %v4084
        %v4210 = vunpack.c.h.b16 %v4084
        %v4211 = vunpack.c.l.b16 %v4085
        %v4212 = vunpack.c.h.b16 %v4085
        %v4213 = vunpack.c.l.b16 %v4086
        %v4214 = vunpack.c.h.b16 %v4086
        %v4215 = vunpack.c.l.b16 %v4087
        %v4216 = vunpack.c.h.b16 %v4087
        %v4217 = vunpack.c.l.b16 %v4088
        %v4218 = vunpack.c.h.b16 %v4088
        %v4219 = vunpack.c.l.b16 %v4089
        %v4220 = vunpack.c.h.b16 %v4089
        %v4221 = vunpack.c.l.b16 %v4090
        %v4222 = vunpack.c.h.b16 %v4090
        %v4223 = vunpack.c.l.b16 %v4091
        %v4224 = vunpack.c.h.b16 %v4091
        %v4225 = vunpack.c.l.b16 %v4092
        %v4226 = vunpack.c.h.b16 %v4092
        %v4227 = vunpack.c.l.b16 %v4093
        %v4228 = vunpack.c.h.b16 %v4093
        %v4229 = vunpack.c.l.b16 %v4094
        %v4230 = vunpack.c.h.b16 %v4094
        %v4231 = vunpack.c.l.b16 %v4095
        %v4232 = vunpack.c.h.b16 %v4095
        %v4233 = vunpack.c.l.b16 %v4096
        %v4234 = vunpack.c.h.b16 %v4096
        %v4235 = vunpack.c.l.b16 %v4097
        %v4236 = vunpack.c.h.b16 %v4097
        %v4237 = vunpack.c.l.b16 %v4098
        %v4238 = vunpack.c.h.b16 %v4098
        %v4239 = vunpack.c.l.b16 %v4099
        %v4240 = vunpack.c.h.b16 %v4099
        %v4241 = vunpack.c.l.b16 %v4100
        %v4242 = vunpack.c.h.b16 %v4100
        %v4243 = vunpack.c.l.b16 %v4101
        %v4244 = vunpack.c.h.b16 %v4101
        %v4245 = vunpack.c.l.b16 %v4126
        %v4246 = vunpack.c.h.b16 %v4126
        %v4247 = vunpack.c.l.b16 %v4127
        %v4248 = vunpack.c.h.b16 %v4127
        %v4249 = vpack.c.b16 %v4187, %v4185
        %v4250 = vpack.c.b16 %v4188, %v4186
        %v4251 = vpack.c.b16 %v4191, %v4189
        %v4252 = vpack.c.b16 %v4192, %v4190
        %v4253 = vpack.c.b16 %v4195, %v4193
        %v4254 = vpack.c.b16 %v4196, %v4194
        %v4255 = vpack.c.b16 %v4199, %v4197
        %v4256 = vpack.c.b16 %v4200, %v4198
        %v4257 = vpack.c.b16 %v4203, %v4201
        %v4258 = vpack.c.b16 %v4204, %v4202
        %v4259 = vpack.c.b16 %v4207, %v4205
        %v4260 = vpack.c.b16 %v4208, %v4206
        %v4261 = vpack.c.b16 %v4211, %v4209
        %v4262 = vpack.c.b16 %v4212, %v4210
        %v4263 = vpack.c.b16 %v4215, %v4213
        %v4264 = vpack.c.b16 %v4216, %v4214
        %v4265 = vpack.c.b16 %v4219, %v4217
        %v4266 = vpack.c.b16 %v4220, %v4218
        %v4267 = vpack.c.b16 %v4223, %v4221
        %v4268 = vpack.c.b16 %v4224, %v4222
        %v4269 = vpack.c.b16 %v4227, %v4225
        %v4270 = vpack.c.b16 %v4228, %v4226
        %v4271 = vpack.c.b16 %v4231, %v4229
        %v4272 = vpack.c.b16 %v4232, %v4230
        %v4273 = vpack.c.b16 %v4235, %v4233
        %v4274 = vpack.c.b16 %v4236, %v4234
        %v4275 = vpack.c.b16 %v4239, %v4237
        %v4276 = vpack.c.b16 %v4240, %v4238
        %v4277 = vpack.c.b16 %v4243, %v4241
        %v4278 = vpack.c.b16 %v4244, %v4242
        %v4279 = vpack.c.b16 %v4247, %v4245
        %v4280 = vpack.c.b16 %v4248, %v4246
        %v4321 = vunpack.c.l.b16 %v4129
        %v4322 = vunpack.c.l.b16 %v4130
        %v4323 = vunpack.c.l.b16 %v4131
        %v4324 = vunpack.c.l.b16 %v4132
        %v4325 = vunpack.c.l.b16 %v4133
        %v4326 = vunpack.c.l.b16 %v4134
        %v4327 = vunpack.c.l.b16 %v4135
        %v4328 = vunpack.c.l.b16 %v4136
        %v4329 = vunpack.c.l.b16 %v4137
        %v4330 = vunpack.c.l.b16 %v4138
        %v4331 = vunpack.c.l.b16 %v4139
        %v4332 = vunpack.c.l.b16 %v4140
        %v4333 = vunpack.c.l.b16 %v4141
        %v4334 = vunpack.c.l.b16 %v4142
        %v4335 = vunpack.c.l.b16 %v4143
        %v4336 = vunpack.c.l.b16 %v4144
        %v4337 = vunpack.c.l.b16 %v4145
        %v4338 = vunpack.c.l.b16 %v4146
        %v4339 = vunpack.c.l.b16 %v4147
        %v4340 = vunpack.c.l.b16 %v4148
        %v4341 = vunpack.c.l.b16 %v4149
        %v4342 = vunpack.c.l.b16 %v4150
        %v4343 = vunpack.c.l.b16 %v4151
        %v4344 = vunpack.c.l.b16 %v4152
        %v4345 = vpack.c.b16 %v4322, %v4321
        %v4346 = vpack.c.b16 %v4324, %v4323
        %v4347 = vpack.c.b16 %v4326, %v4325
        %v4348 = vpack.c.b16 %v4328, %v4327
        %v4349 = vpack.c.b16 %v4330, %v4329
        %v4350 = vpack.c.b16 %v4332, %v4331
        %v4351 = vpack.c.b16 %v4334, %v4333
        %v4352 = vpack.c.b16 %v4336, %v4335
        %v4353 = vpack.c.b16 %v4338, %v4337
        %v4354 = vpack.c.b16 %v4340, %v4339
        %v4355 = vpack.c.b16 %v4342, %v4341
        %v4356 = vpack.c.b16 %v4344, %v4343
        %v4370 = vsel %vm1994, %v4250, 0
        %v4373 = vsel %vm1994, %v4252, 0
        %v4376 = vsel %vm1994, %v4254, 0
        %v4379 = vsel %vm1994, %v4256, 0
        %v4382 = vsel %vm1994, %v4258, 0
        %v4385 = vsel %vm1994, %v4260, 0
        %v4388 = vsel %vm1994, %v4262, 0
        %v4391 = vsel %vm1994, %v4264, 0
        %v4394 = vsel %vm1994, %v4266, 0
        %v4397 = vsel %vm1994, %v4268, 0
        %v4400 = vsel %vm1994, %v4270, 0
        %v4403 = vsel %vm1994, %v4272, 0
        %v4406 = vsel %vm1994, %v4274, 0
        %v4409 = vsel %vm1994, %v4276, 0
        %v4412 = vsel %vm1994, %v4278, 0
        %v4415 = vsel %vm1994, %v4280, 0
        %4417 = vmatpush.bf16.msra.mxu0 %v4352
        %4418 = vmatpush.bf16.msra.mxu0 %v4351
        %4419 = vmatpush.bf16.msra.mxu0 %v4350
        %4420 = vmatpush.bf16.msra.mxu0 %v4349
        %4421 = vmatpush.bf16.msra.mxu0 %v4348
        %4422 = vmatpush.bf16.msra.mxu0 %v4347
        %4423 = vmatpush.bf16.msra.mxu0 %v4346
        %4424 = vmatpush.bf16.msra.mxu0 %v4345
        %4425 = vmatmul.bf16.gmra.mxu0 %v4249
        %v4426 = vpop.f32.mrf.mxu0
        %v4427 = vadd.f32 0.0, %v4426
        %v4428 = vpop.f32.mrf.mxu0
        %v4429 = vadd.f32 0.0, %v4428
        %4430 = vmatmul.bf16.gmra.mxu0 %v4251
        %v4431 = vpop.f32.mrf.mxu0
        %v4432 = vadd.f32 0.0, %v4431
        %v4433 = vpop.f32.mrf.mxu0
        %v4434 = vadd.f32 0.0, %v4433
        %4435 = vmatmul.bf16.gmra.mxu0 %v4253
        %v4436 = vpop.f32.mrf.mxu0
        %v4437 = vadd.f32 0.0, %v4436
        %v4438 = vpop.f32.mrf.mxu0
        %v4439 = vadd.f32 0.0, %v4438
        %4440 = vmatmul.bf16.gmra.mxu0 %v4255
        %v4441 = vpop.f32.mrf.mxu0
        %v4442 = vadd.f32 0.0, %v4441
        %v4443 = vpop.f32.mrf.mxu0
        %v4444 = vadd.f32 0.0, %v4443
        %4445 = vmatmul.bf16.gmra.mxu0 %v4257
        %v4446 = vpop.f32.mrf.mxu0
        %v4447 = vadd.f32 0.0, %v4446
        %v4448 = vpop.f32.mrf.mxu0
        %v4449 = vadd.f32 0.0, %v4448
        %4450 = vmatmul.bf16.gmra.mxu0 %v4259
        %v4451 = vpop.f32.mrf.mxu0
        %v4452 = vadd.f32 0.0, %v4451
        %v4453 = vpop.f32.mrf.mxu0
        %v4454 = vadd.f32 0.0, %v4453
        %4455 = vmatmul.bf16.gmra.mxu0 %v4261
        %v4456 = vpop.f32.mrf.mxu0
        %v4457 = vadd.f32 0.0, %v4456
        %v4458 = vpop.f32.mrf.mxu0
        %v4459 = vadd.f32 0.0, %v4458
        %4460 = vmatmul.bf16.gmra.mxu0 %v4263
        %v4461 = vpop.f32.mrf.mxu0
        %v4462 = vadd.f32 0.0, %v4461
        %v4463 = vpop.f32.mrf.mxu0
        %v4464 = vadd.f32 0.0, %v4463
        %4465 = vmatmul.bf16.gmra.mxu0 %v4265
        %v4466 = vpop.f32.mrf.mxu0
        %v4467 = vadd.f32 0.0, %v4466
        %v4468 = vpop.f32.mrf.mxu0
        %v4469 = vadd.f32 0.0, %v4468
        %4470 = vmatmul.bf16.gmra.mxu0 %v4267
        %v4471 = vpop.f32.mrf.mxu0
        %v4472 = vadd.f32 0.0, %v4471
        %v4473 = vpop.f32.mrf.mxu0
        %v4474 = vadd.f32 0.0, %v4473
        %4475 = vmatmul.bf16.gmra.mxu0 %v4269
        %v4476 = vpop.f32.mrf.mxu0
        %v4477 = vadd.f32 0.0, %v4476
        %v4478 = vpop.f32.mrf.mxu0
        %v4479 = vadd.f32 0.0, %v4478
        %4480 = vmatmul.bf16.gmra.mxu0 %v4271
        %v4481 = vpop.f32.mrf.mxu0
        %v4482 = vadd.f32 0.0, %v4481
        %v4483 = vpop.f32.mrf.mxu0
        %v4484 = vadd.f32 0.0, %v4483
        %4485 = vmatmul.bf16.gmra.mxu0 %v4273
        %v4486 = vpop.f32.mrf.mxu0
        %v4487 = vadd.f32 0.0, %v4486
        %v4488 = vpop.f32.mrf.mxu0
        %v4489 = vadd.f32 0.0, %v4488
        %4490 = vmatmul.bf16.gmra.mxu0 %v4275
        %v4491 = vpop.f32.mrf.mxu0
        %v4492 = vadd.f32 0.0, %v4491
        %v4493 = vpop.f32.mrf.mxu0
        %v4494 = vadd.f32 0.0, %v4493
        %4495 = vmatmul.bf16.gmra.mxu0 %v4277
        %v4496 = vpop.f32.mrf.mxu0
        %v4497 = vadd.f32 0.0, %v4496
        %v4498 = vpop.f32.mrf.mxu0
        %v4499 = vadd.f32 0.0, %v4498
        %4500 = vmatmul.bf16.gmra.mxu0 %v4279
        %v4501 = vpop.f32.mrf.mxu0
        %v4502 = vadd.f32 0.0, %v4501
        %v4503 = vpop.f32.mrf.mxu0
        %v4504 = vadd.f32 0.0, %v4503
        %4505 = vdwg.mxu0
        %4506 = vmatpush.bf16.msra.mxu0 0
        %4507 = vmatpush.bf16.msra.mxu0 0
        %4508 = vmatpush.bf16.msra.mxu0 0
        %4509 = vmatpush.bf16.msra.mxu0 0
        %4510 = vmatpush.bf16.msra.mxu0 %v4356
        %4511 = vmatpush.bf16.msra.mxu0 %v4355
        %4512 = vmatpush.bf16.msra.mxu0 %v4354
        %4513 = vmatpush.bf16.msra.mxu0 %v4353
        %4514 = vmatmul.bf16.gmra.mxu0 %v4370
        %v4515 = vpop.f32.mrf.mxu0
        %v4516 = vadd.f32 %v4427, %v4515
        %v4517 = vpop.f32.mrf.mxu0
        %v4518 = vadd.f32 %v4429, %v4517
        %4519 = vmatmul.bf16.gmra.mxu0 %v4373
        %v4520 = vpop.f32.mrf.mxu0
        %v4521 = vadd.f32 %v4432, %v4520
        %v4522 = vpop.f32.mrf.mxu0
        %v4523 = vadd.f32 %v4434, %v4522
        %4524 = vmatmul.bf16.gmra.mxu0 %v4376
        %v4525 = vpop.f32.mrf.mxu0
        %v4526 = vadd.f32 %v4437, %v4525
        %v4527 = vpop.f32.mrf.mxu0
        %v4528 = vadd.f32 %v4439, %v4527
        %4529 = vmatmul.bf16.gmra.mxu0 %v4379
        %v4530 = vpop.f32.mrf.mxu0
        %v4531 = vadd.f32 %v4442, %v4530
        %v4532 = vpop.f32.mrf.mxu0
        %v4533 = vadd.f32 %v4444, %v4532
        %4534 = vmatmul.bf16.gmra.mxu0 %v4382
        %v4535 = vpop.f32.mrf.mxu0
        %v4536 = vadd.f32 %v4447, %v4535
        %v4537 = vpop.f32.mrf.mxu0
        %v4538 = vadd.f32 %v4449, %v4537
        %4539 = vmatmul.bf16.gmra.mxu0 %v4385
        %v4540 = vpop.f32.mrf.mxu0
        %v4541 = vadd.f32 %v4452, %v4540
        %v4542 = vpop.f32.mrf.mxu0
        %v4543 = vadd.f32 %v4454, %v4542
        %4544 = vmatmul.bf16.gmra.mxu0 %v4388
        %v4545 = vpop.f32.mrf.mxu0
        %v4546 = vadd.f32 %v4457, %v4545
        %v4547 = vpop.f32.mrf.mxu0
        %v4548 = vadd.f32 %v4459, %v4547
        %4549 = vmatmul.bf16.gmra.mxu0 %v4391
        %v4550 = vpop.f32.mrf.mxu0
        %v4551 = vadd.f32 %v4462, %v4550
        %v4552 = vpop.f32.mrf.mxu0
        %v4553 = vadd.f32 %v4464, %v4552
        %4554 = vmatmul.bf16.gmra.mxu0 %v4394
        %v4555 = vpop.f32.mrf.mxu0
        %v4556 = vadd.f32 %v4467, %v4555
        %v4557 = vpop.f32.mrf.mxu0
        %v4558 = vadd.f32 %v4469, %v4557
        %4559 = vmatmul.bf16.gmra.mxu0 %v4397
        %v4560 = vpop.f32.mrf.mxu0
        %v4561 = vadd.f32 %v4472, %v4560
        %v4562 = vpop.f32.mrf.mxu0
        %v4563 = vadd.f32 %v4474, %v4562
        %4564 = vmatmul.bf16.gmra.mxu0 %v4400
        %v4565 = vpop.f32.mrf.mxu0
        %v4566 = vadd.f32 %v4477, %v4565
        %v4567 = vpop.f32.mrf.mxu0
        %v4568 = vadd.f32 %v4479, %v4567
        %4569 = vmatmul.bf16.gmra.mxu0 %v4403
        %v4570 = vpop.f32.mrf.mxu0
        %v4571 = vadd.f32 %v4482, %v4570
        %v4572 = vpop.f32.mrf.mxu0
        %v4573 = vadd.f32 %v4484, %v4572
        %4574 = vmatmul.bf16.gmra.mxu0 %v4406
        %v4575 = vpop.f32.mrf.mxu0
        %v4576 = vadd.f32 %v4487, %v4575
        %v4577 = vpop.f32.mrf.mxu0
        %v4578 = vadd.f32 %v4489, %v4577
        %4579 = vmatmul.bf16.gmra.mxu0 %v4409
        %v4580 = vpop.f32.mrf.mxu0
        %v4581 = vadd.f32 %v4492, %v4580
        %v4582 = vpop.f32.mrf.mxu0
        %v4583 = vadd.f32 %v4494, %v4582
        %4584 = vmatmul.bf16.gmra.mxu0 %v4412
        %v4585 = vpop.f32.mrf.mxu0
        %v4586 = vadd.f32 %v4497, %v4585
        %v4587 = vpop.f32.mrf.mxu0
        %v4588 = vadd.f32 %v4499, %v4587
        %4589 = vmatmul.bf16.gmra.mxu0 %v4415
        %v4590 = vpop.f32.mrf.mxu0
        %v4591 = vadd.f32 %v4502, %v4590
        %v4592 = vpop.f32.mrf.mxu0
        %v4593 = vadd.f32 %v4504, %v4592
        %4594 = vdwg.mxu0
        %v4597 = vunpack.c.l.b16 %v4070
        %v4598 = vunpack.c.h.b16 %v4070
        %v4599 = vunpack.c.l.b16 %v4071
        %v4600 = vunpack.c.h.b16 %v4071
        %v4601 = vpack.c.b16 %v4599, %v4597
        %v4602 = vpack.c.b16 %v4600, %v4598
        %v4628 = vunpack.c.l.b16 %v4102
        %v4629 = vunpack.c.l.b16 %v4103
        %v4630 = vunpack.c.l.b16 %v4104
        %v4631 = vunpack.c.l.b16 %v4105
        %v4632 = vunpack.c.l.b16 %v4106
        %v4633 = vunpack.c.l.b16 %v4107
        %v4634 = vunpack.c.l.b16 %v4108
        %v4635 = vunpack.c.l.b16 %v4109
        %v4636 = vunpack.c.l.b16 %v4110
        %v4637 = vunpack.c.l.b16 %v4111
        %v4638 = vunpack.c.l.b16 %v4112
        %v4639 = vunpack.c.l.b16 %v4113
        %v4640 = vunpack.c.l.b16 %v4114
        %v4641 = vunpack.c.l.b16 %v4115
        %v4642 = vunpack.c.l.b16 %v4116
        %v4643 = vunpack.c.l.b16 %v4117
        %v4644 = vunpack.c.l.b16 %v4118
        %v4645 = vunpack.c.l.b16 %v4119
        %v4646 = vunpack.c.l.b16 %v4120
        %v4647 = vunpack.c.l.b16 %v4121
        %v4648 = vunpack.c.l.b16 %v4122
        %v4649 = vunpack.c.l.b16 %v4123
        %v4650 = vunpack.c.l.b16 %v4124
        %v4651 = vunpack.c.l.b16 %v4125
        %v4652 = vpack.c.b16 %v4629, %v4628
        %v4653 = vpack.c.b16 %v4631, %v4630
        %v4654 = vpack.c.b16 %v4633, %v4632
        %v4655 = vpack.c.b16 %v4635, %v4634
        %v4656 = vpack.c.b16 %v4637, %v4636
        %v4657 = vpack.c.b16 %v4639, %v4638
        %v4658 = vpack.c.b16 %v4641, %v4640
        %v4659 = vpack.c.b16 %v4643, %v4642
        %v4660 = vpack.c.b16 %v4645, %v4644
        %v4661 = vpack.c.b16 %v4647, %v4646
        %v4662 = vpack.c.b16 %v4649, %v4648
        %v4663 = vpack.c.b16 %v4651, %v4650
        %v4677 = vsel %vm1994, %v4602, 0
        %4679 = vmatpush.bf16.msra.mxu0 %v4659
        %4680 = vmatpush.bf16.msra.mxu0 %v4658
        %4681 = vmatpush.bf16.msra.mxu0 %v4657
        %4682 = vmatpush.bf16.msra.mxu0 %v4656
        %4683 = vmatpush.bf16.msra.mxu0 %v4655
        %4684 = vmatpush.bf16.msra.mxu0 %v4654
        %4685 = vmatpush.bf16.msra.mxu0 %v4653
        %4686 = vmatpush.bf16.msra.mxu0 %v4652
        %4687 = vmatmul.bf16.gmra.mxu0 %v4601
        %v4688 = vpop.f32.mrf.mxu0
        %v4689 = vadd.f32 %v4516, %v4688
        %v4690 = vpop.f32.mrf.mxu0
        %v4691 = vadd.f32 %v4518, %v4690
        %4692 = vmatmul.bf16.gmra.mxu0 %v4249
        %v4693 = vpop.f32.mrf.mxu0
        %v4694 = vadd.f32 %v4521, %v4693
        %v4695 = vpop.f32.mrf.mxu0
        %v4696 = vadd.f32 %v4523, %v4695
        %4697 = vmatmul.bf16.gmra.mxu0 %v4251
        %v4698 = vpop.f32.mrf.mxu0
        %v4699 = vadd.f32 %v4526, %v4698
        %v4700 = vpop.f32.mrf.mxu0
        %v4701 = vadd.f32 %v4528, %v4700
        %4702 = vmatmul.bf16.gmra.mxu0 %v4253
        %v4703 = vpop.f32.mrf.mxu0
        %v4704 = vadd.f32 %v4531, %v4703
        %v4705 = vpop.f32.mrf.mxu0
        %v4706 = vadd.f32 %v4533, %v4705
        %4707 = vmatmul.bf16.gmra.mxu0 %v4255
        %v4708 = vpop.f32.mrf.mxu0
        %v4709 = vadd.f32 %v4536, %v4708
        %v4710 = vpop.f32.mrf.mxu0
        %v4711 = vadd.f32 %v4538, %v4710
        %4712 = vmatmul.bf16.gmra.mxu0 %v4257
        %v4713 = vpop.f32.mrf.mxu0
        %v4714 = vadd.f32 %v4541, %v4713
        %v4715 = vpop.f32.mrf.mxu0
        %v4716 = vadd.f32 %v4543, %v4715
        %4717 = vmatmul.bf16.gmra.mxu0 %v4259
        %v4718 = vpop.f32.mrf.mxu0
        %v4719 = vadd.f32 %v4546, %v4718
        %v4720 = vpop.f32.mrf.mxu0
        %v4721 = vadd.f32 %v4548, %v4720
        %4722 = vmatmul.bf16.gmra.mxu0 %v4261
        %v4723 = vpop.f32.mrf.mxu0
        %v4724 = vadd.f32 %v4551, %v4723
        %v4725 = vpop.f32.mrf.mxu0
        %v4726 = vadd.f32 %v4553, %v4725
        %4727 = vmatmul.bf16.gmra.mxu0 %v4263
        %v4728 = vpop.f32.mrf.mxu0
        %v4729 = vadd.f32 %v4556, %v4728
        %v4730 = vpop.f32.mrf.mxu0
        %v4731 = vadd.f32 %v4558, %v4730
        %4732 = vmatmul.bf16.gmra.mxu0 %v4265
        %v4733 = vpop.f32.mrf.mxu0
        %v4734 = vadd.f32 %v4561, %v4733
        %v4735 = vpop.f32.mrf.mxu0
        %v4736 = vadd.f32 %v4563, %v4735
        %4737 = vmatmul.bf16.gmra.mxu0 %v4267
        %v4738 = vpop.f32.mrf.mxu0
        %v4739 = vadd.f32 %v4566, %v4738
        %v4740 = vpop.f32.mrf.mxu0
        %v4741 = vadd.f32 %v4568, %v4740
        %4742 = vmatmul.bf16.gmra.mxu0 %v4269
        %v4743 = vpop.f32.mrf.mxu0
        %v4744 = vadd.f32 %v4571, %v4743
        %v4745 = vpop.f32.mrf.mxu0
        %v4746 = vadd.f32 %v4573, %v4745
        %4747 = vmatmul.bf16.gmra.mxu0 %v4271
        %v4748 = vpop.f32.mrf.mxu0
        %v4749 = vadd.f32 %v4576, %v4748
        %v4750 = vpop.f32.mrf.mxu0
        %v4751 = vadd.f32 %v4578, %v4750
        %4752 = vmatmul.bf16.gmra.mxu0 %v4273
        %v4753 = vpop.f32.mrf.mxu0
        %v4754 = vadd.f32 %v4581, %v4753
        %v4755 = vpop.f32.mrf.mxu0
        %v4756 = vadd.f32 %v4583, %v4755
        %4757 = vmatmul.bf16.gmra.mxu0 %v4275
        %v4758 = vpop.f32.mrf.mxu0
        %v4759 = vadd.f32 %v4586, %v4758
        %v4760 = vpop.f32.mrf.mxu0
        %v4761 = vadd.f32 %v4588, %v4760
        %4762 = vmatmul.bf16.gmra.mxu0 %v4277
        %v4763 = vpop.f32.mrf.mxu0
        %v4764 = vadd.f32 %v4591, %v4763
        %v4765 = vpop.f32.mrf.mxu0
        %v4766 = vadd.f32 %v4593, %v4765
        %4767 = vdwg.mxu0
        %4768 = vmatpush.bf16.msra.mxu0 0
        %4769 = vmatpush.bf16.msra.mxu0 0
        %4770 = vmatpush.bf16.msra.mxu0 0
        %4771 = vmatpush.bf16.msra.mxu0 0
        %4772 = vmatpush.bf16.msra.mxu0 %v4663
        %4773 = vmatpush.bf16.msra.mxu0 %v4662
        %4774 = vmatpush.bf16.msra.mxu0 %v4661
        %4775 = vmatpush.bf16.msra.mxu0 %v4660
        %4776 = vmatmul.bf16.gmra.mxu0 %v4677
        %v4777 = vpop.f32.mrf.mxu0
        %v4778 = vadd.f32 %v4689, %v4777
        %v4779 = vpop.f32.mrf.mxu0
        %v4780 = vadd.f32 %v4691, %v4779
        %4781 = vmatmul.bf16.gmra.mxu0 %v4370
        %v4782 = vpop.f32.mrf.mxu0
        %v4783 = vadd.f32 %v4694, %v4782
        %v4784 = vpop.f32.mrf.mxu0
        %v4785 = vadd.f32 %v4696, %v4784
        %4786 = vmatmul.bf16.gmra.mxu0 %v4373
        %v4787 = vpop.f32.mrf.mxu0
        %v4788 = vadd.f32 %v4699, %v4787
        %v4789 = vpop.f32.mrf.mxu0
        %v4790 = vadd.f32 %v4701, %v4789
        %4791 = vmatmul.bf16.gmra.mxu0 %v4376
        %v4792 = vpop.f32.mrf.mxu0
        %v4793 = vadd.f32 %v4704, %v4792
        %v4794 = vpop.f32.mrf.mxu0
        %v4795 = vadd.f32 %v4706, %v4794
        %4796 = vmatmul.bf16.gmra.mxu0 %v4379
        %v4797 = vpop.f32.mrf.mxu0
        %v4798 = vadd.f32 %v4709, %v4797
        %v4799 = vpop.f32.mrf.mxu0
        %v4800 = vadd.f32 %v4711, %v4799
        %4801 = vmatmul.bf16.gmra.mxu0 %v4382
        %v4802 = vpop.f32.mrf.mxu0
        %v4803 = vadd.f32 %v4714, %v4802
        %v4804 = vpop.f32.mrf.mxu0
        %v4805 = vadd.f32 %v4716, %v4804
        %4806 = vmatmul.bf16.gmra.mxu0 %v4385
        %v4807 = vpop.f32.mrf.mxu0
        %v4808 = vadd.f32 %v4719, %v4807
        %v4809 = vpop.f32.mrf.mxu0
        %v4810 = vadd.f32 %v4721, %v4809
        %4811 = vmatmul.bf16.gmra.mxu0 %v4388
        %v4812 = vpop.f32.mrf.mxu0
        %v4813 = vadd.f32 %v4724, %v4812
        %v4814 = vpop.f32.mrf.mxu0
        %v4815 = vadd.f32 %v4726, %v4814
        %4816 = vmatmul.bf16.gmra.mxu0 %v4391
        %v4817 = vpop.f32.mrf.mxu0
        %v4818 = vadd.f32 %v4729, %v4817
        %v4819 = vpop.f32.mrf.mxu0
        %v4820 = vadd.f32 %v4731, %v4819
        %4821 = vmatmul.bf16.gmra.mxu0 %v4394
        %v4822 = vpop.f32.mrf.mxu0
        %v4823 = vadd.f32 %v4734, %v4822
        %v4824 = vpop.f32.mrf.mxu0
        %v4825 = vadd.f32 %v4736, %v4824
        %4826 = vmatmul.bf16.gmra.mxu0 %v4397
        %v4827 = vpop.f32.mrf.mxu0
        %v4828 = vadd.f32 %v4739, %v4827
        %v4829 = vpop.f32.mrf.mxu0
        %v4830 = vadd.f32 %v4741, %v4829
        %4831 = vmatmul.bf16.gmra.mxu0 %v4400
        %v4832 = vpop.f32.mrf.mxu0
        %v4833 = vadd.f32 %v4744, %v4832
        %v4834 = vpop.f32.mrf.mxu0
        %v4835 = vadd.f32 %v4746, %v4834
        %4836 = vmatmul.bf16.gmra.mxu0 %v4403
        %v4837 = vpop.f32.mrf.mxu0
        %v4838 = vadd.f32 %v4749, %v4837
        %v4839 = vpop.f32.mrf.mxu0
        %v4840 = vadd.f32 %v4751, %v4839
        %4841 = vmatmul.bf16.gmra.mxu0 %v4406
        %v4842 = vpop.f32.mrf.mxu0
        %v4843 = vadd.f32 %v4754, %v4842
        %v4844 = vpop.f32.mrf.mxu0
        %v4845 = vadd.f32 %v4756, %v4844
        %4846 = vmatmul.bf16.gmra.mxu0 %v4409
        %v4847 = vpop.f32.mrf.mxu0
        %v4848 = vadd.f32 %v4759, %v4847
        %v4849 = vpop.f32.mrf.mxu0
        %v4850 = vadd.f32 %v4761, %v4849
        %4851 = vmatmul.bf16.gmra.mxu0 %v4412
        %v4852 = vpop.f32.mrf.mxu0
        %v4853 = vadd.f32 %v4764, %v4852
        %v4854 = vpop.f32.mrf.mxu0
        %v4855 = vadd.f32 %v4766, %v4854
        %4856 = vdwg.mxu0
        %v4857 = vld [vmem:[#allocation3 + $0x28] sm:$0xff]
        %v4858 = vld [vmem:[#allocation3 + $0x30] sm:$0xff]
        %v4859 = vld [vmem:[#allocation3 + $0x38] sm:$0xff]
        %v4860 = vld [vmem:[#allocation3 + $0x40] sm:$0xff]
        %v4861 = vld [vmem:[#allocation3 + $0x48] sm:$0xff]
        %v4862 = vld [vmem:[#allocation3 + $0x50] sm:$0xff]
        %v4863 = vld [vmem:[#allocation3 + $0x58] sm:$0xff]
        %v4864 = vld [vmem:[#allocation3 + $0x60] sm:$0xff]
        %v4865 = vld [vmem:[#allocation3 + $0x68] sm:$0xff]
        %v4866 = vld [vmem:[#allocation3 + $0x70] sm:$0xff]
        %v4867 = vld [vmem:[#allocation3 + $0x78] sm:$0xff]
        %v4868 = vld [vmem:[#allocation3 + $0x80] sm:$0xff]
        %v4869 = vld [vmem:[#allocation3 + $0x88] sm:$0xff]
        %v4870 = vld [vmem:[#allocation3 + $0x90] sm:$0xff]
        %v4871 = vld [vmem:[#allocation3 + $0x98] sm:$0xff]
        %v4872 = vld [vmem:[#allocation3 + $0xa0] sm:$0xff]
        %v4873 = vld [vmem:[#allocation3 + $0xa8] sm:$0xff]
        %v4874 = vld [vmem:[#allocation3 + $0xb0] sm:$0xff]
        %v4875 = vld [vmem:[#allocation3 + $0xb8] sm:$0xff]
        %v4876 = vld [vmem:[#allocation3 + $0xc0] sm:$0xff]
        %v4877 = vld [vmem:[#allocation3 + $0xc8] sm:$0xff]
        %v4878 = vld [vmem:[#allocation3 + $0xd0] sm:$0xff]
        %v4879 = vld [vmem:[#allocation3 + $0xd8] sm:$0xff]
        %v4880 = vld [vmem:[#allocation3 + $0xe0] sm:$0xff]
        %v4881 = vld [vmem:[#allocation3 + $0xe8] sm:$0xff]
        %v4882 = vld [vmem:[#allocation3 + $0xf0] sm:$0xff]
        %v4883 = vld [vmem:[#allocation3 + $0xf8] sm:$0xff]
        %v4884 = vld [vmem:[#allocation3 + $0x100] sm:$0xff]
        %v4885 = vld [vmem:[#allocation3 + $0x108] sm:$0xff]
        %v4886 = vld [vmem:[#allocation3 + $0x110] sm:$0xff]
        %v4887 = vld [vmem:[#allocation3 + $0x118] sm:$0xff]
        %v4888 = vld [vmem:[#allocation3 + $0x120] sm:$0xff]
        %s4889 = scalar_lea.vmem %s4, 192
        %v4890 = vld [vmem:[%s4889] sm:$0xf]
        %v4891 = vld [vmem:[%s4889 + $0x4] sm:$0xf]
        %v4892 = vld [vmem:[%s4889 + $0x8] sm:$0xf]
        %v4893 = vld [vmem:[%s4889 + $0xc] sm:$0xf]
        %v4894 = vld [vmem:[%s4889 + $0x10] sm:$0xf]
        %v4895 = vld [vmem:[%s4889 + $0x14] sm:$0xf]
        %v4896 = vld [vmem:[%s4889 + $0x18] sm:$0xf]
        %v4897 = vld [vmem:[%s4889 + $0x1c] sm:$0xf]
        %v4898 = vld [vmem:[%s4889 + $0x20] sm:$0xf]
        %v4899 = vld [vmem:[%s4889 + $0x24] sm:$0xf]
        %v4900 = vld [vmem:[%s4889 + $0x28] sm:$0xf]
        %v4901 = vld [vmem:[%s4889 + $0x2c] sm:$0xf]
        %v4902 = vld [vmem:[%s4889 + $0x30] sm:$0xf]
        %v4903 = vld [vmem:[%s4889 + $0x34] sm:$0xf]
        %v4904 = vld [vmem:[%s4889 + $0x38] sm:$0xf]
        %v4905 = vld [vmem:[%s4889 + $0x3c] sm:$0xf]
        %v4906 = vld [vmem:[%s4889 + $0x40] sm:$0xf]
        %v4907 = vld [vmem:[%s4889 + $0x44] sm:$0xf]
        %v4908 = vld [vmem:[%s4889 + $0x48] sm:$0xf]
        %v4909 = vld [vmem:[%s4889 + $0x4c] sm:$0xf]
        %v4910 = vld [vmem:[%s4889 + $0x50] sm:$0xf]
        %v4911 = vld [vmem:[%s4889 + $0x54] sm:$0xf]
        %v4912 = vld [vmem:[%s4889 + $0x58] sm:$0xf]
        %v4913 = vld [vmem:[%s4889 + $0x5c] sm:$0xf]
        %v4946 = vunpack.c.l.b16 %v4857
        %v4947 = vunpack.c.h.b16 %v4857
        %v4948 = vunpack.c.l.b16 %v4858
        %v4949 = vunpack.c.h.b16 %v4858
        %v4950 = vunpack.c.l.b16 %v4859
        %v4951 = vunpack.c.h.b16 %v4859
        %v4952 = vunpack.c.l.b16 %v4860
        %v4953 = vunpack.c.h.b16 %v4860
        %v4954 = vunpack.c.l.b16 %v4861
        %v4955 = vunpack.c.h.b16 %v4861
        %v4956 = vunpack.c.l.b16 %v4862
        %v4957 = vunpack.c.h.b16 %v4862
        %v4958 = vunpack.c.l.b16 %v4863
        %v4959 = vunpack.c.h.b16 %v4863
        %v4960 = vunpack.c.l.b16 %v4864
        %v4961 = vunpack.c.h.b16 %v4864
        %v4962 = vunpack.c.l.b16 %v4865
        %v4963 = vunpack.c.h.b16 %v4865
        %v4964 = vunpack.c.l.b16 %v4866
        %v4965 = vunpack.c.h.b16 %v4866
        %v4966 = vunpack.c.l.b16 %v4867
        %v4967 = vunpack.c.h.b16 %v4867
        %v4968 = vunpack.c.l.b16 %v4868
        %v4969 = vunpack.c.h.b16 %v4868
        %v4970 = vunpack.c.l.b16 %v4869
        %v4971 = vunpack.c.h.b16 %v4869
        %v4972 = vunpack.c.l.b16 %v4870
        %v4973 = vunpack.c.h.b16 %v4870
        %v4974 = vunpack.c.l.b16 %v4871
        %v4975 = vunpack.c.h.b16 %v4871
        %v4976 = vunpack.c.l.b16 %v4872
        %v4977 = vunpack.c.h.b16 %v4872
        %v4978 = vunpack.c.l.b16 %v4873
        %v4979 = vunpack.c.h.b16 %v4873
        %v4980 = vunpack.c.l.b16 %v4874
        %v4981 = vunpack.c.h.b16 %v4874
        %v4982 = vunpack.c.l.b16 %v4875
        %v4983 = vunpack.c.h.b16 %v4875
        %v4984 = vunpack.c.l.b16 %v4876
        %v4985 = vunpack.c.h.b16 %v4876
        %v4986 = vunpack.c.l.b16 %v4877
        %v4987 = vunpack.c.h.b16 %v4877
        %v4988 = vunpack.c.l.b16 %v4878
        %v4989 = vunpack.c.h.b16 %v4878
        %v4990 = vunpack.c.l.b16 %v4879
        %v4991 = vunpack.c.h.b16 %v4879
        %v4992 = vunpack.c.l.b16 %v4880
        %v4993 = vunpack.c.h.b16 %v4880
        %v4994 = vunpack.c.l.b16 %v4881
        %v4995 = vunpack.c.h.b16 %v4881
        %v4996 = vunpack.c.l.b16 %v4882
        %v4997 = vunpack.c.h.b16 %v4882
        %v4998 = vunpack.c.l.b16 %v4883
        %v4999 = vunpack.c.h.b16 %v4883
        %v5000 = vunpack.c.l.b16 %v4884
        %v5001 = vunpack.c.h.b16 %v4884
        %v5002 = vunpack.c.l.b16 %v4885
        %v5003 = vunpack.c.h.b16 %v4885
        %v5004 = vunpack.c.l.b16 %v4886
        %v5005 = vunpack.c.h.b16 %v4886
        %v5006 = vunpack.c.l.b16 %v4887
        %v5007 = vunpack.c.h.b16 %v4887
        %v5008 = vunpack.c.l.b16 %v4888
        %v5009 = vunpack.c.h.b16 %v4888
        %v5010 = vpack.c.b16 %v4948, %v4946
        %v5011 = vpack.c.b16 %v4949, %v4947
        %v5012 = vpack.c.b16 %v4952, %v4950
        %v5013 = vpack.c.b16 %v4953, %v4951
        %v5014 = vpack.c.b16 %v4956, %v4954
        %v5015 = vpack.c.b16 %v4957, %v4955
        %v5016 = vpack.c.b16 %v4960, %v4958
        %v5017 = vpack.c.b16 %v4961, %v4959
        %v5018 = vpack.c.b16 %v4964, %v4962
        %v5019 = vpack.c.b16 %v4965, %v4963
        %v5020 = vpack.c.b16 %v4968, %v4966
        %v5021 = vpack.c.b16 %v4969, %v4967
        %v5022 = vpack.c.b16 %v4972, %v4970
        %v5023 = vpack.c.b16 %v4973, %v4971
        %v5024 = vpack.c.b16 %v4976, %v4974
        %v5025 = vpack.c.b16 %v4977, %v4975
        %v5026 = vpack.c.b16 %v4980, %v4978
        %v5027 = vpack.c.b16 %v4981, %v4979
        %v5028 = vpack.c.b16 %v4984, %v4982
        %v5029 = vpack.c.b16 %v4985, %v4983
        %v5030 = vpack.c.b16 %v4988, %v4986
        %v5031 = vpack.c.b16 %v4989, %v4987
        %v5032 = vpack.c.b16 %v4992, %v4990
        %v5033 = vpack.c.b16 %v4993, %v4991
        %v5034 = vpack.c.b16 %v4996, %v4994
        %v5035 = vpack.c.b16 %v4997, %v4995
        %v5036 = vpack.c.b16 %v5000, %v4998
        %v5037 = vpack.c.b16 %v5001, %v4999
        %v5038 = vpack.c.b16 %v5004, %v5002
        %v5039 = vpack.c.b16 %v5005, %v5003
        %v5040 = vpack.c.b16 %v5008, %v5006
        %v5041 = vpack.c.b16 %v5009, %v5007
        %v5082 = vunpack.c.l.b16 %v4890
        %v5083 = vunpack.c.l.b16 %v4891
        %v5084 = vunpack.c.l.b16 %v4892
        %v5085 = vunpack.c.l.b16 %v4893
        %v5086 = vunpack.c.l.b16 %v4894
        %v5087 = vunpack.c.l.b16 %v4895
        %v5088 = vunpack.c.l.b16 %v4896
        %v5089 = vunpack.c.l.b16 %v4897
        %v5090 = vunpack.c.l.b16 %v4898
        %v5091 = vunpack.c.l.b16 %v4899
        %v5092 = vunpack.c.l.b16 %v4900
        %v5093 = vunpack.c.l.b16 %v4901
        %v5094 = vunpack.c.l.b16 %v4902
        %v5095 = vunpack.c.l.b16 %v4903
        %v5096 = vunpack.c.l.b16 %v4904
        %v5097 = vunpack.c.l.b16 %v4905
        %v5098 = vunpack.c.l.b16 %v4906
        %v5099 = vunpack.c.l.b16 %v4907
        %v5100 = vunpack.c.l.b16 %v4908
        %v5101 = vunpack.c.l.b16 %v4909
        %v5102 = vunpack.c.l.b16 %v4910
        %v5103 = vunpack.c.l.b16 %v4911
        %v5104 = vunpack.c.l.b16 %v4912
        %v5105 = vunpack.c.l.b16 %v4913
        %v5106 = vpack.c.b16 %v5083, %v5082
        %v5107 = vpack.c.b16 %v5085, %v5084
        %v5108 = vpack.c.b16 %v5087, %v5086
        %v5109 = vpack.c.b16 %v5089, %v5088
        %v5110 = vpack.c.b16 %v5091, %v5090
        %v5111 = vpack.c.b16 %v5093, %v5092
        %v5112 = vpack.c.b16 %v5095, %v5094
        %v5113 = vpack.c.b16 %v5097, %v5096
        %v5114 = vpack.c.b16 %v5099, %v5098
        %v5115 = vpack.c.b16 %v5101, %v5100
        %v5116 = vpack.c.b16 %v5103, %v5102
        %v5117 = vpack.c.b16 %v5105, %v5104
        %v5131 = vsel %vm1994, %v5011, 0
        %v5134 = vsel %vm1994, %v5013, 0
        %v5137 = vsel %vm1994, %v5015, 0
        %v5140 = vsel %vm1994, %v5017, 0
        %v5143 = vsel %vm1994, %v5019, 0
        %v5146 = vsel %vm1994, %v5021, 0
        %v5149 = vsel %vm1994, %v5023, 0
        %v5152 = vsel %vm1994, %v5025, 0
        %v5155 = vsel %vm1994, %v5027, 0
        %v5158 = vsel %vm1994, %v5029, 0
        %v5161 = vsel %vm1994, %v5031, 0
        %v5164 = vsel %vm1994, %v5033, 0
        %v5167 = vsel %vm1994, %v5035, 0
        %v5170 = vsel %vm1994, %v5037, 0
        %v5173 = vsel %vm1994, %v5039, 0
        %v5176 = vsel %vm1994, %v5041, 0
        %5178 = vmatpush.bf16.msra.mxu0 %v5113
        %5179 = vmatpush.bf16.msra.mxu0 %v5112
        %5180 = vmatpush.bf16.msra.mxu0 %v5111
        %5181 = vmatpush.bf16.msra.mxu0 %v5110
        %5182 = vmatpush.bf16.msra.mxu0 %v5109
        %5183 = vmatpush.bf16.msra.mxu0 %v5108
        %5184 = vmatpush.bf16.msra.mxu0 %v5107
        %5185 = vmatpush.bf16.msra.mxu0 %v5106
        %5186 = vmatmul.bf16.gmra.mxu0 %v5010
        %v5187 = vpop.f32.mrf.mxu0
        %v5188 = vadd.f32 0.0, %v5187
        %v5189 = vpop.f32.mrf.mxu0
        %v5190 = vadd.f32 0.0, %v5189
        %5191 = vmatmul.bf16.gmra.mxu0 %v5012
        %v5192 = vpop.f32.mrf.mxu0
        %v5193 = vadd.f32 0.0, %v5192
        %v5194 = vpop.f32.mrf.mxu0
        %v5195 = vadd.f32 0.0, %v5194
        %5196 = vmatmul.bf16.gmra.mxu0 %v5014
        %v5197 = vpop.f32.mrf.mxu0
        %v5198 = vadd.f32 0.0, %v5197
        %v5199 = vpop.f32.mrf.mxu0
        %v5200 = vadd.f32 0.0, %v5199
        %5201 = vmatmul.bf16.gmra.mxu0 %v5016
        %v5202 = vpop.f32.mrf.mxu0
        %v5203 = vadd.f32 0.0, %v5202
        %v5204 = vpop.f32.mrf.mxu0
        %v5205 = vadd.f32 0.0, %v5204
        %5206 = vmatmul.bf16.gmra.mxu0 %v5018
        %v5207 = vpop.f32.mrf.mxu0
        %v5208 = vadd.f32 0.0, %v5207
        %v5209 = vpop.f32.mrf.mxu0
        %v5210 = vadd.f32 0.0, %v5209
        %5211 = vmatmul.bf16.gmra.mxu0 %v5020
        %v5212 = vpop.f32.mrf.mxu0
        %v5213 = vadd.f32 0.0, %v5212
        %v5214 = vpop.f32.mrf.mxu0
        %v5215 = vadd.f32 0.0, %v5214
        %5216 = vmatmul.bf16.gmra.mxu0 %v5022
        %v5217 = vpop.f32.mrf.mxu0
        %v5218 = vadd.f32 0.0, %v5217
        %v5219 = vpop.f32.mrf.mxu0
        %v5220 = vadd.f32 0.0, %v5219
        %5221 = vmatmul.bf16.gmra.mxu0 %v5024
        %v5222 = vpop.f32.mrf.mxu0
        %v5223 = vadd.f32 0.0, %v5222
        %v5224 = vpop.f32.mrf.mxu0
        %v5225 = vadd.f32 0.0, %v5224
        %5226 = vmatmul.bf16.gmra.mxu0 %v5026
        %v5227 = vpop.f32.mrf.mxu0
        %v5228 = vadd.f32 0.0, %v5227
        %v5229 = vpop.f32.mrf.mxu0
        %v5230 = vadd.f32 0.0, %v5229
        %5231 = vmatmul.bf16.gmra.mxu0 %v5028
        %v5232 = vpop.f32.mrf.mxu0
        %v5233 = vadd.f32 0.0, %v5232
        %v5234 = vpop.f32.mrf.mxu0
        %v5235 = vadd.f32 0.0, %v5234
        %5236 = vmatmul.bf16.gmra.mxu0 %v5030
        %v5237 = vpop.f32.mrf.mxu0
        %v5238 = vadd.f32 0.0, %v5237
        %v5239 = vpop.f32.mrf.mxu0
        %v5240 = vadd.f32 0.0, %v5239
        %5241 = vmatmul.bf16.gmra.mxu0 %v5032
        %v5242 = vpop.f32.mrf.mxu0
        %v5243 = vadd.f32 0.0, %v5242
        %v5244 = vpop.f32.mrf.mxu0
        %v5245 = vadd.f32 0.0, %v5244
        %5246 = vmatmul.bf16.gmra.mxu0 %v5034
        %v5247 = vpop.f32.mrf.mxu0
        %v5248 = vadd.f32 0.0, %v5247
        %v5249 = vpop.f32.mrf.mxu0
        %v5250 = vadd.f32 0.0, %v5249
        %5251 = vmatmul.bf16.gmra.mxu0 %v5036
        %v5252 = vpop.f32.mrf.mxu0
        %v5253 = vadd.f32 0.0, %v5252
        %v5254 = vpop.f32.mrf.mxu0
        %v5255 = vadd.f32 0.0, %v5254
        %5256 = vmatmul.bf16.gmra.mxu0 %v5038
        %v5257 = vpop.f32.mrf.mxu0
        %v5258 = vadd.f32 0.0, %v5257
        %v5259 = vpop.f32.mrf.mxu0
        %v5260 = vadd.f32 0.0, %v5259
        %5261 = vmatmul.bf16.gmra.mxu0 %v5040
        %v5262 = vpop.f32.mrf.mxu0
        %v5263 = vadd.f32 0.0, %v5262
        %v5264 = vpop.f32.mrf.mxu0
        %v5265 = vadd.f32 0.0, %v5264
        %5266 = vdwg.mxu0
        %5267 = vmatpush.bf16.msra.mxu0 0
        %5268 = vmatpush.bf16.msra.mxu0 0
        %5269 = vmatpush.bf16.msra.mxu0 0
        %5270 = vmatpush.bf16.msra.mxu0 0
        %5271 = vmatpush.bf16.msra.mxu0 %v5117
        %5272 = vmatpush.bf16.msra.mxu0 %v5116
        %5273 = vmatpush.bf16.msra.mxu0 %v5115
        %5274 = vmatpush.bf16.msra.mxu0 %v5114
        %5275 = vmatmul.bf16.gmra.mxu0 %v5131
        %v5276 = vpop.f32.mrf.mxu0
        %v5277 = vadd.f32 %v5188, %v5276
        %v5278 = vpop.f32.mrf.mxu0
        %v5279 = vadd.f32 %v5190, %v5278
        %5280 = vmatmul.bf16.gmra.mxu0 %v5134
        %v5281 = vpop.f32.mrf.mxu0
        %v5282 = vadd.f32 %v5193, %v5281
        %v5283 = vpop.f32.mrf.mxu0
        %v5284 = vadd.f32 %v5195, %v5283
        %5285 = vmatmul.bf16.gmra.mxu0 %v5137
        %v5286 = vpop.f32.mrf.mxu0
        %v5287 = vadd.f32 %v5198, %v5286
        %v5288 = vpop.f32.mrf.mxu0
        %v5289 = vadd.f32 %v5200, %v5288
        %5290 = vmatmul.bf16.gmra.mxu0 %v5140
        %v5291 = vpop.f32.mrf.mxu0
        %v5292 = vadd.f32 %v5203, %v5291
        %v5293 = vpop.f32.mrf.mxu0
        %v5294 = vadd.f32 %v5205, %v5293
        %5295 = vmatmul.bf16.gmra.mxu0 %v5143
        %v5296 = vpop.f32.mrf.mxu0
        %v5297 = vadd.f32 %v5208, %v5296
        %v5298 = vpop.f32.mrf.mxu0
        %v5299 = vadd.f32 %v5210, %v5298
        %5300 = vmatmul.bf16.gmra.mxu0 %v5146
        %v5301 = vpop.f32.mrf.mxu0
        %v5302 = vadd.f32 %v5213, %v5301
        %v5303 = vpop.f32.mrf.mxu0
        %v5304 = vadd.f32 %v5215, %v5303
        %5305 = vmatmul.bf16.gmra.mxu0 %v5149
        %v5306 = vpop.f32.mrf.mxu0
        %v5307 = vadd.f32 %v5218, %v5306
        %v5308 = vpop.f32.mrf.mxu0
        %v5309 = vadd.f32 %v5220, %v5308
        %5310 = vmatmul.bf16.gmra.mxu0 %v5152
        %v5311 = vpop.f32.mrf.mxu0
        %v5312 = vadd.f32 %v5223, %v5311
        %v5313 = vpop.f32.mrf.mxu0
        %v5314 = vadd.f32 %v5225, %v5313
        %5315 = vmatmul.bf16.gmra.mxu0 %v5155
        %v5316 = vpop.f32.mrf.mxu0
        %v5317 = vadd.f32 %v5228, %v5316
        %v5318 = vpop.f32.mrf.mxu0
        %v5319 = vadd.f32 %v5230, %v5318
        %5320 = vmatmul.bf16.gmra.mxu0 %v5158
        %v5321 = vpop.f32.mrf.mxu0
        %v5322 = vadd.f32 %v5233, %v5321
        %v5323 = vpop.f32.mrf.mxu0
        %v5324 = vadd.f32 %v5235, %v5323
        %5325 = vmatmul.bf16.gmra.mxu0 %v5161
        %v5326 = vpop.f32.mrf.mxu0
        %v5327 = vadd.f32 %v5238, %v5326
        %v5328 = vpop.f32.mrf.mxu0
        %v5329 = vadd.f32 %v5240, %v5328
        %5330 = vmatmul.bf16.gmra.mxu0 %v5164
        %v5331 = vpop.f32.mrf.mxu0
        %v5332 = vadd.f32 %v5243, %v5331
        %v5333 = vpop.f32.mrf.mxu0
        %v5334 = vadd.f32 %v5245, %v5333
        %5335 = vmatmul.bf16.gmra.mxu0 %v5167
        %v5336 = vpop.f32.mrf.mxu0
        %v5337 = vadd.f32 %v5248, %v5336
        %v5338 = vpop.f32.mrf.mxu0
        %v5339 = vadd.f32 %v5250, %v5338
        %5340 = vmatmul.bf16.gmra.mxu0 %v5170
        %v5341 = vpop.f32.mrf.mxu0
        %v5342 = vadd.f32 %v5253, %v5341
        %v5343 = vpop.f32.mrf.mxu0
        %v5344 = vadd.f32 %v5255, %v5343
        %5345 = vmatmul.bf16.gmra.mxu0 %v5173
        %v5346 = vpop.f32.mrf.mxu0
        %v5347 = vadd.f32 %v5258, %v5346
        %v5348 = vpop.f32.mrf.mxu0
        %v5349 = vadd.f32 %v5260, %v5348
        %5350 = vmatmul.bf16.gmra.mxu0 %v5176
        %v5351 = vpop.f32.mrf.mxu0
        %v5352 = vadd.f32 %v5263, %v5351
        %v5353 = vpop.f32.mrf.mxu0
        %v5354 = vadd.f32 %v5265, %v5353
        %5355 = vdwg.mxu0
        %v5356 = vadd.f32 %v4778, %v5277
        %v5357 = vadd.f32 %v4780, %v5279
        %v5358 = vadd.f32 %v4783, %v5282
        %v5359 = vadd.f32 %v4785, %v5284
        %v5360 = vadd.f32 %v4788, %v5287
        %v5361 = vadd.f32 %v4790, %v5289
        %v5362 = vadd.f32 %v4793, %v5292
        %v5363 = vadd.f32 %v4795, %v5294
        %v5364 = vadd.f32 %v4798, %v5297
        %v5365 = vadd.f32 %v4800, %v5299
        %v5366 = vadd.f32 %v4803, %v5302
        %v5367 = vadd.f32 %v4805, %v5304
        %v5368 = vadd.f32 %v4808, %v5307
        %v5369 = vadd.f32 %v4810, %v5309
        %v5370 = vadd.f32 %v4813, %v5312
        %v5371 = vadd.f32 %v4815, %v5314
        %v5372 = vadd.f32 %v4818, %v5317
        %v5373 = vadd.f32 %v4820, %v5319
        %v5374 = vadd.f32 %v4823, %v5322
        %v5375 = vadd.f32 %v4825, %v5324
        %v5376 = vadd.f32 %v4828, %v5327
        %v5377 = vadd.f32 %v4830, %v5329
        %v5378 = vadd.f32 %v4833, %v5332
        %v5379 = vadd.f32 %v4835, %v5334
        %v5380 = vadd.f32 %v4838, %v5337
        %v5381 = vadd.f32 %v4840, %v5339
        %v5382 = vadd.f32 %v4843, %v5342
        %v5383 = vadd.f32 %v4845, %v5344
        %v5384 = vadd.f32 %v4848, %v5347
        %v5385 = vadd.f32 %v4850, %v5349
        %v5386 = vadd.f32 %v4853, %v5352
        %v5387 = vadd.f32 %v4855, %v5354
        %vm5388 = vcmask 261120
        %v5389 = vsel %vm5388, %v5356, 0.0
        %v5390 = vsel %vm5388, %v5357, 0.0
        %v5391 = vadd.f32 %v5389, %v5390
        %v5392 = vsel %vm5388, %v5358, 0.0
        %v5393 = vadd.f32 %v5391, %v5392
        %v5394 = vsel %vm5388, %v5359, 0.0
        %v5395 = vadd.f32 %v5393, %v5394
        %v5396 = vsel %vm5388, %v5360, 0.0
        %v5397 = vadd.f32 %v5395, %v5396
        %v5398 = vsel %vm5388, %v5361, 0.0
        %v5399 = vadd.f32 %v5397, %v5398
        %v5400 = vsel %vm5388, %v5362, 0.0
        %v5401 = vadd.f32 %v5399, %v5400
        %v5402 = vsel %vm5388, %v5363, 0.0
        %v5403 = vadd.f32 %v5401, %v5402
        %v5404 = vsel %vm5388, %v5364, 0.0
        %v5405 = vadd.f32 %v5403, %v5404
        %v5406 = vsel %vm5388, %v5365, 0.0
        %v5407 = vadd.f32 %v5405, %v5406
        %v5408 = vsel %vm5388, %v5366, 0.0
        %v5409 = vadd.f32 %v5407, %v5408
        %v5410 = vsel %vm5388, %v5367, 0.0
        %v5411 = vadd.f32 %v5409, %v5410
        %v5412 = vsel %vm5388, %v5368, 0.0
        %v5413 = vadd.f32 %v5411, %v5412
        %v5414 = vsel %vm5388, %v5369, 0.0
        %v5415 = vadd.f32 %v5413, %v5414
        %v5416 = vsel %vm5388, %v5370, 0.0
        %v5417 = vadd.f32 %v5415, %v5416
        %v5418 = vsel %vm5388, %v5371, 0.0
        %v5419 = vadd.f32 %v5417, %v5418
        %v5420 = vsel %vm5388, %v5372, 0.0
        %v5421 = vadd.f32 %v5419, %v5420
        %v5422 = vsel %vm5388, %v5373, 0.0
        %v5423 = vadd.f32 %v5421, %v5422
        %v5424 = vsel %vm5388, %v5374, 0.0
        %v5425 = vadd.f32 %v5423, %v5424
        %v5426 = vsel %vm5388, %v5375, 0.0
        %v5427 = vadd.f32 %v5425, %v5426
        %v5428 = vsel %vm5388, %v5376, 0.0
        %v5429 = vadd.f32 %v5427, %v5428
        %v5430 = vsel %vm5388, %v5377, 0.0
        %v5431 = vadd.f32 %v5429, %v5430
        %v5432 = vsel %vm5388, %v5378, 0.0
        %v5433 = vadd.f32 %v5431, %v5432
        %v5434 = vsel %vm5388, %v5379, 0.0
        %v5435 = vadd.f32 %v5433, %v5434
        %v5436 = vsel %vm5388, %v5380, 0.0
        %v5437 = vadd.f32 %v5435, %v5436
        %v5438 = vsel %vm5388, %v5381, 0.0
        %v5439 = vadd.f32 %v5437, %v5438
        %v5440 = vsel %vm5388, %v5382, 0.0
        %v5441 = vadd.f32 %v5439, %v5440
        %v5442 = vsel %vm5388, %v5383, 0.0
        %v5443 = vadd.f32 %v5441, %v5442
        %v5444 = vsel %vm5388, %v5384, 0.0
        %v5445 = vadd.f32 %v5443, %v5444
        %v5446 = vsel %vm5388, %v5385, 0.0
        %v5447 = vadd.f32 %v5445, %v5446
        %v5448 = vsel %vm5388, %v5386, 0.0
        %v5449 = vadd.f32 %v5447, %v5448
        %v5450 = vsel %vm5388, %v5387, 0.0
        %v5451 = vadd.f32 %v5449, %v5450
        %v5452 = vrot.slane %v5451, 4
        %v5453 = vadd.f32 %v5451, %v5452
        %v5454 = vrot.slane %v5453, 2
        %v5455 = vadd.f32 %v5453, %v5454
        %v5456 = vrot.slane %v5455, 1
        %v5457 = vadd.f32 %v5455, %v5456
        %v5458 = vmul.f32 %v5356, %v5356
        %v5459 = vmul.f32 %v5357, %v5357
        %v5460 = vmul.f32 %v5358, %v5358
        %v5461 = vmul.f32 %v5359, %v5359
        %v5462 = vmul.f32 %v5360, %v5360
        %v5463 = vmul.f32 %v5361, %v5361
        %v5464 = vmul.f32 %v5362, %v5362
        %v5465 = vmul.f32 %v5363, %v5363
        %v5466 = vmul.f32 %v5364, %v5364
        %v5467 = vmul.f32 %v5365, %v5365
        %v5468 = vmul.f32 %v5366, %v5366
        %v5469 = vmul.f32 %v5367, %v5367
        %v5470 = vmul.f32 %v5368, %v5368
        %v5471 = vmul.f32 %v5369, %v5369
        %v5472 = vmul.f32 %v5370, %v5370
        %v5473 = vmul.f32 %v5371, %v5371
        %v5474 = vmul.f32 %v5372, %v5372
        %v5475 = vmul.f32 %v5373, %v5373
        %v5476 = vmul.f32 %v5374, %v5374
        %v5477 = vmul.f32 %v5375, %v5375
        %v5478 = vmul.f32 %v5376, %v5376
        %v5479 = vmul.f32 %v5377, %v5377
        %v5480 = vmul.f32 %v5378, %v5378
        %v5481 = vmul.f32 %v5379, %v5379
        %v5482 = vmul.f32 %v5380, %v5380
        %v5483 = vmul.f32 %v5381, %v5381
        %v5484 = vmul.f32 %v5382, %v5382
        %v5485 = vmul.f32 %v5383, %v5383
        %v5486 = vmul.f32 %v5384, %v5384
        %v5487 = vmul.f32 %v5385, %v5385
        %v5488 = vmul.f32 %v5386, %v5386
        %v5489 = vmul.f32 %v5387, %v5387
        %v5490 = vsel %vm5388, %v5458, 0.0
        %v5491 = vsel %vm5388, %v5459, 0.0
        %v5492 = vadd.f32 %v5490, %v5491
        %v5493 = vsel %vm5388, %v5460, 0.0
        %v5494 = vadd.f32 %v5492, %v5493
        %v5495 = vsel %vm5388, %v5461, 0.0
        %v5496 = vadd.f32 %v5494, %v5495
        %v5497 = vsel %vm5388, %v5462, 0.0
        %v5498 = vadd.f32 %v5496, %v5497
        %v5499 = vsel %vm5388, %v5463, 0.0
        %v5500 = vadd.f32 %v5498, %v5499
        %v5501 = vsel %vm5388, %v5464, 0.0
        %v5502 = vadd.f32 %v5500, %v5501
        %v5503 = vsel %vm5388, %v5465, 0.0
        %v5504 = vadd.f32 %v5502, %v5503
        %v5505 = vsel %vm5388, %v5466, 0.0
        %v5506 = vadd.f32 %v5504, %v5505
        %v5507 = vsel %vm5388, %v5467, 0.0
        %v5508 = vadd.f32 %v5506, %v5507
        %v5509 = vsel %vm5388, %v5468, 0.0
        %v5510 = vadd.f32 %v5508, %v5509
        %v5511 = vsel %vm5388, %v5469, 0.0
        %v5512 = vadd.f32 %v5510, %v5511
        %v5513 = vsel %vm5388, %v5470, 0.0
        %v5514 = vadd.f32 %v5512, %v5513
        %v5515 = vsel %vm5388, %v5471, 0.0
        %v5516 = vadd.f32 %v5514, %v5515
        %v5517 = vsel %vm5388, %v5472, 0.0
        %v5518 = vadd.f32 %v5516, %v5517
        %v5519 = vsel %vm5388, %v5473, 0.0
        %v5520 = vadd.f32 %v5518, %v5519
        %v5521 = vsel %vm5388, %v5474, 0.0
        %v5522 = vadd.f32 %v5520, %v5521
        %v5523 = vsel %vm5388, %v5475, 0.0
        %v5524 = vadd.f32 %v5522, %v5523
        %v5525 = vsel %vm5388, %v5476, 0.0
        %v5526 = vadd.f32 %v5524, %v5525
        %v5527 = vsel %vm5388, %v5477, 0.0
        %v5528 = vadd.f32 %v5526, %v5527
        %v5529 = vsel %vm5388, %v5478, 0.0
        %v5530 = vadd.f32 %v5528, %v5529
        %v5531 = vsel %vm5388, %v5479, 0.0
        %v5532 = vadd.f32 %v5530, %v5531
        %v5533 = vsel %vm5388, %v5480, 0.0
        %v5534 = vadd.f32 %v5532, %v5533
        %v5535 = vsel %vm5388, %v5481, 0.0
        %v5536 = vadd.f32 %v5534, %v5535
        %v5537 = vsel %vm5388, %v5482, 0.0
        %v5538 = vadd.f32 %v5536, %v5537
        %v5539 = vsel %vm5388, %v5483, 0.0
        %v5540 = vadd.f32 %v5538, %v5539
        %v5541 = vsel %vm5388, %v5484, 0.0
        %v5542 = vadd.f32 %v5540, %v5541
        %v5543 = vsel %vm5388, %v5485, 0.0
        %v5544 = vadd.f32 %v5542, %v5543
        %v5545 = vsel %vm5388, %v5486, 0.0
        %v5546 = vadd.f32 %v5544, %v5545
        %v5547 = vsel %vm5388, %v5487, 0.0
        %v5548 = vadd.f32 %v5546, %v5547
        %v5549 = vsel %vm5388, %v5488, 0.0
        %v5550 = vadd.f32 %v5548, %v5549
        %v5551 = vsel %vm5388, %v5489, 0.0
        %v5552 = vadd.f32 %v5550, %v5551
        %v5553 = vrot.slane %v5552, 4
        %v5554 = vadd.f32 %v5552, %v5553
        %v5555 = vrot.slane %v5554, 2
        %v5556 = vadd.f32 %v5554, %v5555
        %v5557 = vrot.slane %v5556, 1
        %v5558 = vadd.f32 %v5556, %v5557
        %v5559 = vrcp.pop 256.0
        %v5560 = vmul.f32 256.0, %v5559
        %v5561 = vsub.f32 1.0, %v5560
        %v5562 = vmul.f32 %v5559, %v5561
        %v5563 = vadd.f32 %v5559, %v5562
        %vm5564 = vweird.f32 %v5559
        %v5565 = vsel %vm5564, %v5559, %v5563
        %v5566 = vmul.f32 %v5457, %v5565
        %v5567 = vmul.f32 %v5558, %v5565
        %v5568 = vmul.f32 %v5566, %v5566
        %v5569 = vsub.f32 %v5567, %v5568
        %v5570 = vmax.f32 %v5569, 0.0
        %v5571 = vadd.f32 %v5570, 1e-05
        %v5572 = vrsqrt.pop %v5571
        %v5573 = vmul.f32 %v5572, %v5571
        %v5574 = vmul.f32 %v5573, %v5572
        %v5575 = vmul.f32 0.5, %v5574
        %v5576 = vsub.f32 1.5, %v5575
        %v5577 = vmul.f32 %v5572, %v5576
        %vm5578 = vweird.f32 %v5571
        %vm5579 = vweird.f32 %v5572
        %vm5580 = vmor %vm5578, %vm5579
        %v5581 = vsel %vm5580, %v5572, %v5577
        %v5582 = vsub.f32 %v5356, %v5566
        %v5583 = vsub.f32 %v5357, %v5566
        %v5584 = vsub.f32 %v5358, %v5566
        %v5585 = vsub.f32 %v5359, %v5566
        %v5586 = vsub.f32 %v5360, %v5566
        %v5587 = vsub.f32 %v5361, %v5566
        %v5588 = vsub.f32 %v5362, %v5566
        %v5589 = vsub.f32 %v5363, %v5566
        %v5590 = vsub.f32 %v5364, %v5566
        %v5591 = vsub.f32 %v5365, %v5566
        %v5592 = vsub.f32 %v5366, %v5566
        %v5593 = vsub.f32 %v5367, %v5566
        %v5594 = vsub.f32 %v5368, %v5566
        %v5595 = vsub.f32 %v5369, %v5566
        %v5596 = vsub.f32 %v5370, %v5566
        %v5597 = vsub.f32 %v5371, %v5566
        %v5598 = vsub.f32 %v5372, %v5566
        %v5599 = vsub.f32 %v5373, %v5566
        %v5600 = vsub.f32 %v5374, %v5566
        %v5601 = vsub.f32 %v5375, %v5566
        %v5602 = vsub.f32 %v5376, %v5566
        %v5603 = vsub.f32 %v5377, %v5566
        %v5604 = vsub.f32 %v5378, %v5566
        %v5605 = vsub.f32 %v5379, %v5566
        %v5606 = vsub.f32 %v5380, %v5566
        %v5607 = vsub.f32 %v5381, %v5566
        %v5608 = vsub.f32 %v5382, %v5566
        %v5609 = vsub.f32 %v5383, %v5566
        %v5610 = vsub.f32 %v5384, %v5566
        %v5611 = vsub.f32 %v5385, %v5566
        %v5612 = vsub.f32 %v5386, %v5566
        %v5613 = vsub.f32 %v5387, %v5566
        %v5614 = vmul.f32 %v5582, %v5581
        %v5615 = vmul.f32 %v5583, %v5581
        %v5616 = vmul.f32 %v5584, %v5581
        %v5617 = vmul.f32 %v5585, %v5581
        %v5618 = vmul.f32 %v5586, %v5581
        %v5619 = vmul.f32 %v5587, %v5581
        %v5620 = vmul.f32 %v5588, %v5581
        %v5621 = vmul.f32 %v5589, %v5581
        %v5622 = vmul.f32 %v5590, %v5581
        %v5623 = vmul.f32 %v5591, %v5581
        %v5624 = vmul.f32 %v5592, %v5581
        %v5625 = vmul.f32 %v5593, %v5581
        %v5626 = vmul.f32 %v5594, %v5581
        %v5627 = vmul.f32 %v5595, %v5581
        %v5628 = vmul.f32 %v5596, %v5581
        %v5629 = vmul.f32 %v5597, %v5581
        %v5630 = vmul.f32 %v5598, %v5581
        %v5631 = vmul.f32 %v5599, %v5581
        %v5632 = vmul.f32 %v5600, %v5581
        %v5633 = vmul.f32 %v5601, %v5581
        %v5634 = vmul.f32 %v5602, %v5581
        %v5635 = vmul.f32 %v5603, %v5581
        %v5636 = vmul.f32 %v5604, %v5581
        %v5637 = vmul.f32 %v5605, %v5581
        %v5638 = vmul.f32 %v5606, %v5581
        %v5639 = vmul.f32 %v5607, %v5581
        %v5640 = vmul.f32 %v5608, %v5581
        %v5641 = vmul.f32 %v5609, %v5581
        %v5642 = vmul.f32 %v5610, %v5581
        %v5643 = vmul.f32 %v5611, %v5581
        %v5644 = vmul.f32 %v5612, %v5581
        %v5645 = vmul.f32 %v5613, %v5581
        %v5646 = vld [vmem:[%s5] sm:$0x1]
        %v5648 = vperm.slane %v5646, 0
        %v5650 = vmul.f32 %v5614, %v5648
        %v5651 = vmul.f32 %v5615, %v5648
        %v5652 = vmul.f32 %v5616, %v5648
        %v5653 = vmul.f32 %v5617, %v5648
        %v5654 = vmul.f32 %v5618, %v5648
        %v5655 = vmul.f32 %v5619, %v5648
        %v5656 = vmul.f32 %v5620, %v5648
        %v5657 = vmul.f32 %v5621, %v5648
        %v5658 = vmul.f32 %v5622, %v5648
        %v5659 = vmul.f32 %v5623, %v5648
        %v5660 = vmul.f32 %v5624, %v5648
        %v5661 = vmul.f32 %v5625, %v5648
        %v5662 = vmul.f32 %v5626, %v5648
        %v5663 = vmul.f32 %v5627, %v5648
        %v5664 = vmul.f32 %v5628, %v5648
        %v5665 = vmul.f32 %v5629, %v5648
        %v5666 = vmul.f32 %v5630, %v5648
        %v5667 = vmul.f32 %v5631, %v5648
        %v5668 = vmul.f32 %v5632, %v5648
        %v5669 = vmul.f32 %v5633, %v5648
        %v5670 = vmul.f32 %v5634, %v5648
        %v5671 = vmul.f32 %v5635, %v5648
        %v5672 = vmul.f32 %v5636, %v5648
        %v5673 = vmul.f32 %v5637, %v5648
        %v5674 = vmul.f32 %v5638, %v5648
        %v5675 = vmul.f32 %v5639, %v5648
        %v5676 = vmul.f32 %v5640, %v5648
        %v5677 = vmul.f32 %v5641, %v5648
        %v5678 = vmul.f32 %v5642, %v5648
        %v5679 = vmul.f32 %v5643, %v5648
        %v5680 = vmul.f32 %v5644, %v5648
        %v5681 = vmul.f32 %v5645, %v5648
        %v5682 = vld [vmem:[%s6] sm:$0x1]
        %v5684 = vperm.slane %v5682, 0
        %v5686 = vadd.f32 %v5650, %v5684
        %v5687 = vadd.f32 %v5651, %v5684
        %v5688 = vadd.f32 %v5652, %v5684
        %v5689 = vadd.f32 %v5653, %v5684
        %v5690 = vadd.f32 %v5654, %v5684
        %v5691 = vadd.f32 %v5655, %v5684
        %v5692 = vadd.f32 %v5656, %v5684
        %v5693 = vadd.f32 %v5657, %v5684
        %v5694 = vadd.f32 %v5658, %v5684
        %v5695 = vadd.f32 %v5659, %v5684
        %v5696 = vadd.f32 %v5660, %v5684
        %v5697 = vadd.f32 %v5661, %v5684
        %v5698 = vadd.f32 %v5662, %v5684
        %v5699 = vadd.f32 %v5663, %v5684
        %v5700 = vadd.f32 %v5664, %v5684
        %v5701 = vadd.f32 %v5665, %v5684
        %v5702 = vadd.f32 %v5666, %v5684
        %v5703 = vadd.f32 %v5667, %v5684
        %v5704 = vadd.f32 %v5668, %v5684
        %v5705 = vadd.f32 %v5669, %v5684
        %v5706 = vadd.f32 %v5670, %v5684
        %v5707 = vadd.f32 %v5671, %v5684
        %v5708 = vadd.f32 %v5672, %v5684
        %v5709 = vadd.f32 %v5673, %v5684
        %v5710 = vadd.f32 %v5674, %v5684
        %v5711 = vadd.f32 %v5675, %v5684
        %v5712 = vadd.f32 %v5676, %v5684
        %v5713 = vadd.f32 %v5677, %v5684
        %v5714 = vadd.f32 %v5678, %v5684
        %v5715 = vadd.f32 %v5679, %v5684
        %v5716 = vadd.f32 %v5680, %v5684
        %v5717 = vadd.f32 %v5681, %v5684
        %v5718 = vmax.f32 %v5686, 0.0
        %v5719 = vmax.f32 %v5687, 0.0
        %v5720 = vmax.f32 %v5688, 0.0
        %v5721 = vmax.f32 %v5689, 0.0
        %v5722 = vmax.f32 %v5690, 0.0
        %v5723 = vmax.f32 %v5691, 0.0
        %v5724 = vmax.f32 %v5692, 0.0
        %v5725 = vmax.f32 %v5693, 0.0
        %v5726 = vmax.f32 %v5694, 0.0
        %v5727 = vmax.f32 %v5695, 0.0
        %v5728 = vmax.f32 %v5696, 0.0
        %v5729 = vmax.f32 %v5697, 0.0
        %v5730 = vmax.f32 %v5698, 0.0
        %v5731 = vmax.f32 %v5699, 0.0
        %v5732 = vmax.f32 %v5700, 0.0
        %v5733 = vmax.f32 %v5701, 0.0
        %v5734 = vmax.f32 %v5702, 0.0
        %v5735 = vmax.f32 %v5703, 0.0
        %v5736 = vmax.f32 %v5704, 0.0
        %v5737 = vmax.f32 %v5705, 0.0
        %v5738 = vmax.f32 %v5706, 0.0
        %v5739 = vmax.f32 %v5707, 0.0
        %v5740 = vmax.f32 %v5708, 0.0
        %v5741 = vmax.f32 %v5709, 0.0
        %v5742 = vmax.f32 %v5710, 0.0
        %v5743 = vmax.f32 %v5711, 0.0
        %v5744 = vmax.f32 %v5712, 0.0
        %v5745 = vmax.f32 %v5713, 0.0
        %v5746 = vmax.f32 %v5714, 0.0
        %v5747 = vmax.f32 %v5715, 0.0
        %v5748 = vmax.f32 %v5716, 0.0
        %v5749 = vmax.f32 %v5717, 0.0
        %v5750 = vmul.f32 %v5718, %v889
        %v5751 = vmul.f32 %v5719, %v890
        %v5752 = vmul.f32 %v5720, %v891
        %v5753 = vmul.f32 %v5721, %v892
        %v5754 = vmul.f32 %v5722, %v893
        %v5755 = vmul.f32 %v5723, %v894
        %v5756 = vmul.f32 %v5724, %v895
        %v5757 = vmul.f32 %v5725, %v896
        %v5758 = vmul.f32 %v5726, %v897
        %v5759 = vmul.f32 %v5727, %v898
        %v5760 = vmul.f32 %v5728, %v899
        %v5761 = vmul.f32 %v5729, %v900
        %v5762 = vmul.f32 %v5730, %v901
        %v5763 = vmul.f32 %v5731, %v902
        %v5764 = vmul.f32 %v5732, %v903
        %v5765 = vmul.f32 %v5733, %v904
        %v5766 = vmul.f32 %v5734, %v905
        %v5767 = vmul.f32 %v5735, %v906
        %v5768 = vmul.f32 %v5736, %v907
        %v5769 = vmul.f32 %v5737, %v908
        %v5770 = vmul.f32 %v5738, %v909
        %v5771 = vmul.f32 %v5739, %v910
        %v5772 = vmul.f32 %v5740, %v911
        %v5773 = vmul.f32 %v5741, %v912
        %v5774 = vmul.f32 %v5742, %v913
        %v5775 = vmul.f32 %v5743, %v914
        %v5776 = vmul.f32 %v5744, %v915
        %v5777 = vmul.f32 %v5745, %v916
        %v5778 = vmul.f32 %v5746, %v917
        %v5779 = vmul.f32 %v5747, %v918
        %v5780 = vmul.f32 %v5748, %v919
        %v5781 = vmul.f32 %v5749, %v920
        %v5783 = vrot.slane %v5781, 7
        %v5816 = vrot.slane %v5750, 7
        %v5817 = vrot.slane %v5751, 7
        %v5818 = vsel %vm1147, %v5816, %v5817
        %v5819 = vrot.slane %v5752, 7
        %v5820 = vsel %vm1147, %v5817, %v5819
        %v5821 = vrot.slane %v5753, 7
        %v5822 = vsel %vm1147, %v5819, %v5821
        %v5823 = vrot.slane %v5754, 7
        %v5824 = vsel %vm1147, %v5821, %v5823
        %v5825 = vrot.slane %v5755, 7
        %v5826 = vsel %vm1147, %v5823, %v5825
        %v5827 = vrot.slane %v5756, 7
        %v5828 = vsel %vm1147, %v5825, %v5827
        %v5829 = vrot.slane %v5757, 7
        %v5830 = vsel %vm1147, %v5827, %v5829
        %v5831 = vrot.slane %v5758, 7
        %v5832 = vsel %vm1147, %v5829, %v5831
        %v5833 = vrot.slane %v5759, 7
        %v5834 = vsel %vm1147, %v5831, %v5833
        %v5835 = vrot.slane %v5760, 7
        %v5836 = vsel %vm1147, %v5833, %v5835
        %v5837 = vrot.slane %v5761, 7
        %v5838 = vsel %vm1147, %v5835, %v5837
        %v5839 = vrot.slane %v5762, 7
        %v5840 = vsel %vm1147, %v5837, %v5839
        %v5841 = vrot.slane %v5763, 7
        %v5842 = vsel %vm1147, %v5839, %v5841
        %v5843 = vrot.slane %v5764, 7
        %v5844 = vsel %vm1147, %v5841, %v5843
        %v5845 = vrot.slane %v5765, 7
        %v5846 = vsel %vm1147, %v5843, %v5845
        %v5847 = vrot.slane %v5766, 7
        %v5848 = vsel %vm1147, %v5845, %v5847
        %v5849 = vrot.slane %v5767, 7
        %v5850 = vsel %vm1147, %v5847, %v5849
        %v5851 = vrot.slane %v5768, 7
        %v5852 = vsel %vm1147, %v5849, %v5851
        %v5853 = vrot.slane %v5769, 7
        %v5854 = vsel %vm1147, %v5851, %v5853
        %v5855 = vrot.slane %v5770, 7
        %v5856 = vsel %vm1147, %v5853, %v5855
        %v5857 = vrot.slane %v5771, 7
        %v5858 = vsel %vm1147, %v5855, %v5857
        %v5859 = vrot.slane %v5772, 7
        %v5860 = vsel %vm1147, %v5857, %v5859
        %v5861 = vrot.slane %v5773, 7
        %v5862 = vsel %vm1147, %v5859, %v5861
        %v5863 = vrot.slane %v5774, 7
        %v5864 = vsel %vm1147, %v5861, %v5863
        %v5865 = vrot.slane %v5775, 7
        %v5866 = vsel %vm1147, %v5863, %v5865
        %v5867 = vrot.slane %v5776, 7
        %v5868 = vsel %vm1147, %v5865, %v5867
        %v5869 = vrot.slane %v5777, 7
        %v5870 = vsel %vm1147, %v5867, %v5869
        %v5871 = vrot.slane %v5778, 7
        %v5872 = vsel %vm1147, %v5869, %v5871
        %v5873 = vrot.slane %v5779, 7
        %v5874 = vsel %vm1147, %v5871, %v5873
        %v5875 = vrot.slane %v5780, 7
        %v5876 = vsel %vm1147, %v5873, %v5875
        %v5877 = vsel %vm1147, %v5875, %v5783
        %v5910 = vsel %vm1147, %v5783, %v5816
        %v5911 = vmul.f32 %v5718, %v985
        %v5912 = vmul.f32 %v5719, %v986
        %v5913 = vmul.f32 %v5720, %v987
        %v5914 = vmul.f32 %v5721, %v988
        %v5915 = vmul.f32 %v5722, %v989
        %v5916 = vmul.f32 %v5723, %v990
        %v5917 = vmul.f32 %v5724, %v991
        %v5918 = vmul.f32 %v5725, %v992
        %v5919 = vmul.f32 %v5726, %v993
        %v5920 = vmul.f32 %v5727, %v994
        %v5921 = vmul.f32 %v5728, %v995
        %v5922 = vmul.f32 %v5729, %v996
        %v5923 = vmul.f32 %v5730, %v997
        %v5924 = vmul.f32 %v5731, %v998
        %v5925 = vmul.f32 %v5732, %v999
        %v5926 = vmul.f32 %v5733, %v1000
        %v5927 = vmul.f32 %v5734, %v1001
        %v5928 = vmul.f32 %v5735, %v1002
        %v5929 = vmul.f32 %v5736, %v1003
        %v5930 = vmul.f32 %v5737, %v1004
        %v5931 = vmul.f32 %v5738, %v1005
        %v5932 = vmul.f32 %v5739, %v1006
        %v5933 = vmul.f32 %v5740, %v1007
        %v5934 = vmul.f32 %v5741, %v1008
        %v5935 = vmul.f32 %v5742, %v1009
        %v5936 = vmul.f32 %v5743, %v1010
        %v5937 = vmul.f32 %v5744, %v1011
        %v5938 = vmul.f32 %v5745, %v1012
        %v5939 = vmul.f32 %v5746, %v1013
        %v5940 = vmul.f32 %v5747, %v1014
        %v5941 = vmul.f32 %v5748, %v1015
        %v5942 = vmul.f32 %v5749, %v1016
        %v5975 = vrot.slane %v5911, 1
        %v5976 = vrot.slane %v5912, 1
        %v5977 = vsel %vm1307, %v5975, %v5976
        %v5978 = vrot.slane %v5913, 1
        %v5979 = vsel %vm1307, %v5976, %v5978
        %v5980 = vrot.slane %v5914, 1
        %v5981 = vsel %vm1307, %v5978, %v5980
        %v5982 = vrot.slane %v5915, 1
        %v5983 = vsel %vm1307, %v5980, %v5982
        %v5984 = vrot.slane %v5916, 1
        %v5985 = vsel %vm1307, %v5982, %v5984
        %v5986 = vrot.slane %v5917, 1
        %v5987 = vsel %vm1307, %v5984, %v5986
        %v5988 = vrot.slane %v5918, 1
        %v5989 = vsel %vm1307, %v5986, %v5988
        %v5990 = vrot.slane %v5919, 1
        %v5991 = vsel %vm1307, %v5988, %v5990
        %v5992 = vrot.slane %v5920, 1
        %v5993 = vsel %vm1307, %v5990, %v5992
        %v5994 = vrot.slane %v5921, 1
        %v5995 = vsel %vm1307, %v5992, %v5994
        %v5996 = vrot.slane %v5922, 1
        %v5997 = vsel %vm1307, %v5994, %v5996
        %v5998 = vrot.slane %v5923, 1
        %v5999 = vsel %vm1307, %v5996, %v5998
        %v6000 = vrot.slane %v5924, 1
        %v6001 = vsel %vm1307, %v5998, %v6000
        %v6002 = vrot.slane %v5925, 1
        %v6003 = vsel %vm1307, %v6000, %v6002
        %v6004 = vrot.slane %v5926, 1
        %v6005 = vsel %vm1307, %v6002, %v6004
        %v6006 = vrot.slane %v5927, 1
        %v6007 = vsel %vm1307, %v6004, %v6006
        %v6008 = vrot.slane %v5928, 1
        %v6009 = vsel %vm1307, %v6006, %v6008
        %v6010 = vrot.slane %v5929, 1
        %v6011 = vsel %vm1307, %v6008, %v6010
        %v6012 = vrot.slane %v5930, 1
        %v6013 = vsel %vm1307, %v6010, %v6012
        %v6014 = vrot.slane %v5931, 1
        %v6015 = vsel %vm1307, %v6012, %v6014
        %v6016 = vrot.slane %v5932, 1
        %v6017 = vsel %vm1307, %v6014, %v6016
        %v6018 = vrot.slane %v5933, 1
        %v6019 = vsel %vm1307, %v6016, %v6018
        %v6020 = vrot.slane %v5934, 1
        %v6021 = vsel %vm1307, %v6018, %v6020
        %v6022 = vrot.slane %v5935, 1
        %v6023 = vsel %vm1307, %v6020, %v6022
        %v6024 = vrot.slane %v5936, 1
        %v6025 = vsel %vm1307, %v6022, %v6024
        %v6026 = vrot.slane %v5937, 1
        %v6027 = vsel %vm1307, %v6024, %v6026
        %v6028 = vrot.slane %v5938, 1
        %v6029 = vsel %vm1307, %v6026, %v6028
        %v6030 = vrot.slane %v5939, 1
        %v6031 = vsel %vm1307, %v6028, %v6030
        %v6032 = vrot.slane %v5940, 1
        %v6033 = vsel %vm1307, %v6030, %v6032
        %v6034 = vrot.slane %v5941, 1
        %v6035 = vsel %vm1307, %v6032, %v6034
        %v6036 = vrot.slane %v5942, 1
        %v6037 = vsel %vm1307, %v6034, %v6036
        %v6071 = vsel %vm1307, %v6036, %v5975
        %v6072 = vpack.c.bf16 %v5910, %v5910
        %v6073 = vpack.c.bf16 %v5818, %v5818
        %v6074 = vpack.c.bf16 %v5820, %v5820
        %v6075 = vpack.c.bf16 %v5822, %v5822
        %v6076 = vpack.c.bf16 %v5824, %v5824
        %v6077 = vpack.c.bf16 %v5826, %v5826
        %v6078 = vpack.c.bf16 %v5828, %v5828
        %v6079 = vpack.c.bf16 %v5830, %v5830
        %v6080 = vpack.c.bf16 %v5832, %v5832
        %v6081 = vpack.c.bf16 %v5834, %v5834
        %v6082 = vpack.c.bf16 %v5836, %v5836
        %v6083 = vpack.c.bf16 %v5838, %v5838
        %v6084 = vpack.c.bf16 %v5840, %v5840
        %v6085 = vpack.c.bf16 %v5842, %v5842
        %v6086 = vpack.c.bf16 %v5844, %v5844
        %v6087 = vpack.c.bf16 %v5846, %v5846
        %v6088 = vpack.c.bf16 %v5848, %v5848
        %v6089 = vpack.c.bf16 %v5850, %v5850
        %v6090 = vpack.c.bf16 %v5852, %v5852
        %v6091 = vpack.c.bf16 %v5854, %v5854
        %v6092 = vpack.c.bf16 %v5856, %v5856
        %v6093 = vpack.c.bf16 %v5858, %v5858
        %v6094 = vpack.c.bf16 %v5860, %v5860
        %v6095 = vpack.c.bf16 %v5862, %v5862
        %v6096 = vpack.c.bf16 %v5864, %v5864
        %v6097 = vpack.c.bf16 %v5866, %v5866
        %v6098 = vpack.c.bf16 %v5868, %v5868
        %v6099 = vpack.c.bf16 %v5870, %v5870
        %v6100 = vpack.c.bf16 %v5872, %v5872
        %v6101 = vpack.c.bf16 %v5874, %v5874
        %v6102 = vpack.c.bf16 %v5876, %v5876
        %v6103 = vpack.c.bf16 %v5877, %v5877
        %vm6104 = vcmask 257024
        %6105 = vst.msk [vmem:[#allocation4 + $0xc] sm:$0xf] %vm6104, %v6072
        %6106 = vst.msk [vmem:[#allocation4 + $0x10] sm:$0xf] %vm6104, %v6073
        %6107 = vst.msk [vmem:[#allocation4 + $0x14] sm:$0xf] %vm6104, %v6074
        %6108 = vst.msk [vmem:[#allocation4 + $0x18] sm:$0xf] %vm6104, %v6075
        %6109 = vst.msk [vmem:[#allocation4 + $0x1c] sm:$0xf] %vm6104, %v6076
        %6110 = vst.msk [vmem:[#allocation4 + $0x20] sm:$0xf] %vm6104, %v6077
        %6111 = vst.msk [vmem:[#allocation4 + $0x24] sm:$0xf] %vm6104, %v6078
        %6112 = vst.msk [vmem:[#allocation4 + $0x28] sm:$0xf] %vm6104, %v6079
        %6113 = vst.msk [vmem:[#allocation4 + $0x2c] sm:$0xf] %vm6104, %v6080
        %6114 = vst.msk [vmem:[#allocation4 + $0x30] sm:$0xf] %vm6104, %v6081
        %6115 = vst.msk [vmem:[#allocation4 + $0x34] sm:$0xf] %vm6104, %v6082
        %6116 = vst.msk [vmem:[#allocation4 + $0x38] sm:$0xf] %vm6104, %v6083
        %6117 = vst.msk [vmem:[#allocation4 + $0x3c] sm:$0xf] %vm6104, %v6084
        %6118 = vst.msk [vmem:[#allocation4 + $0x40] sm:$0xf] %vm6104, %v6085
        %6119 = vst.msk [vmem:[#allocation4 + $0x44] sm:$0xf] %vm6104, %v6086
        %6120 = vst.msk [vmem:[#allocation4 + $0x48] sm:$0xf] %vm6104, %v6087
        %6121 = vst.msk [vmem:[#allocation4 + $0x4c] sm:$0xf] %vm6104, %v6088
        %6122 = vst.msk [vmem:[#allocation4 + $0x50] sm:$0xf] %vm6104, %v6089
        %6123 = vst.msk [vmem:[#allocation4 + $0x54] sm:$0xf] %vm6104, %v6090
        %6124 = vst.msk [vmem:[#allocation4 + $0x58] sm:$0xf] %vm6104, %v6091
        %6125 = vst.msk [vmem:[#allocation4 + $0x5c] sm:$0xf] %vm6104, %v6092
        %6126 = vst.msk [vmem:[#allocation4 + $0x60] sm:$0xf] %vm6104, %v6093
        %6127 = vst.msk [vmem:[#allocation4 + $0x64] sm:$0xf] %vm6104, %v6094
        %6128 = vst.msk [vmem:[#allocation4 + $0x68] sm:$0xf] %vm6104, %v6095
        %6129 = vst.msk [vmem:[#allocation4 + $0x6c] sm:$0xf] %vm6104, %v6096
        %6130 = vst.msk [vmem:[#allocation4 + $0x70] sm:$0xf] %vm6104, %v6097
        %6131 = vst.msk [vmem:[#allocation4 + $0x74] sm:$0xf] %vm6104, %v6098
        %6132 = vst.msk [vmem:[#allocation4 + $0x78] sm:$0xf] %vm6104, %v6099
        %6133 = vst.msk [vmem:[#allocation4 + $0x7c] sm:$0xf] %vm6104, %v6100
        %6134 = vst.msk [vmem:[#allocation4 + $0x80] sm:$0xf] %vm6104, %v6101
        %6135 = vst.msk [vmem:[#allocation4 + $0x84] sm:$0xf] %vm6104, %v6102
        %6136 = vst.msk [vmem:[#allocation4 + $0x88] sm:$0xf] %vm6104, %v6103
        %v6137 = vpack.c.bf16 %v5718, %v5718
        %v6138 = vpack.c.bf16 %v5719, %v5719
        %v6139 = vpack.c.bf16 %v5720, %v5720
        %v6140 = vpack.c.bf16 %v5721, %v5721
        %v6141 = vpack.c.bf16 %v5722, %v5722
        %v6142 = vpack.c.bf16 %v5723, %v5723
        %v6143 = vpack.c.bf16 %v5724, %v5724
        %v6144 = vpack.c.bf16 %v5725, %v5725
        %v6145 = vpack.c.bf16 %v5726, %v5726
        %v6146 = vpack.c.bf16 %v5727, %v5727
        %v6147 = vpack.c.bf16 %v5728, %v5728
        %v6148 = vpack.c.bf16 %v5729, %v5729
        %v6149 = vpack.c.bf16 %v5730, %v5730
        %v6150 = vpack.c.bf16 %v5731, %v5731
        %v6151 = vpack.c.bf16 %v5732, %v5732
        %v6152 = vpack.c.bf16 %v5733, %v5733
        %v6153 = vpack.c.bf16 %v5734, %v5734
        %v6154 = vpack.c.bf16 %v5735, %v5735
        %v6155 = vpack.c.bf16 %v5736, %v5736
        %v6156 = vpack.c.bf16 %v5737, %v5737
        %v6157 = vpack.c.bf16 %v5738, %v5738
        %v6158 = vpack.c.bf16 %v5739, %v5739
        %v6159 = vpack.c.bf16 %v5740, %v5740
        %v6160 = vpack.c.bf16 %v5741, %v5741
        %v6161 = vpack.c.bf16 %v5742, %v5742
        %v6162 = vpack.c.bf16 %v5743, %v5743
        %v6163 = vpack.c.bf16 %v5744, %v5744
        %v6164 = vpack.c.bf16 %v5745, %v5745
        %v6165 = vpack.c.bf16 %v5746, %v5746
        %v6166 = vpack.c.bf16 %v5747, %v5747
        %v6167 = vpack.c.bf16 %v5748, %v5748
        %v6168 = vpack.c.bf16 %v5749, %v5749
        %6201 = vrot.lane.b32.xlu0 %v6137, 32
        %v6202 = vpop.permute.xlu0 %6201
        %6203 = vrot.lane.b32.xlu0 %v6138, 32
        %v6204 = vpop.permute.xlu0 %6203
        %6205 = vrot.lane.b32.xlu0 %v6139, 32
        %v6206 = vpop.permute.xlu0 %6205
        %6207 = vrot.lane.b32.xlu0 %v6140, 32
        %v6208 = vpop.permute.xlu0 %6207
        %6209 = vrot.lane.b32.xlu0 %v6141, 32
        %v6210 = vpop.permute.xlu0 %6209
        %6211 = vrot.lane.b32.xlu0 %v6142, 32
        %v6212 = vpop.permute.xlu0 %6211
        %6213 = vrot.lane.b32.xlu0 %v6143, 32
        %v6214 = vpop.permute.xlu0 %6213
        %6215 = vrot.lane.b32.xlu0 %v6144, 32
        %v6216 = vpop.permute.xlu0 %6215
        %6217 = vrot.lane.b32.xlu0 %v6145, 32
        %v6218 = vpop.permute.xlu0 %6217
        %6219 = vrot.lane.b32.xlu0 %v6146, 32
        %v6220 = vpop.permute.xlu0 %6219
        %6221 = vrot.lane.b32.xlu0 %v6147, 32
        %v6222 = vpop.permute.xlu0 %6221
        %6223 = vrot.lane.b32.xlu0 %v6148, 32
        %v6224 = vpop.permute.xlu0 %6223
        %6225 = vrot.lane.b32.xlu0 %v6149, 32
        %v6226 = vpop.permute.xlu0 %6225
        %6227 = vrot.lane.b32.xlu0 %v6150, 32
        %v6228 = vpop.permute.xlu0 %6227
        %6229 = vrot.lane.b32.xlu0 %v6151, 32
        %v6230 = vpop.permute.xlu0 %6229
        %6231 = vrot.lane.b32.xlu0 %v6152, 32
        %v6232 = vpop.permute.xlu0 %6231
        %6233 = vrot.lane.b32.xlu0 %v6153, 32
        %v6234 = vpop.permute.xlu0 %6233
        %6235 = vrot.lane.b32.xlu0 %v6154, 32
        %v6236 = vpop.permute.xlu0 %6235
        %6237 = vrot.lane.b32.xlu0 %v6155, 32
        %v6238 = vpop.permute.xlu0 %6237
        %6239 = vrot.lane.b32.xlu0 %v6156, 32
        %v6240 = vpop.permute.xlu0 %6239
        %6241 = vrot.lane.b32.xlu0 %v6157, 32
        %v6242 = vpop.permute.xlu0 %6241
        %6243 = vrot.lane.b32.xlu0 %v6158, 32
        %v6244 = vpop.permute.xlu0 %6243
        %6245 = vrot.lane.b32.xlu0 %v6159, 32
        %v6246 = vpop.permute.xlu0 %6245
        %6247 = vrot.lane.b32.xlu0 %v6160, 32
        %v6248 = vpop.permute.xlu0 %6247
        %6249 = vrot.lane.b32.xlu0 %v6161, 32
        %v6250 = vpop.permute.xlu0 %6249
        %6251 = vrot.lane.b32.xlu0 %v6162, 32
        %v6252 = vpop.permute.xlu0 %6251
        %6253 = vrot.lane.b32.xlu0 %v6163, 32
        %v6254 = vpop.permute.xlu0 %6253
        %6255 = vrot.lane.b32.xlu0 %v6164, 32
        %v6256 = vpop.permute.xlu0 %6255
        %6257 = vrot.lane.b32.xlu0 %v6165, 32
        %v6258 = vpop.permute.xlu0 %6257
        %6259 = vrot.lane.b32.xlu0 %v6166, 32
        %v6260 = vpop.permute.xlu0 %6259
        %6261 = vrot.lane.b32.xlu0 %v6167, 32
        %v6262 = vpop.permute.xlu0 %6261
        %6263 = vrot.lane.b32.xlu0 %v6168, 32
        %v6264 = vpop.permute.xlu0 %6263
        %vm6297 = vcmask 519424
        %6298 = vst.msk [vmem:[#allocation4 + $0xc] sm:$0xf] %vm6297, %v6202
        %6299 = vst.msk [vmem:[#allocation4 + $0x10] sm:$0xf] %vm6297, %v6204
        %6300 = vst.msk [vmem:[#allocation4 + $0x14] sm:$0xf] %vm6297, %v6206
        %6301 = vst.msk [vmem:[#allocation4 + $0x18] sm:$0xf] %vm6297, %v6208
        %6302 = vst.msk [vmem:[#allocation4 + $0x1c] sm:$0xf] %vm6297, %v6210
        %6303 = vst.msk [vmem:[#allocation4 + $0x20] sm:$0xf] %vm6297, %v6212
        %6304 = vst.msk [vmem:[#allocation4 + $0x24] sm:$0xf] %vm6297, %v6214
        %6305 = vst.msk [vmem:[#allocation4 + $0x28] sm:$0xf] %vm6297, %v6216
        %6306 = vst.msk [vmem:[#allocation4 + $0x2c] sm:$0xf] %vm6297, %v6218
        %6307 = vst.msk [vmem:[#allocation4 + $0x30] sm:$0xf] %vm6297, %v6220
        %6308 = vst.msk [vmem:[#allocation4 + $0x34] sm:$0xf] %vm6297, %v6222
        %6309 = vst.msk [vmem:[#allocation4 + $0x38] sm:$0xf] %vm6297, %v6224
        %6310 = vst.msk [vmem:[#allocation4 + $0x3c] sm:$0xf] %vm6297, %v6226
        %6311 = vst.msk [vmem:[#allocation4 + $0x40] sm:$0xf] %vm6297, %v6228
        %6312 = vst.msk [vmem:[#allocation4 + $0x44] sm:$0xf] %vm6297, %v6230
        %6313 = vst.msk [vmem:[#allocation4 + $0x48] sm:$0xf] %vm6297, %v6232
        %6314 = vst.msk [vmem:[#allocation4 + $0x4c] sm:$0xf] %vm6297, %v6234
        %6315 = vst.msk [vmem:[#allocation4 + $0x50] sm:$0xf] %vm6297, %v6236
        %6316 = vst.msk [vmem:[#allocation4 + $0x54] sm:$0xf] %vm6297, %v6238
        %6317 = vst.msk [vmem:[#allocation4 + $0x58] sm:$0xf] %vm6297, %v6240
        %6318 = vst.msk [vmem:[#allocation4 + $0x5c] sm:$0xf] %vm6297, %v6242
        %6319 = vst.msk [vmem:[#allocation4 + $0x60] sm:$0xf] %vm6297, %v6244
        %6320 = vst.msk [vmem:[#allocation4 + $0x64] sm:$0xf] %vm6297, %v6246
        %6321 = vst.msk [vmem:[#allocation4 + $0x68] sm:$0xf] %vm6297, %v6248
        %6322 = vst.msk [vmem:[#allocation4 + $0x6c] sm:$0xf] %vm6297, %v6250
        %6323 = vst.msk [vmem:[#allocation4 + $0x70] sm:$0xf] %vm6297, %v6252
        %6324 = vst.msk [vmem:[#allocation4 + $0x74] sm:$0xf] %vm6297, %v6254
        %6325 = vst.msk [vmem:[#allocation4 + $0x78] sm:$0xf] %vm6297, %v6256
        %6326 = vst.msk [vmem:[#allocation4 + $0x7c] sm:$0xf] %vm6297, %v6258
        %6327 = vst.msk [vmem:[#allocation4 + $0x80] sm:$0xf] %vm6297, %v6260
        %6328 = vst.msk [vmem:[#allocation4 + $0x84] sm:$0xf] %vm6297, %v6262
        %6329 = vst.msk [vmem:[#allocation4 + $0x88] sm:$0xf] %vm6297, %v6264
        %v6330 = vpack.c.bf16 %v5977, %v5977
        %v6331 = vpack.c.bf16 %v5979, %v5979
        %v6332 = vpack.c.bf16 %v5981, %v5981
        %v6333 = vpack.c.bf16 %v5983, %v5983
        %v6334 = vpack.c.bf16 %v5985, %v5985
        %v6335 = vpack.c.bf16 %v5987, %v5987
        %v6336 = vpack.c.bf16 %v5989, %v5989
        %v6337 = vpack.c.bf16 %v5991, %v5991
        %v6338 = vpack.c.bf16 %v5993, %v5993
        %v6339 = vpack.c.bf16 %v5995, %v5995
        %v6340 = vpack.c.bf16 %v5997, %v5997
        %v6341 = vpack.c.bf16 %v5999, %v5999
        %v6342 = vpack.c.bf16 %v6001, %v6001
        %v6343 = vpack.c.bf16 %v6003, %v6003
        %v6344 = vpack.c.bf16 %v6005, %v6005
        %v6345 = vpack.c.bf16 %v6007, %v6007
        %v6346 = vpack.c.bf16 %v6009, %v6009
        %v6347 = vpack.c.bf16 %v6011, %v6011
        %v6348 = vpack.c.bf16 %v6013, %v6013
        %v6349 = vpack.c.bf16 %v6015, %v6015
        %v6350 = vpack.c.bf16 %v6017, %v6017
        %v6351 = vpack.c.bf16 %v6019, %v6019
        %v6352 = vpack.c.bf16 %v6021, %v6021
        %v6353 = vpack.c.bf16 %v6023, %v6023
        %v6354 = vpack.c.bf16 %v6025, %v6025
        %v6355 = vpack.c.bf16 %v6027, %v6027
        %v6356 = vpack.c.bf16 %v6029, %v6029
        %v6357 = vpack.c.bf16 %v6031, %v6031
        %v6358 = vpack.c.bf16 %v6033, %v6033
        %v6359 = vpack.c.bf16 %v6035, %v6035
        %v6360 = vpack.c.bf16 %v6037, %v6037
        %v6361 = vpack.c.bf16 %v6071, %v6071
        %6394 = vrot.lane.b32.xlu0 %v6330, 64
        %v6395 = vpop.permute.xlu0 %6394
        %6396 = vrot.lane.b32.xlu0 %v6331, 64
        %v6397 = vpop.permute.xlu0 %6396
        %6398 = vrot.lane.b32.xlu0 %v6332, 64
        %v6399 = vpop.permute.xlu0 %6398
        %6400 = vrot.lane.b32.xlu0 %v6333, 64
        %v6401 = vpop.permute.xlu0 %6400
        %6402 = vrot.lane.b32.xlu0 %v6334, 64
        %v6403 = vpop.permute.xlu0 %6402
        %6404 = vrot.lane.b32.xlu0 %v6335, 64
        %v6405 = vpop.permute.xlu0 %6404
        %6406 = vrot.lane.b32.xlu0 %v6336, 64
        %v6407 = vpop.permute.xlu0 %6406
        %6408 = vrot.lane.b32.xlu0 %v6337, 64
        %v6409 = vpop.permute.xlu0 %6408
        %6410 = vrot.lane.b32.xlu0 %v6338, 64
        %v6411 = vpop.permute.xlu0 %6410
        %6412 = vrot.lane.b32.xlu0 %v6339, 64
        %v6413 = vpop.permute.xlu0 %6412
        %6414 = vrot.lane.b32.xlu0 %v6340, 64
        %v6415 = vpop.permute.xlu0 %6414
        %6416 = vrot.lane.b32.xlu0 %v6341, 64
        %v6417 = vpop.permute.xlu0 %6416
        %6418 = vrot.lane.b32.xlu0 %v6342, 64
        %v6419 = vpop.permute.xlu0 %6418
        %6420 = vrot.lane.b32.xlu0 %v6343, 64
        %v6421 = vpop.permute.xlu0 %6420
        %6422 = vrot.lane.b32.xlu0 %v6344, 64
        %v6423 = vpop.permute.xlu0 %6422
        %6424 = vrot.lane.b32.xlu0 %v6345, 64
        %v6425 = vpop.permute.xlu0 %6424
        %6426 = vrot.lane.b32.xlu0 %v6346, 64
        %v6427 = vpop.permute.xlu0 %6426
        %6428 = vrot.lane.b32.xlu0 %v6347, 64
        %v6429 = vpop.permute.xlu0 %6428
        %6430 = vrot.lane.b32.xlu0 %v6348, 64
        %v6431 = vpop.permute.xlu0 %6430
        %6432 = vrot.lane.b32.xlu0 %v6349, 64
        %v6433 = vpop.permute.xlu0 %6432
        %6434 = vrot.lane.b32.xlu0 %v6350, 64
        %v6435 = vpop.permute.xlu0 %6434
        %6436 = vrot.lane.b32.xlu0 %v6351, 64
        %v6437 = vpop.permute.xlu0 %6436
        %6438 = vrot.lane.b32.xlu0 %v6352, 64
        %v6439 = vpop.permute.xlu0 %6438
        %6440 = vrot.lane.b32.xlu0 %v6353, 64
        %v6441 = vpop.permute.xlu0 %6440
        %6442 = vrot.lane.b32.xlu0 %v6354, 64
        %v6443 = vpop.permute.xlu0 %6442
        %6444 = vrot.lane.b32.xlu0 %v6355, 64
        %v6445 = vpop.permute.xlu0 %6444
        %6446 = vrot.lane.b32.xlu0 %v6356, 64
        %v6447 = vpop.permute.xlu0 %6446
        %6448 = vrot.lane.b32.xlu0 %v6357, 64
        %v6449 = vpop.permute.xlu0 %6448
        %6450 = vrot.lane.b32.xlu0 %v6358, 64
        %v6451 = vpop.permute.xlu0 %6450
        %6452 = vrot.lane.b32.xlu0 %v6359, 64
        %v6453 = vpop.permute.xlu0 %6452
        %6454 = vrot.lane.b32.xlu0 %v6360, 64
        %v6455 = vpop.permute.xlu0 %6454
        %6456 = vrot.lane.b32.xlu0 %v6361, 64
        %v6457 = vpop.permute.xlu0 %6456
        %vm6490 = vcmask 781824
        %6491 = vst.msk [vmem:[#allocation4 + $0xc] sm:$0xf] %vm6490, %v6395
        %6492 = vst.msk [vmem:[#allocation4 + $0x10] sm:$0xf] %vm6490, %v6397
        %6493 = vst.msk [vmem:[#allocation4 + $0x14] sm:$0xf] %vm6490, %v6399
        %6494 = vst.msk [vmem:[#allocation4 + $0x18] sm:$0xf] %vm6490, %v6401
        %6495 = vst.msk [vmem:[#allocation4 + $0x1c] sm:$0xf] %vm6490, %v6403
        %6496 = vst.msk [vmem:[#allocation4 + $0x20] sm:$0xf] %vm6490, %v6405
        %6497 = vst.msk [vmem:[#allocation4 + $0x24] sm:$0xf] %vm6490, %v6407
        %6498 = vst.msk [vmem:[#allocation4 + $0x28] sm:$0xf] %vm6490, %v6409
        %6499 = vst.msk [vmem:[#allocation4 + $0x2c] sm:$0xf] %vm6490, %v6411
        %6500 = vst.msk [vmem:[#allocation4 + $0x30] sm:$0xf] %vm6490, %v6413
        %6501 = vst.msk [vmem:[#allocation4 + $0x34] sm:$0xf] %vm6490, %v6415
        %6502 = vst.msk [vmem:[#allocation4 + $0x38] sm:$0xf] %vm6490, %v6417
        %6503 = vst.msk [vmem:[#allocation4 + $0x3c] sm:$0xf] %vm6490, %v6419
        %6504 = vst.msk [vmem:[#allocation4 + $0x40] sm:$0xf] %vm6490, %v6421
        %6505 = vst.msk [vmem:[#allocation4 + $0x44] sm:$0xf] %vm6490, %v6423
        %6506 = vst.msk [vmem:[#allocation4 + $0x48] sm:$0xf] %vm6490, %v6425
        %6507 = vst.msk [vmem:[#allocation4 + $0x4c] sm:$0xf] %vm6490, %v6427
        %6508 = vst.msk [vmem:[#allocation4 + $0x50] sm:$0xf] %vm6490, %v6429
        %6509 = vst.msk [vmem:[#allocation4 + $0x54] sm:$0xf] %vm6490, %v6431
        %6510 = vst.msk [vmem:[#allocation4 + $0x58] sm:$0xf] %vm6490, %v6433
        %6511 = vst.msk [vmem:[#allocation4 + $0x5c] sm:$0xf] %vm6490, %v6435
        %6512 = vst.msk [vmem:[#allocation4 + $0x60] sm:$0xf] %vm6490, %v6437
        %6513 = vst.msk [vmem:[#allocation4 + $0x64] sm:$0xf] %vm6490, %v6439
        %6514 = vst.msk [vmem:[#allocation4 + $0x68] sm:$0xf] %vm6490, %v6441
        %6515 = vst.msk [vmem:[#allocation4 + $0x6c] sm:$0xf] %vm6490, %v6443
        %6516 = vst.msk [vmem:[#allocation4 + $0x70] sm:$0xf] %vm6490, %v6445
        %6517 = vst.msk [vmem:[#allocation4 + $0x74] sm:$0xf] %vm6490, %v6447
        %6518 = vst.msk [vmem:[#allocation4 + $0x78] sm:$0xf] %vm6490, %v6449
        %6519 = vst.msk [vmem:[#allocation4 + $0x7c] sm:$0xf] %vm6490, %v6451
        %6520 = vst.msk [vmem:[#allocation4 + $0x80] sm:$0xf] %vm6490, %v6453
        %6521 = vst.msk [vmem:[#allocation4 + $0x84] sm:$0xf] %vm6490, %v6455
        %6522 = vst.msk [vmem:[#allocation4 + $0x88] sm:$0xf] %vm6490, %v6457
        %v6523 = vld [vmem:[#allocation4 + $0x4] sm:$0xf]
        %v6524 = vld [vmem:[#allocation4 + $0x8] sm:$0xf]
        %v6525 = vld [vmem:[#allocation4 + $0xc] sm:$0xf]
        %v6526 = vld [vmem:[#allocation4 + $0x10] sm:$0xf]
        %v6527 = vld [vmem:[#allocation4 + $0x14] sm:$0xf]
        %v6528 = vld [vmem:[#allocation4 + $0x18] sm:$0xf]
        %v6529 = vld [vmem:[#allocation4 + $0x1c] sm:$0xf]
        %v6530 = vld [vmem:[#allocation4 + $0x20] sm:$0xf]
        %v6531 = vld [vmem:[#allocation4 + $0x24] sm:$0xf]
        %v6532 = vld [vmem:[#allocation4 + $0x28] sm:$0xf]
        %v6533 = vld [vmem:[#allocation4 + $0x2c] sm:$0xf]
        %v6534 = vld [vmem:[#allocation4 + $0x30] sm:$0xf]
        %v6535 = vld [vmem:[#allocation4 + $0x34] sm:$0xf]
        %v6536 = vld [vmem:[#allocation4 + $0x38] sm:$0xf]
        %v6537 = vld [vmem:[#allocation4 + $0x3c] sm:$0xf]
        %v6538 = vld [vmem:[#allocation4 + $0x40] sm:$0xf]
        %v6539 = vld [vmem:[#allocation4 + $0x44] sm:$0xf]
        %v6540 = vld [vmem:[#allocation4 + $0x48] sm:$0xf]
        %v6541 = vld [vmem:[#allocation4 + $0x4c] sm:$0xf]
        %v6542 = vld [vmem:[#allocation4 + $0x50] sm:$0xf]
        %v6543 = vld [vmem:[#allocation4 + $0x54] sm:$0xf]
        %v6544 = vld [vmem:[#allocation4 + $0x58] sm:$0xf]
        %v6545 = vld [vmem:[#allocation4 + $0x5c] sm:$0xf]
        %v6546 = vld [vmem:[#allocation4 + $0x60] sm:$0xf]
        %v6547 = vld [vmem:[#allocation4 + $0x64] sm:$0xf]
        %v6548 = vld [vmem:[#allocation4 + $0x68] sm:$0xf]
        %v6549 = vld [vmem:[#allocation4 + $0x6c] sm:$0xf]
        %v6550 = vld [vmem:[#allocation4 + $0x70] sm:$0xf]
        %v6551 = vld [vmem:[#allocation4 + $0x74] sm:$0xf]
        %v6552 = vld [vmem:[#allocation4 + $0x78] sm:$0xf]
        %v6553 = vld [vmem:[#allocation4 + $0x7c] sm:$0xf]
        %v6554 = vld [vmem:[#allocation4 + $0x80] sm:$0xf]
        %v6555 = vld [vmem:[%s7] sm:$0xf]
        %v6556 = vld [vmem:[%s7 + $0x4] sm:$0xf]
        %v6557 = vld [vmem:[%s7 + $0x8] sm:$0xf]
        %v6558 = vld [vmem:[%s7 + $0xc] sm:$0xf]
        %v6559 = vld [vmem:[%s7 + $0x10] sm:$0xf]
        %v6560 = vld [vmem:[%s7 + $0x14] sm:$0xf]
        %v6561 = vld [vmem:[%s7 + $0x18] sm:$0xf]
        %v6562 = vld [vmem:[%s7 + $0x1c] sm:$0xf]
        %v6563 = vld [vmem:[%s7 + $0x20] sm:$0xf]
        %v6564 = vld [vmem:[%s7 + $0x24] sm:$0xf]
        %v6565 = vld [vmem:[%s7 + $0x28] sm:$0xf]
        %v6566 = vld [vmem:[%s7 + $0x2c] sm:$0xf]
        %v6567 = vld [vmem:[#allocation4 + $0x84] sm:$0xf]
        %v6568 = vld [vmem:[#allocation4 + $0x88] sm:$0xf]
        %s6569 = scalar_lea.vmem %s7, 48
        %v6570 = vld [vmem:[%s6569] sm:$0xf]
        %v6571 = vld [vmem:[%s6569 + $0x4] sm:$0xf]
        %v6572 = vld [vmem:[%s6569 + $0x8] sm:$0xf]
        %v6573 = vld [vmem:[%s6569 + $0xc] sm:$0xf]
        %v6574 = vld [vmem:[%s6569 + $0x10] sm:$0xf]
        %v6575 = vld [vmem:[%s6569 + $0x14] sm:$0xf]
        %v6576 = vld [vmem:[%s6569 + $0x18] sm:$0xf]
        %v6577 = vld [vmem:[%s6569 + $0x1c] sm:$0xf]
        %v6578 = vld [vmem:[%s6569 + $0x20] sm:$0xf]
        %v6579 = vld [vmem:[%s6569 + $0x24] sm:$0xf]
        %v6580 = vld [vmem:[%s6569 + $0x28] sm:$0xf]
        %v6581 = vld [vmem:[%s6569 + $0x2c] sm:$0xf]
        %v6614 = vunpack.c.l.b16 %v6525
        %v6615 = vunpack.c.l.b16 %v6526
        %v6616 = vunpack.c.l.b16 %v6527
        %v6617 = vunpack.c.l.b16 %v6528
        %v6618 = vunpack.c.l.b16 %v6529
        %v6619 = vunpack.c.l.b16 %v6530
        %v6620 = vunpack.c.l.b16 %v6531
        %v6621 = vunpack.c.l.b16 %v6532
        %v6622 = vunpack.c.l.b16 %v6533
        %v6623 = vunpack.c.l.b16 %v6534
        %v6624 = vunpack.c.l.b16 %v6535
        %v6625 = vunpack.c.l.b16 %v6536
        %v6626 = vunpack.c.l.b16 %v6537
        %v6627 = vunpack.c.l.b16 %v6538
        %v6628 = vunpack.c.l.b16 %v6539
        %v6629 = vunpack.c.l.b16 %v6540
        %v6630 = vunpack.c.l.b16 %v6541
        %v6631 = vunpack.c.l.b16 %v6542
        %v6632 = vunpack.c.l.b16 %v6543
        %v6633 = vunpack.c.l.b16 %v6544
        %v6634 = vunpack.c.l.b16 %v6545
        %v6635 = vunpack.c.l.b16 %v6546
        %v6636 = vunpack.c.l.b16 %v6547
        %v6637 = vunpack.c.l.b16 %v6548
        %v6638 = vunpack.c.l.b16 %v6549
        %v6639 = vunpack.c.l.b16 %v6550
        %v6640 = vunpack.c.l.b16 %v6551
        %v6641 = vunpack.c.l.b16 %v6552
        %v6642 = vunpack.c.l.b16 %v6553
        %v6643 = vunpack.c.l.b16 %v6554
        %v6644 = vunpack.c.l.b16 %v6567
        %v6645 = vunpack.c.l.b16 %v6568
        %v6646 = vpack.c.b16 %v6615, %v6614
        %v6647 = vpack.c.b16 %v6617, %v6616
        %v6648 = vpack.c.b16 %v6619, %v6618
        %v6649 = vpack.c.b16 %v6621, %v6620
        %v6650 = vpack.c.b16 %v6623, %v6622
        %v6651 = vpack.c.b16 %v6625, %v6624
        %v6652 = vpack.c.b16 %v6627, %v6626
        %v6653 = vpack.c.b16 %v6629, %v6628
        %v6654 = vpack.c.b16 %v6631, %v6630
        %v6655 = vpack.c.b16 %v6633, %v6632
        %v6656 = vpack.c.b16 %v6635, %v6634
        %v6657 = vpack.c.b16 %v6637, %v6636
        %v6658 = vpack.c.b16 %v6639, %v6638
        %v6659 = vpack.c.b16 %v6641, %v6640
        %v6660 = vpack.c.b16 %v6643, %v6642
        %v6661 = vpack.c.b16 %v6645, %v6644
        %v6674 = vunpack.c.l.b16 %v6570
        %v6675 = vunpack.c.l.b16 %v6571
        %v6676 = vunpack.c.l.b16 %v6572
        %v6677 = vunpack.c.l.b16 %v6573
        %v6678 = vunpack.c.l.b16 %v6574
        %v6679 = vunpack.c.l.b16 %v6575
        %v6680 = vunpack.c.l.b16 %v6576
        %v6681 = vunpack.c.l.b16 %v6577
        %v6682 = vunpack.c.l.b16 %v6578
        %v6683 = vunpack.c.l.b16 %v6579
        %v6684 = vunpack.c.l.b16 %v6580
        %v6685 = vunpack.c.l.b16 %v6581
        %v6686 = vpack.c.b16 %v6675, %v6674
        %v6687 = vpack.c.b16 %v6677, %v6676
        %v6688 = vpack.c.b16 %v6679, %v6678
        %v6689 = vpack.c.b16 %v6681, %v6680
        %v6690 = vpack.c.b16 %v6683, %v6682
        %v6691 = vpack.c.b16 %v6685, %v6684
        %vm6698 = vcmask 785408
        %v6700 = vsel %vm6698, %v6646, 0
        %v6703 = vsel %vm6698, %v6647, 0
        %v6706 = vsel %vm6698, %v6648, 0
        %v6709 = vsel %vm6698, %v6649, 0
        %v6712 = vsel %vm6698, %v6650, 0
        %v6715 = vsel %vm6698, %v6651, 0
        %v6718 = vsel %vm6698, %v6652, 0
        %v6721 = vsel %vm6698, %v6653, 0
        %v6724 = vsel %vm6698, %v6654, 0
        %v6727 = vsel %vm6698, %v6655, 0
        %v6730 = vsel %vm6698, %v6656, 0
        %v6733 = vsel %vm6698, %v6657, 0
        %v6736 = vsel %vm6698, %v6658, 0
        %v6739 = vsel %vm6698, %v6659, 0
        %v6742 = vsel %vm6698, %v6660, 0
        %v6745 = vsel %vm6698, %v6661, 0
        %6747 = vmatpush.bf16.msra.mxu0 0
        %6748 = vmatpush.bf16.msra.mxu0 0
        %6749 = vmatpush.bf16.msra.mxu0 %v6691
        %6750 = vmatpush.bf16.msra.mxu0 %v6690
        %6751 = vmatpush.bf16.msra.mxu0 %v6689
        %6752 = vmatpush.bf16.msra.mxu0 %v6688
        %6753 = vmatpush.bf16.msra.mxu0 %v6687
        %6754 = vmatpush.bf16.msra.mxu0 %v6686
        %6755 = vmatmul.bf16.gmra.mxu0 %v6700
        %v6756 = vpop.f32.mrf.mxu0
        %v6757 = vadd.f32 0.0, %v6756
        %v6758 = vpop.f32.mrf.mxu0
        %v6759 = vadd.f32 0.0, %v6758
        %6760 = vmatmul.bf16.gmra.mxu0 %v6703
        %v6761 = vpop.f32.mrf.mxu0
        %v6762 = vadd.f32 0.0, %v6761
        %v6763 = vpop.f32.mrf.mxu0
        %v6764 = vadd.f32 0.0, %v6763
        %6765 = vmatmul.bf16.gmra.mxu0 %v6706
        %v6766 = vpop.f32.mrf.mxu0
        %v6767 = vadd.f32 0.0, %v6766
        %v6768 = vpop.f32.mrf.mxu0
        %v6769 = vadd.f32 0.0, %v6768
        %6770 = vmatmul.bf16.gmra.mxu0 %v6709
        %v6771 = vpop.f32.mrf.mxu0
        %v6772 = vadd.f32 0.0, %v6771
        %v6773 = vpop.f32.mrf.mxu0
        %v6774 = vadd.f32 0.0, %v6773
        %6775 = vmatmul.bf16.gmra.mxu0 %v6712
        %v6776 = vpop.f32.mrf.mxu0
        %v6777 = vadd.f32 0.0, %v6776
        %v6778 = vpop.f32.mrf.mxu0
        %v6779 = vadd.f32 0.0, %v6778
        %6780 = vmatmul.bf16.gmra.mxu0 %v6715
        %v6781 = vpop.f32.mrf.mxu0
        %v6782 = vadd.f32 0.0, %v6781
        %v6783 = vpop.f32.mrf.mxu0
        %v6784 = vadd.f32 0.0, %v6783
        %6785 = vmatmul.bf16.gmra.mxu0 %v6718
        %v6786 = vpop.f32.mrf.mxu0
        %v6787 = vadd.f32 0.0, %v6786
        %v6788 = vpop.f32.mrf.mxu0
        %v6789 = vadd.f32 0.0, %v6788
        %6790 = vmatmul.bf16.gmra.mxu0 %v6721
        %v6791 = vpop.f32.mrf.mxu0
        %v6792 = vadd.f32 0.0, %v6791
        %v6793 = vpop.f32.mrf.mxu0
        %v6794 = vadd.f32 0.0, %v6793
        %6795 = vmatmul.bf16.gmra.mxu0 %v6724
        %v6796 = vpop.f32.mrf.mxu0
        %v6797 = vadd.f32 0.0, %v6796
        %v6798 = vpop.f32.mrf.mxu0
        %v6799 = vadd.f32 0.0, %v6798
        %6800 = vmatmul.bf16.gmra.mxu0 %v6727
        %v6801 = vpop.f32.mrf.mxu0
        %v6802 = vadd.f32 0.0, %v6801
        %v6803 = vpop.f32.mrf.mxu0
        %v6804 = vadd.f32 0.0, %v6803
        %6805 = vmatmul.bf16.gmra.mxu0 %v6730
        %v6806 = vpop.f32.mrf.mxu0
        %v6807 = vadd.f32 0.0, %v6806
        %v6808 = vpop.f32.mrf.mxu0
        %v6809 = vadd.f32 0.0, %v6808
        %6810 = vmatmul.bf16.gmra.mxu0 %v6733
        %v6811 = vpop.f32.mrf.mxu0
        %v6812 = vadd.f32 0.0, %v6811
        %v6813 = vpop.f32.mrf.mxu0
        %v6814 = vadd.f32 0.0, %v6813
        %6815 = vmatmul.bf16.gmra.mxu0 %v6736
        %v6816 = vpop.f32.mrf.mxu0
        %v6817 = vadd.f32 0.0, %v6816
        %v6818 = vpop.f32.mrf.mxu0
        %v6819 = vadd.f32 0.0, %v6818
        %6820 = vmatmul.bf16.gmra.mxu0 %v6739
        %v6821 = vpop.f32.mrf.mxu0
        %v6822 = vadd.f32 0.0, %v6821
        %v6823 = vpop.f32.mrf.mxu0
        %v6824 = vadd.f32 0.0, %v6823
        %6825 = vmatmul.bf16.gmra.mxu0 %v6742
        %v6826 = vpop.f32.mrf.mxu0
        %v6827 = vadd.f32 0.0, %v6826
        %v6828 = vpop.f32.mrf.mxu0
        %v6829 = vadd.f32 0.0, %v6828
        %6830 = vmatmul.bf16.gmra.mxu0 %v6745
        %v6831 = vpop.f32.mrf.mxu0
        %v6832 = vadd.f32 0.0, %v6831
        %v6833 = vpop.f32.mrf.mxu0
        %v6834 = vadd.f32 0.0, %v6833
        %6835 = vdwg.mxu0
        %v6838 = vunpack.c.l.b16 %v6523
        %v6839 = vunpack.c.l.b16 %v6524
        %v6840 = vpack.c.b16 %v6839, %v6838
        %v6853 = vunpack.c.l.b16 %v6555
        %v6854 = vunpack.c.l.b16 %v6556
        %v6855 = vunpack.c.l.b16 %v6557
        %v6856 = vunpack.c.l.b16 %v6558
        %v6857 = vunpack.c.l.b16 %v6559
        %v6858 = vunpack.c.l.b16 %v6560
        %v6859 = vunpack.c.l.b16 %v6561
        %v6860 = vunpack.c.l.b16 %v6562
        %v6861 = vunpack.c.l.b16 %v6563
        %v6862 = vunpack.c.l.b16 %v6564
        %v6863 = vunpack.c.l.b16 %v6565
        %v6864 = vunpack.c.l.b16 %v6566
        %v6865 = vpack.c.b16 %v6854, %v6853
        %v6866 = vpack.c.b16 %v6856, %v6855
        %v6867 = vpack.c.b16 %v6858, %v6857
        %v6868 = vpack.c.b16 %v6860, %v6859
        %v6869 = vpack.c.b16 %v6862, %v6861
        %v6870 = vpack.c.b16 %v6864, %v6863
        %v6878 = vsel %vm6698, %v6840, 0
        %6880 = vmatpush.bf16.msra.mxu0 0
        %6881 = vmatpush.bf16.msra.mxu0 0
        %6882 = vmatpush.bf16.msra.mxu0 %v6870
        %6883 = vmatpush.bf16.msra.mxu0 %v6869
        %6884 = vmatpush.bf16.msra.mxu0 %v6868
        %6885 = vmatpush.bf16.msra.mxu0 %v6867
        %6886 = vmatpush.bf16.msra.mxu0 %v6866
        %6887 = vmatpush.bf16.msra.mxu0 %v6865
        %6888 = vmatmul.bf16.gmra.mxu0 %v6878
        %v6889 = vpop.f32.mrf.mxu0
        %v6890 = vadd.f32 %v6757, %v6889
        %v6891 = vpop.f32.mrf.mxu0
        %v6892 = vadd.f32 %v6759, %v6891
        %6893 = vmatmul.bf16.gmra.mxu0 %v6700
        %v6894 = vpop.f32.mrf.mxu0
        %v6895 = vadd.f32 %v6762, %v6894
        %v6896 = vpop.f32.mrf.mxu0
        %v6897 = vadd.f32 %v6764, %v6896
        %6898 = vmatmul.bf16.gmra.mxu0 %v6703
        %v6899 = vpop.f32.mrf.mxu0
        %v6900 = vadd.f32 %v6767, %v6899
        %v6901 = vpop.f32.mrf.mxu0
        %v6902 = vadd.f32 %v6769, %v6901
        %6903 = vmatmul.bf16.gmra.mxu0 %v6706
        %v6904 = vpop.f32.mrf.mxu0
        %v6905 = vadd.f32 %v6772, %v6904
        %v6906 = vpop.f32.mrf.mxu0
        %v6907 = vadd.f32 %v6774, %v6906
        %6908 = vmatmul.bf16.gmra.mxu0 %v6709
        %v6909 = vpop.f32.mrf.mxu0
        %v6910 = vadd.f32 %v6777, %v6909
        %v6911 = vpop.f32.mrf.mxu0
        %v6912 = vadd.f32 %v6779, %v6911
        %6913 = vmatmul.bf16.gmra.mxu0 %v6712
        %v6914 = vpop.f32.mrf.mxu0
        %v6915 = vadd.f32 %v6782, %v6914
        %v6916 = vpop.f32.mrf.mxu0
        %v6917 = vadd.f32 %v6784, %v6916
        %6918 = vmatmul.bf16.gmra.mxu0 %v6715
        %v6919 = vpop.f32.mrf.mxu0
        %v6920 = vadd.f32 %v6787, %v6919
        %v6921 = vpop.f32.mrf.mxu0
        %v6922 = vadd.f32 %v6789, %v6921
        %6923 = vmatmul.bf16.gmra.mxu0 %v6718
        %v6924 = vpop.f32.mrf.mxu0
        %v6925 = vadd.f32 %v6792, %v6924
        %v6926 = vpop.f32.mrf.mxu0
        %v6927 = vadd.f32 %v6794, %v6926
        %6928 = vmatmul.bf16.gmra.mxu0 %v6721
        %v6929 = vpop.f32.mrf.mxu0
        %v6930 = vadd.f32 %v6797, %v6929
        %v6931 = vpop.f32.mrf.mxu0
        %v6932 = vadd.f32 %v6799, %v6931
        %6933 = vmatmul.bf16.gmra.mxu0 %v6724
        %v6934 = vpop.f32.mrf.mxu0
        %v6935 = vadd.f32 %v6802, %v6934
        %v6936 = vpop.f32.mrf.mxu0
        %v6937 = vadd.f32 %v6804, %v6936
        %6938 = vmatmul.bf16.gmra.mxu0 %v6727
        %v6939 = vpop.f32.mrf.mxu0
        %v6940 = vadd.f32 %v6807, %v6939
        %v6941 = vpop.f32.mrf.mxu0
        %v6942 = vadd.f32 %v6809, %v6941
        %6943 = vmatmul.bf16.gmra.mxu0 %v6730
        %v6944 = vpop.f32.mrf.mxu0
        %v6945 = vadd.f32 %v6812, %v6944
        %v6946 = vpop.f32.mrf.mxu0
        %v6947 = vadd.f32 %v6814, %v6946
        %6948 = vmatmul.bf16.gmra.mxu0 %v6733
        %v6949 = vpop.f32.mrf.mxu0
        %v6950 = vadd.f32 %v6817, %v6949
        %v6951 = vpop.f32.mrf.mxu0
        %v6952 = vadd.f32 %v6819, %v6951
        %6953 = vmatmul.bf16.gmra.mxu0 %v6736
        %v6954 = vpop.f32.mrf.mxu0
        %v6955 = vadd.f32 %v6822, %v6954
        %v6956 = vpop.f32.mrf.mxu0
        %v6957 = vadd.f32 %v6824, %v6956
        %6958 = vmatmul.bf16.gmra.mxu0 %v6739
        %v6959 = vpop.f32.mrf.mxu0
        %v6960 = vadd.f32 %v6827, %v6959
        %v6961 = vpop.f32.mrf.mxu0
        %v6962 = vadd.f32 %v6829, %v6961
        %6963 = vmatmul.bf16.gmra.mxu0 %v6742
        %v6964 = vpop.f32.mrf.mxu0
        %v6965 = vadd.f32 %v6832, %v6964
        %v6966 = vpop.f32.mrf.mxu0
        %v6967 = vadd.f32 %v6834, %v6966
        %6968 = vdwg.mxu0
        %v6969 = vld [vmem:[#allocation4 + $0x14] sm:$0xf]
        %v6970 = vld [vmem:[#allocation4 + $0x18] sm:$0xf]
        %v6971 = vld [vmem:[#allocation4 + $0x1c] sm:$0xf]
        %v6972 = vld [vmem:[#allocation4 + $0x20] sm:$0xf]
        %v6973 = vld [vmem:[#allocation4 + $0x24] sm:$0xf]
        %v6974 = vld [vmem:[#allocation4 + $0x28] sm:$0xf]
        %v6975 = vld [vmem:[#allocation4 + $0x2c] sm:$0xf]
        %v6976 = vld [vmem:[#allocation4 + $0x30] sm:$0xf]
        %v6977 = vld [vmem:[#allocation4 + $0x34] sm:$0xf]
        %v6978 = vld [vmem:[#allocation4 + $0x38] sm:$0xf]
        %v6979 = vld [vmem:[#allocation4 + $0x3c] sm:$0xf]
        %v6980 = vld [vmem:[#allocation4 + $0x40] sm:$0xf]
        %v6981 = vld [vmem:[#allocation4 + $0x44] sm:$0xf]
        %v6982 = vld [vmem:[#allocation4 + $0x48] sm:$0xf]
        %v6983 = vld [vmem:[#allocation4 + $0x4c] sm:$0xf]
        %v6984 = vld [vmem:[#allocation4 + $0x50] sm:$0xf]
        %v6985 = vld [vmem:[#allocation4 + $0x54] sm:$0xf]
        %v6986 = vld [vmem:[#allocation4 + $0x58] sm:$0xf]
        %v6987 = vld [vmem:[#allocation4 + $0x5c] sm:$0xf]
        %v6988 = vld [vmem:[#allocation4 + $0x60] sm:$0xf]
        %v6989 = vld [vmem:[#allocation4 + $0x64] sm:$0xf]
        %v6990 = vld [vmem:[#allocation4 + $0x68] sm:$0xf]
        %v6991 = vld [vmem:[#allocation4 + $0x6c] sm:$0xf]
        %v6992 = vld [vmem:[#allocation4 + $0x70] sm:$0xf]
        %v6993 = vld [vmem:[#allocation4 + $0x74] sm:$0xf]
        %v6994 = vld [vmem:[#allocation4 + $0x78] sm:$0xf]
        %v6995 = vld [vmem:[#allocation4 + $0x7c] sm:$0xf]
        %v6996 = vld [vmem:[#allocation4 + $0x80] sm:$0xf]
        %v6997 = vld [vmem:[#allocation4 + $0x84] sm:$0xf]
        %v6998 = vld [vmem:[#allocation4 + $0x88] sm:$0xf]
        %v6999 = vld [vmem:[#allocation4 + $0x8c] sm:$0xf]
        %v7000 = vld [vmem:[#allocation4 + $0x90] sm:$0xf]
        %s7001 = scalar_lea.vmem %s7, 96
        %v7002 = vld [vmem:[%s7001] sm:$0xf]
        %v7003 = vld [vmem:[%s7001 + $0x4] sm:$0xf]
        %v7004 = vld [vmem:[%s7001 + $0x8] sm:$0xf]
        %v7005 = vld [vmem:[%s7001 + $0xc] sm:$0xf]
        %v7006 = vld [vmem:[%s7001 + $0x10] sm:$0xf]
        %v7007 = vld [vmem:[%s7001 + $0x14] sm:$0xf]
        %v7008 = vld [vmem:[%s7001 + $0x18] sm:$0xf]
        %v7009 = vld [vmem:[%s7001 + $0x1c] sm:$0xf]
        %v7010 = vld [vmem:[%s7001 + $0x20] sm:$0xf]
        %v7011 = vld [vmem:[%s7001 + $0x24] sm:$0xf]
        %v7012 = vld [vmem:[%s7001 + $0x28] sm:$0xf]
        %v7013 = vld [vmem:[%s7001 + $0x2c] sm:$0xf]
        %v7046 = vunpack.c.l.b16 %v6969
        %v7047 = vunpack.c.l.b16 %v6970
        %v7048 = vunpack.c.l.b16 %v6971
        %v7049 = vunpack.c.l.b16 %v6972
        %v7050 = vunpack.c.l.b16 %v6973
        %v7051 = vunpack.c.l.b16 %v6974
        %v7052 = vunpack.c.l.b16 %v6975
        %v7053 = vunpack.c.l.b16 %v6976
        %v7054 = vunpack.c.l.b16 %v6977
        %v7055 = vunpack.c.l.b16 %v6978
        %v7056 = vunpack.c.l.b16 %v6979
        %v7057 = vunpack.c.l.b16 %v6980
        %v7058 = vunpack.c.l.b16 %v6981
        %v7059 = vunpack.c.l.b16 %v6982
        %v7060 = vunpack.c.l.b16 %v6983
        %v7061 = vunpack.c.l.b16 %v6984
        %v7062 = vunpack.c.l.b16 %v6985
        %v7063 = vunpack.c.l.b16 %v6986
        %v7064 = vunpack.c.l.b16 %v6987
        %v7065 = vunpack.c.l.b16 %v6988
        %v7066 = vunpack.c.l.b16 %v6989
        %v7067 = vunpack.c.l.b16 %v6990
        %v7068 = vunpack.c.l.b16 %v6991
        %v7069 = vunpack.c.l.b16 %v6992
        %v7070 = vunpack.c.l.b16 %v6993
        %v7071 = vunpack.c.l.b16 %v6994
        %v7072 = vunpack.c.l.b16 %v6995
        %v7073 = vunpack.c.l.b16 %v6996
        %v7074 = vunpack.c.l.b16 %v6997
        %v7075 = vunpack.c.l.b16 %v6998
        %v7076 = vunpack.c.l.b16 %v6999
        %v7077 = vunpack.c.l.b16 %v7000
        %v7078 = vpack.c.b16 %v7047, %v7046
        %v7079 = vpack.c.b16 %v7049, %v7048
        %v7080 = vpack.c.b16 %v7051, %v7050
        %v7081 = vpack.c.b16 %v7053, %v7052
        %v7082 = vpack.c.b16 %v7055, %v7054
        %v7083 = vpack.c.b16 %v7057, %v7056
        %v7084 = vpack.c.b16 %v7059, %v7058
        %v7085 = vpack.c.b16 %v7061, %v7060
        %v7086 = vpack.c.b16 %v7063, %v7062
        %v7087 = vpack.c.b16 %v7065, %v7064
        %v7088 = vpack.c.b16 %v7067, %v7066
        %v7089 = vpack.c.b16 %v7069, %v7068
        %v7090 = vpack.c.b16 %v7071, %v7070
        %v7091 = vpack.c.b16 %v7073, %v7072
        %v7092 = vpack.c.b16 %v7075, %v7074
        %v7093 = vpack.c.b16 %v7077, %v7076
        %v7106 = vunpack.c.l.b16 %v7002
        %v7107 = vunpack.c.l.b16 %v7003
        %v7108 = vunpack.c.l.b16 %v7004
        %v7109 = vunpack.c.l.b16 %v7005
        %v7110 = vunpack.c.l.b16 %v7006
        %v7111 = vunpack.c.l.b16 %v7007
        %v7112 = vunpack.c.l.b16 %v7008
        %v7113 = vunpack.c.l.b16 %v7009
        %v7114 = vunpack.c.l.b16 %v7010
        %v7115 = vunpack.c.l.b16 %v7011
        %v7116 = vunpack.c.l.b16 %v7012
        %v7117 = vunpack.c.l.b16 %v7013
        %v7118 = vpack.c.b16 %v7107, %v7106
        %v7119 = vpack.c.b16 %v7109, %v7108
        %v7120 = vpack.c.b16 %v7111, %v7110
        %v7121 = vpack.c.b16 %v7113, %v7112
        %v7122 = vpack.c.b16 %v7115, %v7114
        %v7123 = vpack.c.b16 %v7117, %v7116
        %v7131 = vsel %vm6698, %v7078, 0
        %v7134 = vsel %vm6698, %v7079, 0
        %v7137 = vsel %vm6698, %v7080, 0
        %v7140 = vsel %vm6698, %v7081, 0
        %v7143 = vsel %vm6698, %v7082, 0
        %v7146 = vsel %vm6698, %v7083, 0
        %v7149 = vsel %vm6698, %v7084, 0
        %v7152 = vsel %vm6698, %v7085, 0
        %v7155 = vsel %vm6698, %v7086, 0
        %v7158 = vsel %vm6698, %v7087, 0
        %v7161 = vsel %vm6698, %v7088, 0
        %v7164 = vsel %vm6698, %v7089, 0
        %v7167 = vsel %vm6698, %v7090, 0
        %v7170 = vsel %vm6698, %v7091, 0
        %v7173 = vsel %vm6698, %v7092, 0
        %v7176 = vsel %vm6698, %v7093, 0
        %7178 = vmatpush.bf16.msra.mxu0 0
        %7179 = vmatpush.bf16.msra.mxu0 0
        %7180 = vmatpush.bf16.msra.mxu0 %v7123
        %7181 = vmatpush.bf16.msra.mxu0 %v7122
        %7182 = vmatpush.bf16.msra.mxu0 %v7121
        %7183 = vmatpush.bf16.msra.mxu0 %v7120
        %7184 = vmatpush.bf16.msra.mxu0 %v7119
        %7185 = vmatpush.bf16.msra.mxu0 %v7118
        %7186 = vmatmul.bf16.gmra.mxu0 %v7131
        %v7187 = vpop.f32.mrf.mxu0
        %v7188 = vadd.f32 0.0, %v7187
        %v7189 = vpop.f32.mrf.mxu0
        %v7190 = vadd.f32 0.0, %v7189
        %7191 = vmatmul.bf16.gmra.mxu0 %v7134
        %v7192 = vpop.f32.mrf.mxu0
        %v7193 = vadd.f32 0.0, %v7192
        %v7194 = vpop.f32.mrf.mxu0
        %v7195 = vadd.f32 0.0, %v7194
        %7196 = vmatmul.bf16.gmra.mxu0 %v7137
        %v7197 = vpop.f32.mrf.mxu0
        %v7198 = vadd.f32 0.0, %v7197
        %v7199 = vpop.f32.mrf.mxu0
        %v7200 = vadd.f32 0.0, %v7199
        %7201 = vmatmul.bf16.gmra.mxu0 %v7140
        %v7202 = vpop.f32.mrf.mxu0
        %v7203 = vadd.f32 0.0, %v7202
        %v7204 = vpop.f32.mrf.mxu0
        %v7205 = vadd.f32 0.0, %v7204
        %7206 = vmatmul.bf16.gmra.mxu0 %v7143
        %v7207 = vpop.f32.mrf.mxu0
        %v7208 = vadd.f32 0.0, %v7207
        %v7209 = vpop.f32.mrf.mxu0
        %v7210 = vadd.f32 0.0, %v7209
        %7211 = vmatmul.bf16.gmra.mxu0 %v7146
        %v7212 = vpop.f32.mrf.mxu0
        %v7213 = vadd.f32 0.0, %v7212
        %v7214 = vpop.f32.mrf.mxu0
        %v7215 = vadd.f32 0.0, %v7214
        %7216 = vmatmul.bf16.gmra.mxu0 %v7149
        %v7217 = vpop.f32.mrf.mxu0
        %v7218 = vadd.f32 0.0, %v7217
        %v7219 = vpop.f32.mrf.mxu0
        %v7220 = vadd.f32 0.0, %v7219
        %7221 = vmatmul.bf16.gmra.mxu0 %v7152
        %v7222 = vpop.f32.mrf.mxu0
        %v7223 = vadd.f32 0.0, %v7222
        %v7224 = vpop.f32.mrf.mxu0
        %v7225 = vadd.f32 0.0, %v7224
        %7226 = vmatmul.bf16.gmra.mxu0 %v7155
        %v7227 = vpop.f32.mrf.mxu0
        %v7228 = vadd.f32 0.0, %v7227
        %v7229 = vpop.f32.mrf.mxu0
        %v7230 = vadd.f32 0.0, %v7229
        %7231 = vmatmul.bf16.gmra.mxu0 %v7158
        %v7232 = vpop.f32.mrf.mxu0
        %v7233 = vadd.f32 0.0, %v7232
        %v7234 = vpop.f32.mrf.mxu0
        %v7235 = vadd.f32 0.0, %v7234
        %7236 = vmatmul.bf16.gmra.mxu0 %v7161
        %v7237 = vpop.f32.mrf.mxu0
        %v7238 = vadd.f32 0.0, %v7237
        %v7239 = vpop.f32.mrf.mxu0
        %v7240 = vadd.f32 0.0, %v7239
        %7241 = vmatmul.bf16.gmra.mxu0 %v7164
        %v7242 = vpop.f32.mrf.mxu0
        %v7243 = vadd.f32 0.0, %v7242
        %v7244 = vpop.f32.mrf.mxu0
        %v7245 = vadd.f32 0.0, %v7244
        %7246 = vmatmul.bf16.gmra.mxu0 %v7167
        %v7247 = vpop.f32.mrf.mxu0
        %v7248 = vadd.f32 0.0, %v7247
        %v7249 = vpop.f32.mrf.mxu0
        %v7250 = vadd.f32 0.0, %v7249
        %7251 = vmatmul.bf16.gmra.mxu0 %v7170
        %v7252 = vpop.f32.mrf.mxu0
        %v7253 = vadd.f32 0.0, %v7252
        %v7254 = vpop.f32.mrf.mxu0
        %v7255 = vadd.f32 0.0, %v7254
        %7256 = vmatmul.bf16.gmra.mxu0 %v7173
        %v7257 = vpop.f32.mrf.mxu0
        %v7258 = vadd.f32 0.0, %v7257
        %v7259 = vpop.f32.mrf.mxu0
        %v7260 = vadd.f32 0.0, %v7259
        %7261 = vmatmul.bf16.gmra.mxu0 %v7176
        %v7262 = vpop.f32.mrf.mxu0
        %v7263 = vadd.f32 0.0, %v7262
        %v7264 = vpop.f32.mrf.mxu0
        %v7265 = vadd.f32 0.0, %v7264
        %7266 = vdwg.mxu0
        %v7267 = vadd.f32 %v6890, %v7188
        %v7268 = vadd.f32 %v6892, %v7190
        %v7269 = vadd.f32 %v6895, %v7193
        %v7270 = vadd.f32 %v6897, %v7195
        %v7271 = vadd.f32 %v6900, %v7198
        %v7272 = vadd.f32 %v6902, %v7200
        %v7273 = vadd.f32 %v6905, %v7203
        %v7274 = vadd.f32 %v6907, %v7205
        %v7275 = vadd.f32 %v6910, %v7208
        %v7276 = vadd.f32 %v6912, %v7210
        %v7277 = vadd.f32 %v6915, %v7213
        %v7278 = vadd.f32 %v6917, %v7215
        %v7279 = vadd.f32 %v6920, %v7218
        %v7280 = vadd.f32 %v6922, %v7220
        %v7281 = vadd.f32 %v6925, %v7223
        %v7282 = vadd.f32 %v6927, %v7225
        %v7283 = vadd.f32 %v6930, %v7228
        %v7284 = vadd.f32 %v6932, %v7230
        %v7285 = vadd.f32 %v6935, %v7233
        %v7286 = vadd.f32 %v6937, %v7235
        %v7287 = vadd.f32 %v6940, %v7238
        %v7288 = vadd.f32 %v6942, %v7240
        %v7289 = vadd.f32 %v6945, %v7243
        %v7290 = vadd.f32 %v6947, %v7245
        %v7291 = vadd.f32 %v6950, %v7248
        %v7292 = vadd.f32 %v6952, %v7250
        %v7293 = vadd.f32 %v6955, %v7253
        %v7294 = vadd.f32 %v6957, %v7255
        %v7295 = vadd.f32 %v6960, %v7258
        %v7296 = vadd.f32 %v6962, %v7260
        %v7297 = vadd.f32 %v6965, %v7263
        %v7298 = vadd.f32 %v6967, %v7265
        %v7299 = vsel %vm5388, %v7267, 0.0
        %v7300 = vsel %vm5388, %v7268, 0.0
        %v7301 = vadd.f32 %v7299, %v7300
        %v7302 = vsel %vm5388, %v7269, 0.0
        %v7303 = vadd.f32 %v7301, %v7302
        %v7304 = vsel %vm5388, %v7270, 0.0
        %v7305 = vadd.f32 %v7303, %v7304
        %v7306 = vsel %vm5388, %v7271, 0.0
        %v7307 = vadd.f32 %v7305, %v7306
        %v7308 = vsel %vm5388, %v7272, 0.0
        %v7309 = vadd.f32 %v7307, %v7308
        %v7310 = vsel %vm5388, %v7273, 0.0
        %v7311 = vadd.f32 %v7309, %v7310
        %v7312 = vsel %vm5388, %v7274, 0.0
        %v7313 = vadd.f32 %v7311, %v7312
        %v7314 = vsel %vm5388, %v7275, 0.0
        %v7315 = vadd.f32 %v7313, %v7314
        %v7316 = vsel %vm5388, %v7276, 0.0
        %v7317 = vadd.f32 %v7315, %v7316
        %v7318 = vsel %vm5388, %v7277, 0.0
        %v7319 = vadd.f32 %v7317, %v7318
        %v7320 = vsel %vm5388, %v7278, 0.0
        %v7321 = vadd.f32 %v7319, %v7320
        %v7322 = vsel %vm5388, %v7279, 0.0
        %v7323 = vadd.f32 %v7321, %v7322
        %v7324 = vsel %vm5388, %v7280, 0.0
        %v7325 = vadd.f32 %v7323, %v7324
        %v7326 = vsel %vm5388, %v7281, 0.0
        %v7327 = vadd.f32 %v7325, %v7326
        %v7328 = vsel %vm5388, %v7282, 0.0
        %v7329 = vadd.f32 %v7327, %v7328
        %v7330 = vsel %vm5388, %v7283, 0.0
        %v7331 = vadd.f32 %v7329, %v7330
        %v7332 = vsel %vm5388, %v7284, 0.0
        %v7333 = vadd.f32 %v7331, %v7332
        %v7334 = vsel %vm5388, %v7285, 0.0
        %v7335 = vadd.f32 %v7333, %v7334
        %v7336 = vsel %vm5388, %v7286, 0.0
        %v7337 = vadd.f32 %v7335, %v7336
        %v7338 = vsel %vm5388, %v7287, 0.0
        %v7339 = vadd.f32 %v7337, %v7338
        %v7340 = vsel %vm5388, %v7288, 0.0
        %v7341 = vadd.f32 %v7339, %v7340
        %v7342 = vsel %vm5388, %v7289, 0.0
        %v7343 = vadd.f32 %v7341, %v7342
        %v7344 = vsel %vm5388, %v7290, 0.0
        %v7345 = vadd.f32 %v7343, %v7344
        %v7346 = vsel %vm5388, %v7291, 0.0
        %v7347 = vadd.f32 %v7345, %v7346
        %v7348 = vsel %vm5388, %v7292, 0.0
        %v7349 = vadd.f32 %v7347, %v7348
        %v7350 = vsel %vm5388, %v7293, 0.0
        %v7351 = vadd.f32 %v7349, %v7350
        %v7352 = vsel %vm5388, %v7294, 0.0
        %v7353 = vadd.f32 %v7351, %v7352
        %v7354 = vsel %vm5388, %v7295, 0.0
        %v7355 = vadd.f32 %v7353, %v7354
        %v7356 = vsel %vm5388, %v7296, 0.0
        %v7357 = vadd.f32 %v7355, %v7356
        %v7358 = vsel %vm5388, %v7297, 0.0
        %v7359 = vadd.f32 %v7357, %v7358
        %v7360 = vsel %vm5388, %v7298, 0.0
        %v7361 = vadd.f32 %v7359, %v7360
        %v7362 = vrot.slane %v7361, 4
        %v7363 = vadd.f32 %v7361, %v7362
        %v7364 = vrot.slane %v7363, 2
        %v7365 = vadd.f32 %v7363, %v7364
        %v7366 = vrot.slane %v7365, 1
        %v7367 = vadd.f32 %v7365, %v7366
        %v7368 = vmul.f32 %v7267, %v7267
        %v7369 = vmul.f32 %v7268, %v7268
        %v7370 = vmul.f32 %v7269, %v7269
        %v7371 = vmul.f32 %v7270, %v7270
        %v7372 = vmul.f32 %v7271, %v7271
        %v7373 = vmul.f32 %v7272, %v7272
        %v7374 = vmul.f32 %v7273, %v7273
        %v7375 = vmul.f32 %v7274, %v7274
        %v7376 = vmul.f32 %v7275, %v7275
        %v7377 = vmul.f32 %v7276, %v7276
        %v7378 = vmul.f32 %v7277, %v7277
        %v7379 = vmul.f32 %v7278, %v7278
        %v7380 = vmul.f32 %v7279, %v7279
        %v7381 = vmul.f32 %v7280, %v7280
        %v7382 = vmul.f32 %v7281, %v7281
        %v7383 = vmul.f32 %v7282, %v7282
        %v7384 = vmul.f32 %v7283, %v7283
        %v7385 = vmul.f32 %v7284, %v7284
        %v7386 = vmul.f32 %v7285, %v7285
        %v7387 = vmul.f32 %v7286, %v7286
        %v7388 = vmul.f32 %v7287, %v7287
        %v7389 = vmul.f32 %v7288, %v7288
        %v7390 = vmul.f32 %v7289, %v7289
        %v7391 = vmul.f32 %v7290, %v7290
        %v7392 = vmul.f32 %v7291, %v7291
        %v7393 = vmul.f32 %v7292, %v7292
        %v7394 = vmul.f32 %v7293, %v7293
        %v7395 = vmul.f32 %v7294, %v7294
        %v7396 = vmul.f32 %v7295, %v7295
        %v7397 = vmul.f32 %v7296, %v7296
        %v7398 = vmul.f32 %v7297, %v7297
        %v7399 = vmul.f32 %v7298, %v7298
        %v7400 = vsel %vm5388, %v7368, 0.0
        %v7401 = vsel %vm5388, %v7369, 0.0
        %v7402 = vadd.f32 %v7400, %v7401
        %v7403 = vsel %vm5388, %v7370, 0.0
        %v7404 = vadd.f32 %v7402, %v7403
        %v7405 = vsel %vm5388, %v7371, 0.0
        %v7406 = vadd.f32 %v7404, %v7405
        %v7407 = vsel %vm5388, %v7372, 0.0
        %v7408 = vadd.f32 %v7406, %v7407
        %v7409 = vsel %vm5388, %v7373, 0.0
        %v7410 = vadd.f32 %v7408, %v7409
        %v7411 = vsel %vm5388, %v7374, 0.0
        %v7412 = vadd.f32 %v7410, %v7411
        %v7413 = vsel %vm5388, %v7375, 0.0
        %v7414 = vadd.f32 %v7412, %v7413
        %v7415 = vsel %vm5388, %v7376, 0.0
        %v7416 = vadd.f32 %v7414, %v7415
        %v7417 = vsel %vm5388, %v7377, 0.0
        %v7418 = vadd.f32 %v7416, %v7417
        %v7419 = vsel %vm5388, %v7378, 0.0
        %v7420 = vadd.f32 %v7418, %v7419
        %v7421 = vsel %vm5388, %v7379, 0.0
        %v7422 = vadd.f32 %v7420, %v7421
        %v7423 = vsel %vm5388, %v7380, 0.0
        %v7424 = vadd.f32 %v7422, %v7423
        %v7425 = vsel %vm5388, %v7381, 0.0
        %v7426 = vadd.f32 %v7424, %v7425
        %v7427 = vsel %vm5388, %v7382, 0.0
        %v7428 = vadd.f32 %v7426, %v7427
        %v7429 = vsel %vm5388, %v7383, 0.0
        %v7430 = vadd.f32 %v7428, %v7429
        %v7431 = vsel %vm5388, %v7384, 0.0
        %v7432 = vadd.f32 %v7430, %v7431
        %v7433 = vsel %vm5388, %v7385, 0.0
        %v7434 = vadd.f32 %v7432, %v7433
        %v7435 = vsel %vm5388, %v7386, 0.0
        %v7436 = vadd.f32 %v7434, %v7435
        %v7437 = vsel %vm5388, %v7387, 0.0
        %v7438 = vadd.f32 %v7436, %v7437
        %v7439 = vsel %vm5388, %v7388, 0.0
        %v7440 = vadd.f32 %v7438, %v7439
        %v7441 = vsel %vm5388, %v7389, 0.0
        %v7442 = vadd.f32 %v7440, %v7441
        %v7443 = vsel %vm5388, %v7390, 0.0
        %v7444 = vadd.f32 %v7442, %v7443
        %v7445 = vsel %vm5388, %v7391, 0.0
        %v7446 = vadd.f32 %v7444, %v7445
        %v7447 = vsel %vm5388, %v7392, 0.0
        %v7448 = vadd.f32 %v7446, %v7447
        %v7449 = vsel %vm5388, %v7393, 0.0
        %v7450 = vadd.f32 %v7448, %v7449
        %v7451 = vsel %vm5388, %v7394, 0.0
        %v7452 = vadd.f32 %v7450, %v7451
        %v7453 = vsel %vm5388, %v7395, 0.0
        %v7454 = vadd.f32 %v7452, %v7453
        %v7455 = vsel %vm5388, %v7396, 0.0
        %v7456 = vadd.f32 %v7454, %v7455
        %v7457 = vsel %vm5388, %v7397, 0.0
        %v7458 = vadd.f32 %v7456, %v7457
        %v7459 = vsel %vm5388, %v7398, 0.0
        %v7460 = vadd.f32 %v7458, %v7459
        %v7461 = vsel %vm5388, %v7399, 0.0
        %v7462 = vadd.f32 %v7460, %v7461
        %v7463 = vrot.slane %v7462, 4
        %v7464 = vadd.f32 %v7462, %v7463
        %v7465 = vrot.slane %v7464, 2
        %v7466 = vadd.f32 %v7464, %v7465
        %v7467 = vrot.slane %v7466, 1
        %v7468 = vadd.f32 %v7466, %v7467
        %v7469 = vmul.f32 %v7367, %v5565
        %v7470 = vmul.f32 %v7468, %v5565
        %v7471 = vmul.f32 %v7469, %v7469
        %v7472 = vsub.f32 %v7470, %v7471
        %v7473 = vmax.f32 %v7472, 0.0
        %v7474 = vadd.f32 %v7473, 1e-05
        %v7475 = vrsqrt.pop %v7474
        %v7476 = vmul.f32 %v7475, %v7474
        %v7477 = vmul.f32 %v7476, %v7475
        %v7478 = vmul.f32 0.5, %v7477
        %v7479 = vsub.f32 1.5, %v7478
        %v7480 = vmul.f32 %v7475, %v7479
        %vm7481 = vweird.f32 %v7474
        %vm7482 = vweird.f32 %v7475
        %vm7483 = vmor %vm7481, %vm7482
        %v7484 = vsel %vm7483, %v7475, %v7480
        %v7485 = vsub.f32 %v7267, %v7469
        %v7486 = vsub.f32 %v7268, %v7469
        %v7487 = vsub.f32 %v7269, %v7469
        %v7488 = vsub.f32 %v7270, %v7469
        %v7489 = vsub.f32 %v7271, %v7469
        %v7490 = vsub.f32 %v7272, %v7469
        %v7491 = vsub.f32 %v7273, %v7469
        %v7492 = vsub.f32 %v7274, %v7469
        %v7493 = vsub.f32 %v7275, %v7469
        %v7494 = vsub.f32 %v7276, %v7469
        %v7495 = vsub.f32 %v7277, %v7469
        %v7496 = vsub.f32 %v7278, %v7469
        %v7497 = vsub.f32 %v7279, %v7469
        %v7498 = vsub.f32 %v7280, %v7469
        %v7499 = vsub.f32 %v7281, %v7469
        %v7500 = vsub.f32 %v7282, %v7469
        %v7501 = vsub.f32 %v7283, %v7469
        %v7502 = vsub.f32 %v7284, %v7469
        %v7503 = vsub.f32 %v7285, %v7469
        %v7504 = vsub.f32 %v7286, %v7469
        %v7505 = vsub.f32 %v7287, %v7469
        %v7506 = vsub.f32 %v7288, %v7469
        %v7507 = vsub.f32 %v7289, %v7469
        %v7508 = vsub.f32 %v7290, %v7469
        %v7509 = vsub.f32 %v7291, %v7469
        %v7510 = vsub.f32 %v7292, %v7469
        %v7511 = vsub.f32 %v7293, %v7469
        %v7512 = vsub.f32 %v7294, %v7469
        %v7513 = vsub.f32 %v7295, %v7469
        %v7514 = vsub.f32 %v7296, %v7469
        %v7515 = vsub.f32 %v7297, %v7469
        %v7516 = vsub.f32 %v7298, %v7469
        %v7517 = vmul.f32 %v7485, %v7484
        %v7518 = vmul.f32 %v7486, %v7484
        %v7519 = vmul.f32 %v7487, %v7484
        %v7520 = vmul.f32 %v7488, %v7484
        %v7521 = vmul.f32 %v7489, %v7484
        %v7522 = vmul.f32 %v7490, %v7484
        %v7523 = vmul.f32 %v7491, %v7484
        %v7524 = vmul.f32 %v7492, %v7484
        %v7525 = vmul.f32 %v7493, %v7484
        %v7526 = vmul.f32 %v7494, %v7484
        %v7527 = vmul.f32 %v7495, %v7484
        %v7528 = vmul.f32 %v7496, %v7484
        %v7529 = vmul.f32 %v7497, %v7484
        %v7530 = vmul.f32 %v7498, %v7484
        %v7531 = vmul.f32 %v7499, %v7484
        %v7532 = vmul.f32 %v7500, %v7484
        %v7533 = vmul.f32 %v7501, %v7484
        %v7534 = vmul.f32 %v7502, %v7484
        %v7535 = vmul.f32 %v7503, %v7484
        %v7536 = vmul.f32 %v7504, %v7484
        %v7537 = vmul.f32 %v7505, %v7484
        %v7538 = vmul.f32 %v7506, %v7484
        %v7539 = vmul.f32 %v7507, %v7484
        %v7540 = vmul.f32 %v7508, %v7484
        %v7541 = vmul.f32 %v7509, %v7484
        %v7542 = vmul.f32 %v7510, %v7484
        %v7543 = vmul.f32 %v7511, %v7484
        %v7544 = vmul.f32 %v7512, %v7484
        %v7545 = vmul.f32 %v7513, %v7484
        %v7546 = vmul.f32 %v7514, %v7484
        %v7547 = vmul.f32 %v7515, %v7484
        %v7548 = vmul.f32 %v7516, %v7484
        %v7549 = vld [vmem:[%s8] sm:$0x1]
        %v7551 = vperm.slane %v7549, 0
        %v7553 = vmul.f32 %v7517, %v7551
        %v7554 = vmul.f32 %v7518, %v7551
        %v7555 = vmul.f32 %v7519, %v7551
        %v7556 = vmul.f32 %v7520, %v7551
        %v7557 = vmul.f32 %v7521, %v7551
        %v7558 = vmul.f32 %v7522, %v7551
        %v7559 = vmul.f32 %v7523, %v7551
        %v7560 = vmul.f32 %v7524, %v7551
        %v7561 = vmul.f32 %v7525, %v7551
        %v7562 = vmul.f32 %v7526, %v7551
        %v7563 = vmul.f32 %v7527, %v7551
        %v7564 = vmul.f32 %v7528, %v7551
        %v7565 = vmul.f32 %v7529, %v7551
        %v7566 = vmul.f32 %v7530, %v7551
        %v7567 = vmul.f32 %v7531, %v7551
        %v7568 = vmul.f32 %v7532, %v7551
        %v7569 = vmul.f32 %v7533, %v7551
        %v7570 = vmul.f32 %v7534, %v7551
        %v7571 = vmul.f32 %v7535, %v7551
        %v7572 = vmul.f32 %v7536, %v7551
        %v7573 = vmul.f32 %v7537, %v7551
        %v7574 = vmul.f32 %v7538, %v7551
        %v7575 = vmul.f32 %v7539, %v7551
        %v7576 = vmul.f32 %v7540, %v7551
        %v7577 = vmul.f32 %v7541, %v7551
        %v7578 = vmul.f32 %v7542, %v7551
        %v7579 = vmul.f32 %v7543, %v7551
        %v7580 = vmul.f32 %v7544, %v7551
        %v7581 = vmul.f32 %v7545, %v7551
        %v7582 = vmul.f32 %v7546, %v7551
        %v7583 = vmul.f32 %v7547, %v7551
        %v7584 = vmul.f32 %v7548, %v7551
        %v7585 = vld [vmem:[%s9] sm:$0x1]
        %v7587 = vperm.slane %v7585, 0
        %v7589 = vadd.f32 %v7553, %v7587
        %v7590 = vadd.f32 %v7554, %v7587
        %v7591 = vadd.f32 %v7555, %v7587
        %v7592 = vadd.f32 %v7556, %v7587
        %v7593 = vadd.f32 %v7557, %v7587
        %v7594 = vadd.f32 %v7558, %v7587
        %v7595 = vadd.f32 %v7559, %v7587
        %v7596 = vadd.f32 %v7560, %v7587
        %v7597 = vadd.f32 %v7561, %v7587
        %v7598 = vadd.f32 %v7562, %v7587
        %v7599 = vadd.f32 %v7563, %v7587
        %v7600 = vadd.f32 %v7564, %v7587
        %v7601 = vadd.f32 %v7565, %v7587
        %v7602 = vadd.f32 %v7566, %v7587
        %v7603 = vadd.f32 %v7567, %v7587
        %v7604 = vadd.f32 %v7568, %v7587
        %v7605 = vadd.f32 %v7569, %v7587
        %v7606 = vadd.f32 %v7570, %v7587
        %v7607 = vadd.f32 %v7571, %v7587
        %v7608 = vadd.f32 %v7572, %v7587
        %v7609 = vadd.f32 %v7573, %v7587
        %v7610 = vadd.f32 %v7574, %v7587
        %v7611 = vadd.f32 %v7575, %v7587
        %v7612 = vadd.f32 %v7576, %v7587
        %v7613 = vadd.f32 %v7577, %v7587
        %v7614 = vadd.f32 %v7578, %v7587
        %v7615 = vadd.f32 %v7579, %v7587
        %v7616 = vadd.f32 %v7580, %v7587
        %v7617 = vadd.f32 %v7581, %v7587
        %v7618 = vadd.f32 %v7582, %v7587
        %v7619 = vadd.f32 %v7583, %v7587
        %v7620 = vadd.f32 %v7584, %v7587
        %v7621 = vmax.f32 %v7589, 0.0
        %v7622 = vmax.f32 %v7590, 0.0
        %v7623 = vmax.f32 %v7591, 0.0
        %v7624 = vmax.f32 %v7592, 0.0
        %v7625 = vmax.f32 %v7593, 0.0
        %v7626 = vmax.f32 %v7594, 0.0
        %v7627 = vmax.f32 %v7595, 0.0
        %v7628 = vmax.f32 %v7596, 0.0
        %v7629 = vmax.f32 %v7597, 0.0
        %v7630 = vmax.f32 %v7598, 0.0
        %v7631 = vmax.f32 %v7599, 0.0
        %v7632 = vmax.f32 %v7600, 0.0
        %v7633 = vmax.f32 %v7601, 0.0
        %v7634 = vmax.f32 %v7602, 0.0
        %v7635 = vmax.f32 %v7603, 0.0
        %v7636 = vmax.f32 %v7604, 0.0
        %v7637 = vmax.f32 %v7605, 0.0
        %v7638 = vmax.f32 %v7606, 0.0
        %v7639 = vmax.f32 %v7607, 0.0
        %v7640 = vmax.f32 %v7608, 0.0
        %v7641 = vmax.f32 %v7609, 0.0
        %v7642 = vmax.f32 %v7610, 0.0
        %v7643 = vmax.f32 %v7611, 0.0
        %v7644 = vmax.f32 %v7612, 0.0
        %v7645 = vmax.f32 %v7613, 0.0
        %v7646 = vmax.f32 %v7614, 0.0
        %v7647 = vmax.f32 %v7615, 0.0
        %v7648 = vmax.f32 %v7616, 0.0
        %v7649 = vmax.f32 %v7617, 0.0
        %v7650 = vmax.f32 %v7618, 0.0
        %v7651 = vmax.f32 %v7619, 0.0
        %v7652 = vmax.f32 %v7620, 0.0
        %v7653 = vpack.c.bf16 %v7622, %v7621
        %v7654 = vpack.c.bf16 %v7624, %v7623
        %v7655 = vpack.c.bf16 %v7626, %v7625
        %v7656 = vpack.c.bf16 %v7628, %v7627
        %v7657 = vpack.c.bf16 %v7630, %v7629
        %v7658 = vpack.c.bf16 %v7632, %v7631
        %v7659 = vpack.c.bf16 %v7634, %v7633
        %v7660 = vpack.c.bf16 %v7636, %v7635
        %v7661 = vpack.c.bf16 %v7638, %v7637
        %v7662 = vpack.c.bf16 %v7640, %v7639
        %v7663 = vpack.c.bf16 %v7642, %v7641
        %v7664 = vpack.c.bf16 %v7644, %v7643
        %v7665 = vpack.c.bf16 %v7646, %v7645
        %v7666 = vpack.c.bf16 %v7648, %v7647
        %v7667 = vpack.c.bf16 %v7650, %v7649
        %v7668 = vpack.c.bf16 %v7652, %v7651
        %v7669 = vld [vmem:[%s10] sm:$0xf]
        %v7670 = vld [vmem:[%s10 + $0x4] sm:$0xf]
        %v7671 = vld [vmem:[%s10 + $0x8] sm:$0xf]
        %v7672 = vld [vmem:[%s10 + $0xc] sm:$0xf]
        %v7677 = vunpack.c.l.b16 %v7669
        %v7678 = vunpack.c.l.b16 %v7670
        %v7679 = vunpack.c.l.b16 %v7671
        %v7680 = vunpack.c.l.b16 %v7672
        %v7681 = vpack.c.b16 %v7678, %v7677
        %v7682 = vpack.c.b16 %v7680, %v7679
        %v7686 = vsel %vm5388, %v7653, 0
        %v7689 = vsel %vm5388, %v7654, 0
        %v7692 = vsel %vm5388, %v7655, 0
        %v7695 = vsel %vm5388, %v7656, 0
        %v7698 = vsel %vm5388, %v7657, 0
        %v7701 = vsel %vm5388, %v7658, 0
        %v7704 = vsel %vm5388, %v7659, 0
        %v7707 = vsel %vm5388, %v7660, 0
        %v7710 = vsel %vm5388, %v7661, 0
        %v7713 = vsel %vm5388, %v7662, 0
        %v7716 = vsel %vm5388, %v7663, 0
        %v7719 = vsel %vm5388, %v7664, 0
        %v7722 = vsel %vm5388, %v7665, 0
        %v7725 = vsel %vm5388, %v7666, 0
        %v7728 = vsel %vm5388, %v7667, 0
        %v7731 = vsel %vm5388, %v7668, 0
        %7733 = vmatpush.bf16.msra.mxu0 0
        %7734 = vmatpush.bf16.msra.mxu0 0
        %7735 = vmatpush.bf16.msra.mxu0 0
        %7736 = vmatpush.bf16.msra.mxu0 0
        %7737 = vmatpush.bf16.msra.mxu0 0
        %7738 = vmatpush.bf16.msra.mxu0 0
        %7739 = vmatpush.bf16.msra.mxu0 %v7682
        %7740 = vmatpush.bf16.msra.mxu0 %v7681
        %7741 = vmatmul.bf16.gmra.mxu0 %v7686
        %v7742 = vpop.f32.mrf.mxu0
        %v7743 = vadd.f32 0.0, %v7742
        %v7744 = vpop.f32.mrf.mxu0
        %v7745 = vadd.f32 0.0, %v7744
        %7746 = vmatmul.bf16.gmra.mxu0 %v7689
        %v7747 = vpop.f32.mrf.mxu0
        %v7748 = vadd.f32 0.0, %v7747
        %v7749 = vpop.f32.mrf.mxu0
        %v7750 = vadd.f32 0.0, %v7749
        %7751 = vmatmul.bf16.gmra.mxu0 %v7692
        %v7752 = vpop.f32.mrf.mxu0
        %v7753 = vadd.f32 0.0, %v7752
        %v7754 = vpop.f32.mrf.mxu0
        %v7755 = vadd.f32 0.0, %v7754
        %7756 = vmatmul.bf16.gmra.mxu0 %v7695
        %v7757 = vpop.f32.mrf.mxu0
        %v7758 = vadd.f32 0.0, %v7757
        %v7759 = vpop.f32.mrf.mxu0
        %v7760 = vadd.f32 0.0, %v7759
        %7761 = vmatmul.bf16.gmra.mxu0 %v7698
        %v7762 = vpop.f32.mrf.mxu0
        %v7763 = vadd.f32 0.0, %v7762
        %v7764 = vpop.f32.mrf.mxu0
        %v7765 = vadd.f32 0.0, %v7764
        %7766 = vmatmul.bf16.gmra.mxu0 %v7701
        %v7767 = vpop.f32.mrf.mxu0
        %v7768 = vadd.f32 0.0, %v7767
        %v7769 = vpop.f32.mrf.mxu0
        %v7770 = vadd.f32 0.0, %v7769
        %7771 = vmatmul.bf16.gmra.mxu0 %v7704
        %v7772 = vpop.f32.mrf.mxu0
        %v7773 = vadd.f32 0.0, %v7772
        %v7774 = vpop.f32.mrf.mxu0
        %v7775 = vadd.f32 0.0, %v7774
        %7776 = vmatmul.bf16.gmra.mxu0 %v7707
        %v7777 = vpop.f32.mrf.mxu0
        %v7778 = vadd.f32 0.0, %v7777
        %v7779 = vpop.f32.mrf.mxu0
        %v7780 = vadd.f32 0.0, %v7779
        %7781 = vmatmul.bf16.gmra.mxu0 %v7710
        %v7782 = vpop.f32.mrf.mxu0
        %v7783 = vadd.f32 0.0, %v7782
        %v7784 = vpop.f32.mrf.mxu0
        %v7785 = vadd.f32 0.0, %v7784
        %7786 = vmatmul.bf16.gmra.mxu0 %v7713
        %v7787 = vpop.f32.mrf.mxu0
        %v7788 = vadd.f32 0.0, %v7787
        %v7789 = vpop.f32.mrf.mxu0
        %v7790 = vadd.f32 0.0, %v7789
        %7791 = vmatmul.bf16.gmra.mxu0 %v7716
        %v7792 = vpop.f32.mrf.mxu0
        %v7793 = vadd.f32 0.0, %v7792
        %v7794 = vpop.f32.mrf.mxu0
        %v7795 = vadd.f32 0.0, %v7794
        %7796 = vmatmul.bf16.gmra.mxu0 %v7719
        %v7797 = vpop.f32.mrf.mxu0
        %v7798 = vadd.f32 0.0, %v7797
        %v7799 = vpop.f32.mrf.mxu0
        %v7800 = vadd.f32 0.0, %v7799
        %7801 = vmatmul.bf16.gmra.mxu0 %v7722
        %v7802 = vpop.f32.mrf.mxu0
        %v7803 = vadd.f32 0.0, %v7802
        %v7804 = vpop.f32.mrf.mxu0
        %v7805 = vadd.f32 0.0, %v7804
        %7806 = vmatmul.bf16.gmra.mxu0 %v7725
        %v7807 = vpop.f32.mrf.mxu0
        %v7808 = vadd.f32 0.0, %v7807
        %v7809 = vpop.f32.mrf.mxu0
        %v7810 = vadd.f32 0.0, %v7809
        %7811 = vmatmul.bf16.gmra.mxu0 %v7728
        %v7812 = vpop.f32.mrf.mxu0
        %v7813 = vadd.f32 0.0, %v7812
        %v7814 = vpop.f32.mrf.mxu0
        %v7815 = vadd.f32 0.0, %v7814
        %7816 = vmatmul.bf16.gmra.mxu0 %v7731
        %v7817 = vpop.f32.mrf.mxu0
        %v7818 = vadd.f32 0.0, %v7817
        %v7819 = vpop.f32.mrf.mxu0
        %v7820 = vadd.f32 0.0, %v7819
        %7821 = vdwg.mxu0
        %v7822 = vpack.c.bf16 %v7743, %v7743
        %v7823 = vpack.c.bf16 %v7745, %v7745
        %v7824 = vpack.c.bf16 %v7748, %v7748
        %v7825 = vpack.c.bf16 %v7750, %v7750
        %v7826 = vpack.c.bf16 %v7753, %v7753
        %v7827 = vpack.c.bf16 %v7755, %v7755
        %v7828 = vpack.c.bf16 %v7758, %v7758
        %v7829 = vpack.c.bf16 %v7760, %v7760
        %v7830 = vpack.c.bf16 %v7763, %v7763
        %v7831 = vpack.c.bf16 %v7765, %v7765
        %v7832 = vpack.c.bf16 %v7768, %v7768
        %v7833 = vpack.c.bf16 %v7770, %v7770
        %v7834 = vpack.c.bf16 %v7773, %v7773
        %v7835 = vpack.c.bf16 %v7775, %v7775
        %v7836 = vpack.c.bf16 %v7778, %v7778
        %v7837 = vpack.c.bf16 %v7780, %v7780
        %v7838 = vpack.c.bf16 %v7783, %v7783
        %v7839 = vpack.c.bf16 %v7785, %v7785
        %v7840 = vpack.c.bf16 %v7788, %v7788
        %v7841 = vpack.c.bf16 %v7790, %v7790
        %v7842 = vpack.c.bf16 %v7793, %v7793
        %v7843 = vpack.c.bf16 %v7795, %v7795
        %v7844 = vpack.c.bf16 %v7798, %v7798
        %v7845 = vpack.c.bf16 %v7800, %v7800
        %v7846 = vpack.c.bf16 %v7803, %v7803
        %v7847 = vpack.c.bf16 %v7805, %v7805
        %v7848 = vpack.c.bf16 %v7808, %v7808
        %v7849 = vpack.c.bf16 %v7810, %v7810
        %v7850 = vpack.c.bf16 %v7813, %v7813
        %v7851 = vpack.c.bf16 %v7815, %v7815
        %v7852 = vpack.c.bf16 %v7818, %v7818
        %v7853 = vpack.c.bf16 %v7820, %v7820
        %7854 = vst [vmem:[%s379] sm:$0xf] %v7822
        %7855 = vst [vmem:[%s379 + $0x4] sm:$0xf] %v7823
        %7856 = vst [vmem:[%s379 + $0x8] sm:$0xf] %v7824
        %7857 = vst [vmem:[%s379 + $0xc] sm:$0xf] %v7825
        %7858 = vst [vmem:[%s379 + $0x10] sm:$0xf] %v7826
        %7859 = vst [vmem:[%s379 + $0x14] sm:$0xf] %v7827
        %7860 = vst [vmem:[%s379 + $0x18] sm:$0xf] %v7828
        %7861 = vst [vmem:[%s379 + $0x1c] sm:$0xf] %v7829
        %7862 = vst [vmem:[%s379 + $0x20] sm:$0xf] %v7830
        %7863 = vst [vmem:[%s379 + $0x24] sm:$0xf] %v7831
        %7864 = vst [vmem:[%s379 + $0x28] sm:$0xf] %v7832
        %7865 = vst [vmem:[%s379 + $0x2c] sm:$0xf] %v7833
        %7866 = vst [vmem:[%s379 + $0x30] sm:$0xf] %v7834
        %7867 = vst [vmem:[%s379 + $0x34] sm:$0xf] %v7835
        %7868 = vst [vmem:[%s379 + $0x38] sm:$0xf] %v7836
        %7869 = vst [vmem:[%s379 + $0x3c] sm:$0xf] %v7837
        %7870 = vst [vmem:[%s379 + $0x40] sm:$0xf] %v7838
        %7871 = vst [vmem:[%s379 + $0x44] sm:$0xf] %v7839
        %7872 = vst [vmem:[%s379 + $0x48] sm:$0xf] %v7840
        %7873 = vst [vmem:[%s379 + $0x4c] sm:$0xf] %v7841
        %7874 = vst [vmem:[%s379 + $0x50] sm:$0xf] %v7842
        %7875 = vst [vmem:[%s379 + $0x54] sm:$0xf] %v7843
        %7876 = vst [vmem:[%s379 + $0x58] sm:$0xf] %v7844
        %7877 = vst [vmem:[%s379 + $0x5c] sm:$0xf] %v7845
        %7878 = vst [vmem:[%s379 + $0x60] sm:$0xf] %v7846
        %7879 = vst [vmem:[%s379 + $0x64] sm:$0xf] %v7847
        %7880 = vst [vmem:[%s379 + $0x68] sm:$0xf] %v7848
        %7881 = vst [vmem:[%s379 + $0x6c] sm:$0xf] %v7849
        %7882 = vst [vmem:[%s379 + $0x70] sm:$0xf] %v7850
        %7883 = vst [vmem:[%s379 + $0x74] sm:$0xf] %v7851
        %7884 = vst [vmem:[%s379 + $0x78] sm:$0xf] %v7852
        %7885 = vst [vmem:[%s379 + $0x7c] sm:$0xf] %v7853
        %s7886 = sand.u32 %s269, 1
        %s7887 = scalar_lea.sflag [#allocation6], %s7886
        %s7888 = sand.u32 %s269, 1
        %s7889 = smul.addr %s7888, 128
        %s7890 = scalar_lea.vmem [#allocation5], %s7889
        // Predicated region
        $region65: #{tpu_custom_call.1} parent=63 // pred_check
          %p7891 = pneg %p279
        $region66: #{tpu_custom_call.1} parent=63 // pred_check_branch
          %7893 = sbr.rel (%p7891) target = $region68
        $region67: #{tpu_custom_call.1} parent=63 // pred_region
          %7895 = vsyncadd %s7887, 0
          %s7896 = smul.addr %s25, 32
          %s7897 = smul.addr %s7896, 4
          %s7898 = scalar_lea.hbm %s11, %s7897
          %s7899 = sshll.u32 %s7890, 4
          %s7900 = int_to_ptr.vmem [resolvable:$true] %s7899
          %s7901 = sshll.u32 %s7898, 4
          %s7902 = int_to_ptr.hbm [resolvable:$true] %s7901
          %7907 = dma.vmem_to_hbm [thread:$0]  %s7900, 2048, %s7902, %s7887, 64, 64, 4
        $region68: #{tpu_custom_call.1} parent=63 // pred_fallthru
          _
      $region64: #{tpu_custom_call.1} parent=5 // pred_fallthru
        _
      %p7908 = scmp.le.s32.totalorder 2, %s20
      // Predicated region
      $region69: #{tpu_custom_call.1} parent=5 // pred_check
        %p7909 = pneg %p7908
      $region70: #{tpu_custom_call.1} parent=5 // pred_check_branch
        %7911 = sbr.rel (%p7909) target = $region72
      $region71: #{tpu_custom_call.1} parent=5 // pred_region
        %s7912 = ssub.s32 %s20, 2
        // Predicated region
        $region73: #{tpu_custom_call.1} parent=71 // pred_check
          %p7913 = pneg %p285
        $region74: #{tpu_custom_call.1} parent=71 // pred_check_branch
          %7915 = sbr.rel (%p7913) target = $region76
        $region75: #{tpu_custom_call.1} parent=71 // pred_region
          %s7916 = sand.u32 %s270, 1
          %s7917 = scalar_lea.sflag [#allocation6], %s7916
          %s7918 = sand.u32 %s270, 1
          %s7919 = smul.addr %s7918, 128
          %s7920 = scalar_lea.vmem [#allocation5], %s7919
          %7922 = dma.done %s7917, 2048
        $region76: #{tpu_custom_call.1} parent=71 // pred_fallthru
          _
      $region72: #{tpu_custom_call.1} parent=5 // pred_fallthru
        _
    $region6: #{tpu_custom_call.1} parent=1 // loop_footer
      %s24 = sadd.s32 1, %s20
    $region7: #{tpu_custom_call.1} parent=1 // loop_footer_branch
      %19 = sbr.rel target = $region3
    $region8: #{tpu_custom_call.1} parent=1 // loop_exit
      _
    %7923 = vsyncpa [#allocation6], 1
    %s7924 = scalar_lea.sflag [#allocation6], 1
    %7925 = vsyncpa %s7924, 1

</llo_original>
